<compile_context>
chip_gen: v5e
topology: v5e:2x2
jax: 0.10.0
libtpu: 0.0.40
codegen_flags: <defaults>
</compile_context>

<pallas_src>
import functools

import jax
import jax.numpy as jnp
from jax import lax
from jax.experimental import pallas as pl
from jax.experimental.pallas import tpu as pltpu

BN_EPS = 1e-5
VMEM_LIMIT = 32 * 1024 * 1024     # safe on v5e/v6e and below the ~48 MiB v7x guidance
TARGET_ROWS = 512                 # target output rows (td*H) per grid step


def _round_up(x, m):
    return (x + m - 1) // m * m


# ----------------------------- Pallas kernels ------------------------------- #
def conv_stats_kernel(x_ref, band_ref, conv_ref, stats_ref):
    """Phase A: 3x3x3 conv for one d-tile block + per-block BN partial sums.

    x_ref    : (td+2, H+2, (W+2)*Cin)  bf16  halo'd input slab, (w, ci) in lanes
    band_ref : (9, (W+2)*Cin, W*Cout)  bf16  per-(kd, kh) kw-banded weights
    conv_ref : (td, H, W*Cout)         bf16  conv output block, (w, co) in lanes
    stats_ref: (2, W*Cout)             f32   [row-sum, row-sum-of-squares]
    """
    td, H, WCo = conv_ref.shape
    s1 = jnp.zeros((1, WCo), jnp.float32)
    s2 = jnp.zeros((1, WCo), jnp.float32)
    for d in range(td):
        acc = jnp.zeros((H, WCo), jnp.float32)
        for kd in range(3):
            # Full (H+2)-row plane at depth d+kd.  Slice the kh window on f32
            # rows (native 32-bit sublanes, avoids a packed-bf16 sublane-shift
            # relayout) and cast back to bf16 for the MXU.
            plane = x_ref[d + kd].astype(jnp.float32)
            for kh in range(3):
                lhs = plane[kh:kh + H, :].astype(jnp.bfloat16)
                acc = acc + jnp.dot(lhs, band_ref[3 * kd + kh],
                                    preferred_element_type=jnp.float32)
        conv_ref[d] = acc.astype(conv_ref.dtype)
        # Single-pass BN statistics from the f32 accumulator.
        s1 = s1 + jnp.sum(acc, axis=0, keepdims=True)
        s2 = s2 + jnp.sum(acc * acc, axis=0, keepdims=True)
    stats_ref[0:1, :] = s1
    stats_ref[1:2, :] = s2


def bn_relu_kernel(conv_ref, scale_ref, shift_ref, out_ref):
    """Phase B: folded BatchNorm (per-(w, co)-lane scale/shift) + ReLU."""
    y = conv_ref[...].astype(jnp.float32) * scale_ref[...] + shift_ref[...]
    out_ref[...] = jnp.maximum(y, 0.0).astype(out_ref.dtype)


# ------------------------------- JAX glue ------------------------------------ #
def _pick_td(D, H, W, C):
    """Depth-tile size: aim for >= TARGET_ROWS output rows per grid step while
    keeping the (double-buffered) input slab a few MiB at most."""
    td = max(1, min(D, -(-TARGET_ROWS // max(H, 1))))
    while td > 1 and (td + 2) * (H + 2) * (W + 2) * C * 2 > (4 << 20):
        td = max(1, td // 2)
    return td


def _build_slabs(x_ndhwc, td, Dp):
    """(N, D, H, W, C) -> (N*n_dt, td+2, H+2, (W+2)*C) bf16 halo'd d-tile slabs.

    TODO(synk): replace with in-kernel manual DMA from a single padded HBM
    buffer to remove the (td+2)/td duplication and this extra copy entirely.
    """
    N, D, H, W, C = x_ndhwc.shape
    xb = x_ndhwc.astype(jnp.bfloat16)
    xp = jnp.pad(xb, ((0, 0), (1, 1 + Dp - D), (1, 1), (1, 1), (0, 0)))
    xp = xp.reshape(N, Dp + 2, H + 2, (W + 2) * C)
    n_dt = Dp // td
    slabs = jnp.stack([xp[:, i * td:i * td + td + 2] for i in range(n_dt)], axis=1)
    return slabs.reshape(N * n_dt, td + 2, H + 2, (W + 2) * C)


def _build_band(w, W):
    """PyTorch Conv3d weight (Cout, Cin, 3, 3, 3) -> (9, (W+2)*Cin, W*Cout).

    band[3*kd+kh, w_in*Cin+ci, w*Cout+co] = w[co, ci, kd, kh, w_in-w] when
    0 <= w_in - w < 3 (else 0), so `x_row @ band[3*kd+kh]` performs the kw
    contraction (with zero-padding along W) for one (kd, kh) tap.
    """
    Cout, Cin = w.shape[0], w.shape[1]
    wt = jnp.transpose(w, (2, 3, 4, 1, 0))            # (kd, kh, kw, Cin, Cout)
    r = jnp.arange(W + 2)[:, None]
    c = jnp.arange(W)[None, :]
    k = r - c                                          # (W+2, W)
    mask = (k >= 0) & (k < 3)
    kc = jnp.clip(k, 0, 2)
    b = wt[:, :, kc]                                   # (3, 3, W+2, W, Cin, Cout)
    b = jnp.where(mask[None, None, :, :, None, None], b, 0.0)
    b = b.transpose(0, 1, 2, 4, 3, 5)                  # (3, 3, W+2, Cin, W, Cout)
    return b.reshape(9, (W + 2) * Cin, W * Cout)


def conv_bn_relu_layer(x_ndhwc, w, gamma, beta, *, out_dtype):
    """One (Conv3d 3x3x3 pad=1 -> BatchNorm3d(train) -> ReLU) layer, NDHWC in,
    NDHWC out (out_dtype)."""
    N, D, H, W, Cin = x_ndhwc.shape
    Cout = w.shape[0]
    WCi = (W + 2) * Cin
    WCo = W * Cout

    td = _pick_td(D, H, W, Cin)
    Dp = _round_up(D, td)
    n_dt = Dp // td
    G = N * n_dt

    slabs = _build_slabs(x_ndhwc, td, Dp)                       # (G, td+2, H+2, WCi) bf16
    band = _build_band(w, W).astype(jnp.bfloat16)               # (9, WCi, WCo)

    # --- phase A: in-kernel tap-accumulated conv + per-block BN partials ----
    conv_out, part = pl.pallas_call(
        conv_stats_kernel,
        out_shape=(
            jax.ShapeDtypeStruct((G, td, H, WCo), jnp.bfloat16),
            jax.ShapeDtypeStruct((G, 2, WCo), jnp.float32),
        ),
        grid=(G,),
        in_specs=[
            pl.BlockSpec((None, td + 2, H + 2, WCi), lambda g: (g, 0, 0, 0)),
            pl.BlockSpec((9, WCi, WCo), lambda g: (0, 0, 0)),   # weights stay resident
        ],
        out_specs=(
            pl.BlockSpec((None, td, H, WCo), lambda g: (g, 0, 0, 0)),
            pl.BlockSpec((None, 2, WCo), lambda g: (g, 0, 0)),
        ),
        compiler_params=pltpu.CompilerParams(
            dimension_semantics=("parallel",),                  # megacore / v7x 2 TCs
            vmem_limit_bytes=VMEM_LIMIT,
        ),
    )(slabs, band)

    # --- tiny cross-block reduction + BN fold (per-channel, JAX glue) --------
    M = N * D * H * W                                   # true element count per channel
    totals = jnp.sum(part, axis=0).reshape(2, W, Cout).sum(axis=1)   # (2, Cout)
    mean = totals[0] / M
    var = jnp.maximum(totals[1] / M - mean * mean, 0.0)  # biased variance (training BN)
    scale = gamma * jax.lax.rsqrt(var + BN_EPS)
    shift = beta - mean * scale
    scale_l = jnp.tile(scale, W).reshape(1, WCo)          # lane (w*Cout+co) -> scale[co]
    shift_l = jnp.tile(shift, W).reshape(1, WCo)

    # --- phase B: fused scale/shift + ReLU ------------------------------------
    y = pl.pallas_call(
        bn_relu_kernel,
        out_shape=jax.ShapeDtypeStruct((G, td, H, WCo), out_dtype),
        grid=(G,),
        in_specs=[
            pl.BlockSpec((None, td, H, WCo), lambda g: (g, 0, 0, 0)),
            pl.BlockSpec((1, WCo), lambda g: (0, 0)),
            pl.BlockSpec((1, WCo), lambda g: (0, 0)),
        ],
        out_specs=pl.BlockSpec((None, td, H, WCo), lambda g: (g, 0, 0, 0)),
        compiler_params=pltpu.CompilerParams(
            dimension_semantics=("parallel",),
            vmem_limit_bytes=VMEM_LIMIT,
        ),
    )(conv_out, scale_l, shift_l)

    y = y.reshape(N, Dp, H, WCo)[:, :D].reshape(N, D, H, W, Cout)
    return y


def double_conv_forward(x_ncdhw, params):
    """Forward pass of double_conv (training-mode BatchNorm3d)."""
    (w1, b1, g1, be1, w2, b2, g2, be2) = params
    del b1, b2  # per-channel conv bias is exactly cancelled by training-mode BN
    x = jnp.transpose(x_ncdhw, (0, 2, 3, 4, 1))               # NCDHW -> NDHWC
    y1 = conv_bn_relu_layer(x, w1, g1, be1, out_dtype=jnp.bfloat16)
    y2 = conv_bn_relu_layer(y1, w2, g2, be2, out_dtype=jnp.float32)
    return jnp.transpose(y2, (0, 4, 1, 2, 3))                 # back to NCDHW


# --------------------------- pure-JAX references ----------------------------- #
def _ref_layer(x_ndhwc, w, b, g, be, *, conv_dtype):
    w_dhwio = jnp.transpose(w, (2, 3, 4, 1, 0))
    conv = lax.conv_general_dilated(
        x_ndhwc.astype(conv_dtype), w_dhwio.astype(conv_dtype),
        window_strides=(1, 1, 1), padding=((1, 1), (1, 1), (1, 1)),
        dimension_numbers=("NDHWC", "DHWIO", "NDHWC"),
        preferred_element_type=jnp.float32,
        precision=lax.Precision.HIGHEST)
    conv = conv + b                                    # bias kept -> checks BN cancellation
    mean = jnp.mean(conv, axis=(0, 1, 2, 3))
    var = jnp.mean(jnp.square(conv - mean), axis=(0, 1, 2, 3))
    y = (conv - mean) * lax.rsqrt(var + BN_EPS) * g + be
    return jnp.maximum(y, 0.0)


def double_conv_reference(x_ncdhw, params, conv_dtype=jnp.float32):
    (w1, b1, g1, be1, w2, b2, g2, be2) = params
    x = jnp.transpose(x_ncdhw, (0, 2, 3, 4, 1))
    y1 = _ref_layer(x, w1, b1, g1, be1, conv_dtype=conv_dtype)
    y2 = _ref_layer(y1, w2, b2, g2, be2, conv_dtype=conv_dtype)
    return jnp.transpose(y2, (0, 4, 1, 2, 3))


# --------------------------------- main --------------------------------------- #
if __name__ == "__main__":
    in_ch, out_ch = 4, 8
    N, D, H, W = 2, 8, 8, 8

    key = jax.random.PRNGKey(0)
    kx, kw1, kb1, kw2, kb2 = jax.random.split(key, 5)

    x = jax.random.normal(kx, (N, in_ch, D, H, W), dtype=jnp.float32)

    # PyTorch-layout parameters (BatchNorm defaults: gamma=1, beta=0).
    w1 = 0.1 * jax.random.normal(kw1, (out_ch, in_ch, 3, 3, 3), dtype=jnp.float32)
    b1 = 0.1 * jax.random.normal(kb1, (out_ch,), dtype=jnp.float32)
    g1 = jnp.ones((out_ch,), jnp.float32)
    be1 = jnp.zeros((out_ch,), jnp.float32)
    w2 = 0.1 * jax.random.normal(kw2, (out_ch, out_ch, 3, 3, 3), dtype=jnp.float32)
    b2 = 0.1 * jax.random.normal(kb2, (out_ch,), dtype=jnp.float32)
    g2 = jnp.ones((out_ch,), jnp.float32)
    be2 = jnp.zeros((out_ch,), jnp.float32)

    params = (w1, b1, g1, be1, w2, b2, g2, be2)

    out = jax.block_until_ready(jax.jit(double_conv_forward)(x, params))

    # Check 1: bf16-input / f32-accumulate math through plain XLA (tight-ish
    # check of the kernels, including bias-cancellation; loosened slightly for
    # the new bf16 conv intermediate storage).
    ref_bf16 = jax.block_until_ready(
        jax.jit(functools.partial(double_conv_reference,
                                  conv_dtype=jnp.bfloat16))(x, params))
    # Check 2: full float32 / Precision.HIGHEST reference with conv biases
    # (PyTorch-fidelity sanity check; looser tolerance: bf16 MXU inputs and
    #  bf16 intermediates across two stacked conv+BN layers).
    ref_f32 = jax.block_until_ready(
        jax.jit(functools.partial(double_conv_reference,
                                  conv_dtype=jnp.float32))(x, params))

    assert out.shape == (N, out_ch, D, H, W), out.shape
    assert bool(jnp.all(jnp.isfinite(out)))
    assert bool(jnp.allclose(out, ref_bf16, atol=2e-2, rtol=2e-2))
    assert bool(jnp.allclose(out, ref_f32, atol=5e-2, rtol=5e-2))

    print("KERNEL_OK")
</pallas_src>

<mosaic_0001>
module attributes {stable_mosaic.version = 11 : i64} {
  func.func @conv_stats_kernel(%arg0: i32, %arg1: memref<1x10x10x40xbf16, #tpu.memory_space<vmem>>, %arg2: memref<9x40x64xbf16, #tpu.memory_space<vmem>>, %arg3: memref<1x8x8x64xbf16, #tpu.memory_space<vmem>>, %arg4: memref<1x2x64xf32, #tpu.memory_space<vmem>>) attributes {dimension_semantics = [#tpu.dimension_semantics<parallel>], iteration_bounds = array<i64: 2>, scalar_prefetch = 0 : i64, scratch_operands = 0 : i64, tpu.core_type = #tpu.core_type<tc>, window_params = [{transform_indices = @transform_0, window_bounds = array<i64: 1, 10, 10, 40>}, {pipeline_mode = #tpu.pipeline_mode<synchronous>, transform_indices = @transform_1, window_bounds = array<i64: 9, 40, 64>}, {transform_indices = @transform_2, window_bounds = array<i64: 1, 8, 8, 64>}, {transform_indices = @transform_3, window_bounds = array<i64: 1, 2, 64>}]} {
    %cst = arith.constant 0.000000e+00 : f32
    %0 = vector.broadcast %cst : f32 to vector<1x64xf32>
    %cst_0 = arith.constant 0.000000e+00 : f32
    %1 = vector.broadcast %cst_0 : f32 to vector<1x64xf32>
    %cst_1 = arith.constant 0.000000e+00 : f32
    %2 = vector.broadcast %cst_1 : f32 to vector<8x64xf32>
    %c0 = arith.constant 0 : index
    %c0_2 = arith.constant 0 : index
    %c0_3 = arith.constant 0 : index
    %c0_4 = arith.constant 0 : index
    %3 = vector.load %arg1[%c0, %c0_2, %c0_3, %c0_4] : memref<1x10x10x40xbf16, #tpu.memory_space<vmem>>, vector<1x1x10x40xbf16>
    %4 = vector.shape_cast %3 : vector<1x1x10x40xbf16> to vector<10x40xbf16>
    %5 = arith.extf %4 : vector<10x40xbf16> to vector<10x40xf32>
    %6 = vector.extract_strided_slice %5 {offsets = [0, 0], sizes = [8, 40], strides = [1, 1]} : vector<10x40xf32> to vector<8x40xf32>
    %7 = arith.truncf %6 : vector<8x40xf32> to vector<8x40xbf16>
    %c0_5 = arith.constant 0 : index
    %c0_6 = arith.constant 0 : index
    %c0_7 = arith.constant 0 : index
    %8 = vector.load %arg2[%c0_5, %c0_6, %c0_7] : memref<9x40x64xbf16, #tpu.memory_space<vmem>>, vector<1x40x64xbf16>
    %9 = vector.shape_cast %8 : vector<1x40x64xbf16> to vector<40x64xbf16>
    %cst_8 = arith.constant dense<0.000000e+00> : vector<8x64xf32>
    %10 = tpu.matmul %7, %9, %cst_8 {dimension_numbers = #tpu.dot_dimension_numbers<[1], [0], [0], [1], [0, 0, 1, 1], [], []>} : vector<8x40xbf16>, vector<40x64xbf16>, vector<8x64xf32> -> vector<8x64xf32>
    %11 = arith.addf %2, %10 : vector<8x64xf32>
    %12 = vector.extract_strided_slice %5 {offsets = [1, 0], sizes = [8, 40], strides = [1, 1]} : vector<10x40xf32> to vector<8x40xf32>
    %13 = arith.truncf %12 : vector<8x40xf32> to vector<8x40xbf16>
    %c1 = arith.constant 1 : index
    %c0_9 = arith.constant 0 : index
    %c0_10 = arith.constant 0 : index
    %14 = vector.load %arg2[%c1, %c0_9, %c0_10] : memref<9x40x64xbf16, #tpu.memory_space<vmem>>, vector<1x40x64xbf16>
    %15 = vector.shape_cast %14 : vector<1x40x64xbf16> to vector<40x64xbf16>
    %cst_11 = arith.constant dense<0.000000e+00> : vector<8x64xf32>
    %16 = tpu.matmul %13, %15, %cst_11 {dimension_numbers = #tpu.dot_dimension_numbers<[1], [0], [0], [1], [0, 0, 1, 1], [], []>} : vector<8x40xbf16>, vector<40x64xbf16>, vector<8x64xf32> -> vector<8x64xf32>
    %17 = arith.addf %11, %16 : vector<8x64xf32>
    %18 = vector.extract_strided_slice %5 {offsets = [2, 0], sizes = [8, 40], strides = [1, 1]} : vector<10x40xf32> to vector<8x40xf32>
    %19 = arith.truncf %18 : vector<8x40xf32> to vector<8x40xbf16>
    %c2 = arith.constant 2 : index
    %c0_12 = arith.constant 0 : index
    %c0_13 = arith.constant 0 : index
    %20 = vector.load %arg2[%c2, %c0_12, %c0_13] : memref<9x40x64xbf16, #tpu.memory_space<vmem>>, vector<1x40x64xbf16>
    %21 = vector.shape_cast %20 : vector<1x40x64xbf16> to vector<40x64xbf16>
    %cst_14 = arith.constant dense<0.000000e+00> : vector<8x64xf32>
    %22 = tpu.matmul %19, %21, %cst_14 {dimension_numbers = #tpu.dot_dimension_numbers<[1], [0], [0], [1], [0, 0, 1, 1], [], []>} : vector<8x40xbf16>, vector<40x64xbf16>, vector<8x64xf32> -> vector<8x64xf32>
    %23 = arith.addf %17, %22 : vector<8x64xf32>
    %c0_15 = arith.constant 0 : index
    %c1_16 = arith.constant 1 : index
    %c0_17 = arith.constant 0 : index
    %c0_18 = arith.constant 0 : index
    %24 = vector.load %arg1[%c0_15, %c1_16, %c0_17, %c0_18] : memref<1x10x10x40xbf16, #tpu.memory_space<vmem>>, vector<1x1x10x40xbf16>
    %25 = vector.shape_cast %24 : vector<1x1x10x40xbf16> to vector<10x40xbf16>
    %26 = arith.extf %25 : vector<10x40xbf16> to vector<10x40xf32>
    %27 = vector.extract_strided_slice %26 {offsets = [0, 0], sizes = [8, 40], strides = [1, 1]} : vector<10x40xf32> to vector<8x40xf32>
    %28 = arith.truncf %27 : vector<8x40xf32> to vector<8x40xbf16>
    %c3 = arith.constant 3 : index
    %c0_19 = arith.constant 0 : index
    %c0_20 = arith.constant 0 : index
    %29 = vector.load %arg2[%c3, %c0_19, %c0_20] : memref<9x40x64xbf16, #tpu.memory_space<vmem>>, vector<1x40x64xbf16>
    %30 = vector.shape_cast %29 : vector<1x40x64xbf16> to vector<40x64xbf16>
    %cst_21 = arith.constant dense<0.000000e+00> : vector<8x64xf32>
    %31 = tpu.matmul %28, %30, %cst_21 {dimension_numbers = #tpu.dot_dimension_numbers<[1], [0], [0], [1], [0, 0, 1, 1], [], []>} : vector<8x40xbf16>, vector<40x64xbf16>, vector<8x64xf32> -> vector<8x64xf32>
    %32 = arith.addf %23, %31 : vector<8x64xf32>
    %33 = vector.extract_strided_slice %26 {offsets = [1, 0], sizes = [8, 40], strides = [1, 1]} : vector<10x40xf32> to vector<8x40xf32>
    %34 = arith.truncf %33 : vector<8x40xf32> to vector<8x40xbf16>
    %c4 = arith.constant 4 : index
    %c0_22 = arith.constant 0 : index
    %c0_23 = arith.constant 0 : index
    %35 = vector.load %arg2[%c4, %c0_22, %c0_23] : memref<9x40x64xbf16, #tpu.memory_space<vmem>>, vector<1x40x64xbf16>
    %36 = vector.shape_cast %35 : vector<1x40x64xbf16> to vector<40x64xbf16>
    %cst_24 = arith.constant dense<0.000000e+00> : vector<8x64xf32>
    %37 = tpu.matmul %34, %36, %cst_24 {dimension_numbers = #tpu.dot_dimension_numbers<[1], [0], [0], [1], [0, 0, 1, 1], [], []>} : vector<8x40xbf16>, vector<40x64xbf16>, vector<8x64xf32> -> vector<8x64xf32>
    %38 = arith.addf %32, %37 : vector<8x64xf32>
    %39 = vector.extract_strided_slice %26 {offsets = [2, 0], sizes = [8, 40], strides = [1, 1]} : vector<10x40xf32> to vector<8x40xf32>
    %40 = arith.truncf %39 : vector<8x40xf32> to vector<8x40xbf16>
    %c5 = arith.constant 5 : index
    %c0_25 = arith.constant 0 : index
    %c0_26 = arith.constant 0 : index
    %41 = vector.load %arg2[%c5, %c0_25, %c0_26] : memref<9x40x64xbf16, #tpu.memory_space<vmem>>, vector<1x40x64xbf16>
    %42 = vector.shape_cast %41 : vector<1x40x64xbf16> to vector<40x64xbf16>
    %cst_27 = arith.constant dense<0.000000e+00> : vector<8x64xf32>
    %43 = tpu.matmul %40, %42, %cst_27 {dimension_numbers = #tpu.dot_dimension_numbers<[1], [0], [0], [1], [0, 0, 1, 1], [], []>} : vector<8x40xbf16>, vector<40x64xbf16>, vector<8x64xf32> -> vector<8x64xf32>
    %44 = arith.addf %38, %43 : vector<8x64xf32>
    %c0_28 = arith.constant 0 : index
    %c2_29 = arith.constant 2 : index
    %c0_30 = arith.constant 0 : index
    %c0_31 = arith.constant 0 : index
    %45 = vector.load %arg1[%c0_28, %c2_29, %c0_30, %c0_31] : memref<1x10x10x40xbf16, #tpu.memory_space<vmem>>, vector<1x1x10x40xbf16>
    %46 = vector.shape_cast %45 : vector<1x1x10x40xbf16> to vector<10x40xbf16>
    %47 = arith.extf %46 : vector<10x40xbf16> to vector<10x40xf32>
    %48 = vector.extract_strided_slice %47 {offsets = [0, 0], sizes = [8, 40], strides = [1, 1]} : vector<10x40xf32> to vector<8x40xf32>
    %49 = arith.truncf %48 : vector<8x40xf32> to vector<8x40xbf16>
    %c6 = arith.constant 6 : index
    %c0_32 = arith.constant 0 : index
    %c0_33 = arith.constant 0 : index
    %50 = vector.load %arg2[%c6, %c0_32, %c0_33] : memref<9x40x64xbf16, #tpu.memory_space<vmem>>, vector<1x40x64xbf16>
    %51 = vector.shape_cast %50 : vector<1x40x64xbf16> to vector<40x64xbf16>
    %cst_34 = arith.constant dense<0.000000e+00> : vector<8x64xf32>
    %52 = tpu.matmul %49, %51, %cst_34 {dimension_numbers = #tpu.dot_dimension_numbers<[1], [0], [0], [1], [0, 0, 1, 1], [], []>} : vector<8x40xbf16>, vector<40x64xbf16>, vector<8x64xf32> -> vector<8x64xf32>
    %53 = arith.addf %44, %52 : vector<8x64xf32>
    %54 = vector.extract_strided_slice %47 {offsets = [1, 0], sizes = [8, 40], strides = [1, 1]} : vector<10x40xf32> to vector<8x40xf32>
    %55 = arith.truncf %54 : vector<8x40xf32> to vector<8x40xbf16>
    %c7 = arith.constant 7 : index
    %c0_35 = arith.constant 0 : index
    %c0_36 = arith.constant 0 : index
    %56 = vector.load %arg2[%c7, %c0_35, %c0_36] : memref<9x40x64xbf16, #tpu.memory_space<vmem>>, vector<1x40x64xbf16>
    %57 = vector.shape_cast %56 : vector<1x40x64xbf16> to vector<40x64xbf16>
    %cst_37 = arith.constant dense<0.000000e+00> : vector<8x64xf32>
    %58 = tpu.matmul %55, %57, %cst_37 {dimension_numbers = #tpu.dot_dimension_numbers<[1], [0], [0], [1], [0, 0, 1, 1], [], []>} : vector<8x40xbf16>, vector<40x64xbf16>, vector<8x64xf32> -> vector<8x64xf32>
    %59 = arith.addf %53, %58 : vector<8x64xf32>
    %60 = vector.extract_strided_slice %47 {offsets = [2, 0], sizes = [8, 40], strides = [1, 1]} : vector<10x40xf32> to vector<8x40xf32>
    %61 = arith.truncf %60 : vector<8x40xf32> to vector<8x40xbf16>
    %c8 = arith.constant 8 : index
    %c0_38 = arith.constant 0 : index
    %c0_39 = arith.constant 0 : index
    %62 = vector.load %arg2[%c8, %c0_38, %c0_39] : memref<9x40x64xbf16, #tpu.memory_space<vmem>>, vector<1x40x64xbf16>
    %63 = vector.shape_cast %62 : vector<1x40x64xbf16> to vector<40x64xbf16>
    %cst_40 = arith.constant dense<0.000000e+00> : vector<8x64xf32>
    %64 = tpu.matmul %61, %63, %cst_40 {dimension_numbers = #tpu.dot_dimension_numbers<[1], [0], [0], [1], [0, 0, 1, 1], [], []>} : vector<8x40xbf16>, vector<40x64xbf16>, vector<8x64xf32> -> vector<8x64xf32>
    %65 = arith.addf %59, %64 : vector<8x64xf32>
    %66 = arith.truncf %65 : vector<8x64xf32> to vector<8x64xbf16>
    %c0_41 = arith.constant 0 : index
    %c0_42 = arith.constant 0 : index
    %c0_43 = arith.constant 0 : index
    %c0_44 = arith.constant 0 : index
    %67 = vector.load %arg3[%c0_41, %c0_42, %c0_43, %c0_44] : memref<1x8x8x64xbf16, #tpu.memory_space<vmem>>, vector<1x1x8x64xbf16>
    %68 = vector.shape_cast %67 : vector<1x1x8x64xbf16> to vector<8x64xbf16>
    %69 = vector.shape_cast %66 : vector<8x64xbf16> to vector<1x1x8x64xbf16>
    tpu.vector_store %arg3[%c0_41, %c0_42, %c0_43, %c0_44], %69 {strides = array<i32>} : memref<1x8x8x64xbf16, #tpu.memory_space<vmem>>, vector<1x1x8x64xbf16>,
    %cst_45 = arith.constant dense<0.000000e+00> : vector<64xf32>
    %70 = vector.multi_reduction <add>, %65, %cst_45 [0] : vector<8x64xf32> to vector<64xf32>
    %71 = vector.shape_cast %70 : vector<64xf32> to vector<1x64xf32>
    %72 = arith.addf %0, %71 : vector<1x64xf32>
    %73 = arith.mulf %65, %65 : vector<8x64xf32>
    %cst_46 = arith.constant dense<0.000000e+00> : vector<64xf32>
    %74 = vector.multi_reduction <add>, %73, %cst_46 [0] : vector<8x64xf32> to vector<64xf32>
    %75 = vector.shape_cast %74 : vector<64xf32> to vector<1x64xf32>
    %76 = arith.addf %1, %75 : vector<1x64xf32>
    %cst_47 = arith.constant 0.000000e+00 : f32
    %77 = vector.broadcast %cst_47 : f32 to vector<8x64xf32>
    %c0_48 = arith.constant 0 : index
    %c1_49 = arith.constant 1 : index
    %c0_50 = arith.constant 0 : index
    %c0_51 = arith.constant 0 : index
    %78 = vector.load %arg1[%c0_48, %c1_49, %c0_50, %c0_51] : memref<1x10x10x40xbf16, #tpu.memory_space<vmem>>, vector<1x1x10x40xbf16>
    %79 = vector.shape_cast %78 : vector<1x1x10x40xbf16> to vector<10x40xbf16>
    %80 = arith.extf %79 : vector<10x40xbf16> to vector<10x40xf32>
    %81 = vector.extract_strided_slice %80 {offsets = [0, 0], sizes = [8, 40], strides = [1, 1]} : vector<10x40xf32> to vector<8x40xf32>
    %82 = arith.truncf %81 : vector<8x40xf32> to vector<8x40xbf16>
    %c0_52 = arith.constant 0 : index
    %c0_53 = arith.constant 0 : index
    %c0_54 = arith.constant 0 : index
    %83 = vector.load %arg2[%c0_52, %c0_53, %c0_54] : memref<9x40x64xbf16, #tpu.memory_space<vmem>>, vector<1x40x64xbf16>
    %84 = vector.shape_cast %83 : vector<1x40x64xbf16> to vector<40x64xbf16>
    %cst_55 = arith.constant dense<0.000000e+00> : vector<8x64xf32>
    %85 = tpu.matmul %82, %84, %cst_55 {dimension_numbers = #tpu.dot_dimension_numbers<[1], [0], [0], [1], [0, 0, 1, 1], [], []>} : vector<8x40xbf16>, vector<40x64xbf16>, vector<8x64xf32> -> vector<8x64xf32>
    %86 = arith.addf %77, %85 : vector<8x64xf32>
    %87 = vector.extract_strided_slice %80 {offsets = [1, 0], sizes = [8, 40], strides = [1, 1]} : vector<10x40xf32> to vector<8x40xf32>
    %88 = arith.truncf %87 : vector<8x40xf32> to vector<8x40xbf16>
    %c1_56 = arith.constant 1 : index
    %c0_57 = arith.constant 0 : index
    %c0_58 = arith.constant 0 : index
    %89 = vector.load %arg2[%c1_56, %c0_57, %c0_58] : memref<9x40x64xbf16, #tpu.memory_space<vmem>>, vector<1x40x64xbf16>
    %90 = vector.shape_cast %89 : vector<1x40x64xbf16> to vector<40x64xbf16>
    %cst_59 = arith.constant dense<0.000000e+00> : vector<8x64xf32>
    %91 = tpu.matmul %88, %90, %cst_59 {dimension_numbers = #tpu.dot_dimension_numbers<[1], [0], [0], [1], [0, 0, 1, 1], [], []>} : vector<8x40xbf16>, vector<40x64xbf16>, vector<8x64xf32> -> vector<8x64xf32>
    %92 = arith.addf %86, %91 : vector<8x64xf32>
    %93 = vector.extract_strided_slice %80 {offsets = [2, 0], sizes = [8, 40], strides = [1, 1]} : vector<10x40xf32> to vector<8x40xf32>
    %94 = arith.truncf %93 : vector<8x40xf32> to vector<8x40xbf16>
    %c2_60 = arith.constant 2 : index
    %c0_61 = arith.constant 0 : index
    %c0_62 = arith.constant 0 : index
    %95 = vector.load %arg2[%c2_60, %c0_61, %c0_62] : memref<9x40x64xbf16, #tpu.memory_space<vmem>>, vector<1x40x64xbf16>
    %96 = vector.shape_cast %95 : vector<1x40x64xbf16> to vector<40x64xbf16>
    %cst_63 = arith.constant dense<0.000000e+00> : vector<8x64xf32>
    %97 = tpu.matmul %94, %96, %cst_63 {dimension_numbers = #tpu.dot_dimension_numbers<[1], [0], [0], [1], [0, 0, 1, 1], [], []>} : vector<8x40xbf16>, vector<40x64xbf16>, vector<8x64xf32> -> vector<8x64xf32>
    %98 = arith.addf %92, %97 : vector<8x64xf32>
    %c0_64 = arith.constant 0 : index
    %c2_65 = arith.constant 2 : index
    %c0_66 = arith.constant 0 : index
    %c0_67 = arith.constant 0 : index
    %99 = vector.load %arg1[%c0_64, %c2_65, %c0_66, %c0_67] : memref<1x10x10x40xbf16, #tpu.memory_space<vmem>>, vector<1x1x10x40xbf16>
    %100 = vector.shape_cast %99 : vector<1x1x10x40xbf16> to vector<10x40xbf16>
    %101 = arith.extf %100 : vector<10x40xbf16> to vector<10x40xf32>
    %102 = vector.extract_strided_slice %101 {offsets = [0, 0], sizes = [8, 40], strides = [1, 1]} : vector<10x40xf32> to vector<8x40xf32>
    %103 = arith.truncf %102 : vector<8x40xf32> to vector<8x40xbf16>
    %c3_68 = arith.constant 3 : index
    %c0_69 = arith.constant 0 : index
    %c0_70 = arith.constant 0 : index
    %104 = vector.load %arg2[%c3_68, %c0_69, %c0_70] : memref<9x40x64xbf16, #tpu.memory_space<vmem>>, vector<1x40x64xbf16>
    %105 = vector.shape_cast %104 : vector<1x40x64xbf16> to vector<40x64xbf16>
    %cst_71 = arith.constant dense<0.000000e+00> : vector<8x64xf32>
    %106 = tpu.matmul %103, %105, %cst_71 {dimension_numbers = #tpu.dot_dimension_numbers<[1], [0], [0], [1], [0, 0, 1, 1], [], []>} : vector<8x40xbf16>, vector<40x64xbf16>, vector<8x64xf32> -> vector<8x64xf32>
    %107 = arith.addf %98, %106 : vector<8x64xf32>
    %108 = vector.extract_strided_slice %101 {offsets = [1, 0], sizes = [8, 40], strides = [1, 1]} : vector<10x40xf32> to vector<8x40xf32>
    %109 = arith.truncf %108 : vector<8x40xf32> to vector<8x40xbf16>
    %c4_72 = arith.constant 4 : index
    %c0_73 = arith.constant 0 : index
    %c0_74 = arith.constant 0 : index
    %110 = vector.load %arg2[%c4_72, %c0_73, %c0_74] : memref<9x40x64xbf16, #tpu.memory_space<vmem>>, vector<1x40x64xbf16>
    %111 = vector.shape_cast %110 : vector<1x40x64xbf16> to vector<40x64xbf16>
    %cst_75 = arith.constant dense<0.000000e+00> : vector<8x64xf32>
    %112 = tpu.matmul %109, %111, %cst_75 {dimension_numbers = #tpu.dot_dimension_numbers<[1], [0], [0], [1], [0, 0, 1, 1], [], []>} : vector<8x40xbf16>, vector<40x64xbf16>, vector<8x64xf32> -> vector<8x64xf32>
    %113 = arith.addf %107, %112 : vector<8x64xf32>
    %114 = vector.extract_strided_slice %101 {offsets = [2, 0], sizes = [8, 40], strides = [1, 1]} : vector<10x40xf32> to vector<8x40xf32>
    %115 = arith.truncf %114 : vector<8x40xf32> to vector<8x40xbf16>
    %c5_76 = arith.constant 5 : index
    %c0_77 = arith.constant 0 : index
    %c0_78 = arith.constant 0 : index
    %116 = vector.load %arg2[%c5_76, %c0_77, %c0_78] : memref<9x40x64xbf16, #tpu.memory_space<vmem>>, vector<1x40x64xbf16>
    %117 = vector.shape_cast %116 : vector<1x40x64xbf16> to vector<40x64xbf16>
    %cst_79 = arith.constant dense<0.000000e+00> : vector<8x64xf32>
    %118 = tpu.matmul %115, %117, %cst_79 {dimension_numbers = #tpu.dot_dimension_numbers<[1], [0], [0], [1], [0, 0, 1, 1], [], []>} : vector<8x40xbf16>, vector<40x64xbf16>, vector<8x64xf32> -> vector<8x64xf32>
    %119 = arith.addf %113, %118 : vector<8x64xf32>
    %c0_80 = arith.constant 0 : index
    %c3_81 = arith.constant 3 : index
    %c0_82 = arith.constant 0 : index
    %c0_83 = arith.constant 0 : index
    %120 = vector.load %arg1[%c0_80, %c3_81, %c0_82, %c0_83] : memref<1x10x10x40xbf16, #tpu.memory_space<vmem>>, vector<1x1x10x40xbf16>
    %121 = vector.shape_cast %120 : vector<1x1x10x40xbf16> to vector<10x40xbf16>
    %122 = arith.extf %121 : vector<10x40xbf16> to vector<10x40xf32>
    %123 = vector.extract_strided_slice %122 {offsets = [0, 0], sizes = [8, 40], strides = [1, 1]} : vector<10x40xf32> to vector<8x40xf32>
    %124 = arith.truncf %123 : vector<8x40xf32> to vector<8x40xbf16>
    %c6_84 = arith.constant 6 : index
    %c0_85 = arith.constant 0 : index
    %c0_86 = arith.constant 0 : index
    %125 = vector.load %arg2[%c6_84, %c0_85, %c0_86] : memref<9x40x64xbf16, #tpu.memory_space<vmem>>, vector<1x40x64xbf16>
    %126 = vector.shape_cast %125 : vector<1x40x64xbf16> to vector<40x64xbf16>
    %cst_87 = arith.constant dense<0.000000e+00> : vector<8x64xf32>
    %127 = tpu.matmul %124, %126, %cst_87 {dimension_numbers = #tpu.dot_dimension_numbers<[1], [0], [0], [1], [0, 0, 1, 1], [], []>} : vector<8x40xbf16>, vector<40x64xbf16>, vector<8x64xf32> -> vector<8x64xf32>
    %128 = arith.addf %119, %127 : vector<8x64xf32>
    %129 = vector.extract_strided_slice %122 {offsets = [1, 0], sizes = [8, 40], strides = [1, 1]} : vector<10x40xf32> to vector<8x40xf32>
    %130 = arith.truncf %129 : vector<8x40xf32> to vector<8x40xbf16>
    %c7_88 = arith.constant 7 : index
    %c0_89 = arith.constant 0 : index
    %c0_90 = arith.constant 0 : index
    %131 = vector.load %arg2[%c7_88, %c0_89, %c0_90] : memref<9x40x64xbf16, #tpu.memory_space<vmem>>, vector<1x40x64xbf16>
    %132 = vector.shape_cast %131 : vector<1x40x64xbf16> to vector<40x64xbf16>
    %cst_91 = arith.constant dense<0.000000e+00> : vector<8x64xf32>
    %133 = tpu.matmul %130, %132, %cst_91 {dimension_numbers = #tpu.dot_dimension_numbers<[1], [0], [0], [1], [0, 0, 1, 1], [], []>} : vector<8x40xbf16>, vector<40x64xbf16>, vector<8x64xf32> -> vector<8x64xf32>
    %134 = arith.addf %128, %133 : vector<8x64xf32>
    %135 = vector.extract_strided_slice %122 {offsets = [2, 0], sizes = [8, 40], strides = [1, 1]} : vector<10x40xf32> to vector<8x40xf32>
    %136 = arith.truncf %135 : vector<8x40xf32> to vector<8x40xbf16>
    %c8_92 = arith.constant 8 : index
    %c0_93 = arith.constant 0 : index
    %c0_94 = arith.constant 0 : index
    %137 = vector.load %arg2[%c8_92, %c0_93, %c0_94] : memref<9x40x64xbf16, #tpu.memory_space<vmem>>, vector<1x40x64xbf16>
    %138 = vector.shape_cast %137 : vector<1x40x64xbf16> to vector<40x64xbf16>
    %cst_95 = arith.constant dense<0.000000e+00> : vector<8x64xf32>
    %139 = tpu.matmul %136, %138, %cst_95 {dimension_numbers = #tpu.dot_dimension_numbers<[1], [0], [0], [1], [0, 0, 1, 1], [], []>} : vector<8x40xbf16>, vector<40x64xbf16>, vector<8x64xf32> -> vector<8x64xf32>
    %140 = arith.addf %134, %139 : vector<8x64xf32>
    %141 = arith.truncf %140 : vector<8x64xf32> to vector<8x64xbf16>
    %c0_96 = arith.constant 0 : index
    %c1_97 = arith.constant 1 : index
    %c0_98 = arith.constant 0 : index
    %c0_99 = arith.constant 0 : index
    %142 = vector.load %arg3[%c0_96, %c1_97, %c0_98, %c0_99] : memref<1x8x8x64xbf16, #tpu.memory_space<vmem>>, vector<1x1x8x64xbf16>
    %143 = vector.shape_cast %142 : vector<1x1x8x64xbf16> to vector<8x64xbf16>
    %144 = vector.shape_cast %141 : vector<8x64xbf16> to vector<1x1x8x64xbf16>
    tpu.vector_store %arg3[%c0_96, %c1_97, %c0_98, %c0_99], %144 {strides = array<i32>} : memref<1x8x8x64xbf16, #tpu.memory_space<vmem>>, vector<1x1x8x64xbf16>,
    %cst_100 = arith.constant dense<0.000000e+00> : vector<64xf32>
    %145 = vector.multi_reduction <add>, %140, %cst_100 [0] : vector<8x64xf32> to vector<64xf32>
    %146 = vector.shape_cast %145 : vector<64xf32> to vector<1x64xf32>
    %147 = arith.addf %72, %146 : vector<1x64xf32>
    %148 = arith.mulf %140, %140 : vector<8x64xf32>
    %cst_101 = arith.constant dense<0.000000e+00> : vector<64xf32>
    %149 = vector.multi_reduction <add>, %148, %cst_101 [0] : vector<8x64xf32> to vector<64xf32>
    %150 = vector.shape_cast %149 : vector<64xf32> to vector<1x64xf32>
    %151 = arith.addf %76, %150 : vector<1x64xf32>
    %cst_102 = arith.constant 0.000000e+00 : f32
    %152 = vector.broadcast %cst_102 : f32 to vector<8x64xf32>
    %c0_103 = arith.constant 0 : index
    %c2_104 = arith.constant 2 : index
    %c0_105 = arith.constant 0 : index
    %c0_106 = arith.constant 0 : index
    %153 = vector.load %arg1[%c0_103, %c2_104, %c0_105, %c0_106] : memref<1x10x10x40xbf16, #tpu.memory_space<vmem>>, vector<1x1x10x40xbf16>
    %154 = vector.shape_cast %153 : vector<1x1x10x40xbf16> to vector<10x40xbf16>
    %155 = arith.extf %154 : vector<10x40xbf16> to vector<10x40xf32>
    %156 = vector.extract_strided_slice %155 {offsets = [0, 0], sizes = [8, 40], strides = [1, 1]} : vector<10x40xf32> to vector<8x40xf32>
    %157 = arith.truncf %156 : vector<8x40xf32> to vector<8x40xbf16>
    %c0_107 = arith.constant 0 : index
    %c0_108 = arith.constant 0 : index
    %c0_109 = arith.constant 0 : index
    %158 = vector.load %arg2[%c0_107, %c0_108, %c0_109] : memref<9x40x64xbf16, #tpu.memory_space<vmem>>, vector<1x40x64xbf16>
    %159 = vector.shape_cast %158 : vector<1x40x64xbf16> to vector<40x64xbf16>
    %cst_110 = arith.constant dense<0.000000e+00> : vector<8x64xf32>
    %160 = tpu.matmul %157, %159, %cst_110 {dimension_numbers = #tpu.dot_dimension_numbers<[1], [0], [0], [1], [0, 0, 1, 1], [], []>} : vector<8x40xbf16>, vector<40x64xbf16>, vector<8x64xf32> -> vector<8x64xf32>
    %161 = arith.addf %152, %160 : vector<8x64xf32>
    %162 = vector.extract_strided_slice %155 {offsets = [1, 0], sizes = [8, 40], strides = [1, 1]} : vector<10x40xf32> to vector<8x40xf32>
    %163 = arith.truncf %162 : vector<8x40xf32> to vector<8x40xbf16>
    %c1_111 = arith.constant 1 : index
    %c0_112 = arith.constant 0 : index
    %c0_113 = arith.constant 0 : index
    %164 = vector.load %arg2[%c1_111, %c0_112, %c0_113] : memref<9x40x64xbf16, #tpu.memory_space<vmem>>, vector<1x40x64xbf16>
    %165 = vector.shape_cast %164 : vector<1x40x64xbf16> to vector<40x64xbf16>
    %cst_114 = arith.constant dense<0.000000e+00> : vector<8x64xf32>
    %166 = tpu.matmul %163, %165, %cst_114 {dimension_numbers = #tpu.dot_dimension_numbers<[1], [0], [0], [1], [0, 0, 1, 1], [], []>} : vector<8x40xbf16>, vector<40x64xbf16>, vector<8x64xf32> -> vector<8x64xf32>
    %167 = arith.addf %161, %166 : vector<8x64xf32>
    %168 = vector.extract_strided_slice %155 {offsets = [2, 0], sizes = [8, 40], strides = [1, 1]} : vector<10x40xf32> to vector<8x40xf32>
    %169 = arith.truncf %168 : vector<8x40xf32> to vector<8x40xbf16>
    %c2_115 = arith.constant 2 : index
    %c0_116 = arith.constant 0 : index
    %c0_117 = arith.constant 0 : index
    %170 = vector.load %arg2[%c2_115, %c0_116, %c0_117] : memref<9x40x64xbf16, #tpu.memory_space<vmem>>, vector<1x40x64xbf16>
    %171 = vector.shape_cast %170 : vector<1x40x64xbf16> to vector<40x64xbf16>
    %cst_118 = arith.constant dense<0.000000e+00> : vector<8x64xf32>
    %172 = tpu.matmul %169, %171, %cst_118 {dimension_numbers = #tpu.dot_dimension_numbers<[1], [0], [0], [1], [0, 0, 1, 1], [], []>} : vector<8x40xbf16>, vector<40x64xbf16>, vector<8x64xf32> -> vector<8x64xf32>
    %173 = arith.addf %167, %172 : vector<8x64xf32>
    %c0_119 = arith.constant 0 : index
    %c3_120 = arith.constant 3 : index
    %c0_121 = arith.constant 0 : index
    %c0_122 = arith.constant 0 : index
    %174 = vector.load %arg1[%c0_119, %c3_120, %c0_121, %c0_122] : memref<1x10x10x40xbf16, #tpu.memory_space<vmem>>, vector<1x1x10x40xbf16>
    %175 = vector.shape_cast %174 : vector<1x1x10x40xbf16> to vector<10x40xbf16>
    %176 = arith.extf %175 : vector<10x40xbf16> to vector<10x40xf32>
    %177 = vector.extract_strided_slice %176 {offsets = [0, 0], sizes = [8, 40], strides = [1, 1]} : vector<10x40xf32> to vector<8x40xf32>
    %178 = arith.truncf %177 : vector<8x40xf32> to vector<8x40xbf16>
    %c3_123 = arith.constant 3 : index
    %c0_124 = arith.constant 0 : index
    %c0_125 = arith.constant 0 : index
    %179 = vector.load %arg2[%c3_123, %c0_124, %c0_125] : memref<9x40x64xbf16, #tpu.memory_space<vmem>>, vector<1x40x64xbf16>
    %180 = vector.shape_cast %179 : vector<1x40x64xbf16> to vector<40x64xbf16>
    %cst_126 = arith.constant dense<0.000000e+00> : vector<8x64xf32>
    %181 = tpu.matmul %178, %180, %cst_126 {dimension_numbers = #tpu.dot_dimension_numbers<[1], [0], [0], [1], [0, 0, 1, 1], [], []>} : vector<8x40xbf16>, vector<40x64xbf16>, vector<8x64xf32> -> vector<8x64xf32>
    %182 = arith.addf %173, %181 : vector<8x64xf32>
    %183 = vector.extract_strided_slice %176 {offsets = [1, 0], sizes = [8, 40], strides = [1, 1]} : vector<10x40xf32> to vector<8x40xf32>
    %184 = arith.truncf %183 : vector<8x40xf32> to vector<8x40xbf16>
    %c4_127 = arith.constant 4 : index
    %c0_128 = arith.constant 0 : index
    %c0_129 = arith.constant 0 : index
    %185 = vector.load %arg2[%c4_127, %c0_128, %c0_129] : memref<9x40x64xbf16, #tpu.memory_space<vmem>>, vector<1x40x64xbf16>
    %186 = vector.shape_cast %185 : vector<1x40x64xbf16> to vector<40x64xbf16>
    %cst_130 = arith.constant dense<0.000000e+00> : vector<8x64xf32>
    %187 = tpu.matmul %184, %186, %cst_130 {dimension_numbers = #tpu.dot_dimension_numbers<[1], [0], [0], [1], [0, 0, 1, 1], [], []>} : vector<8x40xbf16>, vector<40x64xbf16>, vector<8x64xf32> -> vector<8x64xf32>
    %188 = arith.addf %182, %187 : vector<8x64xf32>
    %189 = vector.extract_strided_slice %176 {offsets = [2, 0], sizes = [8, 40], strides = [1, 1]} : vector<10x40xf32> to vector<8x40xf32>
    %190 = arith.truncf %189 : vector<8x40xf32> to vector<8x40xbf16>
    %c5_131 = arith.constant 5 : index
    %c0_132 = arith.constant 0 : index
    %c0_133 = arith.constant 0 : index
    %191 = vector.load %arg2[%c5_131, %c0_132, %c0_133] : memref<9x40x64xbf16, #tpu.memory_space<vmem>>, vector<1x40x64xbf16>
    %192 = vector.shape_cast %191 : vector<1x40x64xbf16> to vector<40x64xbf16>
    %cst_134 = arith.constant dense<0.000000e+00> : vector<8x64xf32>
    %193 = tpu.matmul %190, %192, %cst_134 {dimension_numbers = #tpu.dot_dimension_numbers<[1], [0], [0], [1], [0, 0, 1, 1], [], []>} : vector<8x40xbf16>, vector<40x64xbf16>, vector<8x64xf32> -> vector<8x64xf32>
    %194 = arith.addf %188, %193 : vector<8x64xf32>
    %c0_135 = arith.constant 0 : index
    %c4_136 = arith.constant 4 : index
    %c0_137 = arith.constant 0 : index
    %c0_138 = arith.constant 0 : index
    %195 = vector.load %arg1[%c0_135, %c4_136, %c0_137, %c0_138] : memref<1x10x10x40xbf16, #tpu.memory_space<vmem>>, vector<1x1x10x40xbf16>
    %196 = vector.shape_cast %195 : vector<1x1x10x40xbf16> to vector<10x40xbf16>
    %197 = arith.extf %196 : vector<10x40xbf16> to vector<10x40xf32>
    %198 = vector.extract_strided_slice %197 {offsets = [0, 0], sizes = [8, 40], strides = [1, 1]} : vector<10x40xf32> to vector<8x40xf32>
    %199 = arith.truncf %198 : vector<8x40xf32> to vector<8x40xbf16>
    %c6_139 = arith.constant 6 : index
    %c0_140 = arith.constant 0 : index
    %c0_141 = arith.constant 0 : index
    %200 = vector.load %arg2[%c6_139, %c0_140, %c0_141] : memref<9x40x64xbf16, #tpu.memory_space<vmem>>, vector<1x40x64xbf16>
    %201 = vector.shape_cast %200 : vector<1x40x64xbf16> to vector<40x64xbf16>
    %cst_142 = arith.constant dense<0.000000e+00> : vector<8x64xf32>
    %202 = tpu.matmul %199, %201, %cst_142 {dimension_numbers = #tpu.dot_dimension_numbers<[1], [0], [0], [1], [0, 0, 1, 1], [], []>} : vector<8x40xbf16>, vector<40x64xbf16>, vector<8x64xf32> -> vector<8x64xf32>
    %203 = arith.addf %194, %202 : vector<8x64xf32>
    %204 = vector.extract_strided_slice %197 {offsets = [1, 0], sizes = [8, 40], strides = [1, 1]} : vector<10x40xf32> to vector<8x40xf32>
    %205 = arith.truncf %204 : vector<8x40xf32> to vector<8x40xbf16>
    %c7_143 = arith.constant 7 : index
    %c0_144 = arith.constant 0 : index
    %c0_145 = arith.constant 0 : index
    %206 = vector.load %arg2[%c7_143, %c0_144, %c0_145] : memref<9x40x64xbf16, #tpu.memory_space<vmem>>, vector<1x40x64xbf16>
    %207 = vector.shape_cast %206 : vector<1x40x64xbf16> to vector<40x64xbf16>
    %cst_146 = arith.constant dense<0.000000e+00> : vector<8x64xf32>
    %208 = tpu.matmul %205, %207, %cst_146 {dimension_numbers = #tpu.dot_dimension_numbers<[1], [0], [0], [1], [0, 0, 1, 1], [], []>} : vector<8x40xbf16>, vector<40x64xbf16>, vector<8x64xf32> -> vector<8x64xf32>
    %209 = arith.addf %203, %208 : vector<8x64xf32>
    %210 = vector.extract_strided_slice %197 {offsets = [2, 0], sizes = [8, 40], strides = [1, 1]} : vector<10x40xf32> to vector<8x40xf32>
    %211 = arith.truncf %210 : vector<8x40xf32> to vector<8x40xbf16>
    %c8_147 = arith.constant 8 : index
    %c0_148 = arith.constant 0 : index
    %c0_149 = arith.constant 0 : index
    %212 = vector.load %arg2[%c8_147, %c0_148, %c0_149] : memref<9x40x64xbf16, #tpu.memory_space<vmem>>, vector<1x40x64xbf16>
    %213 = vector.shape_cast %212 : vector<1x40x64xbf16> to vector<40x64xbf16>
    %cst_150 = arith.constant dense<0.000000e+00> : vector<8x64xf32>
    %214 = tpu.matmul %211, %213, %cst_150 {dimension_numbers = #tpu.dot_dimension_numbers<[1], [0], [0], [1], [0, 0, 1, 1], [], []>} : vector<8x40xbf16>, vector<40x64xbf16>, vector<8x64xf32> -> vector<8x64xf32>
    %215 = arith.addf %209, %214 : vector<8x64xf32>
    %216 = arith.truncf %215 : vector<8x64xf32> to vector<8x64xbf16>
    %c0_151 = arith.constant 0 : index
    %c2_152 = arith.constant 2 : index
    %c0_153 = arith.constant 0 : index
    %c0_154 = arith.constant 0 : index
    %217 = vector.load %arg3[%c0_151, %c2_152, %c0_153, %c0_154] : memref<1x8x8x64xbf16, #tpu.memory_space<vmem>>, vector<1x1x8x64xbf16>
    %218 = vector.shape_cast %217 : vector<1x1x8x64xbf16> to vector<8x64xbf16>
    %219 = vector.shape_cast %216 : vector<8x64xbf16> to vector<1x1x8x64xbf16>
    tpu.vector_store %arg3[%c0_151, %c2_152, %c0_153, %c0_154], %219 {strides = array<i32>} : memref<1x8x8x64xbf16, #tpu.memory_space<vmem>>, vector<1x1x8x64xbf16>,
    %cst_155 = arith.constant dense<0.000000e+00> : vector<64xf32>
    %220 = vector.multi_reduction <add>, %215, %cst_155 [0] : vector<8x64xf32> to vector<64xf32>
    %221 = vector.shape_cast %220 : vector<64xf32> to vector<1x64xf32>
    %222 = arith.addf %147, %221 : vector<1x64xf32>
    %223 = arith.mulf %215, %215 : vector<8x64xf32>
    %cst_156 = arith.constant dense<0.000000e+00> : vector<64xf32>
    %224 = vector.multi_reduction <add>, %223, %cst_156 [0] : vector<8x64xf32> to vector<64xf32>
    %225 = vector.shape_cast %224 : vector<64xf32> to vector<1x64xf32>
    %226 = arith.addf %151, %225 : vector<1x64xf32>
    %cst_157 = arith.constant 0.000000e+00 : f32
    %227 = vector.broadcast %cst_157 : f32 to vector<8x64xf32>
    %c0_158 = arith.constant 0 : index
    %c3_159 = arith.constant 3 : index
    %c0_160 = arith.constant 0 : index
    %c0_161 = arith.constant 0 : index
    %228 = vector.load %arg1[%c0_158, %c3_159, %c0_160, %c0_161] : memref<1x10x10x40xbf16, #tpu.memory_space<vmem>>, vector<1x1x10x40xbf16>
    %229 = vector.shape_cast %228 : vector<1x1x10x40xbf16> to vector<10x40xbf16>
    %230 = arith.extf %229 : vector<10x40xbf16> to vector<10x40xf32>
    %231 = vector.extract_strided_slice %230 {offsets = [0, 0], sizes = [8, 40], strides = [1, 1]} : vector<10x40xf32> to vector<8x40xf32>
    %232 = arith.truncf %231 : vector<8x40xf32> to vector<8x40xbf16>
    %c0_162 = arith.constant 0 : index
    %c0_163 = arith.constant 0 : index
    %c0_164 = arith.constant 0 : index
    %233 = vector.load %arg2[%c0_162, %c0_163, %c0_164] : memref<9x40x64xbf16, #tpu.memory_space<vmem>>, vector<1x40x64xbf16>
    %234 = vector.shape_cast %233 : vector<1x40x64xbf16> to vector<40x64xbf16>
    %cst_165 = arith.constant dense<0.000000e+00> : vector<8x64xf32>
    %235 = tpu.matmul %232, %234, %cst_165 {dimension_numbers = #tpu.dot_dimension_numbers<[1], [0], [0], [1], [0, 0, 1, 1], [], []>} : vector<8x40xbf16>, vector<40x64xbf16>, vector<8x64xf32> -> vector<8x64xf32>
    %236 = arith.addf %227, %235 : vector<8x64xf32>
    %237 = vector.extract_strided_slice %230 {offsets = [1, 0], sizes = [8, 40], strides = [1, 1]} : vector<10x40xf32> to vector<8x40xf32>
    %238 = arith.truncf %237 : vector<8x40xf32> to vector<8x40xbf16>
    %c1_166 = arith.constant 1 : index
    %c0_167 = arith.constant 0 : index
    %c0_168 = arith.constant 0 : index
    %239 = vector.load %arg2[%c1_166, %c0_167, %c0_168] : memref<9x40x64xbf16, #tpu.memory_space<vmem>>, vector<1x40x64xbf16>
    %240 = vector.shape_cast %239 : vector<1x40x64xbf16> to vector<40x64xbf16>
    %cst_169 = arith.constant dense<0.000000e+00> : vector<8x64xf32>
    %241 = tpu.matmul %238, %240, %cst_169 {dimension_numbers = #tpu.dot_dimension_numbers<[1], [0], [0], [1], [0, 0, 1, 1], [], []>} : vector<8x40xbf16>, vector<40x64xbf16>, vector<8x64xf32> -> vector<8x64xf32>
    %242 = arith.addf %236, %241 : vector<8x64xf32>
    %243 = vector.extract_strided_slice %230 {offsets = [2, 0], sizes = [8, 40], strides = [1, 1]} : vector<10x40xf32> to vector<8x40xf32>
    %244 = arith.truncf %243 : vector<8x40xf32> to vector<8x40xbf16>
    %c2_170 = arith.constant 2 : index
    %c0_171 = arith.constant 0 : index
    %c0_172 = arith.constant 0 : index
    %245 = vector.load %arg2[%c2_170, %c0_171, %c0_172] : memref<9x40x64xbf16, #tpu.memory_space<vmem>>, vector<1x40x64xbf16>
    %246 = vector.shape_cast %245 : vector<1x40x64xbf16> to vector<40x64xbf16>
    %cst_173 = arith.constant dense<0.000000e+00> : vector<8x64xf32>
    %247 = tpu.matmul %244, %246, %cst_173 {dimension_numbers = #tpu.dot_dimension_numbers<[1], [0], [0], [1], [0, 0, 1, 1], [], []>} : vector<8x40xbf16>, vector<40x64xbf16>, vector<8x64xf32> -> vector<8x64xf32>
    %248 = arith.addf %242, %247 : vector<8x64xf32>
    %c0_174 = arith.constant 0 : index
    %c4_175 = arith.constant 4 : index
    %c0_176 = arith.constant 0 : index
    %c0_177 = arith.constant 0 : index
    %249 = vector.load %arg1[%c0_174, %c4_175, %c0_176, %c0_177] : memref<1x10x10x40xbf16, #tpu.memory_space<vmem>>, vector<1x1x10x40xbf16>
    %250 = vector.shape_cast %249 : vector<1x1x10x40xbf16> to vector<10x40xbf16>
    %251 = arith.extf %250 : vector<10x40xbf16> to vector<10x40xf32>
    %252 = vector.extract_strided_slice %251 {offsets = [0, 0], sizes = [8, 40], strides = [1, 1]} : vector<10x40xf32> to vector<8x40xf32>
    %253 = arith.truncf %252 : vector<8x40xf32> to vector<8x40xbf16>
    %c3_178 = arith.constant 3 : index
    %c0_179 = arith.constant 0 : index
    %c0_180 = arith.constant 0 : index
    %254 = vector.load %arg2[%c3_178, %c0_179, %c0_180] : memref<9x40x64xbf16, #tpu.memory_space<vmem>>, vector<1x40x64xbf16>
    %255 = vector.shape_cast %254 : vector<1x40x64xbf16> to vector<40x64xbf16>
    %cst_181 = arith.constant dense<0.000000e+00> : vector<8x64xf32>
    %256 = tpu.matmul %253, %255, %cst_181 {dimension_numbers = #tpu.dot_dimension_numbers<[1], [0], [0], [1], [0, 0, 1, 1], [], []>} : vector<8x40xbf16>, vector<40x64xbf16>, vector<8x64xf32> -> vector<8x64xf32>
    %257 = arith.addf %248, %256 : vector<8x64xf32>
    %258 = vector.extract_strided_slice %251 {offsets = [1, 0], sizes = [8, 40], strides = [1, 1]} : vector<10x40xf32> to vector<8x40xf32>
    %259 = arith.truncf %258 : vector<8x40xf32> to vector<8x40xbf16>
    %c4_182 = arith.constant 4 : index
    %c0_183 = arith.constant 0 : index
    %c0_184 = arith.constant 0 : index
    %260 = vector.load %arg2[%c4_182, %c0_183, %c0_184] : memref<9x40x64xbf16, #tpu.memory_space<vmem>>, vector<1x40x64xbf16>
    %261 = vector.shape_cast %260 : vector<1x40x64xbf16> to vector<40x64xbf16>
    %cst_185 = arith.constant dense<0.000000e+00> : vector<8x64xf32>
    %262 = tpu.matmul %259, %261, %cst_185 {dimension_numbers = #tpu.dot_dimension_numbers<[1], [0], [0], [1], [0, 0, 1, 1], [], []>} : vector<8x40xbf16>, vector<40x64xbf16>, vector<8x64xf32> -> vector<8x64xf32>
    %263 = arith.addf %257, %262 : vector<8x64xf32>
    %264 = vector.extract_strided_slice %251 {offsets = [2, 0], sizes = [8, 40], strides = [1, 1]} : vector<10x40xf32> to vector<8x40xf32>
    %265 = arith.truncf %264 : vector<8x40xf32> to vector<8x40xbf16>
    %c5_186 = arith.constant 5 : index
    %c0_187 = arith.constant 0 : index
    %c0_188 = arith.constant 0 : index
    %266 = vector.load %arg2[%c5_186, %c0_187, %c0_188] : memref<9x40x64xbf16, #tpu.memory_space<vmem>>, vector<1x40x64xbf16>
    %267 = vector.shape_cast %266 : vector<1x40x64xbf16> to vector<40x64xbf16>
    %cst_189 = arith.constant dense<0.000000e+00> : vector<8x64xf32>
    %268 = tpu.matmul %265, %267, %cst_189 {dimension_numbers = #tpu.dot_dimension_numbers<[1], [0], [0], [1], [0, 0, 1, 1], [], []>} : vector<8x40xbf16>, vector<40x64xbf16>, vector<8x64xf32> -> vector<8x64xf32>
    %269 = arith.addf %263, %268 : vector<8x64xf32>
    %c0_190 = arith.constant 0 : index
    %c5_191 = arith.constant 5 : index
    %c0_192 = arith.constant 0 : index
    %c0_193 = arith.constant 0 : index
    %270 = vector.load %arg1[%c0_190, %c5_191, %c0_192, %c0_193] : memref<1x10x10x40xbf16, #tpu.memory_space<vmem>>, vector<1x1x10x40xbf16>
    %271 = vector.shape_cast %270 : vector<1x1x10x40xbf16> to vector<10x40xbf16>
    %272 = arith.extf %271 : vector<10x40xbf16> to vector<10x40xf32>
    %273 = vector.extract_strided_slice %272 {offsets = [0, 0], sizes = [8, 40], strides = [1, 1]} : vector<10x40xf32> to vector<8x40xf32>
    %274 = arith.truncf %273 : vector<8x40xf32> to vector<8x40xbf16>
    %c6_194 = arith.constant 6 : index
    %c0_195 = arith.constant 0 : index
    %c0_196 = arith.constant 0 : index
    %275 = vector.load %arg2[%c6_194, %c0_195, %c0_196] : memref<9x40x64xbf16, #tpu.memory_space<vmem>>, vector<1x40x64xbf16>
    %276 = vector.shape_cast %275 : vector<1x40x64xbf16> to vector<40x64xbf16>
    %cst_197 = arith.constant dense<0.000000e+00> : vector<8x64xf32>
    %277 = tpu.matmul %274, %276, %cst_197 {dimension_numbers = #tpu.dot_dimension_numbers<[1], [0], [0], [1], [0, 0, 1, 1], [], []>} : vector<8x40xbf16>, vector<40x64xbf16>, vector<8x64xf32> -> vector<8x64xf32>
    %278 = arith.addf %269, %277 : vector<8x64xf32>
    %279 = vector.extract_strided_slice %272 {offsets = [1, 0], sizes = [8, 40], strides = [1, 1]} : vector<10x40xf32> to vector<8x40xf32>
    %280 = arith.truncf %279 : vector<8x40xf32> to vector<8x40xbf16>
    %c7_198 = arith.constant 7 : index
    %c0_199 = arith.constant 0 : index
    %c0_200 = arith.constant 0 : index
    %281 = vector.load %arg2[%c7_198, %c0_199, %c0_200] : memref<9x40x64xbf16, #tpu.memory_space<vmem>>, vector<1x40x64xbf16>
    %282 = vector.shape_cast %281 : vector<1x40x64xbf16> to vector<40x64xbf16>
    %cst_201 = arith.constant dense<0.000000e+00> : vector<8x64xf32>
    %283 = tpu.matmul %280, %282, %cst_201 {dimension_numbers = #tpu.dot_dimension_numbers<[1], [0], [0], [1], [0, 0, 1, 1], [], []>} : vector<8x40xbf16>, vector<40x64xbf16>, vector<8x64xf32> -> vector<8x64xf32>
    %284 = arith.addf %278, %283 : vector<8x64xf32>
    %285 = vector.extract_strided_slice %272 {offsets = [2, 0], sizes = [8, 40], strides = [1, 1]} : vector<10x40xf32> to vector<8x40xf32>
    %286 = arith.truncf %285 : vector<8x40xf32> to vector<8x40xbf16>
    %c8_202 = arith.constant 8 : index
    %c0_203 = arith.constant 0 : index
    %c0_204 = arith.constant 0 : index
    %287 = vector.load %arg2[%c8_202, %c0_203, %c0_204] : memref<9x40x64xbf16, #tpu.memory_space<vmem>>, vector<1x40x64xbf16>
    %288 = vector.shape_cast %287 : vector<1x40x64xbf16> to vector<40x64xbf16>
    %cst_205 = arith.constant dense<0.000000e+00> : vector<8x64xf32>
    %289 = tpu.matmul %286, %288, %cst_205 {dimension_numbers = #tpu.dot_dimension_numbers<[1], [0], [0], [1], [0, 0, 1, 1], [], []>} : vector<8x40xbf16>, vector<40x64xbf16>, vector<8x64xf32> -> vector<8x64xf32>
    %290 = arith.addf %284, %289 : vector<8x64xf32>
    %291 = arith.truncf %290 : vector<8x64xf32> to vector<8x64xbf16>
    %c0_206 = arith.constant 0 : index
    %c3_207 = arith.constant 3 : index
    %c0_208 = arith.constant 0 : index
    %c0_209 = arith.constant 0 : index
    %292 = vector.load %arg3[%c0_206, %c3_207, %c0_208, %c0_209] : memref<1x8x8x64xbf16, #tpu.memory_space<vmem>>, vector<1x1x8x64xbf16>
    %293 = vector.shape_cast %292 : vector<1x1x8x64xbf16> to vector<8x64xbf16>
    %294 = vector.shape_cast %291 : vector<8x64xbf16> to vector<1x1x8x64xbf16>
    tpu.vector_store %arg3[%c0_206, %c3_207, %c0_208, %c0_209], %294 {strides = array<i32>} : memref<1x8x8x64xbf16, #tpu.memory_space<vmem>>, vector<1x1x8x64xbf16>,
    %cst_210 = arith.constant dense<0.000000e+00> : vector<64xf32>
    %295 = vector.multi_reduction <add>, %290, %cst_210 [0] : vector<8x64xf32> to vector<64xf32>
    %296 = vector.shape_cast %295 : vector<64xf32> to vector<1x64xf32>
    %297 = arith.addf %222, %296 : vector<1x64xf32>
    %298 = arith.mulf %290, %290 : vector<8x64xf32>
    %cst_211 = arith.constant dense<0.000000e+00> : vector<64xf32>
    %299 = vector.multi_reduction <add>, %298, %cst_211 [0] : vector<8x64xf32> to vector<64xf32>
    %300 = vector.shape_cast %299 : vector<64xf32> to vector<1x64xf32>
    %301 = arith.addf %226, %300 : vector<1x64xf32>
    %cst_212 = arith.constant 0.000000e+00 : f32
    %302 = vector.broadcast %cst_212 : f32 to vector<8x64xf32>
    %c0_213 = arith.constant 0 : index
    %c4_214 = arith.constant 4 : index
    %c0_215 = arith.constant 0 : index
    %c0_216 = arith.constant 0 : index
    %303 = vector.load %arg1[%c0_213, %c4_214, %c0_215, %c0_216] : memref<1x10x10x40xbf16, #tpu.memory_space<vmem>>, vector<1x1x10x40xbf16>
    %304 = vector.shape_cast %303 : vector<1x1x10x40xbf16> to vector<10x40xbf16>
    %305 = arith.extf %304 : vector<10x40xbf16> to vector<10x40xf32>
    %306 = vector.extract_strided_slice %305 {offsets = [0, 0], sizes = [8, 40], strides = [1, 1]} : vector<10x40xf32> to vector<8x40xf32>
    %307 = arith.truncf %306 : vector<8x40xf32> to vector<8x40xbf16>
    %c0_217 = arith.constant 0 : index
    %c0_218 = arith.constant 0 : index
    %c0_219 = arith.constant 0 : index
    %308 = vector.load %arg2[%c0_217, %c0_218, %c0_219] : memref<9x40x64xbf16, #tpu.memory_space<vmem>>, vector<1x40x64xbf16>
    %309 = vector.shape_cast %308 : vector<1x40x64xbf16> to vector<40x64xbf16>
    %cst_220 = arith.constant dense<0.000000e+00> : vector<8x64xf32>
    %310 = tpu.matmul %307, %309, %cst_220 {dimension_numbers = #tpu.dot_dimension_numbers<[1], [0], [0], [1], [0, 0, 1, 1], [], []>} : vector<8x40xbf16>, vector<40x64xbf16>, vector<8x64xf32> -> vector<8x64xf32>
    %311 = arith.addf %302, %310 : vector<8x64xf32>
    %312 = vector.extract_strided_slice %305 {offsets = [1, 0], sizes = [8, 40], strides = [1, 1]} : vector<10x40xf32> to vector<8x40xf32>
    %313 = arith.truncf %312 : vector<8x40xf32> to vector<8x40xbf16>
    %c1_221 = arith.constant 1 : index
    %c0_222 = arith.constant 0 : index
    %c0_223 = arith.constant 0 : index
    %314 = vector.load %arg2[%c1_221, %c0_222, %c0_223] : memref<9x40x64xbf16, #tpu.memory_space<vmem>>, vector<1x40x64xbf16>
    %315 = vector.shape_cast %314 : vector<1x40x64xbf16> to vector<40x64xbf16>
    %cst_224 = arith.constant dense<0.000000e+00> : vector<8x64xf32>
    %316 = tpu.matmul %313, %315, %cst_224 {dimension_numbers = #tpu.dot_dimension_numbers<[1], [0], [0], [1], [0, 0, 1, 1], [], []>} : vector<8x40xbf16>, vector<40x64xbf16>, vector<8x64xf32> -> vector<8x64xf32>
    %317 = arith.addf %311, %316 : vector<8x64xf32>
    %318 = vector.extract_strided_slice %305 {offsets = [2, 0], sizes = [8, 40], strides = [1, 1]} : vector<10x40xf32> to vector<8x40xf32>
    %319 = arith.truncf %318 : vector<8x40xf32> to vector<8x40xbf16>
    %c2_225 = arith.constant 2 : index
    %c0_226 = arith.constant 0 : index
    %c0_227 = arith.constant 0 : index
    %320 = vector.load %arg2[%c2_225, %c0_226, %c0_227] : memref<9x40x64xbf16, #tpu.memory_space<vmem>>, vector<1x40x64xbf16>
    %321 = vector.shape_cast %320 : vector<1x40x64xbf16> to vector<40x64xbf16>
    %cst_228 = arith.constant dense<0.000000e+00> : vector<8x64xf32>
    %322 = tpu.matmul %319, %321, %cst_228 {dimension_numbers = #tpu.dot_dimension_numbers<[1], [0], [0], [1], [0, 0, 1, 1], [], []>} : vector<8x40xbf16>, vector<40x64xbf16>, vector<8x64xf32> -> vector<8x64xf32>
    %323 = arith.addf %317, %322 : vector<8x64xf32>
    %c0_229 = arith.constant 0 : index
    %c5_230 = arith.constant 5 : index
    %c0_231 = arith.constant 0 : index
    %c0_232 = arith.constant 0 : index
    %324 = vector.load %arg1[%c0_229, %c5_230, %c0_231, %c0_232] : memref<1x10x10x40xbf16, #tpu.memory_space<vmem>>, vector<1x1x10x40xbf16>
    %325 = vector.shape_cast %324 : vector<1x1x10x40xbf16> to vector<10x40xbf16>
    %326 = arith.extf %325 : vector<10x40xbf16> to vector<10x40xf32>
    %327 = vector.extract_strided_slice %326 {offsets = [0, 0], sizes = [8, 40], strides = [1, 1]} : vector<10x40xf32> to vector<8x40xf32>
    %328 = arith.truncf %327 : vector<8x40xf32> to vector<8x40xbf16>
    %c3_233 = arith.constant 3 : index
    %c0_234 = arith.constant 0 : index
    %c0_235 = arith.constant 0 : index
    %329 = vector.load %arg2[%c3_233, %c0_234, %c0_235] : memref<9x40x64xbf16, #tpu.memory_space<vmem>>, vector<1x40x64xbf16>
    %330 = vector.shape_cast %329 : vector<1x40x64xbf16> to vector<40x64xbf16>
    %cst_236 = arith.constant dense<0.000000e+00> : vector<8x64xf32>
    %331 = tpu.matmul %328, %330, %cst_236 {dimension_numbers = #tpu.dot_dimension_numbers<[1], [0], [0], [1], [0, 0, 1, 1], [], []>} : vector<8x40xbf16>, vector<40x64xbf16>, vector<8x64xf32> -> vector<8x64xf32>
    %332 = arith.addf %323, %331 : vector<8x64xf32>
    %333 = vector.extract_strided_slice %326 {offsets = [1, 0], sizes = [8, 40], strides = [1, 1]} : vector<10x40xf32> to vector<8x40xf32>
    %334 = arith.truncf %333 : vector<8x40xf32> to vector<8x40xbf16>
    %c4_237 = arith.constant 4 : index
    %c0_238 = arith.constant 0 : index
    %c0_239 = arith.constant 0 : index
    %335 = vector.load %arg2[%c4_237, %c0_238, %c0_239] : memref<9x40x64xbf16, #tpu.memory_space<vmem>>, vector<1x40x64xbf16>
    %336 = vector.shape_cast %335 : vector<1x40x64xbf16> to vector<40x64xbf16>
    %cst_240 = arith.constant dense<0.000000e+00> : vector<8x64xf32>
    %337 = tpu.matmul %334, %336, %cst_240 {dimension_numbers = #tpu.dot_dimension_numbers<[1], [0], [0], [1], [0, 0, 1, 1], [], []>} : vector<8x40xbf16>, vector<40x64xbf16>, vector<8x64xf32> -> vector<8x64xf32>
    %338 = arith.addf %332, %337 : vector<8x64xf32>
    %339 = vector.extract_strided_slice %326 {offsets = [2, 0], sizes = [8, 40], strides = [1, 1]} : vector<10x40xf32> to vector<8x40xf32>
    %340 = arith.truncf %339 : vector<8x40xf32> to vector<8x40xbf16>
    %c5_241 = arith.constant 5 : index
    %c0_242 = arith.constant 0 : index
    %c0_243 = arith.constant 0 : index
    %341 = vector.load %arg2[%c5_241, %c0_242, %c0_243] : memref<9x40x64xbf16, #tpu.memory_space<vmem>>, vector<1x40x64xbf16>
    %342 = vector.shape_cast %341 : vector<1x40x64xbf16> to vector<40x64xbf16>
    %cst_244 = arith.constant dense<0.000000e+00> : vector<8x64xf32>
    %343 = tpu.matmul %340, %342, %cst_244 {dimension_numbers = #tpu.dot_dimension_numbers<[1], [0], [0], [1], [0, 0, 1, 1], [], []>} : vector<8x40xbf16>, vector<40x64xbf16>, vector<8x64xf32> -> vector<8x64xf32>
    %344 = arith.addf %338, %343 : vector<8x64xf32>
    %c0_245 = arith.constant 0 : index
    %c6_246 = arith.constant 6 : index
    %c0_247 = arith.constant 0 : index
    %c0_248 = arith.constant 0 : index
    %345 = vector.load %arg1[%c0_245, %c6_246, %c0_247, %c0_248] : memref<1x10x10x40xbf16, #tpu.memory_space<vmem>>, vector<1x1x10x40xbf16>
    %346 = vector.shape_cast %345 : vector<1x1x10x40xbf16> to vector<10x40xbf16>
    %347 = arith.extf %346 : vector<10x40xbf16> to vector<10x40xf32>
    %348 = vector.extract_strided_slice %347 {offsets = [0, 0], sizes = [8, 40], strides = [1, 1]} : vector<10x40xf32> to vector<8x40xf32>
    %349 = arith.truncf %348 : vector<8x40xf32> to vector<8x40xbf16>
    %c6_249 = arith.constant 6 : index
    %c0_250 = arith.constant 0 : index
    %c0_251 = arith.constant 0 : index
    %350 = vector.load %arg2[%c6_249, %c0_250, %c0_251] : memref<9x40x64xbf16, #tpu.memory_space<vmem>>, vector<1x40x64xbf16>
    %351 = vector.shape_cast %350 : vector<1x40x64xbf16> to vector<40x64xbf16>
    %cst_252 = arith.constant dense<0.000000e+00> : vector<8x64xf32>
    %352 = tpu.matmul %349, %351, %cst_252 {dimension_numbers = #tpu.dot_dimension_numbers<[1], [0], [0], [1], [0, 0, 1, 1], [], []>} : vector<8x40xbf16>, vector<40x64xbf16>, vector<8x64xf32> -> vector<8x64xf32>
    %353 = arith.addf %344, %352 : vector<8x64xf32>
    %354 = vector.extract_strided_slice %347 {offsets = [1, 0], sizes = [8, 40], strides = [1, 1]} : vector<10x40xf32> to vector<8x40xf32>
    %355 = arith.truncf %354 : vector<8x40xf32> to vector<8x40xbf16>
    %c7_253 = arith.constant 7 : index
    %c0_254 = arith.constant 0 : index
    %c0_255 = arith.constant 0 : index
    %356 = vector.load %arg2[%c7_253, %c0_254, %c0_255] : memref<9x40x64xbf16, #tpu.memory_space<vmem>>, vector<1x40x64xbf16>
    %357 = vector.shape_cast %356 : vector<1x40x64xbf16> to vector<40x64xbf16>
    %cst_256 = arith.constant dense<0.000000e+00> : vector<8x64xf32>
    %358 = tpu.matmul %355, %357, %cst_256 {dimension_numbers = #tpu.dot_dimension_numbers<[1], [0], [0], [1], [0, 0, 1, 1], [], []>} : vector<8x40xbf16>, vector<40x64xbf16>, vector<8x64xf32> -> vector<8x64xf32>
    %359 = arith.addf %353, %358 : vector<8x64xf32>
    %360 = vector.extract_strided_slice %347 {offsets = [2, 0], sizes = [8, 40], strides = [1, 1]} : vector<10x40xf32> to vector<8x40xf32>
    %361 = arith.truncf %360 : vector<8x40xf32> to vector<8x40xbf16>
    %c8_257 = arith.constant 8 : index
    %c0_258 = arith.constant 0 : index
    %c0_259 = arith.constant 0 : index
    %362 = vector.load %arg2[%c8_257, %c0_258, %c0_259] : memref<9x40x64xbf16, #tpu.memory_space<vmem>>, vector<1x40x64xbf16>
    %363 = vector.shape_cast %362 : vector<1x40x64xbf16> to vector<40x64xbf16>
    %cst_260 = arith.constant dense<0.000000e+00> : vector<8x64xf32>
    %364 = tpu.matmul %361, %363, %cst_260 {dimension_numbers = #tpu.dot_dimension_numbers<[1], [0], [0], [1], [0, 0, 1, 1], [], []>} : vector<8x40xbf16>, vector<40x64xbf16>, vector<8x64xf32> -> vector<8x64xf32>
    %365 = arith.addf %359, %364 : vector<8x64xf32>
    %366 = arith.truncf %365 : vector<8x64xf32> to vector<8x64xbf16>
    %c0_261 = arith.constant 0 : index
    %c4_262 = arith.constant 4 : index
    %c0_263 = arith.constant 0 : index
    %c0_264 = arith.constant 0 : index
    %367 = vector.load %arg3[%c0_261, %c4_262, %c0_263, %c0_264] : memref<1x8x8x64xbf16, #tpu.memory_space<vmem>>, vector<1x1x8x64xbf16>
    %368 = vector.shape_cast %367 : vector<1x1x8x64xbf16> to vector<8x64xbf16>
    %369 = vector.shape_cast %366 : vector<8x64xbf16> to vector<1x1x8x64xbf16>
    tpu.vector_store %arg3[%c0_261, %c4_262, %c0_263, %c0_264], %369 {strides = array<i32>} : memref<1x8x8x64xbf16, #tpu.memory_space<vmem>>, vector<1x1x8x64xbf16>,
    %cst_265 = arith.constant dense<0.000000e+00> : vector<64xf32>
    %370 = vector.multi_reduction <add>, %365, %cst_265 [0] : vector<8x64xf32> to vector<64xf32>
    %371 = vector.shape_cast %370 : vector<64xf32> to vector<1x64xf32>
    %372 = arith.addf %297, %371 : vector<1x64xf32>
    %373 = arith.mulf %365, %365 : vector<8x64xf32>
    %cst_266 = arith.constant dense<0.000000e+00> : vector<64xf32>
    %374 = vector.multi_reduction <add>, %373, %cst_266 [0] : vector<8x64xf32> to vector<64xf32>
    %375 = vector.shape_cast %374 : vector<64xf32> to vector<1x64xf32>
    %376 = arith.addf %301, %375 : vector<1x64xf32>
    %cst_267 = arith.constant 0.000000e+00 : f32
    %377 = vector.broadcast %cst_267 : f32 to vector<8x64xf32>
    %c0_268 = arith.constant 0 : index
    %c5_269 = arith.constant 5 : index
    %c0_270 = arith.constant 0 : index
    %c0_271 = arith.constant 0 : index
    %378 = vector.load %arg1[%c0_268, %c5_269, %c0_270, %c0_271] : memref<1x10x10x40xbf16, #tpu.memory_space<vmem>>, vector<1x1x10x40xbf16>
    %379 = vector.shape_cast %378 : vector<1x1x10x40xbf16> to vector<10x40xbf16>
    %380 = arith.extf %379 : vector<10x40xbf16> to vector<10x40xf32>
    %381 = vector.extract_strided_slice %380 {offsets = [0, 0], sizes = [8, 40], strides = [1, 1]} : vector<10x40xf32> to vector<8x40xf32>
    %382 = arith.truncf %381 : vector<8x40xf32> to vector<8x40xbf16>
    %c0_272 = arith.constant 0 : index
    %c0_273 = arith.constant 0 : index
    %c0_274 = arith.constant 0 : index
    %383 = vector.load %arg2[%c0_272, %c0_273, %c0_274] : memref<9x40x64xbf16, #tpu.memory_space<vmem>>, vector<1x40x64xbf16>
    %384 = vector.shape_cast %383 : vector<1x40x64xbf16> to vector<40x64xbf16>
    %cst_275 = arith.constant dense<0.000000e+00> : vector<8x64xf32>
    %385 = tpu.matmul %382, %384, %cst_275 {dimension_numbers = #tpu.dot_dimension_numbers<[1], [0], [0], [1], [0, 0, 1, 1], [], []>} : vector<8x40xbf16>, vector<40x64xbf16>, vector<8x64xf32> -> vector<8x64xf32>
    %386 = arith.addf %377, %385 : vector<8x64xf32>
    %387 = vector.extract_strided_slice %380 {offsets = [1, 0], sizes = [8, 40], strides = [1, 1]} : vector<10x40xf32> to vector<8x40xf32>
    %388 = arith.truncf %387 : vector<8x40xf32> to vector<8x40xbf16>
    %c1_276 = arith.constant 1 : index
    %c0_277 = arith.constant 0 : index
    %c0_278 = arith.constant 0 : index
    %389 = vector.load %arg2[%c1_276, %c0_277, %c0_278] : memref<9x40x64xbf16, #tpu.memory_space<vmem>>, vector<1x40x64xbf16>
    %390 = vector.shape_cast %389 : vector<1x40x64xbf16> to vector<40x64xbf16>
    %cst_279 = arith.constant dense<0.000000e+00> : vector<8x64xf32>
    %391 = tpu.matmul %388, %390, %cst_279 {dimension_numbers = #tpu.dot_dimension_numbers<[1], [0], [0], [1], [0, 0, 1, 1], [], []>} : vector<8x40xbf16>, vector<40x64xbf16>, vector<8x64xf32> -> vector<8x64xf32>
    %392 = arith.addf %386, %391 : vector<8x64xf32>
    %393 = vector.extract_strided_slice %380 {offsets = [2, 0], sizes = [8, 40], strides = [1, 1]} : vector<10x40xf32> to vector<8x40xf32>
    %394 = arith.truncf %393 : vector<8x40xf32> to vector<8x40xbf16>
    %c2_280 = arith.constant 2 : index
    %c0_281 = arith.constant 0 : index
    %c0_282 = arith.constant 0 : index
    %395 = vector.load %arg2[%c2_280, %c0_281, %c0_282] : memref<9x40x64xbf16, #tpu.memory_space<vmem>>, vector<1x40x64xbf16>
    %396 = vector.shape_cast %395 : vector<1x40x64xbf16> to vector<40x64xbf16>
    %cst_283 = arith.constant dense<0.000000e+00> : vector<8x64xf32>
    %397 = tpu.matmul %394, %396, %cst_283 {dimension_numbers = #tpu.dot_dimension_numbers<[1], [0], [0], [1], [0, 0, 1, 1], [], []>} : vector<8x40xbf16>, vector<40x64xbf16>, vector<8x64xf32> -> vector<8x64xf32>
    %398 = arith.addf %392, %397 : vector<8x64xf32>
    %c0_284 = arith.constant 0 : index
    %c6_285 = arith.constant 6 : index
    %c0_286 = arith.constant 0 : index
    %c0_287 = arith.constant 0 : index
    %399 = vector.load %arg1[%c0_284, %c6_285, %c0_286, %c0_287] : memref<1x10x10x40xbf16, #tpu.memory_space<vmem>>, vector<1x1x10x40xbf16>
    %400 = vector.shape_cast %399 : vector<1x1x10x40xbf16> to vector<10x40xbf16>
    %401 = arith.extf %400 : vector<10x40xbf16> to vector<10x40xf32>
    %402 = vector.extract_strided_slice %401 {offsets = [0, 0], sizes = [8, 40], strides = [1, 1]} : vector<10x40xf32> to vector<8x40xf32>
    %403 = arith.truncf %402 : vector<8x40xf32> to vector<8x40xbf16>
    %c3_288 = arith.constant 3 : index
    %c0_289 = arith.constant 0 : index
    %c0_290 = arith.constant 0 : index
    %404 = vector.load %arg2[%c3_288, %c0_289, %c0_290] : memref<9x40x64xbf16, #tpu.memory_space<vmem>>, vector<1x40x64xbf16>
    %405 = vector.shape_cast %404 : vector<1x40x64xbf16> to vector<40x64xbf16>
    %cst_291 = arith.constant dense<0.000000e+00> : vector<8x64xf32>
    %406 = tpu.matmul %403, %405, %cst_291 {dimension_numbers = #tpu.dot_dimension_numbers<[1], [0], [0], [1], [0, 0, 1, 1], [], []>} : vector<8x40xbf16>, vector<40x64xbf16>, vector<8x64xf32> -> vector<8x64xf32>
    %407 = arith.addf %398, %406 : vector<8x64xf32>
    %408 = vector.extract_strided_slice %401 {offsets = [1, 0], sizes = [8, 40], strides = [1, 1]} : vector<10x40xf32> to vector<8x40xf32>
    %409 = arith.truncf %408 : vector<8x40xf32> to vector<8x40xbf16>
    %c4_292 = arith.constant 4 : index
    %c0_293 = arith.constant 0 : index
    %c0_294 = arith.constant 0 : index
    %410 = vector.load %arg2[%c4_292, %c0_293, %c0_294] : memref<9x40x64xbf16, #tpu.memory_space<vmem>>, vector<1x40x64xbf16>
    %411 = vector.shape_cast %410 : vector<1x40x64xbf16> to vector<40x64xbf16>
    %cst_295 = arith.constant dense<0.000000e+00> : vector<8x64xf32>
    %412 = tpu.matmul %409, %411, %cst_295 {dimension_numbers = #tpu.dot_dimension_numbers<[1], [0], [0], [1], [0, 0, 1, 1], [], []>} : vector<8x40xbf16>, vector<40x64xbf16>, vector<8x64xf32> -> vector<8x64xf32>
    %413 = arith.addf %407, %412 : vector<8x64xf32>
    %414 = vector.extract_strided_slice %401 {offsets = [2, 0], sizes = [8, 40], strides = [1, 1]} : vector<10x40xf32> to vector<8x40xf32>
    %415 = arith.truncf %414 : vector<8x40xf32> to vector<8x40xbf16>
    %c5_296 = arith.constant 5 : index
    %c0_297 = arith.constant 0 : index
    %c0_298 = arith.constant 0 : index
    %416 = vector.load %arg2[%c5_296, %c0_297, %c0_298] : memref<9x40x64xbf16, #tpu.memory_space<vmem>>, vector<1x40x64xbf16>
    %417 = vector.shape_cast %416 : vector<1x40x64xbf16> to vector<40x64xbf16>
    %cst_299 = arith.constant dense<0.000000e+00> : vector<8x64xf32>
    %418 = tpu.matmul %415, %417, %cst_299 {dimension_numbers = #tpu.dot_dimension_numbers<[1], [0], [0], [1], [0, 0, 1, 1], [], []>} : vector<8x40xbf16>, vector<40x64xbf16>, vector<8x64xf32> -> vector<8x64xf32>
    %419 = arith.addf %413, %418 : vector<8x64xf32>
    %c0_300 = arith.constant 0 : index
    %c7_301 = arith.constant 7 : index
    %c0_302 = arith.constant 0 : index
    %c0_303 = arith.constant 0 : index
    %420 = vector.load %arg1[%c0_300, %c7_301, %c0_302, %c0_303] : memref<1x10x10x40xbf16, #tpu.memory_space<vmem>>, vector<1x1x10x40xbf16>
    %421 = vector.shape_cast %420 : vector<1x1x10x40xbf16> to vector<10x40xbf16>
    %422 = arith.extf %421 : vector<10x40xbf16> to vector<10x40xf32>
    %423 = vector.extract_strided_slice %422 {offsets = [0, 0], sizes = [8, 40], strides = [1, 1]} : vector<10x40xf32> to vector<8x40xf32>
    %424 = arith.truncf %423 : vector<8x40xf32> to vector<8x40xbf16>
    %c6_304 = arith.constant 6 : index
    %c0_305 = arith.constant 0 : index
    %c0_306 = arith.constant 0 : index
    %425 = vector.load %arg2[%c6_304, %c0_305, %c0_306] : memref<9x40x64xbf16, #tpu.memory_space<vmem>>, vector<1x40x64xbf16>
    %426 = vector.shape_cast %425 : vector<1x40x64xbf16> to vector<40x64xbf16>
    %cst_307 = arith.constant dense<0.000000e+00> : vector<8x64xf32>
    %427 = tpu.matmul %424, %426, %cst_307 {dimension_numbers = #tpu.dot_dimension_numbers<[1], [0], [0], [1], [0, 0, 1, 1], [], []>} : vector<8x40xbf16>, vector<40x64xbf16>, vector<8x64xf32> -> vector<8x64xf32>
    %428 = arith.addf %419, %427 : vector<8x64xf32>
    %429 = vector.extract_strided_slice %422 {offsets = [1, 0], sizes = [8, 40], strides = [1, 1]} : vector<10x40xf32> to vector<8x40xf32>
    %430 = arith.truncf %429 : vector<8x40xf32> to vector<8x40xbf16>
    %c7_308 = arith.constant 7 : index
    %c0_309 = arith.constant 0 : index
    %c0_310 = arith.constant 0 : index
    %431 = vector.load %arg2[%c7_308, %c0_309, %c0_310] : memref<9x40x64xbf16, #tpu.memory_space<vmem>>, vector<1x40x64xbf16>
    %432 = vector.shape_cast %431 : vector<1x40x64xbf16> to vector<40x64xbf16>
    %cst_311 = arith.constant dense<0.000000e+00> : vector<8x64xf32>
    %433 = tpu.matmul %430, %432, %cst_311 {dimension_numbers = #tpu.dot_dimension_numbers<[1], [0], [0], [1], [0, 0, 1, 1], [], []>} : vector<8x40xbf16>, vector<40x64xbf16>, vector<8x64xf32> -> vector<8x64xf32>
    %434 = arith.addf %428, %433 : vector<8x64xf32>
    %435 = vector.extract_strided_slice %422 {offsets = [2, 0], sizes = [8, 40], strides = [1, 1]} : vector<10x40xf32> to vector<8x40xf32>
    %436 = arith.truncf %435 : vector<8x40xf32> to vector<8x40xbf16>
    %c8_312 = arith.constant 8 : index
    %c0_313 = arith.constant 0 : index
    %c0_314 = arith.constant 0 : index
    %437 = vector.load %arg2[%c8_312, %c0_313, %c0_314] : memref<9x40x64xbf16, #tpu.memory_space<vmem>>, vector<1x40x64xbf16>
    %438 = vector.shape_cast %437 : vector<1x40x64xbf16> to vector<40x64xbf16>
    %cst_315 = arith.constant dense<0.000000e+00> : vector<8x64xf32>
    %439 = tpu.matmul %436, %438, %cst_315 {dimension_numbers = #tpu.dot_dimension_numbers<[1], [0], [0], [1], [0, 0, 1, 1], [], []>} : vector<8x40xbf16>, vector<40x64xbf16>, vector<8x64xf32> -> vector<8x64xf32>
    %440 = arith.addf %434, %439 : vector<8x64xf32>
    %441 = arith.truncf %440 : vector<8x64xf32> to vector<8x64xbf16>
    %c0_316 = arith.constant 0 : index
    %c5_317 = arith.constant 5 : index
    %c0_318 = arith.constant 0 : index
    %c0_319 = arith.constant 0 : index
    %442 = vector.load %arg3[%c0_316, %c5_317, %c0_318, %c0_319] : memref<1x8x8x64xbf16, #tpu.memory_space<vmem>>, vector<1x1x8x64xbf16>
    %443 = vector.shape_cast %442 : vector<1x1x8x64xbf16> to vector<8x64xbf16>
    %444 = vector.shape_cast %441 : vector<8x64xbf16> to vector<1x1x8x64xbf16>
    tpu.vector_store %arg3[%c0_316, %c5_317, %c0_318, %c0_319], %444 {strides = array<i32>} : memref<1x8x8x64xbf16, #tpu.memory_space<vmem>>, vector<1x1x8x64xbf16>,
    %cst_320 = arith.constant dense<0.000000e+00> : vector<64xf32>
    %445 = vector.multi_reduction <add>, %440, %cst_320 [0] : vector<8x64xf32> to vector<64xf32>
    %446 = vector.shape_cast %445 : vector<64xf32> to vector<1x64xf32>
    %447 = arith.addf %372, %446 : vector<1x64xf32>
    %448 = arith.mulf %440, %440 : vector<8x64xf32>
    %cst_321 = arith.constant dense<0.000000e+00> : vector<64xf32>
    %449 = vector.multi_reduction <add>, %448, %cst_321 [0] : vector<8x64xf32> to vector<64xf32>
    %450 = vector.shape_cast %449 : vector<64xf32> to vector<1x64xf32>
    %451 = arith.addf %376, %450 : vector<1x64xf32>
    %cst_322 = arith.constant 0.000000e+00 : f32
    %452 = vector.broadcast %cst_322 : f32 to vector<8x64xf32>
    %c0_323 = arith.constant 0 : index
    %c6_324 = arith.constant 6 : index
    %c0_325 = arith.constant 0 : index
    %c0_326 = arith.constant 0 : index
    %453 = vector.load %arg1[%c0_323, %c6_324, %c0_325, %c0_326] : memref<1x10x10x40xbf16, #tpu.memory_space<vmem>>, vector<1x1x10x40xbf16>
    %454 = vector.shape_cast %453 : vector<1x1x10x40xbf16> to vector<10x40xbf16>
    %455 = arith.extf %454 : vector<10x40xbf16> to vector<10x40xf32>
    %456 = vector.extract_strided_slice %455 {offsets = [0, 0], sizes = [8, 40], strides = [1, 1]} : vector<10x40xf32> to vector<8x40xf32>
    %457 = arith.truncf %456 : vector<8x40xf32> to vector<8x40xbf16>
    %c0_327 = arith.constant 0 : index
    %c0_328 = arith.constant 0 : index
    %c0_329 = arith.constant 0 : index
    %458 = vector.load %arg2[%c0_327, %c0_328, %c0_329] : memref<9x40x64xbf16, #tpu.memory_space<vmem>>, vector<1x40x64xbf16>
    %459 = vector.shape_cast %458 : vector<1x40x64xbf16> to vector<40x64xbf16>
    %cst_330 = arith.constant dense<0.000000e+00> : vector<8x64xf32>
    %460 = tpu.matmul %457, %459, %cst_330 {dimension_numbers = #tpu.dot_dimension_numbers<[1], [0], [0], [1], [0, 0, 1, 1], [], []>} : vector<8x40xbf16>, vector<40x64xbf16>, vector<8x64xf32> -> vector<8x64xf32>
    %461 = arith.addf %452, %460 : vector<8x64xf32>
    %462 = vector.extract_strided_slice %455 {offsets = [1, 0], sizes = [8, 40], strides = [1, 1]} : vector<10x40xf32> to vector<8x40xf32>
    %463 = arith.truncf %462 : vector<8x40xf32> to vector<8x40xbf16>
    %c1_331 = arith.constant 1 : index
    %c0_332 = arith.constant 0 : index
    %c0_333 = arith.constant 0 : index
    %464 = vector.load %arg2[%c1_331, %c0_332, %c0_333] : memref<9x40x64xbf16, #tpu.memory_space<vmem>>, vector<1x40x64xbf16>
    %465 = vector.shape_cast %464 : vector<1x40x64xbf16> to vector<40x64xbf16>
    %cst_334 = arith.constant dense<0.000000e+00> : vector<8x64xf32>
    %466 = tpu.matmul %463, %465, %cst_334 {dimension_numbers = #tpu.dot_dimension_numbers<[1], [0], [0], [1], [0, 0, 1, 1], [], []>} : vector<8x40xbf16>, vector<40x64xbf16>, vector<8x64xf32> -> vector<8x64xf32>
    %467 = arith.addf %461, %466 : vector<8x64xf32>
    %468 = vector.extract_strided_slice %455 {offsets = [2, 0], sizes = [8, 40], strides = [1, 1]} : vector<10x40xf32> to vector<8x40xf32>
    %469 = arith.truncf %468 : vector<8x40xf32> to vector<8x40xbf16>
    %c2_335 = arith.constant 2 : index
    %c0_336 = arith.constant 0 : index
    %c0_337 = arith.constant 0 : index
    %470 = vector.load %arg2[%c2_335, %c0_336, %c0_337] : memref<9x40x64xbf16, #tpu.memory_space<vmem>>, vector<1x40x64xbf16>
    %471 = vector.shape_cast %470 : vector<1x40x64xbf16> to vector<40x64xbf16>
    %cst_338 = arith.constant dense<0.000000e+00> : vector<8x64xf32>
    %472 = tpu.matmul %469, %471, %cst_338 {dimension_numbers = #tpu.dot_dimension_numbers<[1], [0], [0], [1], [0, 0, 1, 1], [], []>} : vector<8x40xbf16>, vector<40x64xbf16>, vector<8x64xf32> -> vector<8x64xf32>
    %473 = arith.addf %467, %472 : vector<8x64xf32>
    %c0_339 = arith.constant 0 : index
    %c7_340 = arith.constant 7 : index
    %c0_341 = arith.constant 0 : index
    %c0_342 = arith.constant 0 : index
    %474 = vector.load %arg1[%c0_339, %c7_340, %c0_341, %c0_342] : memref<1x10x10x40xbf16, #tpu.memory_space<vmem>>, vector<1x1x10x40xbf16>
    %475 = vector.shape_cast %474 : vector<1x1x10x40xbf16> to vector<10x40xbf16>
    %476 = arith.extf %475 : vector<10x40xbf16> to vector<10x40xf32>
    %477 = vector.extract_strided_slice %476 {offsets = [0, 0], sizes = [8, 40], strides = [1, 1]} : vector<10x40xf32> to vector<8x40xf32>
    %478 = arith.truncf %477 : vector<8x40xf32> to vector<8x40xbf16>
    %c3_343 = arith.constant 3 : index
    %c0_344 = arith.constant 0 : index
    %c0_345 = arith.constant 0 : index
    %479 = vector.load %arg2[%c3_343, %c0_344, %c0_345] : memref<9x40x64xbf16, #tpu.memory_space<vmem>>, vector<1x40x64xbf16>
    %480 = vector.shape_cast %479 : vector<1x40x64xbf16> to vector<40x64xbf16>
    %cst_346 = arith.constant dense<0.000000e+00> : vector<8x64xf32>
    %481 = tpu.matmul %478, %480, %cst_346 {dimension_numbers = #tpu.dot_dimension_numbers<[1], [0], [0], [1], [0, 0, 1, 1], [], []>} : vector<8x40xbf16>, vector<40x64xbf16>, vector<8x64xf32> -> vector<8x64xf32>
    %482 = arith.addf %473, %481 : vector<8x64xf32>
    %483 = vector.extract_strided_slice %476 {offsets = [1, 0], sizes = [8, 40], strides = [1, 1]} : vector<10x40xf32> to vector<8x40xf32>
    %484 = arith.truncf %483 : vector<8x40xf32> to vector<8x40xbf16>
    %c4_347 = arith.constant 4 : index
    %c0_348 = arith.constant 0 : index
    %c0_349 = arith.constant 0 : index
    %485 = vector.load %arg2[%c4_347, %c0_348, %c0_349] : memref<9x40x64xbf16, #tpu.memory_space<vmem>>, vector<1x40x64xbf16>
    %486 = vector.shape_cast %485 : vector<1x40x64xbf16> to vector<40x64xbf16>
    %cst_350 = arith.constant dense<0.000000e+00> : vector<8x64xf32>
    %487 = tpu.matmul %484, %486, %cst_350 {dimension_numbers = #tpu.dot_dimension_numbers<[1], [0], [0], [1], [0, 0, 1, 1], [], []>} : vector<8x40xbf16>, vector<40x64xbf16>, vector<8x64xf32> -> vector<8x64xf32>
    %488 = arith.addf %482, %487 : vector<8x64xf32>
    %489 = vector.extract_strided_slice %476 {offsets = [2, 0], sizes = [8, 40], strides = [1, 1]} : vector<10x40xf32> to vector<8x40xf32>
    %490 = arith.truncf %489 : vector<8x40xf32> to vector<8x40xbf16>
    %c5_351 = arith.constant 5 : index
    %c0_352 = arith.constant 0 : index
    %c0_353 = arith.constant 0 : index
    %491 = vector.load %arg2[%c5_351, %c0_352, %c0_353] : memref<9x40x64xbf16, #tpu.memory_space<vmem>>, vector<1x40x64xbf16>
    %492 = vector.shape_cast %491 : vector<1x40x64xbf16> to vector<40x64xbf16>
    %cst_354 = arith.constant dense<0.000000e+00> : vector<8x64xf32>
    %493 = tpu.matmul %490, %492, %cst_354 {dimension_numbers = #tpu.dot_dimension_numbers<[1], [0], [0], [1], [0, 0, 1, 1], [], []>} : vector<8x40xbf16>, vector<40x64xbf16>, vector<8x64xf32> -> vector<8x64xf32>
    %494 = arith.addf %488, %493 : vector<8x64xf32>
    %c0_355 = arith.constant 0 : index
    %c8_356 = arith.constant 8 : index
    %c0_357 = arith.constant 0 : index
    %c0_358 = arith.constant 0 : index
    %495 = vector.load %arg1[%c0_355, %c8_356, %c0_357, %c0_358] : memref<1x10x10x40xbf16, #tpu.memory_space<vmem>>, vector<1x1x10x40xbf16>
    %496 = vector.shape_cast %495 : vector<1x1x10x40xbf16> to vector<10x40xbf16>
    %497 = arith.extf %496 : vector<10x40xbf16> to vector<10x40xf32>
    %498 = vector.extract_strided_slice %497 {offsets = [0, 0], sizes = [8, 40], strides = [1, 1]} : vector<10x40xf32> to vector<8x40xf32>
    %499 = arith.truncf %498 : vector<8x40xf32> to vector<8x40xbf16>
    %c6_359 = arith.constant 6 : index
    %c0_360 = arith.constant 0 : index
    %c0_361 = arith.constant 0 : index
    %500 = vector.load %arg2[%c6_359, %c0_360, %c0_361] : memref<9x40x64xbf16, #tpu.memory_space<vmem>>, vector<1x40x64xbf16>
    %501 = vector.shape_cast %500 : vector<1x40x64xbf16> to vector<40x64xbf16>
    %cst_362 = arith.constant dense<0.000000e+00> : vector<8x64xf32>
    %502 = tpu.matmul %499, %501, %cst_362 {dimension_numbers = #tpu.dot_dimension_numbers<[1], [0], [0], [1], [0, 0, 1, 1], [], []>} : vector<8x40xbf16>, vector<40x64xbf16>, vector<8x64xf32> -> vector<8x64xf32>
    %503 = arith.addf %494, %502 : vector<8x64xf32>
    %504 = vector.extract_strided_slice %497 {offsets = [1, 0], sizes = [8, 40], strides = [1, 1]} : vector<10x40xf32> to vector<8x40xf32>
    %505 = arith.truncf %504 : vector<8x40xf32> to vector<8x40xbf16>
    %c7_363 = arith.constant 7 : index
    %c0_364 = arith.constant 0 : index
    %c0_365 = arith.constant 0 : index
    %506 = vector.load %arg2[%c7_363, %c0_364, %c0_365] : memref<9x40x64xbf16, #tpu.memory_space<vmem>>, vector<1x40x64xbf16>
    %507 = vector.shape_cast %506 : vector<1x40x64xbf16> to vector<40x64xbf16>
    %cst_366 = arith.constant dense<0.000000e+00> : vector<8x64xf32>
    %508 = tpu.matmul %505, %507, %cst_366 {dimension_numbers = #tpu.dot_dimension_numbers<[1], [0], [0], [1], [0, 0, 1, 1], [], []>} : vector<8x40xbf16>, vector<40x64xbf16>, vector<8x64xf32> -> vector<8x64xf32>
    %509 = arith.addf %503, %508 : vector<8x64xf32>
    %510 = vector.extract_strided_slice %497 {offsets = [2, 0], sizes = [8, 40], strides = [1, 1]} : vector<10x40xf32> to vector<8x40xf32>
    %511 = arith.truncf %510 : vector<8x40xf32> to vector<8x40xbf16>
    %c8_367 = arith.constant 8 : index
    %c0_368 = arith.constant 0 : index
    %c0_369 = arith.constant 0 : index
    %512 = vector.load %arg2[%c8_367, %c0_368, %c0_369] : memref<9x40x64xbf16, #tpu.memory_space<vmem>>, vector<1x40x64xbf16>
    %513 = vector.shape_cast %512 : vector<1x40x64xbf16> to vector<40x64xbf16>
    %cst_370 = arith.constant dense<0.000000e+00> : vector<8x64xf32>
    %514 = tpu.matmul %511, %513, %cst_370 {dimension_numbers = #tpu.dot_dimension_numbers<[1], [0], [0], [1], [0, 0, 1, 1], [], []>} : vector<8x40xbf16>, vector<40x64xbf16>, vector<8x64xf32> -> vector<8x64xf32>
    %515 = arith.addf %509, %514 : vector<8x64xf32>
    %516 = arith.truncf %515 : vector<8x64xf32> to vector<8x64xbf16>
    %c0_371 = arith.constant 0 : index
    %c6_372 = arith.constant 6 : index
    %c0_373 = arith.constant 0 : index
    %c0_374 = arith.constant 0 : index
    %517 = vector.load %arg3[%c0_371, %c6_372, %c0_373, %c0_374] : memref<1x8x8x64xbf16, #tpu.memory_space<vmem>>, vector<1x1x8x64xbf16>
    %518 = vector.shape_cast %517 : vector<1x1x8x64xbf16> to vector<8x64xbf16>
    %519 = vector.shape_cast %516 : vector<8x64xbf16> to vector<1x1x8x64xbf16>
    tpu.vector_store %arg3[%c0_371, %c6_372, %c0_373, %c0_374], %519 {strides = array<i32>} : memref<1x8x8x64xbf16, #tpu.memory_space<vmem>>, vector<1x1x8x64xbf16>,
    %cst_375 = arith.constant dense<0.000000e+00> : vector<64xf32>
    %520 = vector.multi_reduction <add>, %515, %cst_375 [0] : vector<8x64xf32> to vector<64xf32>
    %521 = vector.shape_cast %520 : vector<64xf32> to vector<1x64xf32>
    %522 = arith.addf %447, %521 : vector<1x64xf32>
    %523 = arith.mulf %515, %515 : vector<8x64xf32>
    %cst_376 = arith.constant dense<0.000000e+00> : vector<64xf32>
    %524 = vector.multi_reduction <add>, %523, %cst_376 [0] : vector<8x64xf32> to vector<64xf32>
    %525 = vector.shape_cast %524 : vector<64xf32> to vector<1x64xf32>
    %526 = arith.addf %451, %525 : vector<1x64xf32>
    %cst_377 = arith.constant 0.000000e+00 : f32
    %527 = vector.broadcast %cst_377 : f32 to vector<8x64xf32>
    %c0_378 = arith.constant 0 : index
    %c7_379 = arith.constant 7 : index
    %c0_380 = arith.constant 0 : index
    %c0_381 = arith.constant 0 : index
    %528 = vector.load %arg1[%c0_378, %c7_379, %c0_380, %c0_381] : memref<1x10x10x40xbf16, #tpu.memory_space<vmem>>, vector<1x1x10x40xbf16>
    %529 = vector.shape_cast %528 : vector<1x1x10x40xbf16> to vector<10x40xbf16>
    %530 = arith.extf %529 : vector<10x40xbf16> to vector<10x40xf32>
    %531 = vector.extract_strided_slice %530 {offsets = [0, 0], sizes = [8, 40], strides = [1, 1]} : vector<10x40xf32> to vector<8x40xf32>
    %532 = arith.truncf %531 : vector<8x40xf32> to vector<8x40xbf16>
    %c0_382 = arith.constant 0 : index
    %c0_383 = arith.constant 0 : index
    %c0_384 = arith.constant 0 : index
    %533 = vector.load %arg2[%c0_382, %c0_383, %c0_384] : memref<9x40x64xbf16, #tpu.memory_space<vmem>>, vector<1x40x64xbf16>
    %534 = vector.shape_cast %533 : vector<1x40x64xbf16> to vector<40x64xbf16>
    %cst_385 = arith.constant dense<0.000000e+00> : vector<8x64xf32>
    %535 = tpu.matmul %532, %534, %cst_385 {dimension_numbers = #tpu.dot_dimension_numbers<[1], [0], [0], [1], [0, 0, 1, 1], [], []>} : vector<8x40xbf16>, vector<40x64xbf16>, vector<8x64xf32> -> vector<8x64xf32>
    %536 = arith.addf %527, %535 : vector<8x64xf32>
    %537 = vector.extract_strided_slice %530 {offsets = [1, 0], sizes = [8, 40], strides = [1, 1]} : vector<10x40xf32> to vector<8x40xf32>
    %538 = arith.truncf %537 : vector<8x40xf32> to vector<8x40xbf16>
    %c1_386 = arith.constant 1 : index
    %c0_387 = arith.constant 0 : index
    %c0_388 = arith.constant 0 : index
    %539 = vector.load %arg2[%c1_386, %c0_387, %c0_388] : memref<9x40x64xbf16, #tpu.memory_space<vmem>>, vector<1x40x64xbf16>
    %540 = vector.shape_cast %539 : vector<1x40x64xbf16> to vector<40x64xbf16>
    %cst_389 = arith.constant dense<0.000000e+00> : vector<8x64xf32>
    %541 = tpu.matmul %538, %540, %cst_389 {dimension_numbers = #tpu.dot_dimension_numbers<[1], [0], [0], [1], [0, 0, 1, 1], [], []>} : vector<8x40xbf16>, vector<40x64xbf16>, vector<8x64xf32> -> vector<8x64xf32>
    %542 = arith.addf %536, %541 : vector<8x64xf32>
    %543 = vector.extract_strided_slice %530 {offsets = [2, 0], sizes = [8, 40], strides = [1, 1]} : vector<10x40xf32> to vector<8x40xf32>
    %544 = arith.truncf %543 : vector<8x40xf32> to vector<8x40xbf16>
    %c2_390 = arith.constant 2 : index
    %c0_391 = arith.constant 0 : index
    %c0_392 = arith.constant 0 : index
    %545 = vector.load %arg2[%c2_390, %c0_391, %c0_392] : memref<9x40x64xbf16, #tpu.memory_space<vmem>>, vector<1x40x64xbf16>
    %546 = vector.shape_cast %545 : vector<1x40x64xbf16> to vector<40x64xbf16>
    %cst_393 = arith.constant dense<0.000000e+00> : vector<8x64xf32>
    %547 = tpu.matmul %544, %546, %cst_393 {dimension_numbers = #tpu.dot_dimension_numbers<[1], [0], [0], [1], [0, 0, 1, 1], [], []>} : vector<8x40xbf16>, vector<40x64xbf16>, vector<8x64xf32> -> vector<8x64xf32>
    %548 = arith.addf %542, %547 : vector<8x64xf32>
    %c0_394 = arith.constant 0 : index
    %c8_395 = arith.constant 8 : index
    %c0_396 = arith.constant 0 : index
    %c0_397 = arith.constant 0 : index
    %549 = vector.load %arg1[%c0_394, %c8_395, %c0_396, %c0_397] : memref<1x10x10x40xbf16, #tpu.memory_space<vmem>>, vector<1x1x10x40xbf16>
    %550 = vector.shape_cast %549 : vector<1x1x10x40xbf16> to vector<10x40xbf16>
    %551 = arith.extf %550 : vector<10x40xbf16> to vector<10x40xf32>
    %552 = vector.extract_strided_slice %551 {offsets = [0, 0], sizes = [8, 40], strides = [1, 1]} : vector<10x40xf32> to vector<8x40xf32>
    %553 = arith.truncf %552 : vector<8x40xf32> to vector<8x40xbf16>
    %c3_398 = arith.constant 3 : index
    %c0_399 = arith.constant 0 : index
    %c0_400 = arith.constant 0 : index
    %554 = vector.load %arg2[%c3_398, %c0_399, %c0_400] : memref<9x40x64xbf16, #tpu.memory_space<vmem>>, vector<1x40x64xbf16>
    %555 = vector.shape_cast %554 : vector<1x40x64xbf16> to vector<40x64xbf16>
    %cst_401 = arith.constant dense<0.000000e+00> : vector<8x64xf32>
    %556 = tpu.matmul %553, %555, %cst_401 {dimension_numbers = #tpu.dot_dimension_numbers<[1], [0], [0], [1], [0, 0, 1, 1], [], []>} : vector<8x40xbf16>, vector<40x64xbf16>, vector<8x64xf32> -> vector<8x64xf32>
    %557 = arith.addf %548, %556 : vector<8x64xf32>
    %558 = vector.extract_strided_slice %551 {offsets = [1, 0], sizes = [8, 40], strides = [1, 1]} : vector<10x40xf32> to vector<8x40xf32>
    %559 = arith.truncf %558 : vector<8x40xf32> to vector<8x40xbf16>
    %c4_402 = arith.constant 4 : index
    %c0_403 = arith.constant 0 : index
    %c0_404 = arith.constant 0 : index
    %560 = vector.load %arg2[%c4_402, %c0_403, %c0_404] : memref<9x40x64xbf16, #tpu.memory_space<vmem>>, vector<1x40x64xbf16>
    %561 = vector.shape_cast %560 : vector<1x40x64xbf16> to vector<40x64xbf16>
    %cst_405 = arith.constant dense<0.000000e+00> : vector<8x64xf32>
    %562 = tpu.matmul %559, %561, %cst_405 {dimension_numbers = #tpu.dot_dimension_numbers<[1], [0], [0], [1], [0, 0, 1, 1], [], []>} : vector<8x40xbf16>, vector<40x64xbf16>, vector<8x64xf32> -> vector<8x64xf32>
    %563 = arith.addf %557, %562 : vector<8x64xf32>
    %564 = vector.extract_strided_slice %551 {offsets = [2, 0], sizes = [8, 40], strides = [1, 1]} : vector<10x40xf32> to vector<8x40xf32>
    %565 = arith.truncf %564 : vector<8x40xf32> to vector<8x40xbf16>
    %c5_406 = arith.constant 5 : index
    %c0_407 = arith.constant 0 : index
    %c0_408 = arith.constant 0 : index
    %566 = vector.load %arg2[%c5_406, %c0_407, %c0_408] : memref<9x40x64xbf16, #tpu.memory_space<vmem>>, vector<1x40x64xbf16>
    %567 = vector.shape_cast %566 : vector<1x40x64xbf16> to vector<40x64xbf16>
    %cst_409 = arith.constant dense<0.000000e+00> : vector<8x64xf32>
    %568 = tpu.matmul %565, %567, %cst_409 {dimension_numbers = #tpu.dot_dimension_numbers<[1], [0], [0], [1], [0, 0, 1, 1], [], []>} : vector<8x40xbf16>, vector<40x64xbf16>, vector<8x64xf32> -> vector<8x64xf32>
    %569 = arith.addf %563, %568 : vector<8x64xf32>
    %c0_410 = arith.constant 0 : index
    %c9 = arith.constant 9 : index
    %c0_411 = arith.constant 0 : index
    %c0_412 = arith.constant 0 : index
    %570 = vector.load %arg1[%c0_410, %c9, %c0_411, %c0_412] : memref<1x10x10x40xbf16, #tpu.memory_space<vmem>>, vector<1x1x10x40xbf16>
    %571 = vector.shape_cast %570 : vector<1x1x10x40xbf16> to vector<10x40xbf16>
    %572 = arith.extf %571 : vector<10x40xbf16> to vector<10x40xf32>
    %573 = vector.extract_strided_slice %572 {offsets = [0, 0], sizes = [8, 40], strides = [1, 1]} : vector<10x40xf32> to vector<8x40xf32>
    %574 = arith.truncf %573 : vector<8x40xf32> to vector<8x40xbf16>
    %c6_413 = arith.constant 6 : index
    %c0_414 = arith.constant 0 : index
    %c0_415 = arith.constant 0 : index
    %575 = vector.load %arg2[%c6_413, %c0_414, %c0_415] : memref<9x40x64xbf16, #tpu.memory_space<vmem>>, vector<1x40x64xbf16>
    %576 = vector.shape_cast %575 : vector<1x40x64xbf16> to vector<40x64xbf16>
    %cst_416 = arith.constant dense<0.000000e+00> : vector<8x64xf32>
    %577 = tpu.matmul %574, %576, %cst_416 {dimension_numbers = #tpu.dot_dimension_numbers<[1], [0], [0], [1], [0, 0, 1, 1], [], []>} : vector<8x40xbf16>, vector<40x64xbf16>, vector<8x64xf32> -> vector<8x64xf32>
    %578 = arith.addf %569, %577 : vector<8x64xf32>
    %579 = vector.extract_strided_slice %572 {offsets = [1, 0], sizes = [8, 40], strides = [1, 1]} : vector<10x40xf32> to vector<8x40xf32>
    %580 = arith.truncf %579 : vector<8x40xf32> to vector<8x40xbf16>
    %c7_417 = arith.constant 7 : index
    %c0_418 = arith.constant 0 : index
    %c0_419 = arith.constant 0 : index
    %581 = vector.load %arg2[%c7_417, %c0_418, %c0_419] : memref<9x40x64xbf16, #tpu.memory_space<vmem>>, vector<1x40x64xbf16>
    %582 = vector.shape_cast %581 : vector<1x40x64xbf16> to vector<40x64xbf16>
    %cst_420 = arith.constant dense<0.000000e+00> : vector<8x64xf32>
    %583 = tpu.matmul %580, %582, %cst_420 {dimension_numbers = #tpu.dot_dimension_numbers<[1], [0], [0], [1], [0, 0, 1, 1], [], []>} : vector<8x40xbf16>, vector<40x64xbf16>, vector<8x64xf32> -> vector<8x64xf32>
    %584 = arith.addf %578, %583 : vector<8x64xf32>
    %585 = vector.extract_strided_slice %572 {offsets = [2, 0], sizes = [8, 40], strides = [1, 1]} : vector<10x40xf32> to vector<8x40xf32>
    %586 = arith.truncf %585 : vector<8x40xf32> to vector<8x40xbf16>
    %c8_421 = arith.constant 8 : index
    %c0_422 = arith.constant 0 : index
    %c0_423 = arith.constant 0 : index
    %587 = vector.load %arg2[%c8_421, %c0_422, %c0_423] : memref<9x40x64xbf16, #tpu.memory_space<vmem>>, vector<1x40x64xbf16>
    %588 = vector.shape_cast %587 : vector<1x40x64xbf16> to vector<40x64xbf16>
    %cst_424 = arith.constant dense<0.000000e+00> : vector<8x64xf32>
    %589 = tpu.matmul %586, %588, %cst_424 {dimension_numbers = #tpu.dot_dimension_numbers<[1], [0], [0], [1], [0, 0, 1, 1], [], []>} : vector<8x40xbf16>, vector<40x64xbf16>, vector<8x64xf32> -> vector<8x64xf32>
    %590 = arith.addf %584, %589 : vector<8x64xf32>
    %591 = arith.truncf %590 : vector<8x64xf32> to vector<8x64xbf16>
    %c0_425 = arith.constant 0 : index
    %c7_426 = arith.constant 7 : index
    %c0_427 = arith.constant 0 : index
    %c0_428 = arith.constant 0 : index
    %592 = vector.load %arg3[%c0_425, %c7_426, %c0_427, %c0_428] : memref<1x8x8x64xbf16, #tpu.memory_space<vmem>>, vector<1x1x8x64xbf16>
    %593 = vector.shape_cast %592 : vector<1x1x8x64xbf16> to vector<8x64xbf16>
    %594 = vector.shape_cast %591 : vector<8x64xbf16> to vector<1x1x8x64xbf16>
    tpu.vector_store %arg3[%c0_425, %c7_426, %c0_427, %c0_428], %594 {strides = array<i32>} : memref<1x8x8x64xbf16, #tpu.memory_space<vmem>>, vector<1x1x8x64xbf16>,
    %cst_429 = arith.constant dense<0.000000e+00> : vector<64xf32>
    %595 = vector.multi_reduction <add>, %590, %cst_429 [0] : vector<8x64xf32> to vector<64xf32>
    %596 = vector.shape_cast %595 : vector<64xf32> to vector<1x64xf32>
    %597 = arith.addf %522, %596 : vector<1x64xf32>
    %598 = arith.mulf %590, %590 : vector<8x64xf32>
    %cst_430 = arith.constant dense<0.000000e+00> : vector<64xf32>
    %599 = vector.multi_reduction <add>, %598, %cst_430 [0] : vector<8x64xf32> to vector<64xf32>
    %600 = vector.shape_cast %599 : vector<64xf32> to vector<1x64xf32>
    %601 = arith.addf %526, %600 : vector<1x64xf32>
    %c0_431 = arith.constant 0 : index
    %c0_432 = arith.constant 0 : index
    %c0_433 = arith.constant 0 : index
    %602 = vector.load %arg4[%c0_431, %c0_432, %c0_433] : memref<1x2x64xf32, #tpu.memory_space<vmem>>, vector<1x1x64xf32>
    %603 = vector.shape_cast %602 : vector<1x1x64xf32> to vector<1x64xf32>
    %604 = vector.shape_cast %597 : vector<1x64xf32> to vector<1x1x64xf32>
    tpu.vector_store %arg4[%c0_431, %c0_432, %c0_433], %604 {strides = array<i32>} : memref<1x2x64xf32, #tpu.memory_space<vmem>>, vector<1x1x64xf32>,
    %c0_434 = arith.constant 0 : index
    %c1_435 = arith.constant 1 : index
    %c0_436 = arith.constant 0 : index
    %605 = vector.load %arg4[%c0_434, %c1_435, %c0_436] : memref<1x2x64xf32, #tpu.memory_space<vmem>>, vector<1x1x64xf32>
    %606 = vector.shape_cast %605 : vector<1x1x64xf32> to vector<1x64xf32>
    %607 = vector.shape_cast %601 : vector<1x64xf32> to vector<1x1x64xf32>
    tpu.vector_store %arg4[%c0_434, %c1_435, %c0_436], %607 {strides = array<i32>} : memref<1x2x64xf32, #tpu.memory_space<vmem>>, vector<1x1x64xf32>,
    return
  }
  func.func @transform_0(%arg0: i32) -> (i32, i32, i32, i32) {
    %c0_i32 = arith.constant 0 : i32
    %c0_i32_0 = arith.constant 0 : i32
    %c0_i32_1 = arith.constant 0 : i32
    %c0_i32_2 = arith.constant 0 : i32
    return %arg0, %c0_i32, %c0_i32_0, %c0_i32_1 : i32, i32, i32, i32
  }
  func.func @transform_1(%arg0: i32) -> (i32, i32, i32) {
    %c0_i32 = arith.constant 0 : i32
    %c0_i32_0 = arith.constant 0 : i32
    %c0_i32_1 = arith.constant 0 : i32
    %c0_i32_2 = arith.constant 0 : i32
    return %c0_i32, %c0_i32_0, %c0_i32_1 : i32, i32, i32
  }
  func.func @transform_2(%arg0: i32) -> (i32, i32, i32, i32) {
    %c0_i32 = arith.constant 0 : i32
    %c0_i32_0 = arith.constant 0 : i32
    %c0_i32_1 = arith.constant 0 : i32
    %c0_i32_2 = arith.constant 0 : i32
    return %arg0, %c0_i32, %c0_i32_0, %c0_i32_1 : i32, i32, i32, i32
  }
  func.func @transform_3(%arg0: i32) -> (i32, i32, i32) {
    %c0_i32 = arith.constant 0 : i32
    %c0_i32_0 = arith.constant 0 : i32
    %c0_i32_1 = arith.constant 0 : i32
    return %arg0, %c0_i32, %c0_i32_0 : i32, i32, i32
  }
}

module attributes {stable_mosaic.version = 11 : i64} {
  func.func @bn_relu_kernel(%arg0: i32, %arg1: memref<1x8x8x64xbf16, #tpu.memory_space<vmem>>, %arg2: memref<1x64xf32, #tpu.memory_space<vmem>>, %arg3: memref<1x64xf32, #tpu.memory_space<vmem>>, %arg4: memref<1x8x8x64xbf16, #tpu.memory_space<vmem>>) attributes {dimension_semantics = [#tpu.dimension_semantics<parallel>], iteration_bounds = array<i64: 2>, scalar_prefetch = 0 : i64, scratch_operands = 0 : i64, tpu.core_type = #tpu.core_type<tc>, window_params = [{transform_indices = @transform_0, window_bounds = array<i64: 1, 8, 8, 64>}, {pipeline_mode = #tpu.pipeline_mode<synchronous>, transform_indices = @transform_1, window_bounds = array<i64: 1, 64>}, {pipeline_mode = #tpu.pipeline_mode<synchronous>, transform_indices = @transform_2, window_bounds = array<i64: 1, 64>}, {transform_indices = @transform_3, window_bounds = array<i64: 1, 8, 8, 64>}]} {
    %c0 = arith.constant 0 : index
    %c0_0 = arith.constant 0 : index
    %c0_1 = arith.constant 0 : index
    %c0_2 = arith.constant 0 : index
    %0 = vector.load %arg1[%c0, %c0_0, %c0_1, %c0_2] : memref<1x8x8x64xbf16, #tpu.memory_space<vmem>>, vector<1x8x8x64xbf16>
    %1 = vector.shape_cast %0 : vector<1x8x8x64xbf16> to vector<8x8x64xbf16>
    %2 = arith.extf %1 : vector<8x8x64xbf16> to vector<8x8x64xf32>
    %c0_3 = arith.constant 0 : index
    %c0_4 = arith.constant 0 : index
    %3 = vector.load %arg2[%c0_3, %c0_4] : memref<1x64xf32, #tpu.memory_space<vmem>>, vector<1x64xf32>
    %4 = vector.shape_cast %3 : vector<1x64xf32> to vector<1x1x64xf32>
    %5 = vector.broadcast %4 : vector<1x1x64xf32> to vector<8x8x64xf32>
    %6 = arith.mulf %2, %5 : vector<8x8x64xf32>
    %c0_5 = arith.constant 0 : index
    %c0_6 = arith.constant 0 : index
    %7 = vector.load %arg3[%c0_5, %c0_6] : memref<1x64xf32, #tpu.memory_space<vmem>>, vector<1x64xf32>
    %8 = vector.shape_cast %7 : vector<1x64xf32> to vector<1x1x64xf32>
    %9 = vector.broadcast %8 : vector<1x1x64xf32> to vector<8x8x64xf32>
    %10 = arith.addf %6, %9 : vector<8x8x64xf32>
    %cst = arith.constant 0.000000e+00 : f32
    %11 = vector.broadcast %cst : f32 to vector<8x8x64xf32>
    %12 = arith.maximumf %10, %11 : vector<8x8x64xf32>
    %13 = arith.truncf %12 : vector<8x8x64xf32> to vector<8x8x64xbf16>
    %c0_7 = arith.constant 0 : index
    %c0_8 = arith.constant 0 : index
    %c0_9 = arith.constant 0 : index
    %c0_10 = arith.constant 0 : index
    %14 = vector.load %arg4[%c0_7, %c0_8, %c0_9, %c0_10] : memref<1x8x8x64xbf16, #tpu.memory_space<vmem>>, vector<1x8x8x64xbf16>
    %15 = vector.shape_cast %14 : vector<1x8x8x64xbf16> to vector<8x8x64xbf16>
    %16 = vector.shape_cast %13 : vector<8x8x64xbf16> to vector<1x8x8x64xbf16>
    tpu.vector_store %arg4[%c0_7, %c0_8, %c0_9, %c0_10], %16 {strides = array<i32>} : memref<1x8x8x64xbf16, #tpu.memory_space<vmem>>, vector<1x8x8x64xbf16>,
    return
  }
  func.func @transform_0(%arg0: i32) -> (i32, i32, i32, i32) {
    %c0_i32 = arith.constant 0 : i32
    %c0_i32_0 = arith.constant 0 : i32
    %c0_i32_1 = arith.constant 0 : i32
    %c0_i32_2 = arith.constant 0 : i32
    return %arg0, %c0_i32, %c0_i32_0, %c0_i32_1 : i32, i32, i32, i32
  }
  func.func @transform_1(%arg0: i32) -> (i32, i32) {
    %c0_i32 = arith.constant 0 : i32
    %c0_i32_0 = arith.constant 0 : i32
    %c0_i32_1 = arith.constant 0 : i32
    return %c0_i32, %c0_i32_0 : i32, i32
  }
  func.func @transform_2(%arg0: i32) -> (i32, i32) {
    %c0_i32 = arith.constant 0 : i32
    %c0_i32_0 = arith.constant 0 : i32
    %c0_i32_1 = arith.constant 0 : i32
    return %c0_i32, %c0_i32_0 : i32, i32
  }
  func.func @transform_3(%arg0: i32) -> (i32, i32, i32, i32) {
    %c0_i32 = arith.constant 0 : i32
    %c0_i32_0 = arith.constant 0 : i32
    %c0_i32_1 = arith.constant 0 : i32
    %c0_i32_2 = arith.constant 0 : i32
    return %arg0, %c0_i32, %c0_i32_0, %c0_i32_1 : i32, i32, i32, i32
  }
}

module attributes {stable_mosaic.version = 11 : i64} {
  func.func @conv_stats_kernel(%arg0: i32, %arg1: memref<1x10x10x80xbf16, #tpu.memory_space<vmem>>, %arg2: memref<9x80x64xbf16, #tpu.memory_space<vmem>>, %arg3: memref<1x8x8x64xbf16, #tpu.memory_space<vmem>>, %arg4: memref<1x2x64xf32, #tpu.memory_space<vmem>>) attributes {dimension_semantics = [#tpu.dimension_semantics<parallel>], iteration_bounds = array<i64: 2>, scalar_prefetch = 0 : i64, scratch_operands = 0 : i64, tpu.core_type = #tpu.core_type<tc>, window_params = [{transform_indices = @transform_0, window_bounds = array<i64: 1, 10, 10, 80>}, {pipeline_mode = #tpu.pipeline_mode<synchronous>, transform_indices = @transform_1, window_bounds = array<i64: 9, 80, 64>}, {transform_indices = @transform_2, window_bounds = array<i64: 1, 8, 8, 64>}, {transform_indices = @transform_3, window_bounds = array<i64: 1, 2, 64>}]} {
    %cst = arith.constant 0.000000e+00 : f32
    %0 = vector.broadcast %cst : f32 to vector<1x64xf32>
    %cst_0 = arith.constant 0.000000e+00 : f32
    %1 = vector.broadcast %cst_0 : f32 to vector<1x64xf32>
    %cst_1 = arith.constant 0.000000e+00 : f32
    %2 = vector.broadcast %cst_1 : f32 to vector<8x64xf32>
    %c0 = arith.constant 0 : index
    %c0_2 = arith.constant 0 : index
    %c0_3 = arith.constant 0 : index
    %c0_4 = arith.constant 0 : index
    %3 = vector.load %arg1[%c0, %c0_2, %c0_3, %c0_4] : memref<1x10x10x80xbf16, #tpu.memory_space<vmem>>, vector<1x1x10x80xbf16>
    %4 = vector.shape_cast %3 : vector<1x1x10x80xbf16> to vector<10x80xbf16>
    %5 = arith.extf %4 : vector<10x80xbf16> to vector<10x80xf32>
    %6 = vector.extract_strided_slice %5 {offsets = [0, 0], sizes = [8, 80], strides = [1, 1]} : vector<10x80xf32> to vector<8x80xf32>
    %7 = arith.truncf %6 : vector<8x80xf32> to vector<8x80xbf16>
    %c0_5 = arith.constant 0 : index
    %c0_6 = arith.constant 0 : index
    %c0_7 = arith.constant 0 : index
    %8 = vector.load %arg2[%c0_5, %c0_6, %c0_7] : memref<9x80x64xbf16, #tpu.memory_space<vmem>>, vector<1x80x64xbf16>
    %9 = vector.shape_cast %8 : vector<1x80x64xbf16> to vector<80x64xbf16>
    %cst_8 = arith.constant dense<0.000000e+00> : vector<8x64xf32>
    %10 = tpu.matmul %7, %9, %cst_8 {dimension_numbers = #tpu.dot_dimension_numbers<[1], [0], [0], [1], [0, 0, 1, 1], [], []>} : vector<8x80xbf16>, vector<80x64xbf16>, vector<8x64xf32> -> vector<8x64xf32>
    %11 = arith.addf %2, %10 : vector<8x64xf32>
    %12 = vector.extract_strided_slice %5 {offsets = [1, 0], sizes = [8, 80], strides = [1, 1]} : vector<10x80xf32> to vector<8x80xf32>
    %13 = arith.truncf %12 : vector<8x80xf32> to vector<8x80xbf16>
    %c1 = arith.constant 1 : index
    %c0_9 = arith.constant 0 : index
    %c0_10 = arith.constant 0 : index
    %14 = vector.load %arg2[%c1, %c0_9, %c0_10] : memref<9x80x64xbf16, #tpu.memory_space<vmem>>, vector<1x80x64xbf16>
    %15 = vector.shape_cast %14 : vector<1x80x64xbf16> to vector<80x64xbf16>
    %cst_11 = arith.constant dense<0.000000e+00> : vector<8x64xf32>
    %16 = tpu.matmul %13, %15, %cst_11 {dimension_numbers = #tpu.dot_dimension_numbers<[1], [0], [0], [1], [0, 0, 1, 1], [], []>} : vector<8x80xbf16>, vector<80x64xbf16>, vector<8x64xf32> -> vector<8x64xf32>
    %17 = arith.addf %11, %16 : vector<8x64xf32>
    %18 = vector.extract_strided_slice %5 {offsets = [2, 0], sizes = [8, 80], strides = [1, 1]} : vector<10x80xf32> to vector<8x80xf32>
    %19 = arith.truncf %18 : vector<8x80xf32> to vector<8x80xbf16>
    %c2 = arith.constant 2 : index
    %c0_12 = arith.constant 0 : index
    %c0_13 = arith.constant 0 : index
    %20 = vector.load %arg2[%c2, %c0_12, %c0_13] : memref<9x80x64xbf16, #tpu.memory_space<vmem>>, vector<1x80x64xbf16>
    %21 = vector.shape_cast %20 : vector<1x80x64xbf16> to vector<80x64xbf16>
    %cst_14 = arith.constant dense<0.000000e+00> : vector<8x64xf32>
    %22 = tpu.matmul %19, %21, %cst_14 {dimension_numbers = #tpu.dot_dimension_numbers<[1], [0], [0], [1], [0, 0, 1, 1], [], []>} : vector<8x80xbf16>, vector<80x64xbf16>, vector<8x64xf32> -> vector<8x64xf32>
    %23 = arith.addf %17, %22 : vector<8x64xf32>
    %c0_15 = arith.constant 0 : index
    %c1_16 = arith.constant 1 : index
    %c0_17 = arith.constant 0 : index
    %c0_18 = arith.constant 0 : index
    %24 = vector.load %arg1[%c0_15, %c1_16, %c0_17, %c0_18] : memref<1x10x10x80xbf16, #tpu.memory_space<vmem>>, vector<1x1x10x80xbf16>
    %25 = vector.shape_cast %24 : vector<1x1x10x80xbf16> to vector<10x80xbf16>
    %26 = arith.extf %25 : vector<10x80xbf16> to vector<10x80xf32>
    %27 = vector.extract_strided_slice %26 {offsets = [0, 0], sizes = [8, 80], strides = [1, 1]} : vector<10x80xf32> to vector<8x80xf32>
    %28 = arith.truncf %27 : vector<8x80xf32> to vector<8x80xbf16>
    %c3 = arith.constant 3 : index
    %c0_19 = arith.constant 0 : index
    %c0_20 = arith.constant 0 : index
    %29 = vector.load %arg2[%c3, %c0_19, %c0_20] : memref<9x80x64xbf16, #tpu.memory_space<vmem>>, vector<1x80x64xbf16>
    %30 = vector.shape_cast %29 : vector<1x80x64xbf16> to vector<80x64xbf16>
    %cst_21 = arith.constant dense<0.000000e+00> : vector<8x64xf32>
    %31 = tpu.matmul %28, %30, %cst_21 {dimension_numbers = #tpu.dot_dimension_numbers<[1], [0], [0], [1], [0, 0, 1, 1], [], []>} : vector<8x80xbf16>, vector<80x64xbf16>, vector<8x64xf32> -> vector<8x64xf32>
    %32 = arith.addf %23, %31 : vector<8x64xf32>
    %33 = vector.extract_strided_slice %26 {offsets = [1, 0], sizes = [8, 80], strides = [1, 1]} : vector<10x80xf32> to vector<8x80xf32>
    %34 = arith.truncf %33 : vector<8x80xf32> to vector<8x80xbf16>
    %c4 = arith.constant 4 : index
    %c0_22 = arith.constant 0 : index
    %c0_23 = arith.constant 0 : index
    %35 = vector.load %arg2[%c4, %c0_22, %c0_23] : memref<9x80x64xbf16, #tpu.memory_space<vmem>>, vector<1x80x64xbf16>
    %36 = vector.shape_cast %35 : vector<1x80x64xbf16> to vector<80x64xbf16>
    %cst_24 = arith.constant dense<0.000000e+00> : vector<8x64xf32>
    %37 = tpu.matmul %34, %36, %cst_24 {dimension_numbers = #tpu.dot_dimension_numbers<[1], [0], [0], [1], [0, 0, 1, 1], [], []>} : vector<8x80xbf16>, vector<80x64xbf16>, vector<8x64xf32> -> vector<8x64xf32>
    %38 = arith.addf %32, %37 : vector<8x64xf32>
    %39 = vector.extract_strided_slice %26 {offsets = [2, 0], sizes = [8, 80], strides = [1, 1]} : vector<10x80xf32> to vector<8x80xf32>
    %40 = arith.truncf %39 : vector<8x80xf32> to vector<8x80xbf16>
    %c5 = arith.constant 5 : index
    %c0_25 = arith.constant 0 : index
    %c0_26 = arith.constant 0 : index
    %41 = vector.load %arg2[%c5, %c0_25, %c0_26] : memref<9x80x64xbf16, #tpu.memory_space<vmem>>, vector<1x80x64xbf16>
    %42 = vector.shape_cast %41 : vector<1x80x64xbf16> to vector<80x64xbf16>
    %cst_27 = arith.constant dense<0.000000e+00> : vector<8x64xf32>
    %43 = tpu.matmul %40, %42, %cst_27 {dimension_numbers = #tpu.dot_dimension_numbers<[1], [0], [0], [1], [0, 0, 1, 1], [], []>} : vector<8x80xbf16>, vector<80x64xbf16>, vector<8x64xf32> -> vector<8x64xf32>
    %44 = arith.addf %38, %43 : vector<8x64xf32>
    %c0_28 = arith.constant 0 : index
    %c2_29 = arith.constant 2 : index
    %c0_30 = arith.constant 0 : index
    %c0_31 = arith.constant 0 : index
    %45 = vector.load %arg1[%c0_28, %c2_29, %c0_30, %c0_31] : memref<1x10x10x80xbf16, #tpu.memory_space<vmem>>, vector<1x1x10x80xbf16>
    %46 = vector.shape_cast %45 : vector<1x1x10x80xbf16> to vector<10x80xbf16>
    %47 = arith.extf %46 : vector<10x80xbf16> to vector<10x80xf32>
    %48 = vector.extract_strided_slice %47 {offsets = [0, 0], sizes = [8, 80], strides = [1, 1]} : vector<10x80xf32> to vector<8x80xf32>
    %49 = arith.truncf %48 : vector<8x80xf32> to vector<8x80xbf16>
    %c6 = arith.constant 6 : index
    %c0_32 = arith.constant 0 : index
    %c0_33 = arith.constant 0 : index
    %50 = vector.load %arg2[%c6, %c0_32, %c0_33] : memref<9x80x64xbf16, #tpu.memory_space<vmem>>, vector<1x80x64xbf16>
    %51 = vector.shape_cast %50 : vector<1x80x64xbf16> to vector<80x64xbf16>
    %cst_34 = arith.constant dense<0.000000e+00> : vector<8x64xf32>
    %52 = tpu.matmul %49, %51, %cst_34 {dimension_numbers = #tpu.dot_dimension_numbers<[1], [0], [0], [1], [0, 0, 1, 1], [], []>} : vector<8x80xbf16>, vector<80x64xbf16>, vector<8x64xf32> -> vector<8x64xf32>
    %53 = arith.addf %44, %52 : vector<8x64xf32>
    %54 = vector.extract_strided_slice %47 {offsets = [1, 0], sizes = [8, 80], strides = [1, 1]} : vector<10x80xf32> to vector<8x80xf32>
    %55 = arith.truncf %54 : vector<8x80xf32> to vector<8x80xbf16>
    %c7 = arith.constant 7 : index
    %c0_35 = arith.constant 0 : index
    %c0_36 = arith.constant 0 : index
    %56 = vector.load %arg2[%c7, %c0_35, %c0_36] : memref<9x80x64xbf16, #tpu.memory_space<vmem>>, vector<1x80x64xbf16>
    %57 = vector.shape_cast %56 : vector<1x80x64xbf16> to vector<80x64xbf16>
    %cst_37 = arith.constant dense<0.000000e+00> : vector<8x64xf32>
    %58 = tpu.matmul %55, %57, %cst_37 {dimension_numbers = #tpu.dot_dimension_numbers<[1], [0], [0], [1], [0, 0, 1, 1], [], []>} : vector<8x80xbf16>, vector<80x64xbf16>, vector<8x64xf32> -> vector<8x64xf32>
    %59 = arith.addf %53, %58 : vector<8x64xf32>
    %60 = vector.extract_strided_slice %47 {offsets = [2, 0], sizes = [8, 80], strides = [1, 1]} : vector<10x80xf32> to vector<8x80xf32>
    %61 = arith.truncf %60 : vector<8x80xf32> to vector<8x80xbf16>
    %c8 = arith.constant 8 : index
    %c0_38 = arith.constant 0 : index
    %c0_39 = arith.constant 0 : index
    %62 = vector.load %arg2[%c8, %c0_38, %c0_39] : memref<9x80x64xbf16, #tpu.memory_space<vmem>>, vector<1x80x64xbf16>
    %63 = vector.shape_cast %62 : vector<1x80x64xbf16> to vector<80x64xbf16>
    %cst_40 = arith.constant dense<0.000000e+00> : vector<8x64xf32>
    %64 = tpu.matmul %61, %63, %cst_40 {dimension_numbers = #tpu.dot_dimension_numbers<[1], [0], [0], [1], [0, 0, 1, 1], [], []>} : vector<8x80xbf16>, vector<80x64xbf16>, vector<8x64xf32> -> vector<8x64xf32>
    %65 = arith.addf %59, %64 : vector<8x64xf32>
    %66 = arith.truncf %65 : vector<8x64xf32> to vector<8x64xbf16>
    %c0_41 = arith.constant 0 : index
    %c0_42 = arith.constant 0 : index
    %c0_43 = arith.constant 0 : index
    %c0_44 = arith.constant 0 : index
    %67 = vector.load %arg3[%c0_41, %c0_42, %c0_43, %c0_44] : memref<1x8x8x64xbf16, #tpu.memory_space<vmem>>, vector<1x1x8x64xbf16>
    %68 = vector.shape_cast %67 : vector<1x1x8x64xbf16> to vector<8x64xbf16>
    %69 = vector.shape_cast %66 : vector<8x64xbf16> to vector<1x1x8x64xbf16>
    tpu.vector_store %arg3[%c0_41, %c0_42, %c0_43, %c0_44], %69 {strides = array<i32>} : memref<1x8x8x64xbf16, #tpu.memory_space<vmem>>, vector<1x1x8x64xbf16>,
    %cst_45 = arith.constant dense<0.000000e+00> : vector<64xf32>
    %70 = vector.multi_reduction <add>, %65, %cst_45 [0] : vector<8x64xf32> to vector<64xf32>
    %71 = vector.shape_cast %70 : vector<64xf32> to vector<1x64xf32>
    %72 = arith.addf %0, %71 : vector<1x64xf32>
    %73 = arith.mulf %65, %65 : vector<8x64xf32>
    %cst_46 = arith.constant dense<0.000000e+00> : vector<64xf32>
    %74 = vector.multi_reduction <add>, %73, %cst_46 [0] : vector<8x64xf32> to vector<64xf32>
    %75 = vector.shape_cast %74 : vector<64xf32> to vector<1x64xf32>
    %76 = arith.addf %1, %75 : vector<1x64xf32>
    %cst_47 = arith.constant 0.000000e+00 : f32
    %77 = vector.broadcast %cst_47 : f32 to vector<8x64xf32>
    %c0_48 = arith.constant 0 : index
    %c1_49 = arith.constant 1 : index
    %c0_50 = arith.constant 0 : index
    %c0_51 = arith.constant 0 : index
    %78 = vector.load %arg1[%c0_48, %c1_49, %c0_50, %c0_51] : memref<1x10x10x80xbf16, #tpu.memory_space<vmem>>, vector<1x1x10x80xbf16>
    %79 = vector.shape_cast %78 : vector<1x1x10x80xbf16> to vector<10x80xbf16>
    %80 = arith.extf %79 : vector<10x80xbf16> to vector<10x80xf32>
    %81 = vector.extract_strided_slice %80 {offsets = [0, 0], sizes = [8, 80], strides = [1, 1]} : vector<10x80xf32> to vector<8x80xf32>
    %82 = arith.truncf %81 : vector<8x80xf32> to vector<8x80xbf16>
    %c0_52 = arith.constant 0 : index
    %c0_53 = arith.constant 0 : index
    %c0_54 = arith.constant 0 : index
    %83 = vector.load %arg2[%c0_52, %c0_53, %c0_54] : memref<9x80x64xbf16, #tpu.memory_space<vmem>>, vector<1x80x64xbf16>
    %84 = vector.shape_cast %83 : vector<1x80x64xbf16> to vector<80x64xbf16>
    %cst_55 = arith.constant dense<0.000000e+00> : vector<8x64xf32>
    %85 = tpu.matmul %82, %84, %cst_55 {dimension_numbers = #tpu.dot_dimension_numbers<[1], [0], [0], [1], [0, 0, 1, 1], [], []>} : vector<8x80xbf16>, vector<80x64xbf16>, vector<8x64xf32> -> vector<8x64xf32>
    %86 = arith.addf %77, %85 : vector<8x64xf32>
    %87 = vector.extract_strided_slice %80 {offsets = [1, 0], sizes = [8, 80], strides = [1, 1]} : vector<10x80xf32> to vector<8x80xf32>
    %88 = arith.truncf %87 : vector<8x80xf32> to vector<8x80xbf16>
    %c1_56 = arith.constant 1 : index
    %c0_57 = arith.constant 0 : index
    %c0_58 = arith.constant 0 : index
    %89 = vector.load %arg2[%c1_56, %c0_57, %c0_58] : memref<9x80x64xbf16, #tpu.memory_space<vmem>>, vector<1x80x64xbf16>
    %90 = vector.shape_cast %89 : vector<1x80x64xbf16> to vector<80x64xbf16>
    %cst_59 = arith.constant dense<0.000000e+00> : vector<8x64xf32>
    %91 = tpu.matmul %88, %90, %cst_59 {dimension_numbers = #tpu.dot_dimension_numbers<[1], [0], [0], [1], [0, 0, 1, 1], [], []>} : vector<8x80xbf16>, vector<80x64xbf16>, vector<8x64xf32> -> vector<8x64xf32>
    %92 = arith.addf %86, %91 : vector<8x64xf32>
    %93 = vector.extract_strided_slice %80 {offsets = [2, 0], sizes = [8, 80], strides = [1, 1]} : vector<10x80xf32> to vector<8x80xf32>
    %94 = arith.truncf %93 : vector<8x80xf32> to vector<8x80xbf16>
    %c2_60 = arith.constant 2 : index
    %c0_61 = arith.constant 0 : index
    %c0_62 = arith.constant 0 : index
    %95 = vector.load %arg2[%c2_60, %c0_61, %c0_62] : memref<9x80x64xbf16, #tpu.memory_space<vmem>>, vector<1x80x64xbf16>
    %96 = vector.shape_cast %95 : vector<1x80x64xbf16> to vector<80x64xbf16>
    %cst_63 = arith.constant dense<0.000000e+00> : vector<8x64xf32>
    %97 = tpu.matmul %94, %96, %cst_63 {dimension_numbers = #tpu.dot_dimension_numbers<[1], [0], [0], [1], [0, 0, 1, 1], [], []>} : vector<8x80xbf16>, vector<80x64xbf16>, vector<8x64xf32> -> vector<8x64xf32>
    %98 = arith.addf %92, %97 : vector<8x64xf32>
    %c0_64 = arith.constant 0 : index
    %c2_65 = arith.constant 2 : index
    %c0_66 = arith.constant 0 : index
    %c0_67 = arith.constant 0 : index
    %99 = vector.load %arg1[%c0_64, %c2_65, %c0_66, %c0_67] : memref<1x10x10x80xbf16, #tpu.memory_space<vmem>>, vector<1x1x10x80xbf16>
    %100 = vector.shape_cast %99 : vector<1x1x10x80xbf16> to vector<10x80xbf16>
    %101 = arith.extf %100 : vector<10x80xbf16> to vector<10x80xf32>
    %102 = vector.extract_strided_slice %101 {offsets = [0, 0], sizes = [8, 80], strides = [1, 1]} : vector<10x80xf32> to vector<8x80xf32>
    %103 = arith.truncf %102 : vector<8x80xf32> to vector<8x80xbf16>
    %c3_68 = arith.constant 3 : index
    %c0_69 = arith.constant 0 : index
    %c0_70 = arith.constant 0 : index
    %104 = vector.load %arg2[%c3_68, %c0_69, %c0_70] : memref<9x80x64xbf16, #tpu.memory_space<vmem>>, vector<1x80x64xbf16>
    %105 = vector.shape_cast %104 : vector<1x80x64xbf16> to vector<80x64xbf16>
    %cst_71 = arith.constant dense<0.000000e+00> : vector<8x64xf32>
    %106 = tpu.matmul %103, %105, %cst_71 {dimension_numbers = #tpu.dot_dimension_numbers<[1], [0], [0], [1], [0, 0, 1, 1], [], []>} : vector<8x80xbf16>, vector<80x64xbf16>, vector<8x64xf32> -> vector<8x64xf32>
    %107 = arith.addf %98, %106 : vector<8x64xf32>
    %108 = vector.extract_strided_slice %101 {offsets = [1, 0], sizes = [8, 80], strides = [1, 1]} : vector<10x80xf32> to vector<8x80xf32>
    %109 = arith.truncf %108 : vector<8x80xf32> to vector<8x80xbf16>
    %c4_72 = arith.constant 4 : index
    %c0_73 = arith.constant 0 : index
    %c0_74 = arith.constant 0 : index
    %110 = vector.load %arg2[%c4_72, %c0_73, %c0_74] : memref<9x80x64xbf16, #tpu.memory_space<vmem>>, vector<1x80x64xbf16>
    %111 = vector.shape_cast %110 : vector<1x80x64xbf16> to vector<80x64xbf16>
    %cst_75 = arith.constant dense<0.000000e+00> : vector<8x64xf32>
    %112 = tpu.matmul %109, %111, %cst_75 {dimension_numbers = #tpu.dot_dimension_numbers<[1], [0], [0], [1], [0, 0, 1, 1], [], []>} : vector<8x80xbf16>, vector<80x64xbf16>, vector<8x64xf32> -> vector<8x64xf32>
    %113 = arith.addf %107, %112 : vector<8x64xf32>
    %114 = vector.extract_strided_slice %101 {offsets = [2, 0], sizes = [8, 80], strides = [1, 1]} : vector<10x80xf32> to vector<8x80xf32>
    %115 = arith.truncf %114 : vector<8x80xf32> to vector<8x80xbf16>
    %c5_76 = arith.constant 5 : index
    %c0_77 = arith.constant 0 : index
    %c0_78 = arith.constant 0 : index
    %116 = vector.load %arg2[%c5_76, %c0_77, %c0_78] : memref<9x80x64xbf16, #tpu.memory_space<vmem>>, vector<1x80x64xbf16>
    %117 = vector.shape_cast %116 : vector<1x80x64xbf16> to vector<80x64xbf16>
    %cst_79 = arith.constant dense<0.000000e+00> : vector<8x64xf32>
    %118 = tpu.matmul %115, %117, %cst_79 {dimension_numbers = #tpu.dot_dimension_numbers<[1], [0], [0], [1], [0, 0, 1, 1], [], []>} : vector<8x80xbf16>, vector<80x64xbf16>, vector<8x64xf32> -> vector<8x64xf32>
    %119 = arith.addf %113, %118 : vector<8x64xf32>
    %c0_80 = arith.constant 0 : index
    %c3_81 = arith.constant 3 : index
    %c0_82 = arith.constant 0 : index
    %c0_83 = arith.constant 0 : index
    %120 = vector.load %arg1[%c0_80, %c3_81, %c0_82, %c0_83] : memref<1x10x10x80xbf16, #tpu.memory_space<vmem>>, vector<1x1x10x80xbf16>
    %121 = vector.shape_cast %120 : vector<1x1x10x80xbf16> to vector<10x80xbf16>
    %122 = arith.extf %121 : vector<10x80xbf16> to vector<10x80xf32>
    %123 = vector.extract_strided_slice %122 {offsets = [0, 0], sizes = [8, 80], strides = [1, 1]} : vector<10x80xf32> to vector<8x80xf32>
    %124 = arith.truncf %123 : vector<8x80xf32> to vector<8x80xbf16>
    %c6_84 = arith.constant 6 : index
    %c0_85 = arith.constant 0 : index
    %c0_86 = arith.constant 0 : index
    %125 = vector.load %arg2[%c6_84, %c0_85, %c0_86] : memref<9x80x64xbf16, #tpu.memory_space<vmem>>, vector<1x80x64xbf16>
    %126 = vector.shape_cast %125 : vector<1x80x64xbf16> to vector<80x64xbf16>
    %cst_87 = arith.constant dense<0.000000e+00> : vector<8x64xf32>
    %127 = tpu.matmul %124, %126, %cst_87 {dimension_numbers = #tpu.dot_dimension_numbers<[1], [0], [0], [1], [0, 0, 1, 1], [], []>} : vector<8x80xbf16>, vector<80x64xbf16>, vector<8x64xf32> -> vector<8x64xf32>
    %128 = arith.addf %119, %127 : vector<8x64xf32>
    %129 = vector.extract_strided_slice %122 {offsets = [1, 0], sizes = [8, 80], strides = [1, 1]} : vector<10x80xf32> to vector<8x80xf32>
    %130 = arith.truncf %129 : vector<8x80xf32> to vector<8x80xbf16>
    %c7_88 = arith.constant 7 : index
    %c0_89 = arith.constant 0 : index
    %c0_90 = arith.constant 0 : index
    %131 = vector.load %arg2[%c7_88, %c0_89, %c0_90] : memref<9x80x64xbf16, #tpu.memory_space<vmem>>, vector<1x80x64xbf16>
    %132 = vector.shape_cast %131 : vector<1x80x64xbf16> to vector<80x64xbf16>
    %cst_91 = arith.constant dense<0.000000e+00> : vector<8x64xf32>
    %133 = tpu.matmul %130, %132, %cst_91 {dimension_numbers = #tpu.dot_dimension_numbers<[1], [0], [0], [1], [0, 0, 1, 1], [], []>} : vector<8x80xbf16>, vector<80x64xbf16>, vector<8x64xf32> -> vector<8x64xf32>
    %134 = arith.addf %128, %133 : vector<8x64xf32>
    %135 = vector.extract_strided_slice %122 {offsets = [2, 0], sizes = [8, 80], strides = [1, 1]} : vector<10x80xf32> to vector<8x80xf32>
    %136 = arith.truncf %135 : vector<8x80xf32> to vector<8x80xbf16>
    %c8_92 = arith.constant 8 : index
    %c0_93 = arith.constant 0 : index
    %c0_94 = arith.constant 0 : index
    %137 = vector.load %arg2[%c8_92, %c0_93, %c0_94] : memref<9x80x64xbf16, #tpu.memory_space<vmem>>, vector<1x80x64xbf16>
    %138 = vector.shape_cast %137 : vector<1x80x64xbf16> to vector<80x64xbf16>
    %cst_95 = arith.constant dense<0.000000e+00> : vector<8x64xf32>
    %139 = tpu.matmul %136, %138, %cst_95 {dimension_numbers = #tpu.dot_dimension_numbers<[1], [0], [0], [1], [0, 0, 1, 1], [], []>} : vector<8x80xbf16>, vector<80x64xbf16>, vector<8x64xf32> -> vector<8x64xf32>
    %140 = arith.addf %134, %139 : vector<8x64xf32>
    %141 = arith.truncf %140 : vector<8x64xf32> to vector<8x64xbf16>
    %c0_96 = arith.constant 0 : index
    %c1_97 = arith.constant 1 : index
    %c0_98 = arith.constant 0 : index
    %c0_99 = arith.constant 0 : index
    %142 = vector.load %arg3[%c0_96, %c1_97, %c0_98, %c0_99] : memref<1x8x8x64xbf16, #tpu.memory_space<vmem>>, vector<1x1x8x64xbf16>
    %143 = vector.shape_cast %142 : vector<1x1x8x64xbf16> to vector<8x64xbf16>
    %144 = vector.shape_cast %141 : vector<8x64xbf16> to vector<1x1x8x64xbf16>
    tpu.vector_store %arg3[%c0_96, %c1_97, %c0_98, %c0_99], %144 {strides = array<i32>} : memref<1x8x8x64xbf16, #tpu.memory_space<vmem>>, vector<1x1x8x64xbf16>,
    %cst_100 = arith.constant dense<0.000000e+00> : vector<64xf32>
    %145 = vector.multi_reduction <add>, %140, %cst_100 [0] : vector<8x64xf32> to vector<64xf32>
    %146 = vector.shape_cast %145 : vector<64xf32> to vector<1x64xf32>
    %147 = arith.addf %72, %146 : vector<1x64xf32>
    %148 = arith.mulf %140, %140 : vector<8x64xf32>
    %cst_101 = arith.constant dense<0.000000e+00> : vector<64xf32>
    %149 = vector.multi_reduction <add>, %148, %cst_101 [0] : vector<8x64xf32> to vector<64xf32>
    %150 = vector.shape_cast %149 : vector<64xf32> to vector<1x64xf32>
    %151 = arith.addf %76, %150 : vector<1x64xf32>
    %cst_102 = arith.constant 0.000000e+00 : f32
    %152 = vector.broadcast %cst_102 : f32 to vector<8x64xf32>
    %c0_103 = arith.constant 0 : index
    %c2_104 = arith.constant 2 : index
    %c0_105 = arith.constant 0 : index
    %c0_106 = arith.constant 0 : index
    %153 = vector.load %arg1[%c0_103, %c2_104, %c0_105, %c0_106] : memref<1x10x10x80xbf16, #tpu.memory_space<vmem>>, vector<1x1x10x80xbf16>
    %154 = vector.shape_cast %153 : vector<1x1x10x80xbf16> to vector<10x80xbf16>
    %155 = arith.extf %154 : vector<10x80xbf16> to vector<10x80xf32>
    %156 = vector.extract_strided_slice %155 {offsets = [0, 0], sizes = [8, 80], strides = [1, 1]} : vector<10x80xf32> to vector<8x80xf32>
    %157 = arith.truncf %156 : vector<8x80xf32> to vector<8x80xbf16>
    %c0_107 = arith.constant 0 : index
    %c0_108 = arith.constant 0 : index
    %c0_109 = arith.constant 0 : index
    %158 = vector.load %arg2[%c0_107, %c0_108, %c0_109] : memref<9x80x64xbf16, #tpu.memory_space<vmem>>, vector<1x80x64xbf16>
    %159 = vector.shape_cast %158 : vector<1x80x64xbf16> to vector<80x64xbf16>
    %cst_110 = arith.constant dense<0.000000e+00> : vector<8x64xf32>
    %160 = tpu.matmul %157, %159, %cst_110 {dimension_numbers = #tpu.dot_dimension_numbers<[1], [0], [0], [1], [0, 0, 1, 1], [], []>} : vector<8x80xbf16>, vector<80x64xbf16>, vector<8x64xf32> -> vector<8x64xf32>
    %161 = arith.addf %152, %160 : vector<8x64xf32>
    %162 = vector.extract_strided_slice %155 {offsets = [1, 0], sizes = [8, 80], strides = [1, 1]} : vector<10x80xf32> to vector<8x80xf32>
    %163 = arith.truncf %162 : vector<8x80xf32> to vector<8x80xbf16>
    %c1_111 = arith.constant 1 : index
    %c0_112 = arith.constant 0 : index
    %c0_113 = arith.constant 0 : index
    %164 = vector.load %arg2[%c1_111, %c0_112, %c0_113] : memref<9x80x64xbf16, #tpu.memory_space<vmem>>, vector<1x80x64xbf16>
    %165 = vector.shape_cast %164 : vector<1x80x64xbf16> to vector<80x64xbf16>
    %cst_114 = arith.constant dense<0.000000e+00> : vector<8x64xf32>
    %166 = tpu.matmul %163, %165, %cst_114 {dimension_numbers = #tpu.dot_dimension_numbers<[1], [0], [0], [1], [0, 0, 1, 1], [], []>} : vector<8x80xbf16>, vector<80x64xbf16>, vector<8x64xf32> -> vector<8x64xf32>
    %167 = arith.addf %161, %166 : vector<8x64xf32>
    %168 = vector.extract_strided_slice %155 {offsets = [2, 0], sizes = [8, 80], strides = [1, 1]} : vector<10x80xf32> to vector<8x80xf32>
    %169 = arith.truncf %168 : vector<8x80xf32> to vector<8x80xbf16>
    %c2_115 = arith.constant 2 : index
    %c0_116 = arith.constant 0 : index
    %c0_117 = arith.constant 0 : index
    %170 = vector.load %arg2[%c2_115, %c0_116, %c0_117] : memref<9x80x64xbf16, #tpu.memory_space<vmem>>, vector<1x80x64xbf16>
    %171 = vector.shape_cast %170 : vector<1x80x64xbf16> to vector<80x64xbf16>
    %cst_118 = arith.constant dense<0.000000e+00> : vector<8x64xf32>
    %172 = tpu.matmul %169, %171, %cst_118 {dimension_numbers = #tpu.dot_dimension_numbers<[1], [0], [0], [1], [0, 0, 1, 1], [], []>} : vector<8x80xbf16>, vector<80x64xbf16>, vector<8x64xf32> -> vector<8x64xf32>
    %173 = arith.addf %167, %172 : vector<8x64xf32>
    %c0_119 = arith.constant 0 : index
    %c3_120 = arith.constant 3 : index
    %c0_121 = arith.constant 0 : index
    %c0_122 = arith.constant 0 : index
    %174 = vector.load %arg1[%c0_119, %c3_120, %c0_121, %c0_122] : memref<1x10x10x80xbf16, #tpu.memory_space<vmem>>, vector<1x1x10x80xbf16>
    %175 = vector.shape_cast %174 : vector<1x1x10x80xbf16> to vector<10x80xbf16>
    %176 = arith.extf %175 : vector<10x80xbf16> to vector<10x80xf32>
    %177 = vector.extract_strided_slice %176 {offsets = [0, 0], sizes = [8, 80], strides = [1, 1]} : vector<10x80xf32> to vector<8x80xf32>
    %178 = arith.truncf %177 : vector<8x80xf32> to vector<8x80xbf16>
    %c3_123 = arith.constant 3 : index
    %c0_124 = arith.constant 0 : index
    %c0_125 = arith.constant 0 : index
    %179 = vector.load %arg2[%c3_123, %c0_124, %c0_125] : memref<9x80x64xbf16, #tpu.memory_space<vmem>>, vector<1x80x64xbf16>
    %180 = vector.shape_cast %179 : vector<1x80x64xbf16> to vector<80x64xbf16>
    %cst_126 = arith.constant dense<0.000000e+00> : vector<8x64xf32>
    %181 = tpu.matmul %178, %180, %cst_126 {dimension_numbers = #tpu.dot_dimension_numbers<[1], [0], [0], [1], [0, 0, 1, 1], [], []>} : vector<8x80xbf16>, vector<80x64xbf16>, vector<8x64xf32> -> vector<8x64xf32>
    %182 = arith.addf %173, %181 : vector<8x64xf32>
    %183 = vector.extract_strided_slice %176 {offsets = [1, 0], sizes = [8, 80], strides = [1, 1]} : vector<10x80xf32> to vector<8x80xf32>
    %184 = arith.truncf %183 : vector<8x80xf32> to vector<8x80xbf16>
    %c4_127 = arith.constant 4 : index
    %c0_128 = arith.constant 0 : index
    %c0_129 = arith.constant 0 : index
    %185 = vector.load %arg2[%c4_127, %c0_128, %c0_129] : memref<9x80x64xbf16, #tpu.memory_space<vmem>>, vector<1x80x64xbf16>
    %186 = vector.shape_cast %185 : vector<1x80x64xbf16> to vector<80x64xbf16>
    %cst_130 = arith.constant dense<0.000000e+00> : vector<8x64xf32>
    %187 = tpu.matmul %184, %186, %cst_130 {dimension_numbers = #tpu.dot_dimension_numbers<[1], [0], [0], [1], [0, 0, 1, 1], [], []>} : vector<8x80xbf16>, vector<80x64xbf16>, vector<8x64xf32> -> vector<8x64xf32>
    %188 = arith.addf %182, %187 : vector<8x64xf32>
    %189 = vector.extract_strided_slice %176 {offsets = [2, 0], sizes = [8, 80], strides = [1, 1]} : vector<10x80xf32> to vector<8x80xf32>
    %190 = arith.truncf %189 : vector<8x80xf32> to vector<8x80xbf16>
    %c5_131 = arith.constant 5 : index
    %c0_132 = arith.constant 0 : index
    %c0_133 = arith.constant 0 : index
    %191 = vector.load %arg2[%c5_131, %c0_132, %c0_133] : memref<9x80x64xbf16, #tpu.memory_space<vmem>>, vector<1x80x64xbf16>
    %192 = vector.shape_cast %191 : vector<1x80x64xbf16> to vector<80x64xbf16>
    %cst_134 = arith.constant dense<0.000000e+00> : vector<8x64xf32>
    %193 = tpu.matmul %190, %192, %cst_134 {dimension_numbers = #tpu.dot_dimension_numbers<[1], [0], [0], [1], [0, 0, 1, 1], [], []>} : vector<8x80xbf16>, vector<80x64xbf16>, vector<8x64xf32> -> vector<8x64xf32>
    %194 = arith.addf %188, %193 : vector<8x64xf32>
    %c0_135 = arith.constant 0 : index
    %c4_136 = arith.constant 4 : index
    %c0_137 = arith.constant 0 : index
    %c0_138 = arith.constant 0 : index
    %195 = vector.load %arg1[%c0_135, %c4_136, %c0_137, %c0_138] : memref<1x10x10x80xbf16, #tpu.memory_space<vmem>>, vector<1x1x10x80xbf16>
    %196 = vector.shape_cast %195 : vector<1x1x10x80xbf16> to vector<10x80xbf16>
    %197 = arith.extf %196 : vector<10x80xbf16> to vector<10x80xf32>
    %198 = vector.extract_strided_slice %197 {offsets = [0, 0], sizes = [8, 80], strides = [1, 1]} : vector<10x80xf32> to vector<8x80xf32>
    %199 = arith.truncf %198 : vector<8x80xf32> to vector<8x80xbf16>
    %c6_139 = arith.constant 6 : index
    %c0_140 = arith.constant 0 : index
    %c0_141 = arith.constant 0 : index
    %200 = vector.load %arg2[%c6_139, %c0_140, %c0_141] : memref<9x80x64xbf16, #tpu.memory_space<vmem>>, vector<1x80x64xbf16>
    %201 = vector.shape_cast %200 : vector<1x80x64xbf16> to vector<80x64xbf16>
    %cst_142 = arith.constant dense<0.000000e+00> : vector<8x64xf32>
    %202 = tpu.matmul %199, %201, %cst_142 {dimension_numbers = #tpu.dot_dimension_numbers<[1], [0], [0], [1], [0, 0, 1, 1], [], []>} : vector<8x80xbf16>, vector<80x64xbf16>, vector<8x64xf32> -> vector<8x64xf32>
    %203 = arith.addf %194, %202 : vector<8x64xf32>
    %204 = vector.extract_strided_slice %197 {offsets = [1, 0], sizes = [8, 80], strides = [1, 1]} : vector<10x80xf32> to vector<8x80xf32>
    %205 = arith.truncf %204 : vector<8x80xf32> to vector<8x80xbf16>
    %c7_143 = arith.constant 7 : index
    %c0_144 = arith.constant 0 : index
    %c0_145 = arith.constant 0 : index
    %206 = vector.load %arg2[%c7_143, %c0_144, %c0_145] : memref<9x80x64xbf16, #tpu.memory_space<vmem>>, vector<1x80x64xbf16>
    %207 = vector.shape_cast %206 : vector<1x80x64xbf16> to vector<80x64xbf16>
    %cst_146 = arith.constant dense<0.000000e+00> : vector<8x64xf32>
    %208 = tpu.matmul %205, %207, %cst_146 {dimension_numbers = #tpu.dot_dimension_numbers<[1], [0], [0], [1], [0, 0, 1, 1], [], []>} : vector<8x80xbf16>, vector<80x64xbf16>, vector<8x64xf32> -> vector<8x64xf32>
    %209 = arith.addf %203, %208 : vector<8x64xf32>
    %210 = vector.extract_strided_slice %197 {offsets = [2, 0], sizes = [8, 80], strides = [1, 1]} : vector<10x80xf32> to vector<8x80xf32>
    %211 = arith.truncf %210 : vector<8x80xf32> to vector<8x80xbf16>
    %c8_147 = arith.constant 8 : index
    %c0_148 = arith.constant 0 : index
    %c0_149 = arith.constant 0 : index
    %212 = vector.load %arg2[%c8_147, %c0_148, %c0_149] : memref<9x80x64xbf16, #tpu.memory_space<vmem>>, vector<1x80x64xbf16>
    %213 = vector.shape_cast %212 : vector<1x80x64xbf16> to vector<80x64xbf16>
    %cst_150 = arith.constant dense<0.000000e+00> : vector<8x64xf32>
    %214 = tpu.matmul %211, %213, %cst_150 {dimension_numbers = #tpu.dot_dimension_numbers<[1], [0], [0], [1], [0, 0, 1, 1], [], []>} : vector<8x80xbf16>, vector<80x64xbf16>, vector<8x64xf32> -> vector<8x64xf32>
    %215 = arith.addf %209, %214 : vector<8x64xf32>
    %216 = arith.truncf %215 : vector<8x64xf32> to vector<8x64xbf16>
    %c0_151 = arith.constant 0 : index
    %c2_152 = arith.constant 2 : index
    %c0_153 = arith.constant 0 : index
    %c0_154 = arith.constant 0 : index
    %217 = vector.load %arg3[%c0_151, %c2_152, %c0_153, %c0_154] : memref<1x8x8x64xbf16, #tpu.memory_space<vmem>>, vector<1x1x8x64xbf16>
    %218 = vector.shape_cast %217 : vector<1x1x8x64xbf16> to vector<8x64xbf16>
    %219 = vector.shape_cast %216 : vector<8x64xbf16> to vector<1x1x8x64xbf16>
    tpu.vector_store %arg3[%c0_151, %c2_152, %c0_153, %c0_154], %219 {strides = array<i32>} : memref<1x8x8x64xbf16, #tpu.memory_space<vmem>>, vector<1x1x8x64xbf16>,
    %cst_155 = arith.constant dense<0.000000e+00> : vector<64xf32>
    %220 = vector.multi_reduction <add>, %215, %cst_155 [0] : vector<8x64xf32> to vector<64xf32>
    %221 = vector.shape_cast %220 : vector<64xf32> to vector<1x64xf32>
    %222 = arith.addf %147, %221 : vector<1x64xf32>
    %223 = arith.mulf %215, %215 : vector<8x64xf32>
    %cst_156 = arith.constant dense<0.000000e+00> : vector<64xf32>
    %224 = vector.multi_reduction <add>, %223, %cst_156 [0] : vector<8x64xf32> to vector<64xf32>
    %225 = vector.shape_cast %224 : vector<64xf32> to vector<1x64xf32>
    %226 = arith.addf %151, %225 : vector<1x64xf32>
    %cst_157 = arith.constant 0.000000e+00 : f32
    %227 = vector.broadcast %cst_157 : f32 to vector<8x64xf32>
    %c0_158 = arith.constant 0 : index
    %c3_159 = arith.constant 3 : index
    %c0_160 = arith.constant 0 : index
    %c0_161 = arith.constant 0 : index
    %228 = vector.load %arg1[%c0_158, %c3_159, %c0_160, %c0_161] : memref<1x10x10x80xbf16, #tpu.memory_space<vmem>>, vector<1x1x10x80xbf16>
    %229 = vector.shape_cast %228 : vector<1x1x10x80xbf16> to vector<10x80xbf16>
    %230 = arith.extf %229 : vector<10x80xbf16> to vector<10x80xf32>
    %231 = vector.extract_strided_slice %230 {offsets = [0, 0], sizes = [8, 80], strides = [1, 1]} : vector<10x80xf32> to vector<8x80xf32>
    %232 = arith.truncf %231 : vector<8x80xf32> to vector<8x80xbf16>
    %c0_162 = arith.constant 0 : index
    %c0_163 = arith.constant 0 : index
    %c0_164 = arith.constant 0 : index
    %233 = vector.load %arg2[%c0_162, %c0_163, %c0_164] : memref<9x80x64xbf16, #tpu.memory_space<vmem>>, vector<1x80x64xbf16>
    %234 = vector.shape_cast %233 : vector<1x80x64xbf16> to vector<80x64xbf16>
    %cst_165 = arith.constant dense<0.000000e+00> : vector<8x64xf32>
    %235 = tpu.matmul %232, %234, %cst_165 {dimension_numbers = #tpu.dot_dimension_numbers<[1], [0], [0], [1], [0, 0, 1, 1], [], []>} : vector<8x80xbf16>, vector<80x64xbf16>, vector<8x64xf32> -> vector<8x64xf32>
    %236 = arith.addf %227, %235 : vector<8x64xf32>
    %237 = vector.extract_strided_slice %230 {offsets = [1, 0], sizes = [8, 80], strides = [1, 1]} : vector<10x80xf32> to vector<8x80xf32>
    %238 = arith.truncf %237 : vector<8x80xf32> to vector<8x80xbf16>
    %c1_166 = arith.constant 1 : index
    %c0_167 = arith.constant 0 : index
    %c0_168 = arith.constant 0 : index
    %239 = vector.load %arg2[%c1_166, %c0_167, %c0_168] : memref<9x80x64xbf16, #tpu.memory_space<vmem>>, vector<1x80x64xbf16>
    %240 = vector.shape_cast %239 : vector<1x80x64xbf16> to vector<80x64xbf16>
    %cst_169 = arith.constant dense<0.000000e+00> : vector<8x64xf32>
    %241 = tpu.matmul %238, %240, %cst_169 {dimension_numbers = #tpu.dot_dimension_numbers<[1], [0], [0], [1], [0, 0, 1, 1], [], []>} : vector<8x80xbf16>, vector<80x64xbf16>, vector<8x64xf32> -> vector<8x64xf32>
    %242 = arith.addf %236, %241 : vector<8x64xf32>
    %243 = vector.extract_strided_slice %230 {offsets = [2, 0], sizes = [8, 80], strides = [1, 1]} : vector<10x80xf32> to vector<8x80xf32>
    %244 = arith.truncf %243 : vector<8x80xf32> to vector<8x80xbf16>
    %c2_170 = arith.constant 2 : index
    %c0_171 = arith.constant 0 : index
    %c0_172 = arith.constant 0 : index
    %245 = vector.load %arg2[%c2_170, %c0_171, %c0_172] : memref<9x80x64xbf16, #tpu.memory_space<vmem>>, vector<1x80x64xbf16>
    %246 = vector.shape_cast %245 : vector<1x80x64xbf16> to vector<80x64xbf16>
    %cst_173 = arith.constant dense<0.000000e+00> : vector<8x64xf32>
    %247 = tpu.matmul %244, %246, %cst_173 {dimension_numbers = #tpu.dot_dimension_numbers<[1], [0], [0], [1], [0, 0, 1, 1], [], []>} : vector<8x80xbf16>, vector<80x64xbf16>, vector<8x64xf32> -> vector<8x64xf32>
    %248 = arith.addf %242, %247 : vector<8x64xf32>
    %c0_174 = arith.constant 0 : index
    %c4_175 = arith.constant 4 : index
    %c0_176 = arith.constant 0 : index
    %c0_177 = arith.constant 0 : index
    %249 = vector.load %arg1[%c0_174, %c4_175, %c0_176, %c0_177] : memref<1x10x10x80xbf16, #tpu.memory_space<vmem>>, vector<1x1x10x80xbf16>
    %250 = vector.shape_cast %249 : vector<1x1x10x80xbf16> to vector<10x80xbf16>
    %251 = arith.extf %250 : vector<10x80xbf16> to vector<10x80xf32>
    %252 = vector.extract_strided_slice %251 {offsets = [0, 0], sizes = [8, 80], strides = [1, 1]} : vector<10x80xf32> to vector<8x80xf32>
    %253 = arith.truncf %252 : vector<8x80xf32> to vector<8x80xbf16>
    %c3_178 = arith.constant 3 : index
    %c0_179 = arith.constant 0 : index
    %c0_180 = arith.constant 0 : index
    %254 = vector.load %arg2[%c3_178, %c0_179, %c0_180] : memref<9x80x64xbf16, #tpu.memory_space<vmem>>, vector<1x80x64xbf16>
    %255 = vector.shape_cast %254 : vector<1x80x64xbf16> to vector<80x64xbf16>
    %cst_181 = arith.constant dense<0.000000e+00> : vector<8x64xf32>
    %256 = tpu.matmul %253, %255, %cst_181 {dimension_numbers = #tpu.dot_dimension_numbers<[1], [0], [0], [1], [0, 0, 1, 1], [], []>} : vector<8x80xbf16>, vector<80x64xbf16>, vector<8x64xf32> -> vector<8x64xf32>
    %257 = arith.addf %248, %256 : vector<8x64xf32>
    %258 = vector.extract_strided_slice %251 {offsets = [1, 0], sizes = [8, 80], strides = [1, 1]} : vector<10x80xf32> to vector<8x80xf32>
    %259 = arith.truncf %258 : vector<8x80xf32> to vector<8x80xbf16>
    %c4_182 = arith.constant 4 : index
    %c0_183 = arith.constant 0 : index
    %c0_184 = arith.constant 0 : index
    %260 = vector.load %arg2[%c4_182, %c0_183, %c0_184] : memref<9x80x64xbf16, #tpu.memory_space<vmem>>, vector<1x80x64xbf16>
    %261 = vector.shape_cast %260 : vector<1x80x64xbf16> to vector<80x64xbf16>
    %cst_185 = arith.constant dense<0.000000e+00> : vector<8x64xf32>
    %262 = tpu.matmul %259, %261, %cst_185 {dimension_numbers = #tpu.dot_dimension_numbers<[1], [0], [0], [1], [0, 0, 1, 1], [], []>} : vector<8x80xbf16>, vector<80x64xbf16>, vector<8x64xf32> -> vector<8x64xf32>
    %263 = arith.addf %257, %262 : vector<8x64xf32>
    %264 = vector.extract_strided_slice %251 {offsets = [2, 0], sizes = [8, 80], strides = [1, 1]} : vector<10x80xf32> to vector<8x80xf32>
    %265 = arith.truncf %264 : vector<8x80xf32> to vector<8x80xbf16>
    %c5_186 = arith.constant 5 : index
    %c0_187 = arith.constant 0 : index
    %c0_188 = arith.constant 0 : index
    %266 = vector.load %arg2[%c5_186, %c0_187, %c0_188] : memref<9x80x64xbf16, #tpu.memory_space<vmem>>, vector<1x80x64xbf16>
    %267 = vector.shape_cast %266 : vector<1x80x64xbf16> to vector<80x64xbf16>
    %cst_189 = arith.constant dense<0.000000e+00> : vector<8x64xf32>
    %268 = tpu.matmul %265, %267, %cst_189 {dimension_numbers = #tpu.dot_dimension_numbers<[1], [0], [0], [1], [0, 0, 1, 1], [], []>} : vector<8x80xbf16>, vector<80x64xbf16>, vector<8x64xf32> -> vector<8x64xf32>
    %269 = arith.addf %263, %268 : vector<8x64xf32>
    %c0_190 = arith.constant 0 : index
    %c5_191 = arith.constant 5 : index
    %c0_192 = arith.constant 0 : index
    %c0_193 = arith.constant 0 : index
    %270 = vector.load %arg1[%c0_190, %c5_191, %c0_192, %c0_193] : memref<1x10x10x80xbf16, #tpu.memory_space<vmem>>, vector<1x1x10x80xbf16>
    %271 = vector.shape_cast %270 : vector<1x1x10x80xbf16> to vector<10x80xbf16>
    %272 = arith.extf %271 : vector<10x80xbf16> to vector<10x80xf32>
    %273 = vector.extract_strided_slice %272 {offsets = [0, 0], sizes = [8, 80], strides = [1, 1]} : vector<10x80xf32> to vector<8x80xf32>
    %274 = arith.truncf %273 : vector<8x80xf32> to vector<8x80xbf16>
    %c6_194 = arith.constant 6 : index
    %c0_195 = arith.constant 0 : index
    %c0_196 = arith.constant 0 : index
    %275 = vector.load %arg2[%c6_194, %c0_195, %c0_196] : memref<9x80x64xbf16, #tpu.memory_space<vmem>>, vector<1x80x64xbf16>
    %276 = vector.shape_cast %275 : vector<1x80x64xbf16> to vector<80x64xbf16>
    %cst_197 = arith.constant dense<0.000000e+00> : vector<8x64xf32>
    %277 = tpu.matmul %274, %276, %cst_197 {dimension_numbers = #tpu.dot_dimension_numbers<[1], [0], [0], [1], [0, 0, 1, 1], [], []>} : vector<8x80xbf16>, vector<80x64xbf16>, vector<8x64xf32> -> vector<8x64xf32>
    %278 = arith.addf %269, %277 : vector<8x64xf32>
    %279 = vector.extract_strided_slice %272 {offsets = [1, 0], sizes = [8, 80], strides = [1, 1]} : vector<10x80xf32> to vector<8x80xf32>
    %280 = arith.truncf %279 : vector<8x80xf32> to vector<8x80xbf16>
    %c7_198 = arith.constant 7 : index
    %c0_199 = arith.constant 0 : index
    %c0_200 = arith.constant 0 : index
    %281 = vector.load %arg2[%c7_198, %c0_199, %c0_200] : memref<9x80x64xbf16, #tpu.memory_space<vmem>>, vector<1x80x64xbf16>
    %282 = vector.shape_cast %281 : vector<1x80x64xbf16> to vector<80x64xbf16>
    %cst_201 = arith.constant dense<0.000000e+00> : vector<8x64xf32>
    %283 = tpu.matmul %280, %282, %cst_201 {dimension_numbers = #tpu.dot_dimension_numbers<[1], [0], [0], [1], [0, 0, 1, 1], [], []>} : vector<8x80xbf16>, vector<80x64xbf16>, vector<8x64xf32> -> vector<8x64xf32>
    %284 = arith.addf %278, %283 : vector<8x64xf32>
    %285 = vector.extract_strided_slice %272 {offsets = [2, 0], sizes = [8, 80], strides = [1, 1]} : vector<10x80xf32> to vector<8x80xf32>
    %286 = arith.truncf %285 : vector<8x80xf32> to vector<8x80xbf16>
    %c8_202 = arith.constant 8 : index
    %c0_203 = arith.constant 0 : index
    %c0_204 = arith.constant 0 : index
    %287 = vector.load %arg2[%c8_202, %c0_203, %c0_204] : memref<9x80x64xbf16, #tpu.memory_space<vmem>>, vector<1x80x64xbf16>
    %288 = vector.shape_cast %287 : vector<1x80x64xbf16> to vector<80x64xbf16>
    %cst_205 = arith.constant dense<0.000000e+00> : vector<8x64xf32>
    %289 = tpu.matmul %286, %288, %cst_205 {dimension_numbers = #tpu.dot_dimension_numbers<[1], [0], [0], [1], [0, 0, 1, 1], [], []>} : vector<8x80xbf16>, vector<80x64xbf16>, vector<8x64xf32> -> vector<8x64xf32>
    %290 = arith.addf %284, %289 : vector<8x64xf32>
    %291 = arith.truncf %290 : vector<8x64xf32> to vector<8x64xbf16>
    %c0_206 = arith.constant 0 : index
    %c3_207 = arith.constant 3 : index
    %c0_208 = arith.constant 0 : index
    %c0_209 = arith.constant 0 : index
    %292 = vector.load %arg3[%c0_206, %c3_207, %c0_208, %c0_209] : memref<1x8x8x64xbf16, #tpu.memory_space<vmem>>, vector<1x1x8x64xbf16>
    %293 = vector.shape_cast %292 : vector<1x1x8x64xbf16> to vector<8x64xbf16>
    %294 = vector.shape_cast %291 : vector<8x64xbf16> to vector<1x1x8x64xbf16>
    tpu.vector_store %arg3[%c0_206, %c3_207, %c0_208, %c0_209], %294 {strides = array<i32>} : memref<1x8x8x64xbf16, #tpu.memory_space<vmem>>, vector<1x1x8x64xbf16>,
    %cst_210 = arith.constant dense<0.000000e+00> : vector<64xf32>
    %295 = vector.multi_reduction <add>, %290, %cst_210 [0] : vector<8x64xf32> to vector<64xf32>
    %296 = vector.shape_cast %295 : vector<64xf32> to vector<1x64xf32>
    %297 = arith.addf %222, %296 : vector<1x64xf32>
    %298 = arith.mulf %290, %290 : vector<8x64xf32>
    %cst_211 = arith.constant dense<0.000000e+00> : vector<64xf32>
    %299 = vector.multi_reduction <add>, %298, %cst_211 [0] : vector<8x64xf32> to vector<64xf32>
    %300 = vector.shape_cast %299 : vector<64xf32> to vector<1x64xf32>
    %301 = arith.addf %226, %300 : vector<1x64xf32>
    %cst_212 = arith.constant 0.000000e+00 : f32
    %302 = vector.broadcast %cst_212 : f32 to vector<8x64xf32>
    %c0_213 = arith.constant 0 : index
    %c4_214 = arith.constant 4 : index
    %c0_215 = arith.constant 0 : index
    %c0_216 = arith.constant 0 : index
    %303 = vector.load %arg1[%c0_213, %c4_214, %c0_215, %c0_216] : memref<1x10x10x80xbf16, #tpu.memory_space<vmem>>, vector<1x1x10x80xbf16>
    %304 = vector.shape_cast %303 : vector<1x1x10x80xbf16> to vector<10x80xbf16>
    %305 = arith.extf %304 : vector<10x80xbf16> to vector<10x80xf32>
    %306 = vector.extract_strided_slice %305 {offsets = [0, 0], sizes = [8, 80], strides = [1, 1]} : vector<10x80xf32> to vector<8x80xf32>
    %307 = arith.truncf %306 : vector<8x80xf32> to vector<8x80xbf16>
    %c0_217 = arith.constant 0 : index
    %c0_218 = arith.constant 0 : index
    %c0_219 = arith.constant 0 : index
    %308 = vector.load %arg2[%c0_217, %c0_218, %c0_219] : memref<9x80x64xbf16, #tpu.memory_space<vmem>>, vector<1x80x64xbf16>
    %309 = vector.shape_cast %308 : vector<1x80x64xbf16> to vector<80x64xbf16>
    %cst_220 = arith.constant dense<0.000000e+00> : vector<8x64xf32>
    %310 = tpu.matmul %307, %309, %cst_220 {dimension_numbers = #tpu.dot_dimension_numbers<[1], [0], [0], [1], [0, 0, 1, 1], [], []>} : vector<8x80xbf16>, vector<80x64xbf16>, vector<8x64xf32> -> vector<8x64xf32>
    %311 = arith.addf %302, %310 : vector<8x64xf32>
    %312 = vector.extract_strided_slice %305 {offsets = [1, 0], sizes = [8, 80], strides = [1, 1]} : vector<10x80xf32> to vector<8x80xf32>
    %313 = arith.truncf %312 : vector<8x80xf32> to vector<8x80xbf16>
    %c1_221 = arith.constant 1 : index
    %c0_222 = arith.constant 0 : index
    %c0_223 = arith.constant 0 : index
    %314 = vector.load %arg2[%c1_221, %c0_222, %c0_223] : memref<9x80x64xbf16, #tpu.memory_space<vmem>>, vector<1x80x64xbf16>
    %315 = vector.shape_cast %314 : vector<1x80x64xbf16> to vector<80x64xbf16>
    %cst_224 = arith.constant dense<0.000000e+00> : vector<8x64xf32>
    %316 = tpu.matmul %313, %315, %cst_224 {dimension_numbers = #tpu.dot_dimension_numbers<[1], [0], [0], [1], [0, 0, 1, 1], [], []>} : vector<8x80xbf16>, vector<80x64xbf16>, vector<8x64xf32> -> vector<8x64xf32>
    %317 = arith.addf %311, %316 : vector<8x64xf32>
    %318 = vector.extract_strided_slice %305 {offsets = [2, 0], sizes = [8, 80], strides = [1, 1]} : vector<10x80xf32> to vector<8x80xf32>
    %319 = arith.truncf %318 : vector<8x80xf32> to vector<8x80xbf16>
    %c2_225 = arith.constant 2 : index
    %c0_226 = arith.constant 0 : index
    %c0_227 = arith.constant 0 : index
    %320 = vector.load %arg2[%c2_225, %c0_226, %c0_227] : memref<9x80x64xbf16, #tpu.memory_space<vmem>>, vector<1x80x64xbf16>
    %321 = vector.shape_cast %320 : vector<1x80x64xbf16> to vector<80x64xbf16>
    %cst_228 = arith.constant dense<0.000000e+00> : vector<8x64xf32>
    %322 = tpu.matmul %319, %321, %cst_228 {dimension_numbers = #tpu.dot_dimension_numbers<[1], [0], [0], [1], [0, 0, 1, 1], [], []>} : vector<8x80xbf16>, vector<80x64xbf16>, vector<8x64xf32> -> vector<8x64xf32>
    %323 = arith.addf %317, %322 : vector<8x64xf32>
    %c0_229 = arith.constant 0 : index
    %c5_230 = arith.constant 5 : index
    %c0_231 = arith.constant 0 : index
    %c0_232 = arith.constant 0 : index
    %324 = vector.load %arg1[%c0_229, %c5_230, %c0_231, %c0_232] : memref<1x10x10x80xbf16, #tpu.memory_space<vmem>>, vector<1x1x10x80xbf16>
    %325 = vector.shape_cast %324 : vector<1x1x10x80xbf16> to vector<10x80xbf16>
    %326 = arith.extf %325 : vector<10x80xbf16> to vector<10x80xf32>
    %327 = vector.extract_strided_slice %326 {offsets = [0, 0], sizes = [8, 80], strides = [1, 1]} : vector<10x80xf32> to vector<8x80xf32>
    %328 = arith.truncf %327 : vector<8x80xf32> to vector<8x80xbf16>
    %c3_233 = arith.constant 3 : index
    %c0_234 = arith.constant 0 : index
    %c0_235 = arith.constant 0 : index
    %329 = vector.load %arg2[%c3_233, %c0_234, %c0_235] : memref<9x80x64xbf16, #tpu.memory_space<vmem>>, vector<1x80x64xbf16>
    %330 = vector.shape_cast %329 : vector<1x80x64xbf16> to vector<80x64xbf16>
    %cst_236 = arith.constant dense<0.000000e+00> : vector<8x64xf32>
    %331 = tpu.matmul %328, %330, %cst_236 {dimension_numbers = #tpu.dot_dimension_numbers<[1], [0], [0], [1], [0, 0, 1, 1], [], []>} : vector<8x80xbf16>, vector<80x64xbf16>, vector<8x64xf32> -> vector<8x64xf32>
    %332 = arith.addf %323, %331 : vector<8x64xf32>
    %333 = vector.extract_strided_slice %326 {offsets = [1, 0], sizes = [8, 80], strides = [1, 1]} : vector<10x80xf32> to vector<8x80xf32>
    %334 = arith.truncf %333 : vector<8x80xf32> to vector<8x80xbf16>
    %c4_237 = arith.constant 4 : index
    %c0_238 = arith.constant 0 : index
    %c0_239 = arith.constant 0 : index
    %335 = vector.load %arg2[%c4_237, %c0_238, %c0_239] : memref<9x80x64xbf16, #tpu.memory_space<vmem>>, vector<1x80x64xbf16>
    %336 = vector.shape_cast %335 : vector<1x80x64xbf16> to vector<80x64xbf16>
    %cst_240 = arith.constant dense<0.000000e+00> : vector<8x64xf32>
    %337 = tpu.matmul %334, %336, %cst_240 {dimension_numbers = #tpu.dot_dimension_numbers<[1], [0], [0], [1], [0, 0, 1, 1], [], []>} : vector<8x80xbf16>, vector<80x64xbf16>, vector<8x64xf32> -> vector<8x64xf32>
    %338 = arith.addf %332, %337 : vector<8x64xf32>
    %339 = vector.extract_strided_slice %326 {offsets = [2, 0], sizes = [8, 80], strides = [1, 1]} : vector<10x80xf32> to vector<8x80xf32>
    %340 = arith.truncf %339 : vector<8x80xf32> to vector<8x80xbf16>
    %c5_241 = arith.constant 5 : index
    %c0_242 = arith.constant 0 : index
    %c0_243 = arith.constant 0 : index
    %341 = vector.load %arg2[%c5_241, %c0_242, %c0_243] : memref<9x80x64xbf16, #tpu.memory_space<vmem>>, vector<1x80x64xbf16>
    %342 = vector.shape_cast %341 : vector<1x80x64xbf16> to vector<80x64xbf16>
    %cst_244 = arith.constant dense<0.000000e+00> : vector<8x64xf32>
    %343 = tpu.matmul %340, %342, %cst_244 {dimension_numbers = #tpu.dot_dimension_numbers<[1], [0], [0], [1], [0, 0, 1, 1], [], []>} : vector<8x80xbf16>, vector<80x64xbf16>, vector<8x64xf32> -> vector<8x64xf32>
    %344 = arith.addf %338, %343 : vector<8x64xf32>
    %c0_245 = arith.constant 0 : index
    %c6_246 = arith.constant 6 : index
    %c0_247 = arith.constant 0 : index
    %c0_248 = arith.constant 0 : index
    %345 = vector.load %arg1[%c0_245, %c6_246, %c0_247, %c0_248] : memref<1x10x10x80xbf16, #tpu.memory_space<vmem>>, vector<1x1x10x80xbf16>
    %346 = vector.shape_cast %345 : vector<1x1x10x80xbf16> to vector<10x80xbf16>
    %347 = arith.extf %346 : vector<10x80xbf16> to vector<10x80xf32>
    %348 = vector.extract_strided_slice %347 {offsets = [0, 0], sizes = [8, 80], strides = [1, 1]} : vector<10x80xf32> to vector<8x80xf32>
    %349 = arith.truncf %348 : vector<8x80xf32> to vector<8x80xbf16>
    %c6_249 = arith.constant 6 : index
    %c0_250 = arith.constant 0 : index
    %c0_251 = arith.constant 0 : index
    %350 = vector.load %arg2[%c6_249, %c0_250, %c0_251] : memref<9x80x64xbf16, #tpu.memory_space<vmem>>, vector<1x80x64xbf16>
    %351 = vector.shape_cast %350 : vector<1x80x64xbf16> to vector<80x64xbf16>
    %cst_252 = arith.constant dense<0.000000e+00> : vector<8x64xf32>
    %352 = tpu.matmul %349, %351, %cst_252 {dimension_numbers = #tpu.dot_dimension_numbers<[1], [0], [0], [1], [0, 0, 1, 1], [], []>} : vector<8x80xbf16>, vector<80x64xbf16>, vector<8x64xf32> -> vector<8x64xf32>
    %353 = arith.addf %344, %352 : vector<8x64xf32>
    %354 = vector.extract_strided_slice %347 {offsets = [1, 0], sizes = [8, 80], strides = [1, 1]} : vector<10x80xf32> to vector<8x80xf32>
    %355 = arith.truncf %354 : vector<8x80xf32> to vector<8x80xbf16>
    %c7_253 = arith.constant 7 : index
    %c0_254 = arith.constant 0 : index
    %c0_255 = arith.constant 0 : index
    %356 = vector.load %arg2[%c7_253, %c0_254, %c0_255] : memref<9x80x64xbf16, #tpu.memory_space<vmem>>, vector<1x80x64xbf16>
    %357 = vector.shape_cast %356 : vector<1x80x64xbf16> to vector<80x64xbf16>
    %cst_256 = arith.constant dense<0.000000e+00> : vector<8x64xf32>
    %358 = tpu.matmul %355, %357, %cst_256 {dimension_numbers = #tpu.dot_dimension_numbers<[1], [0], [0], [1], [0, 0, 1, 1], [], []>} : vector<8x80xbf16>, vector<80x64xbf16>, vector<8x64xf32> -> vector<8x64xf32>
    %359 = arith.addf %353, %358 : vector<8x64xf32>
    %360 = vector.extract_strided_slice %347 {offsets = [2, 0], sizes = [8, 80], strides = [1, 1]} : vector<10x80xf32> to vector<8x80xf32>
    %361 = arith.truncf %360 : vector<8x80xf32> to vector<8x80xbf16>
    %c8_257 = arith.constant 8 : index
    %c0_258 = arith.constant 0 : index
    %c0_259 = arith.constant 0 : index
    %362 = vector.load %arg2[%c8_257, %c0_258, %c0_259] : memref<9x80x64xbf16, #tpu.memory_space<vmem>>, vector<1x80x64xbf16>
    %363 = vector.shape_cast %362 : vector<1x80x64xbf16> to vector<80x64xbf16>
    %cst_260 = arith.constant dense<0.000000e+00> : vector<8x64xf32>
    %364 = tpu.matmul %361, %363, %cst_260 {dimension_numbers = #tpu.dot_dimension_numbers<[1], [0], [0], [1], [0, 0, 1, 1], [], []>} : vector<8x80xbf16>, vector<80x64xbf16>, vector<8x64xf32> -> vector<8x64xf32>
    %365 = arith.addf %359, %364 : vector<8x64xf32>
    %366 = arith.truncf %365 : vector<8x64xf32> to vector<8x64xbf16>
    %c0_261 = arith.constant 0 : index
    %c4_262 = arith.constant 4 : index
    %c0_263 = arith.constant 0 : index
    %c0_264 = arith.constant 0 : index
    %367 = vector.load %arg3[%c0_261, %c4_262, %c0_263, %c0_264] : memref<1x8x8x64xbf16, #tpu.memory_space<vmem>>, vector<1x1x8x64xbf16>
    %368 = vector.shape_cast %367 : vector<1x1x8x64xbf16> to vector<8x64xbf16>
    %369 = vector.shape_cast %366 : vector<8x64xbf16> to vector<1x1x8x64xbf16>
    tpu.vector_store %arg3[%c0_261, %c4_262, %c0_263, %c0_264], %369 {strides = array<i32>} : memref<1x8x8x64xbf16, #tpu.memory_space<vmem>>, vector<1x1x8x64xbf16>,
    %cst_265 = arith.constant dense<0.000000e+00> : vector<64xf32>
    %370 = vector.multi_reduction <add>, %365, %cst_265 [0] : vector<8x64xf32> to vector<64xf32>
    %371 = vector.shape_cast %370 : vector<64xf32> to vector<1x64xf32>
    %372 = arith.addf %297, %371 : vector<1x64xf32>
    %373 = arith.mulf %365, %365 : vector<8x64xf32>
    %cst_266 = arith.constant dense<0.000000e+00> : vector<64xf32>
    %374 = vector.multi_reduction <add>, %373, %cst_266 [0] : vector<8x64xf32> to vector<64xf32>
    %375 = vector.shape_cast %374 : vector<64xf32> to vector<1x64xf32>
    %376 = arith.addf %301, %375 : vector<1x64xf32>
    %cst_267 = arith.constant 0.000000e+00 : f32
    %377 = vector.broadcast %cst_267 : f32 to vector<8x64xf32>
    %c0_268 = arith.constant 0 : index
    %c5_269 = arith.constant 5 : index
    %c0_270 = arith.constant 0 : index
    %c0_271 = arith.constant 0 : index
    %378 = vector.load %arg1[%c0_268, %c5_269, %c0_270, %c0_271] : memref<1x10x10x80xbf16, #tpu.memory_space<vmem>>, vector<1x1x10x80xbf16>
    %379 = vector.shape_cast %378 : vector<1x1x10x80xbf16> to vector<10x80xbf16>
    %380 = arith.extf %379 : vector<10x80xbf16> to vector<10x80xf32>
    %381 = vector.extract_strided_slice %380 {offsets = [0, 0], sizes = [8, 80], strides = [1, 1]} : vector<10x80xf32> to vector<8x80xf32>
    %382 = arith.truncf %381 : vector<8x80xf32> to vector<8x80xbf16>
    %c0_272 = arith.constant 0 : index
    %c0_273 = arith.constant 0 : index
    %c0_274 = arith.constant 0 : index
    %383 = vector.load %arg2[%c0_272, %c0_273, %c0_274] : memref<9x80x64xbf16, #tpu.memory_space<vmem>>, vector<1x80x64xbf16>
    %384 = vector.shape_cast %383 : vector<1x80x64xbf16> to vector<80x64xbf16>
    %cst_275 = arith.constant dense<0.000000e+00> : vector<8x64xf32>
    %385 = tpu.matmul %382, %384, %cst_275 {dimension_numbers = #tpu.dot_dimension_numbers<[1], [0], [0], [1], [0, 0, 1, 1], [], []>} : vector<8x80xbf16>, vector<80x64xbf16>, vector<8x64xf32> -> vector<8x64xf32>
    %386 = arith.addf %377, %385 : vector<8x64xf32>
    %387 = vector.extract_strided_slice %380 {offsets = [1, 0], sizes = [8, 80], strides = [1, 1]} : vector<10x80xf32> to vector<8x80xf32>
    %388 = arith.truncf %387 : vector<8x80xf32> to vector<8x80xbf16>
    %c1_276 = arith.constant 1 : index
    %c0_277 = arith.constant 0 : index
    %c0_278 = arith.constant 0 : index
    %389 = vector.load %arg2[%c1_276, %c0_277, %c0_278] : memref<9x80x64xbf16, #tpu.memory_space<vmem>>, vector<1x80x64xbf16>
    %390 = vector.shape_cast %389 : vector<1x80x64xbf16> to vector<80x64xbf16>
    %cst_279 = arith.constant dense<0.000000e+00> : vector<8x64xf32>
    %391 = tpu.matmul %388, %390, %cst_279 {dimension_numbers = #tpu.dot_dimension_numbers<[1], [0], [0], [1], [0, 0, 1, 1], [], []>} : vector<8x80xbf16>, vector<80x64xbf16>, vector<8x64xf32> -> vector<8x64xf32>
    %392 = arith.addf %386, %391 : vector<8x64xf32>
    %393 = vector.extract_strided_slice %380 {offsets = [2, 0], sizes = [8, 80], strides = [1, 1]} : vector<10x80xf32> to vector<8x80xf32>
    %394 = arith.truncf %393 : vector<8x80xf32> to vector<8x80xbf16>
    %c2_280 = arith.constant 2 : index
    %c0_281 = arith.constant 0 : index
    %c0_282 = arith.constant 0 : index
    %395 = vector.load %arg2[%c2_280, %c0_281, %c0_282] : memref<9x80x64xbf16, #tpu.memory_space<vmem>>, vector<1x80x64xbf16>
    %396 = vector.shape_cast %395 : vector<1x80x64xbf16> to vector<80x64xbf16>
    %cst_283 = arith.constant dense<0.000000e+00> : vector<8x64xf32>
    %397 = tpu.matmul %394, %396, %cst_283 {dimension_numbers = #tpu.dot_dimension_numbers<[1], [0], [0], [1], [0, 0, 1, 1], [], []>} : vector<8x80xbf16>, vector<80x64xbf16>, vector<8x64xf32> -> vector<8x64xf32>
    %398 = arith.addf %392, %397 : vector<8x64xf32>
    %c0_284 = arith.constant 0 : index
    %c6_285 = arith.constant 6 : index
    %c0_286 = arith.constant 0 : index
    %c0_287 = arith.constant 0 : index
    %399 = vector.load %arg1[%c0_284, %c6_285, %c0_286, %c0_287] : memref<1x10x10x80xbf16, #tpu.memory_space<vmem>>, vector<1x1x10x80xbf16>
    %400 = vector.shape_cast %399 : vector<1x1x10x80xbf16> to vector<10x80xbf16>
    %401 = arith.extf %400 : vector<10x80xbf16> to vector<10x80xf32>
    %402 = vector.extract_strided_slice %401 {offsets = [0, 0], sizes = [8, 80], strides = [1, 1]} : vector<10x80xf32> to vector<8x80xf32>
    %403 = arith.truncf %402 : vector<8x80xf32> to vector<8x80xbf16>
    %c3_288 = arith.constant 3 : index
    %c0_289 = arith.constant 0 : index
    %c0_290 = arith.constant 0 : index
    %404 = vector.load %arg2[%c3_288, %c0_289, %c0_290] : memref<9x80x64xbf16, #tpu.memory_space<vmem>>, vector<1x80x64xbf16>
    %405 = vector.shape_cast %404 : vector<1x80x64xbf16> to vector<80x64xbf16>
    %cst_291 = arith.constant dense<0.000000e+00> : vector<8x64xf32>
    %406 = tpu.matmul %403, %405, %cst_291 {dimension_numbers = #tpu.dot_dimension_numbers<[1], [0], [0], [1], [0, 0, 1, 1], [], []>} : vector<8x80xbf16>, vector<80x64xbf16>, vector<8x64xf32> -> vector<8x64xf32>
    %407 = arith.addf %398, %406 : vector<8x64xf32>
    %408 = vector.extract_strided_slice %401 {offsets = [1, 0], sizes = [8, 80], strides = [1, 1]} : vector<10x80xf32> to vector<8x80xf32>
    %409 = arith.truncf %408 : vector<8x80xf32> to vector<8x80xbf16>
    %c4_292 = arith.constant 4 : index
    %c0_293 = arith.constant 0 : index
    %c0_294 = arith.constant 0 : index
    %410 = vector.load %arg2[%c4_292, %c0_293, %c0_294] : memref<9x80x64xbf16, #tpu.memory_space<vmem>>, vector<1x80x64xbf16>
    %411 = vector.shape_cast %410 : vector<1x80x64xbf16> to vector<80x64xbf16>
    %cst_295 = arith.constant dense<0.000000e+00> : vector<8x64xf32>
    %412 = tpu.matmul %409, %411, %cst_295 {dimension_numbers = #tpu.dot_dimension_numbers<[1], [0], [0], [1], [0, 0, 1, 1], [], []>} : vector<8x80xbf16>, vector<80x64xbf16>, vector<8x64xf32> -> vector<8x64xf32>
    %413 = arith.addf %407, %412 : vector<8x64xf32>
    %414 = vector.extract_strided_slice %401 {offsets = [2, 0], sizes = [8, 80], strides = [1, 1]} : vector<10x80xf32> to vector<8x80xf32>
    %415 = arith.truncf %414 : vector<8x80xf32> to vector<8x80xbf16>
    %c5_296 = arith.constant 5 : index
    %c0_297 = arith.constant 0 : index
    %c0_298 = arith.constant 0 : index
    %416 = vector.load %arg2[%c5_296, %c0_297, %c0_298] : memref<9x80x64xbf16, #tpu.memory_space<vmem>>, vector<1x80x64xbf16>
    %417 = vector.shape_cast %416 : vector<1x80x64xbf16> to vector<80x64xbf16>
    %cst_299 = arith.constant dense<0.000000e+00> : vector<8x64xf32>
    %418 = tpu.matmul %415, %417, %cst_299 {dimension_numbers = #tpu.dot_dimension_numbers<[1], [0], [0], [1], [0, 0, 1, 1], [], []>} : vector<8x80xbf16>, vector<80x64xbf16>, vector<8x64xf32> -> vector<8x64xf32>
    %419 = arith.addf %413, %418 : vector<8x64xf32>
    %c0_300 = arith.constant 0 : index
    %c7_301 = arith.constant 7 : index
    %c0_302 = arith.constant 0 : index
    %c0_303 = arith.constant 0 : index
    %420 = vector.load %arg1[%c0_300, %c7_301, %c0_302, %c0_303] : memref<1x10x10x80xbf16, #tpu.memory_space<vmem>>, vector<1x1x10x80xbf16>
    %421 = vector.shape_cast %420 : vector<1x1x10x80xbf16> to vector<10x80xbf16>
    %422 = arith.extf %421 : vector<10x80xbf16> to vector<10x80xf32>
    %423 = vector.extract_strided_slice %422 {offsets = [0, 0], sizes = [8, 80], strides = [1, 1]} : vector<10x80xf32> to vector<8x80xf32>
    %424 = arith.truncf %423 : vector<8x80xf32> to vector<8x80xbf16>
    %c6_304 = arith.constant 6 : index
    %c0_305 = arith.constant 0 : index
    %c0_306 = arith.constant 0 : index
    %425 = vector.load %arg2[%c6_304, %c0_305, %c0_306] : memref<9x80x64xbf16, #tpu.memory_space<vmem>>, vector<1x80x64xbf16>
    %426 = vector.shape_cast %425 : vector<1x80x64xbf16> to vector<80x64xbf16>
    %cst_307 = arith.constant dense<0.000000e+00> : vector<8x64xf32>
    %427 = tpu.matmul %424, %426, %cst_307 {dimension_numbers = #tpu.dot_dimension_numbers<[1], [0], [0], [1], [0, 0, 1, 1], [], []>} : vector<8x80xbf16>, vector<80x64xbf16>, vector<8x64xf32> -> vector<8x64xf32>
    %428 = arith.addf %419, %427 : vector<8x64xf32>
    %429 = vector.extract_strided_slice %422 {offsets = [1, 0], sizes = [8, 80], strides = [1, 1]} : vector<10x80xf32> to vector<8x80xf32>
    %430 = arith.truncf %429 : vector<8x80xf32> to vector<8x80xbf16>
    %c7_308 = arith.constant 7 : index
    %c0_309 = arith.constant 0 : index
    %c0_310 = arith.constant 0 : index
    %431 = vector.load %arg2[%c7_308, %c0_309, %c0_310] : memref<9x80x64xbf16, #tpu.memory_space<vmem>>, vector<1x80x64xbf16>
    %432 = vector.shape_cast %431 : vector<1x80x64xbf16> to vector<80x64xbf16>
    %cst_311 = arith.constant dense<0.000000e+00> : vector<8x64xf32>
    %433 = tpu.matmul %430, %432, %cst_311 {dimension_numbers = #tpu.dot_dimension_numbers<[1], [0], [0], [1], [0, 0, 1, 1], [], []>} : vector<8x80xbf16>, vector<80x64xbf16>, vector<8x64xf32> -> vector<8x64xf32>
    %434 = arith.addf %428, %433 : vector<8x64xf32>
    %435 = vector.extract_strided_slice %422 {offsets = [2, 0], sizes = [8, 80], strides = [1, 1]} : vector<10x80xf32> to vector<8x80xf32>
    %436 = arith.truncf %435 : vector<8x80xf32> to vector<8x80xbf16>
    %c8_312 = arith.constant 8 : index
    %c0_313 = arith.constant 0 : index
    %c0_314 = arith.constant 0 : index
    %437 = vector.load %arg2[%c8_312, %c0_313, %c0_314] : memref<9x80x64xbf16, #tpu.memory_space<vmem>>, vector<1x80x64xbf16>
    %438 = vector.shape_cast %437 : vector<1x80x64xbf16> to vector<80x64xbf16>
    %cst_315 = arith.constant dense<0.000000e+00> : vector<8x64xf32>
    %439 = tpu.matmul %436, %438, %cst_315 {dimension_numbers = #tpu.dot_dimension_numbers<[1], [0], [0], [1], [0, 0, 1, 1], [], []>} : vector<8x80xbf16>, vector<80x64xbf16>, vector<8x64xf32> -> vector<8x64xf32>
    %440 = arith.addf %434, %439 : vector<8x64xf32>
    %441 = arith.truncf %440 : vector<8x64xf32> to vector<8x64xbf16>
    %c0_316 = arith.constant 0 : index
    %c5_317 = arith.constant 5 : index
    %c0_318 = arith.constant 0 : index
    %c0_319 = arith.constant 0 : index
    %442 = vector.load %arg3[%c0_316, %c5_317, %c0_318, %c0_319] : memref<1x8x8x64xbf16, #tpu.memory_space<vmem>>, vector<1x1x8x64xbf16>
    %443 = vector.shape_cast %442 : vector<1x1x8x64xbf16> to vector<8x64xbf16>
    %444 = vector.shape_cast %441 : vector<8x64xbf16> to vector<1x1x8x64xbf16>
    tpu.vector_store %arg3[%c0_316, %c5_317, %c0_318, %c0_319], %444 {strides = array<i32>} : memref<1x8x8x64xbf16, #tpu.memory_space<vmem>>, vector<1x1x8x64xbf16>,
    %cst_320 = arith.constant dense<0.000000e+00> : vector<64xf32>
    %445 = vector.multi_reduction <add>, %440, %cst_320 [0] : vector<8x64xf32> to vector<64xf32>
    %446 = vector.shape_cast %445 : vector<64xf32> to vector<1x64xf32>
    %447 = arith.addf %372, %446 : vector<1x64xf32>
    %448 = arith.mulf %440, %440 : vector<8x64xf32>
    %cst_321 = arith.constant dense<0.000000e+00> : vector<64xf32>
    %449 = vector.multi_reduction <add>, %448, %cst_321 [0] : vector<8x64xf32> to vector<64xf32>
    %450 = vector.shape_cast %449 : vector<64xf32> to vector<1x64xf32>
    %451 = arith.addf %376, %450 : vector<1x64xf32>
    %cst_322 = arith.constant 0.000000e+00 : f32
    %452 = vector.broadcast %cst_322 : f32 to vector<8x64xf32>
    %c0_323 = arith.constant 0 : index
    %c6_324 = arith.constant 6 : index
    %c0_325 = arith.constant 0 : index
    %c0_326 = arith.constant 0 : index
    %453 = vector.load %arg1[%c0_323, %c6_324, %c0_325, %c0_326] : memref<1x10x10x80xbf16, #tpu.memory_space<vmem>>, vector<1x1x10x80xbf16>
    %454 = vector.shape_cast %453 : vector<1x1x10x80xbf16> to vector<10x80xbf16>
    %455 = arith.extf %454 : vector<10x80xbf16> to vector<10x80xf32>
    %456 = vector.extract_strided_slice %455 {offsets = [0, 0], sizes = [8, 80], strides = [1, 1]} : vector<10x80xf32> to vector<8x80xf32>
    %457 = arith.truncf %456 : vector<8x80xf32> to vector<8x80xbf16>
    %c0_327 = arith.constant 0 : index
    %c0_328 = arith.constant 0 : index
    %c0_329 = arith.constant 0 : index
    %458 = vector.load %arg2[%c0_327, %c0_328, %c0_329] : memref<9x80x64xbf16, #tpu.memory_space<vmem>>, vector<1x80x64xbf16>
    %459 = vector.shape_cast %458 : vector<1x80x64xbf16> to vector<80x64xbf16>
    %cst_330 = arith.constant dense<0.000000e+00> : vector<8x64xf32>
    %460 = tpu.matmul %457, %459, %cst_330 {dimension_numbers = #tpu.dot_dimension_numbers<[1], [0], [0], [1], [0, 0, 1, 1], [], []>} : vector<8x80xbf16>, vector<80x64xbf16>, vector<8x64xf32> -> vector<8x64xf32>
    %461 = arith.addf %452, %460 : vector<8x64xf32>
    %462 = vector.extract_strided_slice %455 {offsets = [1, 0], sizes = [8, 80], strides = [1, 1]} : vector<10x80xf32> to vector<8x80xf32>
    %463 = arith.truncf %462 : vector<8x80xf32> to vector<8x80xbf16>
    %c1_331 = arith.constant 1 : index
    %c0_332 = arith.constant 0 : index
    %c0_333 = arith.constant 0 : index
    %464 = vector.load %arg2[%c1_331, %c0_332, %c0_333] : memref<9x80x64xbf16, #tpu.memory_space<vmem>>, vector<1x80x64xbf16>
    %465 = vector.shape_cast %464 : vector<1x80x64xbf16> to vector<80x64xbf16>
    %cst_334 = arith.constant dense<0.000000e+00> : vector<8x64xf32>
    %466 = tpu.matmul %463, %465, %cst_334 {dimension_numbers = #tpu.dot_dimension_numbers<[1], [0], [0], [1], [0, 0, 1, 1], [], []>} : vector<8x80xbf16>, vector<80x64xbf16>, vector<8x64xf32> -> vector<8x64xf32>
    %467 = arith.addf %461, %466 : vector<8x64xf32>
    %468 = vector.extract_strided_slice %455 {offsets = [2, 0], sizes = [8, 80], strides = [1, 1]} : vector<10x80xf32> to vector<8x80xf32>
    %469 = arith.truncf %468 : vector<8x80xf32> to vector<8x80xbf16>
    %c2_335 = arith.constant 2 : index
    %c0_336 = arith.constant 0 : index
    %c0_337 = arith.constant 0 : index
    %470 = vector.load %arg2[%c2_335, %c0_336, %c0_337] : memref<9x80x64xbf16, #tpu.memory_space<vmem>>, vector<1x80x64xbf16>
    %471 = vector.shape_cast %470 : vector<1x80x64xbf16> to vector<80x64xbf16>
    %cst_338 = arith.constant dense<0.000000e+00> : vector<8x64xf32>
    %472 = tpu.matmul %469, %471, %cst_338 {dimension_numbers = #tpu.dot_dimension_numbers<[1], [0], [0], [1], [0, 0, 1, 1], [], []>} : vector<8x80xbf16>, vector<80x64xbf16>, vector<8x64xf32> -> vector<8x64xf32>
    %473 = arith.addf %467, %472 : vector<8x64xf32>
    %c0_339 = arith.constant 0 : index
    %c7_340 = arith.constant 7 : index
    %c0_341 = arith.constant 0 : index
    %c0_342 = arith.constant 0 : index
    %474 = vector.load %arg1[%c0_339, %c7_340, %c0_341, %c0_342] : memref<1x10x10x80xbf16, #tpu.memory_space<vmem>>, vector<1x1x10x80xbf16>
    %475 = vector.shape_cast %474 : vector<1x1x10x80xbf16> to vector<10x80xbf16>
    %476 = arith.extf %475 : vector<10x80xbf16> to vector<10x80xf32>
    %477 = vector.extract_strided_slice %476 {offsets = [0, 0], sizes = [8, 80], strides = [1, 1]} : vector<10x80xf32> to vector<8x80xf32>
    %478 = arith.truncf %477 : vector<8x80xf32> to vector<8x80xbf16>
    %c3_343 = arith.constant 3 : index
    %c0_344 = arith.constant 0 : index
    %c0_345 = arith.constant 0 : index
    %479 = vector.load %arg2[%c3_343, %c0_344, %c0_345] : memref<9x80x64xbf16, #tpu.memory_space<vmem>>, vector<1x80x64xbf16>
    %480 = vector.shape_cast %479 : vector<1x80x64xbf16> to vector<80x64xbf16>
    %cst_346 = arith.constant dense<0.000000e+00> : vector<8x64xf32>
    %481 = tpu.matmul %478, %480, %cst_346 {dimension_numbers = #tpu.dot_dimension_numbers<[1], [0], [0], [1], [0, 0, 1, 1], [], []>} : vector<8x80xbf16>, vector<80x64xbf16>, vector<8x64xf32> -> vector<8x64xf32>
    %482 = arith.addf %473, %481 : vector<8x64xf32>
    %483 = vector.extract_strided_slice %476 {offsets = [1, 0], sizes = [8, 80], strides = [1, 1]} : vector<10x80xf32> to vector<8x80xf32>
    %484 = arith.truncf %483 : vector<8x80xf32> to vector<8x80xbf16>
    %c4_347 = arith.constant 4 : index
    %c0_348 = arith.constant 0 : index
    %c0_349 = arith.constant 0 : index
    %485 = vector.load %arg2[%c4_347, %c0_348, %c0_349] : memref<9x80x64xbf16, #tpu.memory_space<vmem>>, vector<1x80x64xbf16>
    %486 = vector.shape_cast %485 : vector<1x80x64xbf16> to vector<80x64xbf16>
    %cst_350 = arith.constant dense<0.000000e+00> : vector<8x64xf32>
    %487 = tpu.matmul %484, %486, %cst_350 {dimension_numbers = #tpu.dot_dimension_numbers<[1], [0], [0], [1], [0, 0, 1, 1], [], []>} : vector<8x80xbf16>, vector<80x64xbf16>, vector<8x64xf32> -> vector<8x64xf32>
    %488 = arith.addf %482, %487 : vector<8x64xf32>
    %489 = vector.extract_strided_slice %476 {offsets = [2, 0], sizes = [8, 80], strides = [1, 1]} : vector<10x80xf32> to vector<8x80xf32>
    %490 = arith.truncf %489 : vector<8x80xf32> to vector<8x80xbf16>
    %c5_351 = arith.constant 5 : index
    %c0_352 = arith.constant 0 : index
    %c0_353 = arith.constant 0 : index
    %491 = vector.load %arg2[%c5_351, %c0_352, %c0_353] : memref<9x80x64xbf16, #tpu.memory_space<vmem>>, vector<1x80x64xbf16>
    %492 = vector.shape_cast %491 : vector<1x80x64xbf16> to vector<80x64xbf16>
    %cst_354 = arith.constant dense<0.000000e+00> : vector<8x64xf32>
    %493 = tpu.matmul %490, %492, %cst_354 {dimension_numbers = #tpu.dot_dimension_numbers<[1], [0], [0], [1], [0, 0, 1, 1], [], []>} : vector<8x80xbf16>, vector<80x64xbf16>, vector<8x64xf32> -> vector<8x64xf32>
    %494 = arith.addf %488, %493 : vector<8x64xf32>
    %c0_355 = arith.constant 0 : index
    %c8_356 = arith.constant 8 : index
    %c0_357 = arith.constant 0 : index
    %c0_358 = arith.constant 0 : index
    %495 = vector.load %arg1[%c0_355, %c8_356, %c0_357, %c0_358] : memref<1x10x10x80xbf16, #tpu.memory_space<vmem>>, vector<1x1x10x80xbf16>
    %496 = vector.shape_cast %495 : vector<1x1x10x80xbf16> to vector<10x80xbf16>
    %497 = arith.extf %496 : vector<10x80xbf16> to vector<10x80xf32>
    %498 = vector.extract_strided_slice %497 {offsets = [0, 0], sizes = [8, 80], strides = [1, 1]} : vector<10x80xf32> to vector<8x80xf32>
    %499 = arith.truncf %498 : vector<8x80xf32> to vector<8x80xbf16>
    %c6_359 = arith.constant 6 : index
    %c0_360 = arith.constant 0 : index
    %c0_361 = arith.constant 0 : index
    %500 = vector.load %arg2[%c6_359, %c0_360, %c0_361] : memref<9x80x64xbf16, #tpu.memory_space<vmem>>, vector<1x80x64xbf16>
    %501 = vector.shape_cast %500 : vector<1x80x64xbf16> to vector<80x64xbf16>
    %cst_362 = arith.constant dense<0.000000e+00> : vector<8x64xf32>
    %502 = tpu.matmul %499, %501, %cst_362 {dimension_numbers = #tpu.dot_dimension_numbers<[1], [0], [0], [1], [0, 0, 1, 1], [], []>} : vector<8x80xbf16>, vector<80x64xbf16>, vector<8x64xf32> -> vector<8x64xf32>
    %503 = arith.addf %494, %502 : vector<8x64xf32>
    %504 = vector.extract_strided_slice %497 {offsets = [1, 0], sizes = [8, 80], strides = [1, 1]} : vector<10x80xf32> to vector<8x80xf32>
    %505 = arith.truncf %504 : vector<8x80xf32> to vector<8x80xbf16>
    %c7_363 = arith.constant 7 : index
    %c0_364 = arith.constant 0 : index
    %c0_365 = arith.constant 0 : index
    %506 = vector.load %arg2[%c7_363, %c0_364, %c0_365] : memref<9x80x64xbf16, #tpu.memory_space<vmem>>, vector<1x80x64xbf16>
    %507 = vector.shape_cast %506 : vector<1x80x64xbf16> to vector<80x64xbf16>
    %cst_366 = arith.constant dense<0.000000e+00> : vector<8x64xf32>
    %508 = tpu.matmul %505, %507, %cst_366 {dimension_numbers = #tpu.dot_dimension_numbers<[1], [0], [0], [1], [0, 0, 1, 1], [], []>} : vector<8x80xbf16>, vector<80x64xbf16>, vector<8x64xf32> -> vector<8x64xf32>
    %509 = arith.addf %503, %508 : vector<8x64xf32>
    %510 = vector.extract_strided_slice %497 {offsets = [2, 0], sizes = [8, 80], strides = [1, 1]} : vector<10x80xf32> to vector<8x80xf32>
    %511 = arith.truncf %510 : vector<8x80xf32> to vector<8x80xbf16>
    %c8_367 = arith.constant 8 : index
    %c0_368 = arith.constant 0 : index
    %c0_369 = arith.constant 0 : index
    %512 = vector.load %arg2[%c8_367, %c0_368, %c0_369] : memref<9x80x64xbf16, #tpu.memory_space<vmem>>, vector<1x80x64xbf16>
    %513 = vector.shape_cast %512 : vector<1x80x64xbf16> to vector<80x64xbf16>
    %cst_370 = arith.constant dense<0.000000e+00> : vector<8x64xf32>
    %514 = tpu.matmul %511, %513, %cst_370 {dimension_numbers = #tpu.dot_dimension_numbers<[1], [0], [0], [1], [0, 0, 1, 1], [], []>} : vector<8x80xbf16>, vector<80x64xbf16>, vector<8x64xf32> -> vector<8x64xf32>
    %515 = arith.addf %509, %514 : vector<8x64xf32>
    %516 = arith.truncf %515 : vector<8x64xf32> to vector<8x64xbf16>
    %c0_371 = arith.constant 0 : index
    %c6_372 = arith.constant 6 : index
    %c0_373 = arith.constant 0 : index
    %c0_374 = arith.constant 0 : index
    %517 = vector.load %arg3[%c0_371, %c6_372, %c0_373, %c0_374] : memref<1x8x8x64xbf16, #tpu.memory_space<vmem>>, vector<1x1x8x64xbf16>
    %518 = vector.shape_cast %517 : vector<1x1x8x64xbf16> to vector<8x64xbf16>
    %519 = vector.shape_cast %516 : vector<8x64xbf16> to vector<1x1x8x64xbf16>
    tpu.vector_store %arg3[%c0_371, %c6_372, %c0_373, %c0_374], %519 {strides = array<i32>} : memref<1x8x8x64xbf16, #tpu.memory_space<vmem>>, vector<1x1x8x64xbf16>,
    %cst_375 = arith.constant dense<0.000000e+00> : vector<64xf32>
    %520 = vector.multi_reduction <add>, %515, %cst_375 [0] : vector<8x64xf32> to vector<64xf32>
    %521 = vector.shape_cast %520 : vector<64xf32> to vector<1x64xf32>
    %522 = arith.addf %447, %521 : vector<1x64xf32>
    %523 = arith.mulf %515, %515 : vector<8x64xf32>
    %cst_376 = arith.constant dense<0.000000e+00> : vector<64xf32>
    %524 = vector.multi_reduction <add>, %523, %cst_376 [0] : vector<8x64xf32> to vector<64xf32>
    %525 = vector.shape_cast %524 : vector<64xf32> to vector<1x64xf32>
    %526 = arith.addf %451, %525 : vector<1x64xf32>
    %cst_377 = arith.constant 0.000000e+00 : f32
    %527 = vector.broadcast %cst_377 : f32 to vector<8x64xf32>
    %c0_378 = arith.constant 0 : index
    %c7_379 = arith.constant 7 : index
    %c0_380 = arith.constant 0 : index
    %c0_381 = arith.constant 0 : index
    %528 = vector.load %arg1[%c0_378, %c7_379, %c0_380, %c0_381] : memref<1x10x10x80xbf16, #tpu.memory_space<vmem>>, vector<1x1x10x80xbf16>
    %529 = vector.shape_cast %528 : vector<1x1x10x80xbf16> to vector<10x80xbf16>
    %530 = arith.extf %529 : vector<10x80xbf16> to vector<10x80xf32>
    %531 = vector.extract_strided_slice %530 {offsets = [0, 0], sizes = [8, 80], strides = [1, 1]} : vector<10x80xf32> to vector<8x80xf32>
    %532 = arith.truncf %531 : vector<8x80xf32> to vector<8x80xbf16>
    %c0_382 = arith.constant 0 : index
    %c0_383 = arith.constant 0 : index
    %c0_384 = arith.constant 0 : index
    %533 = vector.load %arg2[%c0_382, %c0_383, %c0_384] : memref<9x80x64xbf16, #tpu.memory_space<vmem>>, vector<1x80x64xbf16>
    %534 = vector.shape_cast %533 : vector<1x80x64xbf16> to vector<80x64xbf16>
    %cst_385 = arith.constant dense<0.000000e+00> : vector<8x64xf32>
    %535 = tpu.matmul %532, %534, %cst_385 {dimension_numbers = #tpu.dot_dimension_numbers<[1], [0], [0], [1], [0, 0, 1, 1], [], []>} : vector<8x80xbf16>, vector<80x64xbf16>, vector<8x64xf32> -> vector<8x64xf32>
    %536 = arith.addf %527, %535 : vector<8x64xf32>
    %537 = vector.extract_strided_slice %530 {offsets = [1, 0], sizes = [8, 80], strides = [1, 1]} : vector<10x80xf32> to vector<8x80xf32>
    %538 = arith.truncf %537 : vector<8x80xf32> to vector<8x80xbf16>
    %c1_386 = arith.constant 1 : index
    %c0_387 = arith.constant 0 : index
    %c0_388 = arith.constant 0 : index
    %539 = vector.load %arg2[%c1_386, %c0_387, %c0_388] : memref<9x80x64xbf16, #tpu.memory_space<vmem>>, vector<1x80x64xbf16>
    %540 = vector.shape_cast %539 : vector<1x80x64xbf16> to vector<80x64xbf16>
    %cst_389 = arith.constant dense<0.000000e+00> : vector<8x64xf32>
    %541 = tpu.matmul %538, %540, %cst_389 {dimension_numbers = #tpu.dot_dimension_numbers<[1], [0], [0], [1], [0, 0, 1, 1], [], []>} : vector<8x80xbf16>, vector<80x64xbf16>, vector<8x64xf32> -> vector<8x64xf32>
    %542 = arith.addf %536, %541 : vector<8x64xf32>
    %543 = vector.extract_strided_slice %530 {offsets = [2, 0], sizes = [8, 80], strides = [1, 1]} : vector<10x80xf32> to vector<8x80xf32>
    %544 = arith.truncf %543 : vector<8x80xf32> to vector<8x80xbf16>
    %c2_390 = arith.constant 2 : index
    %c0_391 = arith.constant 0 : index
    %c0_392 = arith.constant 0 : index
    %545 = vector.load %arg2[%c2_390, %c0_391, %c0_392] : memref<9x80x64xbf16, #tpu.memory_space<vmem>>, vector<1x80x64xbf16>
    %546 = vector.shape_cast %545 : vector<1x80x64xbf16> to vector<80x64xbf16>
    %cst_393 = arith.constant dense<0.000000e+00> : vector<8x64xf32>
    %547 = tpu.matmul %544, %546, %cst_393 {dimension_numbers = #tpu.dot_dimension_numbers<[1], [0], [0], [1], [0, 0, 1, 1], [], []>} : vector<8x80xbf16>, vector<80x64xbf16>, vector<8x64xf32> -> vector<8x64xf32>
    %548 = arith.addf %542, %547 : vector<8x64xf32>
    %c0_394 = arith.constant 0 : index
    %c8_395 = arith.constant 8 : index
    %c0_396 = arith.constant 0 : index
    %c0_397 = arith.constant 0 : index
    %549 = vector.load %arg1[%c0_394, %c8_395, %c0_396, %c0_397] : memref<1x10x10x80xbf16, #tpu.memory_space<vmem>>, vector<1x1x10x80xbf16>
    %550 = vector.shape_cast %549 : vector<1x1x10x80xbf16> to vector<10x80xbf16>
    %551 = arith.extf %550 : vector<10x80xbf16> to vector<10x80xf32>
    %552 = vector.extract_strided_slice %551 {offsets = [0, 0], sizes = [8, 80], strides = [1, 1]} : vector<10x80xf32> to vector<8x80xf32>
    %553 = arith.truncf %552 : vector<8x80xf32> to vector<8x80xbf16>
    %c3_398 = arith.constant 3 : index
    %c0_399 = arith.constant 0 : index
    %c0_400 = arith.constant 0 : index
    %554 = vector.load %arg2[%c3_398, %c0_399, %c0_400] : memref<9x80x64xbf16, #tpu.memory_space<vmem>>, vector<1x80x64xbf16>
    %555 = vector.shape_cast %554 : vector<1x80x64xbf16> to vector<80x64xbf16>
    %cst_401 = arith.constant dense<0.000000e+00> : vector<8x64xf32>
    %556 = tpu.matmul %553, %555, %cst_401 {dimension_numbers = #tpu.dot_dimension_numbers<[1], [0], [0], [1], [0, 0, 1, 1], [], []>} : vector<8x80xbf16>, vector<80x64xbf16>, vector<8x64xf32> -> vector<8x64xf32>
    %557 = arith.addf %548, %556 : vector<8x64xf32>
    %558 = vector.extract_strided_slice %551 {offsets = [1, 0], sizes = [8, 80], strides = [1, 1]} : vector<10x80xf32> to vector<8x80xf32>
    %559 = arith.truncf %558 : vector<8x80xf32> to vector<8x80xbf16>
    %c4_402 = arith.constant 4 : index
    %c0_403 = arith.constant 0 : index
    %c0_404 = arith.constant 0 : index
    %560 = vector.load %arg2[%c4_402, %c0_403, %c0_404] : memref<9x80x64xbf16, #tpu.memory_space<vmem>>, vector<1x80x64xbf16>
    %561 = vector.shape_cast %560 : vector<1x80x64xbf16> to vector<80x64xbf16>
    %cst_405 = arith.constant dense<0.000000e+00> : vector<8x64xf32>
    %562 = tpu.matmul %559, %561, %cst_405 {dimension_numbers = #tpu.dot_dimension_numbers<[1], [0], [0], [1], [0, 0, 1, 1], [], []>} : vector<8x80xbf16>, vector<80x64xbf16>, vector<8x64xf32> -> vector<8x64xf32>
    %563 = arith.addf %557, %562 : vector<8x64xf32>
    %564 = vector.extract_strided_slice %551 {offsets = [2, 0], sizes = [8, 80], strides = [1, 1]} : vector<10x80xf32> to vector<8x80xf32>
    %565 = arith.truncf %564 : vector<8x80xf32> to vector<8x80xbf16>
    %c5_406 = arith.constant 5 : index
    %c0_407 = arith.constant 0 : index
    %c0_408 = arith.constant 0 : index
    %566 = vector.load %arg2[%c5_406, %c0_407, %c0_408] : memref<9x80x64xbf16, #tpu.memory_space<vmem>>, vector<1x80x64xbf16>
    %567 = vector.shape_cast %566 : vector<1x80x64xbf16> to vector<80x64xbf16>
    %cst_409 = arith.constant dense<0.000000e+00> : vector<8x64xf32>
    %568 = tpu.matmul %565, %567, %cst_409 {dimension_numbers = #tpu.dot_dimension_numbers<[1], [0], [0], [1], [0, 0, 1, 1], [], []>} : vector<8x80xbf16>, vector<80x64xbf16>, vector<8x64xf32> -> vector<8x64xf32>
    %569 = arith.addf %563, %568 : vector<8x64xf32>
    %c0_410 = arith.constant 0 : index
    %c9 = arith.constant 9 : index
    %c0_411 = arith.constant 0 : index
    %c0_412 = arith.constant 0 : index
    %570 = vector.load %arg1[%c0_410, %c9, %c0_411, %c0_412] : memref<1x10x10x80xbf16, #tpu.memory_space<vmem>>, vector<1x1x10x80xbf16>
    %571 = vector.shape_cast %570 : vector<1x1x10x80xbf16> to vector<10x80xbf16>
    %572 = arith.extf %571 : vector<10x80xbf16> to vector<10x80xf32>
    %573 = vector.extract_strided_slice %572 {offsets = [0, 0], sizes = [8, 80], strides = [1, 1]} : vector<10x80xf32> to vector<8x80xf32>
    %574 = arith.truncf %573 : vector<8x80xf32> to vector<8x80xbf16>
    %c6_413 = arith.constant 6 : index
    %c0_414 = arith.constant 0 : index
    %c0_415 = arith.constant 0 : index
    %575 = vector.load %arg2[%c6_413, %c0_414, %c0_415] : memref<9x80x64xbf16, #tpu.memory_space<vmem>>, vector<1x80x64xbf16>
    %576 = vector.shape_cast %575 : vector<1x80x64xbf16> to vector<80x64xbf16>
    %cst_416 = arith.constant dense<0.000000e+00> : vector<8x64xf32>
    %577 = tpu.matmul %574, %576, %cst_416 {dimension_numbers = #tpu.dot_dimension_numbers<[1], [0], [0], [1], [0, 0, 1, 1], [], []>} : vector<8x80xbf16>, vector<80x64xbf16>, vector<8x64xf32> -> vector<8x64xf32>
    %578 = arith.addf %569, %577 : vector<8x64xf32>
    %579 = vector.extract_strided_slice %572 {offsets = [1, 0], sizes = [8, 80], strides = [1, 1]} : vector<10x80xf32> to vector<8x80xf32>
    %580 = arith.truncf %579 : vector<8x80xf32> to vector<8x80xbf16>
    %c7_417 = arith.constant 7 : index
    %c0_418 = arith.constant 0 : index
    %c0_419 = arith.constant 0 : index
    %581 = vector.load %arg2[%c7_417, %c0_418, %c0_419] : memref<9x80x64xbf16, #tpu.memory_space<vmem>>, vector<1x80x64xbf16>
    %582 = vector.shape_cast %581 : vector<1x80x64xbf16> to vector<80x64xbf16>
    %cst_420 = arith.constant dense<0.000000e+00> : vector<8x64xf32>
    %583 = tpu.matmul %580, %582, %cst_420 {dimension_numbers = #tpu.dot_dimension_numbers<[1], [0], [0], [1], [0, 0, 1, 1], [], []>} : vector<8x80xbf16>, vector<80x64xbf16>, vector<8x64xf32> -> vector<8x64xf32>
    %584 = arith.addf %578, %583 : vector<8x64xf32>
    %585 = vector.extract_strided_slice %572 {offsets = [2, 0], sizes = [8, 80], strides = [1, 1]} : vector<10x80xf32> to vector<8x80xf32>
    %586 = arith.truncf %585 : vector<8x80xf32> to vector<8x80xbf16>
    %c8_421 = arith.constant 8 : index
    %c0_422 = arith.constant 0 : index
    %c0_423 = arith.constant 0 : index
    %587 = vector.load %arg2[%c8_421, %c0_422, %c0_423] : memref<9x80x64xbf16, #tpu.memory_space<vmem>>, vector<1x80x64xbf16>
    %588 = vector.shape_cast %587 : vector<1x80x64xbf16> to vector<80x64xbf16>
    %cst_424 = arith.constant dense<0.000000e+00> : vector<8x64xf32>
    %589 = tpu.matmul %586, %588, %cst_424 {dimension_numbers = #tpu.dot_dimension_numbers<[1], [0], [0], [1], [0, 0, 1, 1], [], []>} : vector<8x80xbf16>, vector<80x64xbf16>, vector<8x64xf32> -> vector<8x64xf32>
    %590 = arith.addf %584, %589 : vector<8x64xf32>
    %591 = arith.truncf %590 : vector<8x64xf32> to vector<8x64xbf16>
    %c0_425 = arith.constant 0 : index
    %c7_426 = arith.constant 7 : index
    %c0_427 = arith.constant 0 : index
    %c0_428 = arith.constant 0 : index
    %592 = vector.load %arg3[%c0_425, %c7_426, %c0_427, %c0_428] : memref<1x8x8x64xbf16, #tpu.memory_space<vmem>>, vector<1x1x8x64xbf16>
    %593 = vector.shape_cast %592 : vector<1x1x8x64xbf16> to vector<8x64xbf16>
    %594 = vector.shape_cast %591 : vector<8x64xbf16> to vector<1x1x8x64xbf16>
    tpu.vector_store %arg3[%c0_425, %c7_426, %c0_427, %c0_428], %594 {strides = array<i32>} : memref<1x8x8x64xbf16, #tpu.memory_space<vmem>>, vector<1x1x8x64xbf16>,
    %cst_429 = arith.constant dense<0.000000e+00> : vector<64xf32>
    %595 = vector.multi_reduction <add>, %590, %cst_429 [0] : vector<8x64xf32> to vector<64xf32>
    %596 = vector.shape_cast %595 : vector<64xf32> to vector<1x64xf32>
    %597 = arith.addf %522, %596 : vector<1x64xf32>
    %598 = arith.mulf %590, %590 : vector<8x64xf32>
    %cst_430 = arith.constant dense<0.000000e+00> : vector<64xf32>
    %599 = vector.multi_reduction <add>, %598, %cst_430 [0] : vector<8x64xf32> to vector<64xf32>
    %600 = vector.shape_cast %599 : vector<64xf32> to vector<1x64xf32>
    %601 = arith.addf %526, %600 : vector<1x64xf32>
    %c0_431 = arith.constant 0 : index
    %c0_432 = arith.constant 0 : index
    %c0_433 = arith.constant 0 : index
    %602 = vector.load %arg4[%c0_431, %c0_432, %c0_433] : memref<1x2x64xf32, #tpu.memory_space<vmem>>, vector<1x1x64xf32>
    %603 = vector.shape_cast %602 : vector<1x1x64xf32> to vector<1x64xf32>
    %604 = vector.shape_cast %597 : vector<1x64xf32> to vector<1x1x64xf32>
    tpu.vector_store %arg4[%c0_431, %c0_432, %c0_433], %604 {strides = array<i32>} : memref<1x2x64xf32, #tpu.memory_space<vmem>>, vector<1x1x64xf32>,
    %c0_434 = arith.constant 0 : index
    %c1_435 = arith.constant 1 : index
    %c0_436 = arith.constant 0 : index
    %605 = vector.load %arg4[%c0_434, %c1_435, %c0_436] : memref<1x2x64xf32, #tpu.memory_space<vmem>>, vector<1x1x64xf32>
    %606 = vector.shape_cast %605 : vector<1x1x64xf32> to vector<1x64xf32>
    %607 = vector.shape_cast %601 : vector<1x64xf32> to vector<1x1x64xf32>
    tpu.vector_store %arg4[%c0_434, %c1_435, %c0_436], %607 {strides = array<i32>} : memref<1x2x64xf32, #tpu.memory_space<vmem>>, vector<1x1x64xf32>,
    return
  }
  func.func @transform_0(%arg0: i32) -> (i32, i32, i32, i32) {
    %c0_i32 = arith.constant 0 : i32
    %c0_i32_0 = arith.constant 0 : i32
    %c0_i32_1 = arith.constant 0 : i32
    %c0_i32_2 = arith.constant 0 : i32
    return %arg0, %c0_i32, %c0_i32_0, %c0_i32_1 : i32, i32, i32, i32
  }
  func.func @transform_1(%arg0: i32) -> (i32, i32, i32) {
    %c0_i32 = arith.constant 0 : i32
    %c0_i32_0 = arith.constant 0 : i32
    %c0_i32_1 = arith.constant 0 : i32
    %c0_i32_2 = arith.constant 0 : i32
    return %c0_i32, %c0_i32_0, %c0_i32_1 : i32, i32, i32
  }
  func.func @transform_2(%arg0: i32) -> (i32, i32, i32, i32) {
    %c0_i32 = arith.constant 0 : i32
    %c0_i32_0 = arith.constant 0 : i32
    %c0_i32_1 = arith.constant 0 : i32
    %c0_i32_2 = arith.constant 0 : i32
    return %arg0, %c0_i32, %c0_i32_0, %c0_i32_1 : i32, i32, i32, i32
  }
  func.func @transform_3(%arg0: i32) -> (i32, i32, i32) {
    %c0_i32 = arith.constant 0 : i32
    %c0_i32_0 = arith.constant 0 : i32
    %c0_i32_1 = arith.constant 0 : i32
    return %arg0, %c0_i32, %c0_i32_0 : i32, i32, i32
  }
}

module attributes {stable_mosaic.version = 11 : i64} {
  func.func @bn_relu_kernel(%arg0: i32, %arg1: memref<1x8x8x64xbf16, #tpu.memory_space<vmem>>, %arg2: memref<1x64xf32, #tpu.memory_space<vmem>>, %arg3: memref<1x64xf32, #tpu.memory_space<vmem>>, %arg4: memref<1x8x8x64xf32, #tpu.memory_space<vmem>>) attributes {dimension_semantics = [#tpu.dimension_semantics<parallel>], iteration_bounds = array<i64: 2>, scalar_prefetch = 0 : i64, scratch_operands = 0 : i64, tpu.core_type = #tpu.core_type<tc>, window_params = [{transform_indices = @transform_0, window_bounds = array<i64: 1, 8, 8, 64>}, {pipeline_mode = #tpu.pipeline_mode<synchronous>, transform_indices = @transform_1, window_bounds = array<i64: 1, 64>}, {pipeline_mode = #tpu.pipeline_mode<synchronous>, transform_indices = @transform_2, window_bounds = array<i64: 1, 64>}, {transform_indices = @transform_3, window_bounds = array<i64: 1, 8, 8, 64>}]} {
    %c0 = arith.constant 0 : index
    %c0_0 = arith.constant 0 : index
    %c0_1 = arith.constant 0 : index
    %c0_2 = arith.constant 0 : index
    %0 = vector.load %arg1[%c0, %c0_0, %c0_1, %c0_2] : memref<1x8x8x64xbf16, #tpu.memory_space<vmem>>, vector<1x8x8x64xbf16>
    %1 = vector.shape_cast %0 : vector<1x8x8x64xbf16> to vector<8x8x64xbf16>
    %2 = arith.extf %1 : vector<8x8x64xbf16> to vector<8x8x64xf32>
    %c0_3 = arith.constant 0 : index
    %c0_4 = arith.constant 0 : index
    %3 = vector.load %arg2[%c0_3, %c0_4] : memref<1x64xf32, #tpu.memory_space<vmem>>, vector<1x64xf32>
    %4 = vector.shape_cast %3 : vector<1x64xf32> to vector<1x1x64xf32>
    %5 = vector.broadcast %4 : vector<1x1x64xf32> to vector<8x8x64xf32>
    %6 = arith.mulf %2, %5 : vector<8x8x64xf32>
    %c0_5 = arith.constant 0 : index
    %c0_6 = arith.constant 0 : index
    %7 = vector.load %arg3[%c0_5, %c0_6] : memref<1x64xf32, #tpu.memory_space<vmem>>, vector<1x64xf32>
    %8 = vector.shape_cast %7 : vector<1x64xf32> to vector<1x1x64xf32>
    %9 = vector.broadcast %8 : vector<1x1x64xf32> to vector<8x8x64xf32>
    %10 = arith.addf %6, %9 : vector<8x8x64xf32>
    %cst = arith.constant 0.000000e+00 : f32
    %11 = vector.broadcast %cst : f32 to vector<8x8x64xf32>
    %12 = arith.maximumf %10, %11 : vector<8x8x64xf32>
    %c0_7 = arith.constant 0 : index
    %c0_8 = arith.constant 0 : index
    %c0_9 = arith.constant 0 : index
    %c0_10 = arith.constant 0 : index
    %13 = vector.load %arg4[%c0_7, %c0_8, %c0_9, %c0_10] : memref<1x8x8x64xf32, #tpu.memory_space<vmem>>, vector<1x8x8x64xf32>
    %14 = vector.shape_cast %13 : vector<1x8x8x64xf32> to vector<8x8x64xf32>
    %15 = vector.shape_cast %12 : vector<8x8x64xf32> to vector<1x8x8x64xf32>
    tpu.vector_store %arg4[%c0_7, %c0_8, %c0_9, %c0_10], %15 {strides = array<i32>} : memref<1x8x8x64xf32, #tpu.memory_space<vmem>>, vector<1x8x8x64xf32>,
    return
  }
  func.func @transform_0(%arg0: i32) -> (i32, i32, i32, i32) {
    %c0_i32 = arith.constant 0 : i32
    %c0_i32_0 = arith.constant 0 : i32
    %c0_i32_1 = arith.constant 0 : i32
    %c0_i32_2 = arith.constant 0 : i32
    return %arg0, %c0_i32, %c0_i32_0, %c0_i32_1 : i32, i32, i32, i32
  }
  func.func @transform_1(%arg0: i32) -> (i32, i32) {
    %c0_i32 = arith.constant 0 : i32
    %c0_i32_0 = arith.constant 0 : i32
    %c0_i32_1 = arith.constant 0 : i32
    return %c0_i32, %c0_i32_0 : i32, i32
  }
  func.func @transform_2(%arg0: i32) -> (i32, i32) {
    %c0_i32 = arith.constant 0 : i32
    %c0_i32_0 = arith.constant 0 : i32
    %c0_i32_1 = arith.constant 0 : i32
    return %c0_i32, %c0_i32_0 : i32, i32
  }
  func.func @transform_3(%arg0: i32) -> (i32, i32, i32, i32) {
    %c0_i32 = arith.constant 0 : i32
    %c0_i32_0 = arith.constant 0 : i32
    %c0_i32_1 = arith.constant 0 : i32
    %c0_i32_2 = arith.constant 0 : i32
    return %arg0, %c0_i32, %c0_i32_0, %c0_i32_1 : i32, i32, i32, i32
  }
}

</mosaic_0001>

<llo_original>
// kernel: tile.28
$region0: #{tile.28}
  #allocation0 [shape = 's32[1]{0}', space=sflag, size = 0x4, scoped, tag = 'scoped memory for tile.28']
  %s0 = inlined_call_operand.vmem [shape: f32[8], index: 0, kind: input, shape index: {}]
  %s1 = inlined_call_operand.vmem [shape: f32[8,8], index: 1, kind: output, shape index: {}]
  // Predicated region
  $region2: #{tile.28} parent=0 // pred_check
    _
  $region3: #{tile.28} parent=0 // pred_check_branch
    %3 = sbr.rel (0) target = $region5
  $region4: #{tile.28} parent=0 // pred_region
    _
  $region5: #{tile.28} parent=0 // pred_fallthru
    _
  %v4 = vld [vmem:[%s0] ss:$0 sm:$0xff]
  %5 = vst [vmem:[%s1] sm:$0xff] %v4

// kernel: tile.29
$region0: #{tile.29}
  %s0 = inlined_call_operand.vmem [shape: f32[8,8], index: 0, kind: input, shape index: {}]
  %s1 = inlined_call_operand.vmem [shape: f32[1,64], index: 1, kind: output, shape index: {}]
  $region1: #{tile.29} parent=0
    #allocation0 [shape = 'u8[4096]{0}', space=vmem, size = 0x1000, scoped, tag = 'scoped mem for output reshape']
    %v2 = vld [vmem:[%s0] sm:$0x1]
    %vm3 = vcmask 64512
    %4 = vst.msk [vmem:[#allocation0] sm:$0x1] %vm3, %v2
    %s5 = scalar_lea.vmem %s0, 7
    %v6 = vld [vmem:[%s5] sm:$0x1]
    %7 = vrot.lane.b32.xlu0 %v6, 56
    %v8 = vpop.permute.xlu0 %7
    %vm9 = vcmask 523712
    %10 = vst.msk [vmem:[#allocation0] sm:$0x1] %vm9, %v8
    %s11 = scalar_lea.vmem %s0, 6
    %v12 = vld [vmem:[%s11] sm:$0x1]
    %13 = vrot.lane.b32.xlu0 %v12, 48
    %v14 = vpop.permute.xlu0 %13
    %vm15 = vcmask 458112
    %16 = vst.msk [vmem:[#allocation0] sm:$0x1] %vm15, %v14
    %s17 = scalar_lea.vmem %s0, 5
    %v18 = vld [vmem:[%s17] sm:$0x1]
    %19 = vrot.lane.b32.xlu0 %v18, 40
    %v20 = vpop.permute.xlu0 %19
    %vm21 = vcmask 392512
    %22 = vst.msk [vmem:[#allocation0] sm:$0x1] %vm21, %v20
    %s23 = scalar_lea.vmem %s0, 4
    %v24 = vld [vmem:[%s23] sm:$0x1]
    %25 = vrot.lane.b32.xlu0 %v24, 32
    %v26 = vpop.permute.xlu0 %25
    %vm27 = vcmask 326912
    %28 = vst.msk [vmem:[#allocation0] sm:$0x1] %vm27, %v26
    %s29 = scalar_lea.vmem %s0, 3
    %v30 = vld [vmem:[%s29] sm:$0x1]
    %31 = vrot.lane.b32.xlu0 %v30, 24
    %v32 = vpop.permute.xlu0 %31
    %vm33 = vcmask 261312
    %34 = vst.msk [vmem:[#allocation0] sm:$0x1] %vm33, %v32
    %s35 = scalar_lea.vmem %s0, 2
    %v36 = vld [vmem:[%s35] sm:$0x1]
    %37 = vrot.lane.b32.xlu0 %v36, 16
    %v38 = vpop.permute.xlu0 %37
    %vm39 = vcmask 195712
    %40 = vst.msk [vmem:[#allocation0] sm:$0x1] %vm39, %v38
    %s41 = scalar_lea.vmem %s0, 1
    %v42 = vld [vmem:[%s41] sm:$0x1]
    %43 = vrot.lane.b32.xlu0 %v42, 8
    %v44 = vpop.permute.xlu0 %43
    %vm45 = vcmask 130112
    %46 = vst.msk [vmem:[#allocation0] sm:$0x1] %vm45, %v44
    %s48 = ssub.s32 2, 1
    %v49 = vld [vmem:[#allocation0] sm:%s48]
    %s51 = ssub.s32 2, 1
    %52 = vst [vmem:[%s1] sm:%s51] %v49

// kernel: double_conv_forward.5
$region0: #{double_conv_forward.5}
  #allocation0 [shape = 'u32[]', space=smem, size = 0x4, offset = 0x4, fixed_abs, tag = 'smem constant byte address 0x4 - core index']
  #allocation1 [shape = 'u32[72,128]{1,0:T(1,128)}', space=vmem, size = 0x9000, scoped, tag = 'internal scratch']
  %s0 = inlined_call_operand.vmem [shape: bf16[2,8,8,64], index: 0, kind: input, shape index: {}]
  %s1 = inlined_call_operand.vmem [shape: f32[1,64], index: 1, kind: input, shape index: {}]
  %s2 = inlined_call_operand.vmem [shape: f32[1,64], index: 2, kind: input, shape index: {}]
  %s3 = inlined_call_operand.vmem [shape: bf16[2,8,8,64], index: 3, kind: output, shape index: {}]
  %s4 = sld [smem:[#allocation0]]
  $region45: #{double_conv_forward.5} parent=0
    _
  %s6 = ssub.s32 1, %s4
  %s7 = scalar_select 0, %s6, %s4
  loop: start=0, step=1, limit=4
  $region2: #{double_conv_forward.5} parent=0 // loop_pre_header
    _
  $region3: #{double_conv_forward.5} parent=0 // loop_header
    %s9 = sphi 0, %s13
    %p10 = scmp.ge.s32.totalorder %s9, 4
    %s19 = sphi 0, %s21
    %s22 = sphi 0, %s19
    %s23 = sphi 0, %s22
    %s39 = sphi 0, %s23
    %s43 = sphi 0, %s43
    %s45 = sphi 0, %s43
    %s46 = sphi 0, %s45
    %s60 = sphi 0, %s46
    %s64 = sphi 0, %s64
    %s66 = sphi 0, %s64
    %s67 = sphi 0, %s66
    %s81 = sphi 0, %s67
    %s87 = sphi 0, %s89
    %s90 = sphi 0, %s87
    %s91 = sphi 0, %s90
    %s107 = sphi 0, %s91
  $region4: #{double_conv_forward.5} parent=0 // loop_header_branch
    %12 = sbr.rel (%p10) target = $region8
  $region5: #{double_conv_forward.5} parent=0 // loop_body
    %s14 = ssub.s32 %s9, 1
    %s15 = ssub.s32 %s9, 2
    %s16 = sadd.s32 %s9, 1
    %s17 = ssub.s32 %s9, %s16
    %p18 = scmp.eq.s32.totalorder %s17, 0
    %s20 = sadd.s32 %s19, 1
    %s21 = scalar_select %p18, %s19, %s20
    %p24 = pneg %p18
    %p25 = scmp.eq.s32.totalorder %s9, 1
    %p26 = por %p24, %p25
    %p27 = scmp.ne.s32.totalorder %s19, %s22
    %p28 = scmp.eq.s32.totalorder %s9, 0
    %p29 = por %p27, %p28
    %p30 = scmp.ne.s32.totalorder %s19, %s22
    %p31 = scmp.eq.s32.totalorder %s14, 1
    %p32 = por %p30, %p31
    %p33 = scmp.ne.s32.totalorder %s22, %s23
    %p34 = scmp.eq.s32.totalorder %s14, 0
    %p35 = por %p33, %p34
    %p36 = scmp.ne.s32.totalorder %s22, %s23
    %p37 = scmp.eq.s32.totalorder %s15, 1
    %p38 = por %p36, %p37
    %p40 = scmp.ne.s32.totalorder %s23, %s39
    %p41 = scmp.eq.s32.totalorder %s15, 0
    %p42 = por %p40, %p41
    %s44 = sadd.s32 %s43, 1
    %p47 = scmp.eq.s32.totalorder %s9, 1
    %p48 = scmp.ne.s32.totalorder %s43, %s45
    %p49 = scmp.eq.s32.totalorder %s9, 0
    %p50 = por %p48, %p49
    %p51 = scmp.ne.s32.totalorder %s43, %s45
    %p52 = scmp.eq.s32.totalorder %s14, 1
    %p53 = por %p51, %p52
    %p54 = scmp.ne.s32.totalorder %s45, %s46
    %p55 = scmp.eq.s32.totalorder %s14, 0
    %p56 = por %p54, %p55
    %p57 = scmp.ne.s32.totalorder %s45, %s46
    %p58 = scmp.eq.s32.totalorder %s15, 1
    %p59 = por %p57, %p58
    %p61 = scmp.ne.s32.totalorder %s46, %s60
    %p62 = scmp.eq.s32.totalorder %s15, 0
    %p63 = por %p61, %p62
    %s65 = sadd.s32 %s64, 1
    %p68 = scmp.eq.s32.totalorder %s9, 1
    %p69 = scmp.ne.s32.totalorder %s64, %s66
    %p70 = scmp.eq.s32.totalorder %s9, 0
    %p71 = por %p69, %p70
    %p72 = scmp.ne.s32.totalorder %s64, %s66
    %p73 = scmp.eq.s32.totalorder %s14, 1
    %p74 = por %p72, %p73
    %p75 = scmp.ne.s32.totalorder %s66, %s67
    %p76 = scmp.eq.s32.totalorder %s14, 0
    %p77 = por %p75, %p76
    %p78 = scmp.ne.s32.totalorder %s66, %s67
    %p79 = scmp.eq.s32.totalorder %s15, 1
    %p80 = por %p78, %p79
    %p82 = scmp.ne.s32.totalorder %s67, %s81
    %p83 = scmp.eq.s32.totalorder %s15, 0
    %p84 = por %p82, %p83
    %s85 = ssub.s32 %s9, %s16
    %p86 = scmp.eq.s32.totalorder %s85, 0
    %s88 = sadd.s32 %s87, 1
    %s89 = scalar_select %p86, %s87, %s88
    %p92 = pneg %p86
    %p93 = scmp.eq.s32.totalorder %s9, 1
    %p94 = por %p92, %p93
    %p95 = scmp.ne.s32.totalorder %s87, %s90
    %p96 = scmp.eq.s32.totalorder %s9, 0
    %p97 = por %p95, %p96
    %p98 = scmp.ne.s32.totalorder %s87, %s90
    %p99 = scmp.eq.s32.totalorder %s14, 1
    %p100 = por %p98, %p99
    %p101 = scmp.ne.s32.totalorder %s90, %s91
    %p102 = scmp.eq.s32.totalorder %s14, 0
    %p103 = por %p101, %p102
    %p104 = scmp.ne.s32.totalorder %s90, %s91
    %p105 = scmp.eq.s32.totalorder %s15, 1
    %p106 = por %p104, %p105
    %p108 = scmp.ne.s32.totalorder %s91, %s107
    %p109 = scmp.eq.s32.totalorder %s15, 0
    %p110 = por %p108, %p109
    %p111 = scmp.le.s32.totalorder 1, %s9
    %p112 = scmp.lt.s32.totalorder %s9, 3
    %p113 = pnand %p111, %p112
    %p114 = pneg %p113
    // Predicated region
    $region9: #{double_conv_forward.5} parent=5 // pred_check
      _
    $region10: #{double_conv_forward.5} parent=5 // pred_check_branch
      %116 = sbr.rel (%p113) target = $region12
    $region11: #{double_conv_forward.5} parent=5 // pred_region
      %s117 = ssub.s32 %s9, 1
      // Predicated region
      $region13: #{double_conv_forward.5} parent=11 // pred_check
        %p118 = pneg %p56
      $region14: #{double_conv_forward.5} parent=11 // pred_check_branch
        %120 = sbr.rel (%p118) target = $region16
      $region15: #{double_conv_forward.5} parent=11 // pred_region
        _
      $region16: #{double_conv_forward.5} parent=11 // pred_fallthru
        _
      // Predicated region
      $region17: #{double_conv_forward.5} parent=11 // pred_check
        %p121 = pneg %p77
      $region18: #{double_conv_forward.5} parent=11 // pred_check_branch
        %123 = sbr.rel (%p121) target = $region20
      $region19: #{double_conv_forward.5} parent=11 // pred_region
        _
      $region20: #{double_conv_forward.5} parent=11 // pred_fallthru
        _
    $region12: #{double_conv_forward.5} parent=5 // pred_fallthru
      _
    %p124 = scmp.lt.s32.totalorder %s9, 2
    // Predicated region
    $region21: #{double_conv_forward.5} parent=5 // pred_check
      %p125 = pneg %p124
    $region22: #{double_conv_forward.5} parent=5 // pred_check_branch
      %127 = sbr.rel (%p125) target = $region24
    $region23: #{double_conv_forward.5} parent=5 // pred_region
      // Predicated region
      $region25: #{double_conv_forward.5} parent=23 // pred_check
        %p128 = pneg %p29
      $region26: #{double_conv_forward.5} parent=23 // pred_check_branch
        %130 = sbr.rel (%p128) target = $region28
      $region27: #{double_conv_forward.5} parent=23 // pred_region
        %p131 = scmp.lt.s32.totalorder %s9, 1
        %s132 = scalar_select %p131, %s9, 1
        %s133 = smul.addr %s132, 8
        %s134 = smul.addr %s133, 4
        %s135 = scalar_lea.vmem %s0, %s134
      $region28: #{double_conv_forward.5} parent=23 // pred_fallthru
        _
    $region24: #{double_conv_forward.5} parent=5 // pred_fallthru
      _
    %p136 = scmp.le.s32.totalorder 1, %s9
    %p137 = scmp.lt.s32.totalorder %s9, 3
    %p138 = pnand %p136, %p137
    %p139 = pneg %p138
    // Predicated region
    $region29: #{double_conv_forward.5} parent=5 // pred_check
      _
    $region30: #{double_conv_forward.5} parent=5 // pred_check_branch
      %141 = sbr.rel (%p138) target = $region32
    $region31: #{double_conv_forward.5} parent=5 // pred_region
      %s142 = ssub.s32 %s9, 1
      %p143 = scmp.lt.s32.totalorder %s14, 1
      %s144 = scalar_select %p143, %s14, 1
      %s145 = smul.addr %s144, 8
      %s146 = smul.addr %s145, 4
      %s147 = scalar_lea.vmem %s0, %s146
      %p148 = pneg %p35
      %p149 = pneg %p32
      %p150 = pneg %p56
      %p151 = pneg %p53
      %p152 = pneg %p77
      %p153 = pneg %p74
      %p154 = pneg %p103
      %p155 = pneg %p100
      %p156 = scmp.lt.s32.totalorder %s14, 1
      %s157 = scalar_select %p156, %s14, 1
      %s158 = smul.addr %s157, 8
      %s159 = smul.addr %s158, 4
      %s160 = scalar_lea.vmem %s3, %s159
      %p161 = scmp.lt.s32.totalorder %s14, 1
      %s162 = scalar_select %p161, %s14, 1
      %s163 = smul.addr %s162, 8
      %s164 = smul.addr %s163, 4
      %s165 = scalar_lea.vmem %s0, %s164
      %p166 = scmp.lt.s32.totalorder %s14, 1
      %s167 = scalar_select %p166, %s14, 1
      %s168 = smul.addr %s167, 8
      %s169 = smul.addr %s168, 4
      %s170 = scalar_lea.vmem %s3, %s169
      %v171 = vld [vmem:[%s165] sm:$0xf]
      %v172 = vld [vmem:[%s165 + $0x4] sm:$0xf]
      %v173 = vld [vmem:[%s165 + $0x8] sm:$0xf]
      %v174 = vld [vmem:[%s165 + $0xc] sm:$0xf]
      %v175 = vld [vmem:[%s165 + $0x10] sm:$0xf]
      %v176 = vld [vmem:[%s165 + $0x14] sm:$0xf]
      %v177 = vld [vmem:[%s165 + $0x18] sm:$0xf]
      %v178 = vld [vmem:[%s165 + $0x1c] sm:$0xf]
      %v179 = vunpack.c.l.bf16 %v171
      %v180 = vunpack.c.l.bf16 %v172
      %v181 = vunpack.c.l.bf16 %v173
      %v182 = vunpack.c.l.bf16 %v174
      %v183 = vunpack.c.l.bf16 %v175
      %v184 = vunpack.c.l.bf16 %v176
      %v185 = vunpack.c.l.bf16 %v177
      %v186 = vunpack.c.l.bf16 %v178
      %v187 = vld [vmem:[%s1] sm:$0x1]
      %v189 = vperm.slane %v187, 0
      %v191 = vmul.f32 %v179, %v189
      %v192 = vmul.f32 %v180, %v189
      %v193 = vmul.f32 %v181, %v189
      %v194 = vmul.f32 %v182, %v189
      %v195 = vmul.f32 %v183, %v189
      %v196 = vmul.f32 %v184, %v189
      %v197 = vmul.f32 %v185, %v189
      %v198 = vmul.f32 %v186, %v189
      %v199 = vld [vmem:[%s2] sm:$0x1]
      %v201 = vperm.slane %v199, 0
      %v203 = vadd.f32 %v191, %v201
      %v204 = vadd.f32 %v192, %v201
      %v205 = vadd.f32 %v193, %v201
      %v206 = vadd.f32 %v194, %v201
      %v207 = vadd.f32 %v195, %v201
      %v208 = vadd.f32 %v196, %v201
      %v209 = vadd.f32 %v197, %v201
      %v210 = vadd.f32 %v198, %v201
      %v211 = vmax.f32 %v203, 0.0
      %v212 = vmax.f32 %v204, 0.0
      %v213 = vmax.f32 %v205, 0.0
      %v214 = vmax.f32 %v206, 0.0
      %v215 = vmax.f32 %v207, 0.0
      %v216 = vmax.f32 %v208, 0.0
      %v217 = vmax.f32 %v209, 0.0
      %v218 = vmax.f32 %v210, 0.0
      %v219 = vpack.c.bf16 %v211, %v211
      %v220 = vpack.c.bf16 %v212, %v212
      %v221 = vpack.c.bf16 %v213, %v213
      %v222 = vpack.c.bf16 %v214, %v214
      %v223 = vpack.c.bf16 %v215, %v215
      %v224 = vpack.c.bf16 %v216, %v216
      %v225 = vpack.c.bf16 %v217, %v217
      %v226 = vpack.c.bf16 %v218, %v218
      %vm227 = vcmask 519168
      %228 = vst.msk [vmem:[%s170] sm:$0xf] %vm227, %v219
      %229 = vst.msk [vmem:[%s170 + $0x4] sm:$0xf] %vm227, %v220
      %230 = vst.msk [vmem:[%s170 + $0x8] sm:$0xf] %vm227, %v221
      %231 = vst.msk [vmem:[%s170 + $0xc] sm:$0xf] %vm227, %v222
      %232 = vst.msk [vmem:[%s170 + $0x10] sm:$0xf] %vm227, %v223
      %233 = vst.msk [vmem:[%s170 + $0x14] sm:$0xf] %vm227, %v224
      %234 = vst.msk [vmem:[%s170 + $0x18] sm:$0xf] %vm227, %v225
      %235 = vst.msk [vmem:[%s170 + $0x1c] sm:$0xf] %vm227, %v226
      %p236 = scmp.lt.s32.totalorder %s14, 1
      %s237 = scalar_select %p236, %s14, 1
      %s238 = smul.addr %s237, 8
      %s239 = smul.addr %s238, 4
      %s240 = scalar_lea.vmem %s3, %s239
      // Predicated region
      $region33: #{double_conv_forward.5} parent=31 // pred_check
        %p241 = pneg %p100
      $region34: #{double_conv_forward.5} parent=31 // pred_check_branch
        %243 = sbr.rel (%p241) target = $region36
      $region35: #{double_conv_forward.5} parent=31 // pred_region
        _
      $region36: #{double_conv_forward.5} parent=31 // pred_fallthru
        _
    $region32: #{double_conv_forward.5} parent=5 // pred_fallthru
      _
    %p244 = scmp.le.s32.totalorder 2, %s9
    // Predicated region
    $region37: #{double_conv_forward.5} parent=5 // pred_check
      %p245 = pneg %p244
    $region38: #{double_conv_forward.5} parent=5 // pred_check_branch
      %247 = sbr.rel (%p245) target = $region40
    $region39: #{double_conv_forward.5} parent=5 // pred_region
      %s248 = ssub.s32 %s9, 2
      // Predicated region
      $region41: #{double_conv_forward.5} parent=39 // pred_check
        %p249 = pneg %p106
      $region42: #{double_conv_forward.5} parent=39 // pred_check_branch
        %251 = sbr.rel (%p249) target = $region44
      $region43: #{double_conv_forward.5} parent=39 // pred_region
        %p252 = scmp.lt.s32.totalorder %s15, 1
        %s253 = scalar_select %p252, %s15, 1
        %s254 = smul.addr %s253, 8
        %s255 = smul.addr %s254, 4
        %s256 = scalar_lea.vmem %s3, %s255
      $region44: #{double_conv_forward.5} parent=39 // pred_fallthru
        _
    $region40: #{double_conv_forward.5} parent=5 // pred_fallthru
      _
  $region6: #{double_conv_forward.5} parent=0 // loop_footer
    %s13 = sadd.s32 1, %s9
  $region7: #{double_conv_forward.5} parent=0 // loop_footer_branch
    %8 = sbr.rel target = $region3
  $region8: #{double_conv_forward.5} parent=0 // loop_exit
    _

// kernel: double_conv_forward.4
$region0: #{double_conv_forward.4}
  #allocation0 [shape = 'u32[]', space=smem, size = 0x4, offset = 0x4, fixed_abs, tag = 'smem constant byte address 0x4 - core index']
  #allocation1 [shape = 'u32[72,128]{1,0:T(1,128)}', space=vmem, size = 0x9000, scoped, tag = 'internal scratch']
  %s0 = inlined_call_operand.vmem [shape: bf16[2,10,10,40], index: 0, kind: input, shape index: {}]
  %s1 = inlined_call_operand.vmem [shape: bf16[9,40,64], index: 1, kind: input, shape index: {}]
  %s2 = inlined_call_operand.vmem [shape: bf16[2,8,8,64], index: 2, kind: output, shape index: {0}]
  %s3 = inlined_call_operand.vmem [shape: f32[2,2,64], index: 3, kind: output, shape index: {1}]
  %4 = xla_tuple %s2, %s3
  %s5 = sld [smem:[#allocation0]]
  $region49: #{double_conv_forward.4} parent=0
    _
  %s7 = ssub.s32 1, %s5
  %s8 = scalar_select 0, %s7, %s5
  loop: start=0, step=1, limit=4
  $region2: #{double_conv_forward.4} parent=0 // loop_pre_header
    _
  $region3: #{double_conv_forward.4} parent=0 // loop_header
    %s10 = sphi 0, %s14
    %p11 = scmp.ge.s32.totalorder %s10, 4
    %s20 = sphi 0, %s22
    %s23 = sphi 0, %s20
    %s24 = sphi 0, %s23
    %s40 = sphi 0, %s24
    %s44 = sphi 0, %s44
    %s46 = sphi 0, %s44
    %s47 = sphi 0, %s46
    %s61 = sphi 0, %s47
    %s67 = sphi 0, %s69
    %s70 = sphi 0, %s67
    %s71 = sphi 0, %s70
    %s87 = sphi 0, %s71
    %s93 = sphi 0, %s95
    %s96 = sphi 0, %s93
    %s97 = sphi 0, %s96
    %s113 = sphi 0, %s97
  $region4: #{double_conv_forward.4} parent=0 // loop_header_branch
    %13 = sbr.rel (%p11) target = $region8
  $region5: #{double_conv_forward.4} parent=0 // loop_body
    %s15 = ssub.s32 %s10, 1
    %s16 = ssub.s32 %s10, 2
    %s17 = sadd.s32 %s10, 1
    %s18 = ssub.s32 %s10, %s17
    %p19 = scmp.eq.s32.totalorder %s18, 0
    %s21 = sadd.s32 %s20, 1
    %s22 = scalar_select %p19, %s20, %s21
    %p25 = pneg %p19
    %p26 = scmp.eq.s32.totalorder %s10, 1
    %p27 = por %p25, %p26
    %p28 = scmp.ne.s32.totalorder %s20, %s23
    %p29 = scmp.eq.s32.totalorder %s10, 0
    %p30 = por %p28, %p29
    %p31 = scmp.ne.s32.totalorder %s20, %s23
    %p32 = scmp.eq.s32.totalorder %s15, 1
    %p33 = por %p31, %p32
    %p34 = scmp.ne.s32.totalorder %s23, %s24
    %p35 = scmp.eq.s32.totalorder %s15, 0
    %p36 = por %p34, %p35
    %p37 = scmp.ne.s32.totalorder %s23, %s24
    %p38 = scmp.eq.s32.totalorder %s16, 1
    %p39 = por %p37, %p38
    %p41 = scmp.ne.s32.totalorder %s24, %s40
    %p42 = scmp.eq.s32.totalorder %s16, 0
    %p43 = por %p41, %p42
    %s45 = sadd.s32 %s44, 1
    %p48 = scmp.eq.s32.totalorder %s10, 1
    %p49 = scmp.ne.s32.totalorder %s44, %s46
    %p50 = scmp.eq.s32.totalorder %s10, 0
    %p51 = por %p49, %p50
    %p52 = scmp.ne.s32.totalorder %s44, %s46
    %p53 = scmp.eq.s32.totalorder %s15, 1
    %p54 = por %p52, %p53
    %p55 = scmp.ne.s32.totalorder %s46, %s47
    %p56 = scmp.eq.s32.totalorder %s15, 0
    %p57 = por %p55, %p56
    %p58 = scmp.ne.s32.totalorder %s46, %s47
    %p59 = scmp.eq.s32.totalorder %s16, 1
    %p60 = por %p58, %p59
    %p62 = scmp.ne.s32.totalorder %s47, %s61
    %p63 = scmp.eq.s32.totalorder %s16, 0
    %p64 = por %p62, %p63
    %s65 = ssub.s32 %s10, %s17
    %p66 = scmp.eq.s32.totalorder %s65, 0
    %s68 = sadd.s32 %s67, 1
    %s69 = scalar_select %p66, %s67, %s68
    %p72 = pneg %p66
    %p73 = scmp.eq.s32.totalorder %s10, 1
    %p74 = por %p72, %p73
    %p75 = scmp.ne.s32.totalorder %s67, %s70
    %p76 = scmp.eq.s32.totalorder %s10, 0
    %p77 = por %p75, %p76
    %p78 = scmp.ne.s32.totalorder %s67, %s70
    %p79 = scmp.eq.s32.totalorder %s15, 1
    %p80 = por %p78, %p79
    %p81 = scmp.ne.s32.totalorder %s70, %s71
    %p82 = scmp.eq.s32.totalorder %s15, 0
    %p83 = por %p81, %p82
    %p84 = scmp.ne.s32.totalorder %s70, %s71
    %p85 = scmp.eq.s32.totalorder %s16, 1
    %p86 = por %p84, %p85
    %p88 = scmp.ne.s32.totalorder %s71, %s87
    %p89 = scmp.eq.s32.totalorder %s16, 0
    %p90 = por %p88, %p89
    %s91 = ssub.s32 %s10, %s17
    %p92 = scmp.eq.s32.totalorder %s91, 0
    %s94 = sadd.s32 %s93, 1
    %s95 = scalar_select %p92, %s93, %s94
    %p98 = pneg %p92
    %p99 = scmp.eq.s32.totalorder %s10, 1
    %p100 = por %p98, %p99
    %p101 = scmp.ne.s32.totalorder %s93, %s96
    %p102 = scmp.eq.s32.totalorder %s10, 0
    %p103 = por %p101, %p102
    %p104 = scmp.ne.s32.totalorder %s93, %s96
    %p105 = scmp.eq.s32.totalorder %s15, 1
    %p106 = por %p104, %p105
    %p107 = scmp.ne.s32.totalorder %s96, %s97
    %p108 = scmp.eq.s32.totalorder %s15, 0
    %p109 = por %p107, %p108
    %p110 = scmp.ne.s32.totalorder %s96, %s97
    %p111 = scmp.eq.s32.totalorder %s16, 1
    %p112 = por %p110, %p111
    %p114 = scmp.ne.s32.totalorder %s97, %s113
    %p115 = scmp.eq.s32.totalorder %s16, 0
    %p116 = por %p114, %p115
    %p117 = scmp.le.s32.totalorder 1, %s10
    %p118 = scmp.lt.s32.totalorder %s10, 3
    %p119 = pnand %p117, %p118
    %p120 = pneg %p119
    // Predicated region
    $region9: #{double_conv_forward.4} parent=5 // pred_check
      _
    $region10: #{double_conv_forward.4} parent=5 // pred_check_branch
      %122 = sbr.rel (%p119) target = $region12
    $region11: #{double_conv_forward.4} parent=5 // pred_region
      %s123 = ssub.s32 %s10, 1
      // Predicated region
      $region13: #{double_conv_forward.4} parent=11 // pred_check
        %p124 = pneg %p57
      $region14: #{double_conv_forward.4} parent=11 // pred_check_branch
        %126 = sbr.rel (%p124) target = $region16
      $region15: #{double_conv_forward.4} parent=11 // pred_region
        _
      $region16: #{double_conv_forward.4} parent=11 // pred_fallthru
        _
    $region12: #{double_conv_forward.4} parent=5 // pred_fallthru
      _
    %p127 = scmp.lt.s32.totalorder %s10, 2
    // Predicated region
    $region17: #{double_conv_forward.4} parent=5 // pred_check
      %p128 = pneg %p127
    $region18: #{double_conv_forward.4} parent=5 // pred_check_branch
      %130 = sbr.rel (%p128) target = $region20
    $region19: #{double_conv_forward.4} parent=5 // pred_region
      // Predicated region
      $region21: #{double_conv_forward.4} parent=19 // pred_check
        %p131 = pneg %p30
      $region22: #{double_conv_forward.4} parent=19 // pred_check_branch
        %133 = sbr.rel (%p131) target = $region24
      $region23: #{double_conv_forward.4} parent=19 // pred_region
        %p134 = scmp.lt.s32.totalorder %s10, 1
        %s135 = scalar_select %p134, %s10, 1
        %s136 = smul.addr %s135, 20
        %s137 = smul.addr %s136, 4
        %s138 = scalar_lea.vmem %s0, %s137
      $region24: #{double_conv_forward.4} parent=19 // pred_fallthru
        _
    $region20: #{double_conv_forward.4} parent=5 // pred_fallthru
      _
    %p139 = scmp.le.s32.totalorder 1, %s10
    %p140 = scmp.lt.s32.totalorder %s10, 3
    %p141 = pnand %p139, %p140
    %p142 = pneg %p141
    // Predicated region
    $region25: #{double_conv_forward.4} parent=5 // pred_check
      _
    $region26: #{double_conv_forward.4} parent=5 // pred_check_branch
      %144 = sbr.rel (%p141) target = $region28
    $region27: #{double_conv_forward.4} parent=5 // pred_region
      %s145 = ssub.s32 %s10, 1
      %p146 = scmp.lt.s32.totalorder %s15, 1
      %s147 = scalar_select %p146, %s15, 1
      %s148 = smul.addr %s147, 20
      %s149 = smul.addr %s148, 4
      %s150 = scalar_lea.vmem %s0, %s149
      %p151 = pneg %p36
      %p152 = pneg %p33
      %p153 = pneg %p57
      %p154 = pneg %p54
      %p155 = pneg %p83
      %p156 = pneg %p80
      %p157 = scmp.lt.s32.totalorder %s15, 1
      %s158 = scalar_select %p157, %s15, 1
      %s159 = smul.addr %s158, 8
      %s160 = smul.addr %s159, 4
      %s161 = scalar_lea.vmem %s2, %s160
      %p162 = pneg %p109
      %p163 = pneg %p106
      %p164 = scmp.lt.s32.totalorder %s15, 1
      %s165 = scalar_select %p164, %s15, 1
      %s166 = smul.addr %s165, 2
      %s167 = scalar_lea.vmem %s3, %s166
      %p168 = scmp.lt.s32.totalorder %s15, 1
      %s169 = scalar_select %p168, %s15, 1
      %s170 = smul.addr %s169, 20
      %s171 = smul.addr %s170, 4
      %s172 = scalar_lea.vmem %s0, %s171
      %p173 = scmp.lt.s32.totalorder %s15, 1
      %s174 = scalar_select %p173, %s15, 1
      %s175 = smul.addr %s174, 8
      %s176 = smul.addr %s175, 4
      %s177 = scalar_lea.vmem %s2, %s176
      %p178 = scmp.lt.s32.totalorder %s15, 1
      %s179 = scalar_select %p178, %s15, 1
      %s180 = smul.addr %s179, 2
      %s181 = scalar_lea.vmem %s3, %s180
      %v183 = vld [vmem:[%s172] sm:$0xf]
      %v184 = vld [vmem:[%s172 + $0x4] sm:$0x1]
      %v185 = vunpack.c.l.bf16 %v183
      %v186 = vunpack.c.l.bf16 %v184
      %v187 = vpack.c.bf16 %v185, %v185
      %v188 = vld [vmem:[%s1] sm:$0xf]
      %v189 = vld [vmem:[%s1 + $0x4] sm:$0xf]
      %v190 = vld [vmem:[%s1 + $0x8] sm:$0xf]
      %v191 = vld [vmem:[%s1 + $0xc] sm:$0xf]
      %v192 = vld [vmem:[%s1 + $0x10] sm:$0xf]
      %v193 = vpack.c.bf16 %v186, %v185
      %s194 = scalar_lea.vmem %s1, 20
      %v195 = vld [vmem:[%s194] sm:$0xf]
      %v196 = vld [vmem:[%s194 + $0x4] sm:$0xf]
      %v197 = vld [vmem:[%s194 + $0x8] sm:$0xf]
      %v198 = vld [vmem:[%s194 + $0xc] sm:$0xf]
      %v199 = vld [vmem:[%s194 + $0x10] sm:$0xf]
      %v201 = vshrl.u32 %v193, 16
      %v203 = vshll.u32 %v193, 16
      %v205 = vrot.slane %v203, 1
      %v206 = vor.u32 %v201, %v205
      %v212 = vunpack.c.l.b16 %v195
      %v213 = vunpack.c.l.b16 %v196
      %v214 = vunpack.c.l.b16 %v197
      %v215 = vunpack.c.l.b16 %v198
      %v216 = vunpack.c.l.b16 %v199
      %v217 = vpack.c.b16 %v213, %v212
      %v218 = vpack.c.b16 %v215, %v214
      %v219 = vpack.c.b16 %v216, %v216
      %vm222 = vcmask 326656
      %v224 = vsel %vm222, %v206, 0
      %vm226 = vcmask 1043456
      %v228 = vsel %vm226, %v219, 0
      %230 = vmatpush.bf16.msra.mxu0 0
      %231 = vmatpush.bf16.msra.mxu0 0
      %232 = vmatpush.bf16.msra.mxu0 0
      %233 = vmatpush.bf16.msra.mxu0 0
      %234 = vmatpush.bf16.msra.mxu0 0
      %235 = vmatpush.bf16.msra.mxu0 %v228
      %236 = vmatpush.bf16.msra.mxu0 %v218
      %237 = vmatpush.bf16.msra.mxu0 %v217
      %238 = vmatmul.bf16.gmra.mxu0 %v224
      %v239 = vpop.f32.mrf.mxu0
      %v240 = vadd.f32 0.0, %v239
      %v241 = vpop.f32.mrf.mxu0
      %242 = vdwg.mxu0
      %v248 = vunpack.c.l.b16 %v188
      %v249 = vunpack.c.l.b16 %v189
      %v250 = vunpack.c.l.b16 %v190
      %v251 = vunpack.c.l.b16 %v191
      %v252 = vunpack.c.l.b16 %v192
      %v253 = vpack.c.b16 %v249, %v248
      %v254 = vpack.c.b16 %v251, %v250
      %v255 = vpack.c.b16 %v252, %v252
      %v259 = vsel %vm222, %v187, 0
      %v262 = vsel %vm226, %v255, 0
      %264 = vmatpush.bf16.msra.mxu0 0
      %265 = vmatpush.bf16.msra.mxu0 0
      %266 = vmatpush.bf16.msra.mxu0 0
      %267 = vmatpush.bf16.msra.mxu0 0
      %268 = vmatpush.bf16.msra.mxu0 0
      %269 = vmatpush.bf16.msra.mxu0 %v262
      %270 = vmatpush.bf16.msra.mxu0 %v254
      %271 = vmatpush.bf16.msra.mxu0 %v253
      %272 = vmatmul.bf16.gmra.mxu0 %v259
      %v273 = vpop.f32.mrf.mxu0
      %v274 = vadd.f32 %v240, %v273
      %v275 = vpop.f32.mrf.mxu0
      %276 = vdwg.mxu0
      %s277 = scalar_lea.vmem %s1, 40
      %v278 = vld [vmem:[%s277] sm:$0xf]
      %v279 = vld [vmem:[%s277 + $0x4] sm:$0xf]
      %v280 = vld [vmem:[%s277 + $0x8] sm:$0xf]
      %v281 = vld [vmem:[%s277 + $0xc] sm:$0xf]
      %v282 = vld [vmem:[%s277 + $0x10] sm:$0xf]
      %v284 = vrot.slane %v193, 1
      %v290 = vunpack.c.l.b16 %v278
      %v291 = vunpack.c.l.b16 %v279
      %v292 = vunpack.c.l.b16 %v280
      %v293 = vunpack.c.l.b16 %v281
      %v294 = vunpack.c.l.b16 %v282
      %v295 = vpack.c.b16 %v291, %v290
      %v296 = vpack.c.b16 %v293, %v292
      %v297 = vpack.c.b16 %v294, %v294
      %v301 = vsel %vm222, %v284, 0
      %v304 = vsel %vm226, %v297, 0
      %306 = vmatpush.bf16.msra.mxu0 0
      %307 = vmatpush.bf16.msra.mxu0 0
      %308 = vmatpush.bf16.msra.mxu0 0
      %309 = vmatpush.bf16.msra.mxu0 0
      %310 = vmatpush.bf16.msra.mxu0 0
      %311 = vmatpush.bf16.msra.mxu0 %v304
      %312 = vmatpush.bf16.msra.mxu0 %v296
      %313 = vmatpush.bf16.msra.mxu0 %v295
      %314 = vmatmul.bf16.gmra.mxu0 %v301
      %v315 = vpop.f32.mrf.mxu0
      %v316 = vadd.f32 0.0, %v315
      %v317 = vpop.f32.mrf.mxu0
      %318 = vdwg.mxu0
      %v319 = vadd.f32 %v274, %v316
      %s320 = scalar_lea.vmem %s172, 8
      %v321 = vld [vmem:[%s320] sm:$0xf]
      %v322 = vld [vmem:[%s320 + $0x4] sm:$0x1]
      %v323 = vunpack.c.l.bf16 %v321
      %v324 = vunpack.c.l.bf16 %v322
      %v325 = vpack.c.bf16 %v323, %v323
      %s326 = scalar_lea.vmem %s1, 60
      %v327 = vld [vmem:[%s326] sm:$0xf]
      %v328 = vld [vmem:[%s326 + $0x4] sm:$0xf]
      %v329 = vld [vmem:[%s326 + $0x8] sm:$0xf]
      %v330 = vld [vmem:[%s326 + $0xc] sm:$0xf]
      %v331 = vld [vmem:[%s326 + $0x10] sm:$0xf]
      %v337 = vunpack.c.l.b16 %v327
      %v338 = vunpack.c.l.b16 %v328
      %v339 = vunpack.c.l.b16 %v329
      %v340 = vunpack.c.l.b16 %v330
      %v341 = vunpack.c.l.b16 %v331
      %v342 = vpack.c.b16 %v338, %v337
      %v343 = vpack.c.b16 %v340, %v339
      %v344 = vpack.c.b16 %v341, %v341
      %v348 = vsel %vm222, %v325, 0
      %v351 = vsel %vm226, %v344, 0
      %353 = vmatpush.bf16.msra.mxu0 0
      %354 = vmatpush.bf16.msra.mxu0 0
      %355 = vmatpush.bf16.msra.mxu0 0
      %356 = vmatpush.bf16.msra.mxu0 0
      %357 = vmatpush.bf16.msra.mxu0 0
      %358 = vmatpush.bf16.msra.mxu0 %v351
      %359 = vmatpush.bf16.msra.mxu0 %v343
      %360 = vmatpush.bf16.msra.mxu0 %v342
      %361 = vmatmul.bf16.gmra.mxu0 %v348
      %v362 = vpop.f32.mrf.mxu0
      %v363 = vadd.f32 0.0, %v362
      %v364 = vpop.f32.mrf.mxu0
      %365 = vdwg.mxu0
      %v366 = vadd.f32 %v319, %v363
      %v367 = vpack.c.bf16 %v324, %v323
      %s368 = scalar_lea.vmem %s1, 80
      %v369 = vld [vmem:[%s368] sm:$0xf]
      %v370 = vld [vmem:[%s368 + $0x4] sm:$0xf]
      %v371 = vld [vmem:[%s368 + $0x8] sm:$0xf]
      %v372 = vld [vmem:[%s368 + $0xc] sm:$0xf]
      %v373 = vld [vmem:[%s368 + $0x10] sm:$0xf]
      %v375 = vshrl.u32 %v367, 16
      %v377 = vshll.u32 %v367, 16
      %v379 = vrot.slane %v377, 1
      %v380 = vor.u32 %v375, %v379
      %v386 = vunpack.c.l.b16 %v369
      %v387 = vunpack.c.l.b16 %v370
      %v388 = vunpack.c.l.b16 %v371
      %v389 = vunpack.c.l.b16 %v372
      %v390 = vunpack.c.l.b16 %v373
      %v391 = vpack.c.b16 %v387, %v386
      %v392 = vpack.c.b16 %v389, %v388
      %v393 = vpack.c.b16 %v390, %v390
      %v397 = vsel %vm222, %v380, 0
      %v400 = vsel %vm226, %v393, 0
      %402 = vmatpush.bf16.msra.mxu0 0
      %403 = vmatpush.bf16.msra.mxu0 0
      %404 = vmatpush.bf16.msra.mxu0 0
      %405 = vmatpush.bf16.msra.mxu0 0
      %406 = vmatpush.bf16.msra.mxu0 0
      %407 = vmatpush.bf16.msra.mxu0 %v400
      %408 = vmatpush.bf16.msra.mxu0 %v392
      %409 = vmatpush.bf16.msra.mxu0 %v391
      %410 = vmatmul.bf16.gmra.mxu0 %v397
      %v411 = vpop.f32.mrf.mxu0
      %v412 = vadd.f32 0.0, %v411
      %v413 = vpop.f32.mrf.mxu0
      %414 = vdwg.mxu0
      %v415 = vadd.f32 %v366, %v412
      %s416 = scalar_lea.vmem %s1, 100
      %v417 = vld [vmem:[%s416] sm:$0xf]
      %v418 = vld [vmem:[%s416 + $0x4] sm:$0xf]
      %v419 = vld [vmem:[%s416 + $0x8] sm:$0xf]
      %v420 = vld [vmem:[%s416 + $0xc] sm:$0xf]
      %v421 = vld [vmem:[%s416 + $0x10] sm:$0xf]
      %v423 = vrot.slane %v367, 1
      %v429 = vunpack.c.l.b16 %v417
      %v430 = vunpack.c.l.b16 %v418
      %v431 = vunpack.c.l.b16 %v419
      %v432 = vunpack.c.l.b16 %v420
      %v433 = vunpack.c.l.b16 %v421
      %v434 = vpack.c.b16 %v430, %v429
      %v435 = vpack.c.b16 %v432, %v431
      %v436 = vpack.c.b16 %v433, %v433
      %v440 = vsel %vm222, %v423, 0
      %v443 = vsel %vm226, %v436, 0
      %445 = vmatpush.bf16.msra.mxu0 0
      %446 = vmatpush.bf16.msra.mxu0 0
      %447 = vmatpush.bf16.msra.mxu0 0
      %448 = vmatpush.bf16.msra.mxu0 0
      %449 = vmatpush.bf16.msra.mxu0 0
      %450 = vmatpush.bf16.msra.mxu0 %v443
      %451 = vmatpush.bf16.msra.mxu0 %v435
      %452 = vmatpush.bf16.msra.mxu0 %v434
      %453 = vmatmul.bf16.gmra.mxu0 %v440
      %v454 = vpop.f32.mrf.mxu0
      %v455 = vadd.f32 0.0, %v454
      %v456 = vpop.f32.mrf.mxu0
      %457 = vdwg.mxu0
      %v458 = vadd.f32 %v415, %v455
      %s459 = scalar_lea.vmem %s172, 16
      %v460 = vld [vmem:[%s459] sm:$0xf]
      %v461 = vld [vmem:[%s459 + $0x4] sm:$0x1]
      %v462 = vunpack.c.l.bf16 %v460
      %v463 = vunpack.c.l.bf16 %v461
      %v464 = vpack.c.bf16 %v462, %v462
      %s465 = scalar_lea.vmem %s1, 120
      %v466 = vld [vmem:[%s465] sm:$0xf]
      %v467 = vld [vmem:[%s465 + $0x4] sm:$0xf]
      %v468 = vld [vmem:[%s465 + $0x8] sm:$0xf]
      %v469 = vld [vmem:[%s465 + $0xc] sm:$0xf]
      %v470 = vld [vmem:[%s465 + $0x10] sm:$0xf]
      %v476 = vunpack.c.l.b16 %v466
      %v477 = vunpack.c.l.b16 %v467
      %v478 = vunpack.c.l.b16 %v468
      %v479 = vunpack.c.l.b16 %v469
      %v480 = vunpack.c.l.b16 %v470
      %v481 = vpack.c.b16 %v477, %v476
      %v482 = vpack.c.b16 %v479, %v478
      %v483 = vpack.c.b16 %v480, %v480
      %v487 = vsel %vm222, %v464, 0
      %v490 = vsel %vm226, %v483, 0
      %492 = vmatpush.bf16.msra.mxu0 0
      %493 = vmatpush.bf16.msra.mxu0 0
      %494 = vmatpush.bf16.msra.mxu0 0
      %495 = vmatpush.bf16.msra.mxu0 0
      %496 = vmatpush.bf16.msra.mxu0 0
      %497 = vmatpush.bf16.msra.mxu0 %v490
      %498 = vmatpush.bf16.msra.mxu0 %v482
      %499 = vmatpush.bf16.msra.mxu0 %v481
      %500 = vmatmul.bf16.gmra.mxu0 %v487
      %v501 = vpop.f32.mrf.mxu0
      %v502 = vadd.f32 0.0, %v501
      %v503 = vpop.f32.mrf.mxu0
      %504 = vdwg.mxu0
      %v505 = vadd.f32 %v458, %v502
      %v506 = vpack.c.bf16 %v463, %v462
      %s507 = scalar_lea.vmem %s1, 140
      %v508 = vld [vmem:[%s507] sm:$0xf]
      %v509 = vld [vmem:[%s507 + $0x4] sm:$0xf]
      %v510 = vld [vmem:[%s507 + $0x8] sm:$0xf]
      %v511 = vld [vmem:[%s507 + $0xc] sm:$0xf]
      %v512 = vld [vmem:[%s507 + $0x10] sm:$0xf]
      %v514 = vshrl.u32 %v506, 16
      %v516 = vshll.u32 %v506, 16
      %v518 = vrot.slane %v516, 1
      %v519 = vor.u32 %v514, %v518
      %v525 = vunpack.c.l.b16 %v508
      %v526 = vunpack.c.l.b16 %v509
      %v527 = vunpack.c.l.b16 %v510
      %v528 = vunpack.c.l.b16 %v511
      %v529 = vunpack.c.l.b16 %v512
      %v530 = vpack.c.b16 %v526, %v525
      %v531 = vpack.c.b16 %v528, %v527
      %v532 = vpack.c.b16 %v529, %v529
      %v536 = vsel %vm222, %v519, 0
      %v539 = vsel %vm226, %v532, 0
      %541 = vmatpush.bf16.msra.mxu0 0
      %542 = vmatpush.bf16.msra.mxu0 0
      %543 = vmatpush.bf16.msra.mxu0 0
      %544 = vmatpush.bf16.msra.mxu0 0
      %545 = vmatpush.bf16.msra.mxu0 0
      %546 = vmatpush.bf16.msra.mxu0 %v539
      %547 = vmatpush.bf16.msra.mxu0 %v531
      %548 = vmatpush.bf16.msra.mxu0 %v530
      %549 = vmatmul.bf16.gmra.mxu0 %v536
      %v550 = vpop.f32.mrf.mxu0
      %v551 = vadd.f32 0.0, %v550
      %v552 = vpop.f32.mrf.mxu0
      %553 = vdwg.mxu0
      %v554 = vadd.f32 %v505, %v551
      %s555 = scalar_lea.vmem %s1, 160
      %v556 = vld [vmem:[%s555] sm:$0xf]
      %v557 = vld [vmem:[%s555 + $0x4] sm:$0xf]
      %v558 = vld [vmem:[%s555 + $0x8] sm:$0xf]
      %v559 = vld [vmem:[%s555 + $0xc] sm:$0xf]
      %v560 = vld [vmem:[%s555 + $0x10] sm:$0xf]
      %v562 = vrot.slane %v506, 1
      %v568 = vunpack.c.l.b16 %v556
      %v569 = vunpack.c.l.b16 %v557
      %v570 = vunpack.c.l.b16 %v558
      %v571 = vunpack.c.l.b16 %v559
      %v572 = vunpack.c.l.b16 %v560
      %v573 = vpack.c.b16 %v569, %v568
      %v574 = vpack.c.b16 %v571, %v570
      %v575 = vpack.c.b16 %v572, %v572
      %v579 = vsel %vm222, %v562, 0
      %v582 = vsel %vm226, %v575, 0
      %584 = vmatpush.bf16.msra.mxu0 0
      %585 = vmatpush.bf16.msra.mxu0 0
      %586 = vmatpush.bf16.msra.mxu0 0
      %587 = vmatpush.bf16.msra.mxu0 0
      %588 = vmatpush.bf16.msra.mxu0 0
      %589 = vmatpush.bf16.msra.mxu0 %v582
      %590 = vmatpush.bf16.msra.mxu0 %v574
      %591 = vmatpush.bf16.msra.mxu0 %v573
      %592 = vmatmul.bf16.gmra.mxu0 %v579
      %v593 = vpop.f32.mrf.mxu0
      %v594 = vadd.f32 0.0, %v593
      %v595 = vpop.f32.mrf.mxu0
      %596 = vdwg.mxu0
      %v597 = vadd.f32 %v554, %v594
      %v598 = vpack.c.bf16 %v597, %v597
      %vm599 = vcmask 519168
      %600 = vst.msk [vmem:[%s177] sm:$0xf] %vm599, %v598
      %vm601 = vcmask 523264
      %v602 = vsel %vm601, %v597, 0.0
      %v603 = vrot.slane %v602, 4
      %v604 = vadd.f32 %v602, %v603
      %v605 = vrot.slane %v604, 2
      %v606 = vadd.f32 %v604, %v605
      %v607 = vrot.slane %v606, 1
      %v608 = vadd.f32 %v606, %v607
      %v609 = vadd.f32 %v608, 0.0
      %v610 = vmul.f32 %v597, %v597
      %v611 = vsel %vm601, %v610, 0.0
      %v612 = vrot.slane %v611, 4
      %v613 = vadd.f32 %v611, %v612
      %v614 = vrot.slane %v613, 2
      %v615 = vadd.f32 %v613, %v614
      %v616 = vrot.slane %v615, 1
      %v617 = vadd.f32 %v615, %v616
      %v618 = vadd.f32 %v617, 0.0
      %v619 = vld [vmem:[%s320] sm:$0xf]
      %v620 = vld [vmem:[%s320 + $0x4] sm:$0x1]
      %v621 = vunpack.c.l.bf16 %v619
      %v622 = vunpack.c.l.bf16 %v620
      %v623 = vpack.c.bf16 %v621, %v621
      %v624 = vld [vmem:[%s1] sm:$0xf]
      %v625 = vld [vmem:[%s1 + $0x4] sm:$0xf]
      %v626 = vld [vmem:[%s1 + $0x8] sm:$0xf]
      %v627 = vld [vmem:[%s1 + $0xc] sm:$0xf]
      %v628 = vld [vmem:[%s1 + $0x10] sm:$0xf]
      %v629 = vpack.c.bf16 %v622, %v621
      %v630 = vld [vmem:[%s194] sm:$0xf]
      %v631 = vld [vmem:[%s194 + $0x4] sm:$0xf]
      %v632 = vld [vmem:[%s194 + $0x8] sm:$0xf]
      %v633 = vld [vmem:[%s194 + $0xc] sm:$0xf]
      %v634 = vld [vmem:[%s194 + $0x10] sm:$0xf]
      %v636 = vshrl.u32 %v629, 16
      %v638 = vshll.u32 %v629, 16
      %v640 = vrot.slane %v638, 1
      %v641 = vor.u32 %v636, %v640
      %v647 = vunpack.c.l.b16 %v630
      %v648 = vunpack.c.l.b16 %v631
      %v649 = vunpack.c.l.b16 %v632
      %v650 = vunpack.c.l.b16 %v633
      %v651 = vunpack.c.l.b16 %v634
      %v652 = vpack.c.b16 %v648, %v647
      %v653 = vpack.c.b16 %v650, %v649
      %v654 = vpack.c.b16 %v651, %v651
      %v658 = vsel %vm222, %v641, 0
      %v661 = vsel %vm226, %v654, 0
      %663 = vmatpush.bf16.msra.mxu0 0
      %664 = vmatpush.bf16.msra.mxu0 0
      %665 = vmatpush.bf16.msra.mxu0 0
      %666 = vmatpush.bf16.msra.mxu0 0
      %667 = vmatpush.bf16.msra.mxu0 0
      %668 = vmatpush.bf16.msra.mxu0 %v661
      %669 = vmatpush.bf16.msra.mxu0 %v653
      %670 = vmatpush.bf16.msra.mxu0 %v652
      %671 = vmatmul.bf16.gmra.mxu0 %v658
      %v672 = vpop.f32.mrf.mxu0
      %v673 = vadd.f32 0.0, %v672
      %v674 = vpop.f32.mrf.mxu0
      %675 = vdwg.mxu0
      %v681 = vunpack.c.l.b16 %v624
      %v682 = vunpack.c.l.b16 %v625
      %v683 = vunpack.c.l.b16 %v626
      %v684 = vunpack.c.l.b16 %v627
      %v685 = vunpack.c.l.b16 %v628
      %v686 = vpack.c.b16 %v682, %v681
      %v687 = vpack.c.b16 %v684, %v683
      %v688 = vpack.c.b16 %v685, %v685
      %v692 = vsel %vm222, %v623, 0
      %v695 = vsel %vm226, %v688, 0
      %697 = vmatpush.bf16.msra.mxu0 0
      %698 = vmatpush.bf16.msra.mxu0 0
      %699 = vmatpush.bf16.msra.mxu0 0
      %700 = vmatpush.bf16.msra.mxu0 0
      %701 = vmatpush.bf16.msra.mxu0 0
      %702 = vmatpush.bf16.msra.mxu0 %v695
      %703 = vmatpush.bf16.msra.mxu0 %v687
      %704 = vmatpush.bf16.msra.mxu0 %v686
      %705 = vmatmul.bf16.gmra.mxu0 %v692
      %v706 = vpop.f32.mrf.mxu0
      %v707 = vadd.f32 %v673, %v706
      %v708 = vpop.f32.mrf.mxu0
      %709 = vdwg.mxu0
      %v710 = vld [vmem:[%s277] sm:$0xf]
      %v711 = vld [vmem:[%s277 + $0x4] sm:$0xf]
      %v712 = vld [vmem:[%s277 + $0x8] sm:$0xf]
      %v713 = vld [vmem:[%s277 + $0xc] sm:$0xf]
      %v714 = vld [vmem:[%s277 + $0x10] sm:$0xf]
      %v716 = vrot.slane %v629, 1
      %v722 = vunpack.c.l.b16 %v710
      %v723 = vunpack.c.l.b16 %v711
      %v724 = vunpack.c.l.b16 %v712
      %v725 = vunpack.c.l.b16 %v713
      %v726 = vunpack.c.l.b16 %v714
      %v727 = vpack.c.b16 %v723, %v722
      %v728 = vpack.c.b16 %v725, %v724
      %v729 = vpack.c.b16 %v726, %v726
      %v733 = vsel %vm222, %v716, 0
      %v736 = vsel %vm226, %v729, 0
      %738 = vmatpush.bf16.msra.mxu0 0
      %739 = vmatpush.bf16.msra.mxu0 0
      %740 = vmatpush.bf16.msra.mxu0 0
      %741 = vmatpush.bf16.msra.mxu0 0
      %742 = vmatpush.bf16.msra.mxu0 0
      %743 = vmatpush.bf16.msra.mxu0 %v736
      %744 = vmatpush.bf16.msra.mxu0 %v728
      %745 = vmatpush.bf16.msra.mxu0 %v727
      %746 = vmatmul.bf16.gmra.mxu0 %v733
      %v747 = vpop.f32.mrf.mxu0
      %v748 = vadd.f32 0.0, %v747
      %v749 = vpop.f32.mrf.mxu0
      %750 = vdwg.mxu0
      %v751 = vadd.f32 %v707, %v748
      %v752 = vld [vmem:[%s459] sm:$0xf]
      %v753 = vld [vmem:[%s459 + $0x4] sm:$0x1]
      %v754 = vunpack.c.l.bf16 %v752
      %v755 = vunpack.c.l.bf16 %v753
      %v756 = vpack.c.bf16 %v754, %v754
      %v757 = vld [vmem:[%s326] sm:$0xf]
      %v758 = vld [vmem:[%s326 + $0x4] sm:$0xf]
      %v759 = vld [vmem:[%s326 + $0x8] sm:$0xf]
      %v760 = vld [vmem:[%s326 + $0xc] sm:$0xf]
      %v761 = vld [vmem:[%s326 + $0x10] sm:$0xf]
      %v767 = vunpack.c.l.b16 %v757
      %v768 = vunpack.c.l.b16 %v758
      %v769 = vunpack.c.l.b16 %v759
      %v770 = vunpack.c.l.b16 %v760
      %v771 = vunpack.c.l.b16 %v761
      %v772 = vpack.c.b16 %v768, %v767
      %v773 = vpack.c.b16 %v770, %v769
      %v774 = vpack.c.b16 %v771, %v771
      %v778 = vsel %vm222, %v756, 0
      %v781 = vsel %vm226, %v774, 0
      %783 = vmatpush.bf16.msra.mxu0 0
      %784 = vmatpush.bf16.msra.mxu0 0
      %785 = vmatpush.bf16.msra.mxu0 0
      %786 = vmatpush.bf16.msra.mxu0 0
      %787 = vmatpush.bf16.msra.mxu0 0
      %788 = vmatpush.bf16.msra.mxu0 %v781
      %789 = vmatpush.bf16.msra.mxu0 %v773
      %790 = vmatpush.bf16.msra.mxu0 %v772
      %791 = vmatmul.bf16.gmra.mxu0 %v778
      %v792 = vpop.f32.mrf.mxu0
      %v793 = vadd.f32 0.0, %v792
      %v794 = vpop.f32.mrf.mxu0
      %795 = vdwg.mxu0
      %v796 = vadd.f32 %v751, %v793
      %v797 = vpack.c.bf16 %v755, %v754
      %v798 = vld [vmem:[%s368] sm:$0xf]
      %v799 = vld [vmem:[%s368 + $0x4] sm:$0xf]
      %v800 = vld [vmem:[%s368 + $0x8] sm:$0xf]
      %v801 = vld [vmem:[%s368 + $0xc] sm:$0xf]
      %v802 = vld [vmem:[%s368 + $0x10] sm:$0xf]
      %v804 = vshrl.u32 %v797, 16
      %v806 = vshll.u32 %v797, 16
      %v808 = vrot.slane %v806, 1
      %v809 = vor.u32 %v804, %v808
      %v815 = vunpack.c.l.b16 %v798
      %v816 = vunpack.c.l.b16 %v799
      %v817 = vunpack.c.l.b16 %v800
      %v818 = vunpack.c.l.b16 %v801
      %v819 = vunpack.c.l.b16 %v802
      %v820 = vpack.c.b16 %v816, %v815
      %v821 = vpack.c.b16 %v818, %v817
      %v822 = vpack.c.b16 %v819, %v819
      %v826 = vsel %vm222, %v809, 0
      %v829 = vsel %vm226, %v822, 0
      %831 = vmatpush.bf16.msra.mxu0 0
      %832 = vmatpush.bf16.msra.mxu0 0
      %833 = vmatpush.bf16.msra.mxu0 0
      %834 = vmatpush.bf16.msra.mxu0 0
      %835 = vmatpush.bf16.msra.mxu0 0
      %836 = vmatpush.bf16.msra.mxu0 %v829
      %837 = vmatpush.bf16.msra.mxu0 %v821
      %838 = vmatpush.bf16.msra.mxu0 %v820
      %839 = vmatmul.bf16.gmra.mxu0 %v826
      %v840 = vpop.f32.mrf.mxu0
      %v841 = vadd.f32 0.0, %v840
      %v842 = vpop.f32.mrf.mxu0
      %843 = vdwg.mxu0
      %v844 = vadd.f32 %v796, %v841
      %v845 = vld [vmem:[%s416] sm:$0xf]
      %v846 = vld [vmem:[%s416 + $0x4] sm:$0xf]
      %v847 = vld [vmem:[%s416 + $0x8] sm:$0xf]
      %v848 = vld [vmem:[%s416 + $0xc] sm:$0xf]
      %v849 = vld [vmem:[%s416 + $0x10] sm:$0xf]
      %v851 = vrot.slane %v797, 1
      %v857 = vunpack.c.l.b16 %v845
      %v858 = vunpack.c.l.b16 %v846
      %v859 = vunpack.c.l.b16 %v847
      %v860 = vunpack.c.l.b16 %v848
      %v861 = vunpack.c.l.b16 %v849
      %v862 = vpack.c.b16 %v858, %v857
      %v863 = vpack.c.b16 %v860, %v859
      %v864 = vpack.c.b16 %v861, %v861
      %v868 = vsel %vm222, %v851, 0
      %v871 = vsel %vm226, %v864, 0
      %873 = vmatpush.bf16.msra.mxu0 0
      %874 = vmatpush.bf16.msra.mxu0 0
      %875 = vmatpush.bf16.msra.mxu0 0
      %876 = vmatpush.bf16.msra.mxu0 0
      %877 = vmatpush.bf16.msra.mxu0 0
      %878 = vmatpush.bf16.msra.mxu0 %v871
      %879 = vmatpush.bf16.msra.mxu0 %v863
      %880 = vmatpush.bf16.msra.mxu0 %v862
      %881 = vmatmul.bf16.gmra.mxu0 %v868
      %v882 = vpop.f32.mrf.mxu0
      %v883 = vadd.f32 0.0, %v882
      %v884 = vpop.f32.mrf.mxu0
      %885 = vdwg.mxu0
      %v886 = vadd.f32 %v844, %v883
      %s887 = scalar_lea.vmem %s172, 24
      %v888 = vld [vmem:[%s887] sm:$0xf]
      %v889 = vld [vmem:[%s887 + $0x4] sm:$0x1]
      %v890 = vunpack.c.l.bf16 %v888
      %v891 = vunpack.c.l.bf16 %v889
      %v892 = vpack.c.bf16 %v890, %v890
      %v893 = vld [vmem:[%s465] sm:$0xf]
      %v894 = vld [vmem:[%s465 + $0x4] sm:$0xf]
      %v895 = vld [vmem:[%s465 + $0x8] sm:$0xf]
      %v896 = vld [vmem:[%s465 + $0xc] sm:$0xf]
      %v897 = vld [vmem:[%s465 + $0x10] sm:$0xf]
      %v903 = vunpack.c.l.b16 %v893
      %v904 = vunpack.c.l.b16 %v894
      %v905 = vunpack.c.l.b16 %v895
      %v906 = vunpack.c.l.b16 %v896
      %v907 = vunpack.c.l.b16 %v897
      %v908 = vpack.c.b16 %v904, %v903
      %v909 = vpack.c.b16 %v906, %v905
      %v910 = vpack.c.b16 %v907, %v907
      %v914 = vsel %vm222, %v892, 0
      %v917 = vsel %vm226, %v910, 0
      %919 = vmatpush.bf16.msra.mxu0 0
      %920 = vmatpush.bf16.msra.mxu0 0
      %921 = vmatpush.bf16.msra.mxu0 0
      %922 = vmatpush.bf16.msra.mxu0 0
      %923 = vmatpush.bf16.msra.mxu0 0
      %924 = vmatpush.bf16.msra.mxu0 %v917
      %925 = vmatpush.bf16.msra.mxu0 %v909
      %926 = vmatpush.bf16.msra.mxu0 %v908
      %927 = vmatmul.bf16.gmra.mxu0 %v914
      %v928 = vpop.f32.mrf.mxu0
      %v929 = vadd.f32 0.0, %v928
      %v930 = vpop.f32.mrf.mxu0
      %931 = vdwg.mxu0
      %v932 = vadd.f32 %v886, %v929
      %v933 = vpack.c.bf16 %v891, %v890
      %v934 = vld [vmem:[%s507] sm:$0xf]
      %v935 = vld [vmem:[%s507 + $0x4] sm:$0xf]
      %v936 = vld [vmem:[%s507 + $0x8] sm:$0xf]
      %v937 = vld [vmem:[%s507 + $0xc] sm:$0xf]
      %v938 = vld [vmem:[%s507 + $0x10] sm:$0xf]
      %v940 = vshrl.u32 %v933, 16
      %v942 = vshll.u32 %v933, 16
      %v944 = vrot.slane %v942, 1
      %v945 = vor.u32 %v940, %v944
      %v951 = vunpack.c.l.b16 %v934
      %v952 = vunpack.c.l.b16 %v935
      %v953 = vunpack.c.l.b16 %v936
      %v954 = vunpack.c.l.b16 %v937
      %v955 = vunpack.c.l.b16 %v938
      %v956 = vpack.c.b16 %v952, %v951
      %v957 = vpack.c.b16 %v954, %v953
      %v958 = vpack.c.b16 %v955, %v955
      %v962 = vsel %vm222, %v945, 0
      %v965 = vsel %vm226, %v958, 0
      %967 = vmatpush.bf16.msra.mxu0 0
      %968 = vmatpush.bf16.msra.mxu0 0
      %969 = vmatpush.bf16.msra.mxu0 0
      %970 = vmatpush.bf16.msra.mxu0 0
      %971 = vmatpush.bf16.msra.mxu0 0
      %972 = vmatpush.bf16.msra.mxu0 %v965
      %973 = vmatpush.bf16.msra.mxu0 %v957
      %974 = vmatpush.bf16.msra.mxu0 %v956
      %975 = vmatmul.bf16.gmra.mxu0 %v962
      %v976 = vpop.f32.mrf.mxu0
      %v977 = vadd.f32 0.0, %v976
      %v978 = vpop.f32.mrf.mxu0
      %979 = vdwg.mxu0
      %v980 = vadd.f32 %v932, %v977
      %v981 = vld [vmem:[%s555] sm:$0xf]
      %v982 = vld [vmem:[%s555 + $0x4] sm:$0xf]
      %v983 = vld [vmem:[%s555 + $0x8] sm:$0xf]
      %v984 = vld [vmem:[%s555 + $0xc] sm:$0xf]
      %v985 = vld [vmem:[%s555 + $0x10] sm:$0xf]
      %v987 = vrot.slane %v933, 1
      %v993 = vunpack.c.l.b16 %v981
      %v994 = vunpack.c.l.b16 %v982
      %v995 = vunpack.c.l.b16 %v983
      %v996 = vunpack.c.l.b16 %v984
      %v997 = vunpack.c.l.b16 %v985
      %v998 = vpack.c.b16 %v994, %v993
      %v999 = vpack.c.b16 %v996, %v995
      %v1000 = vpack.c.b16 %v997, %v997
      %v1004 = vsel %vm222, %v987, 0
      %v1007 = vsel %vm226, %v1000, 0
      %1009 = vmatpush.bf16.msra.mxu0 0
      %1010 = vmatpush.bf16.msra.mxu0 0
      %1011 = vmatpush.bf16.msra.mxu0 0
      %1012 = vmatpush.bf16.msra.mxu0 0
      %1013 = vmatpush.bf16.msra.mxu0 0
      %1014 = vmatpush.bf16.msra.mxu0 %v1007
      %1015 = vmatpush.bf16.msra.mxu0 %v999
      %1016 = vmatpush.bf16.msra.mxu0 %v998
      %1017 = vmatmul.bf16.gmra.mxu0 %v1004
      %v1018 = vpop.f32.mrf.mxu0
      %v1019 = vadd.f32 0.0, %v1018
      %v1020 = vpop.f32.mrf.mxu0
      %1021 = vdwg.mxu0
      %v1022 = vadd.f32 %v980, %v1019
      %v1023 = vpack.c.bf16 %v1022, %v1022
      %s1024 = scalar_lea.vmem %s177, 4
      %1025 = vst.msk [vmem:[%s1024] sm:$0xf] %vm599, %v1023
      %v1026 = vsel %vm601, %v1022, 0.0
      %v1027 = vrot.slane %v1026, 4
      %v1028 = vadd.f32 %v1026, %v1027
      %v1029 = vrot.slane %v1028, 2
      %v1030 = vadd.f32 %v1028, %v1029
      %v1031 = vrot.slane %v1030, 1
      %v1032 = vadd.f32 %v1030, %v1031
      %v1033 = vadd.f32 %v609, %v1032
      %v1034 = vmul.f32 %v1022, %v1022
      %v1035 = vsel %vm601, %v1034, 0.0
      %v1036 = vrot.slane %v1035, 4
      %v1037 = vadd.f32 %v1035, %v1036
      %v1038 = vrot.slane %v1037, 2
      %v1039 = vadd.f32 %v1037, %v1038
      %v1040 = vrot.slane %v1039, 1
      %v1041 = vadd.f32 %v1039, %v1040
      %v1042 = vadd.f32 %v618, %v1041
      %v1043 = vld [vmem:[%s459] sm:$0xf]
      %v1044 = vld [vmem:[%s459 + $0x4] sm:$0x1]
      %v1045 = vunpack.c.l.bf16 %v1043
      %v1046 = vunpack.c.l.bf16 %v1044
      %v1047 = vpack.c.bf16 %v1045, %v1045
      %v1048 = vld [vmem:[%s1] sm:$0xf]
      %v1049 = vld [vmem:[%s1 + $0x4] sm:$0xf]
      %v1050 = vld [vmem:[%s1 + $0x8] sm:$0xf]
      %v1051 = vld [vmem:[%s1 + $0xc] sm:$0xf]
      %v1052 = vld [vmem:[%s1 + $0x10] sm:$0xf]
      %v1053 = vpack.c.bf16 %v1046, %v1045
      %v1054 = vld [vmem:[%s194] sm:$0xf]
      %v1055 = vld [vmem:[%s194 + $0x4] sm:$0xf]
      %v1056 = vld [vmem:[%s194 + $0x8] sm:$0xf]
      %v1057 = vld [vmem:[%s194 + $0xc] sm:$0xf]
      %v1058 = vld [vmem:[%s194 + $0x10] sm:$0xf]
      %v1060 = vshrl.u32 %v1053, 16
      %v1062 = vshll.u32 %v1053, 16
      %v1064 = vrot.slane %v1062, 1
      %v1065 = vor.u32 %v1060, %v1064
      %v1071 = vunpack.c.l.b16 %v1054
      %v1072 = vunpack.c.l.b16 %v1055
      %v1073 = vunpack.c.l.b16 %v1056
      %v1074 = vunpack.c.l.b16 %v1057
      %v1075 = vunpack.c.l.b16 %v1058
      %v1076 = vpack.c.b16 %v1072, %v1071
      %v1077 = vpack.c.b16 %v1074, %v1073
      %v1078 = vpack.c.b16 %v1075, %v1075
      %v1082 = vsel %vm222, %v1065, 0
      %v1085 = vsel %vm226, %v1078, 0
      %1087 = vmatpush.bf16.msra.mxu0 0
      %1088 = vmatpush.bf16.msra.mxu0 0
      %1089 = vmatpush.bf16.msra.mxu0 0
      %1090 = vmatpush.bf16.msra.mxu0 0
      %1091 = vmatpush.bf16.msra.mxu0 0
      %1092 = vmatpush.bf16.msra.mxu0 %v1085
      %1093 = vmatpush.bf16.msra.mxu0 %v1077
      %1094 = vmatpush.bf16.msra.mxu0 %v1076
      %1095 = vmatmul.bf16.gmra.mxu0 %v1082
      %v1096 = vpop.f32.mrf.mxu0
      %v1097 = vadd.f32 0.0, %v1096
      %v1098 = vpop.f32.mrf.mxu0
      %1099 = vdwg.mxu0
      %v1105 = vunpack.c.l.b16 %v1048
      %v1106 = vunpack.c.l.b16 %v1049
      %v1107 = vunpack.c.l.b16 %v1050
      %v1108 = vunpack.c.l.b16 %v1051
      %v1109 = vunpack.c.l.b16 %v1052
      %v1110 = vpack.c.b16 %v1106, %v1105
      %v1111 = vpack.c.b16 %v1108, %v1107
      %v1112 = vpack.c.b16 %v1109, %v1109
      %v1116 = vsel %vm222, %v1047, 0
      %v1119 = vsel %vm226, %v1112, 0
      %1121 = vmatpush.bf16.msra.mxu0 0
      %1122 = vmatpush.bf16.msra.mxu0 0
      %1123 = vmatpush.bf16.msra.mxu0 0
      %1124 = vmatpush.bf16.msra.mxu0 0
      %1125 = vmatpush.bf16.msra.mxu0 0
      %1126 = vmatpush.bf16.msra.mxu0 %v1119
      %1127 = vmatpush.bf16.msra.mxu0 %v1111
      %1128 = vmatpush.bf16.msra.mxu0 %v1110
      %1129 = vmatmul.bf16.gmra.mxu0 %v1116
      %v1130 = vpop.f32.mrf.mxu0
      %v1131 = vadd.f32 %v1097, %v1130
      %v1132 = vpop.f32.mrf.mxu0
      %1133 = vdwg.mxu0
      %v1134 = vld [vmem:[%s277] sm:$0xf]
      %v1135 = vld [vmem:[%s277 + $0x4] sm:$0xf]
      %v1136 = vld [vmem:[%s277 + $0x8] sm:$0xf]
      %v1137 = vld [vmem:[%s277 + $0xc] sm:$0xf]
      %v1138 = vld [vmem:[%s277 + $0x10] sm:$0xf]
      %v1140 = vrot.slane %v1053, 1
      %v1146 = vunpack.c.l.b16 %v1134
      %v1147 = vunpack.c.l.b16 %v1135
      %v1148 = vunpack.c.l.b16 %v1136
      %v1149 = vunpack.c.l.b16 %v1137
      %v1150 = vunpack.c.l.b16 %v1138
      %v1151 = vpack.c.b16 %v1147, %v1146
      %v1152 = vpack.c.b16 %v1149, %v1148
      %v1153 = vpack.c.b16 %v1150, %v1150
      %v1157 = vsel %vm222, %v1140, 0
      %v1160 = vsel %vm226, %v1153, 0
      %1162 = vmatpush.bf16.msra.mxu0 0
      %1163 = vmatpush.bf16.msra.mxu0 0
      %1164 = vmatpush.bf16.msra.mxu0 0
      %1165 = vmatpush.bf16.msra.mxu0 0
      %1166 = vmatpush.bf16.msra.mxu0 0
      %1167 = vmatpush.bf16.msra.mxu0 %v1160
      %1168 = vmatpush.bf16.msra.mxu0 %v1152
      %1169 = vmatpush.bf16.msra.mxu0 %v1151
      %1170 = vmatmul.bf16.gmra.mxu0 %v1157
      %v1171 = vpop.f32.mrf.mxu0
      %v1172 = vadd.f32 0.0, %v1171
      %v1173 = vpop.f32.mrf.mxu0
      %1174 = vdwg.mxu0
      %v1175 = vadd.f32 %v1131, %v1172
      %v1176 = vld [vmem:[%s887] sm:$0xf]
      %v1177 = vld [vmem:[%s887 + $0x4] sm:$0x1]
      %v1178 = vunpack.c.l.bf16 %v1176
      %v1179 = vunpack.c.l.bf16 %v1177
      %v1180 = vpack.c.bf16 %v1178, %v1178
      %v1181 = vld [vmem:[%s326] sm:$0xf]
      %v1182 = vld [vmem:[%s326 + $0x4] sm:$0xf]
      %v1183 = vld [vmem:[%s326 + $0x8] sm:$0xf]
      %v1184 = vld [vmem:[%s326 + $0xc] sm:$0xf]
      %v1185 = vld [vmem:[%s326 + $0x10] sm:$0xf]
      %v1191 = vunpack.c.l.b16 %v1181
      %v1192 = vunpack.c.l.b16 %v1182
      %v1193 = vunpack.c.l.b16 %v1183
      %v1194 = vunpack.c.l.b16 %v1184
      %v1195 = vunpack.c.l.b16 %v1185
      %v1196 = vpack.c.b16 %v1192, %v1191
      %v1197 = vpack.c.b16 %v1194, %v1193
      %v1198 = vpack.c.b16 %v1195, %v1195
      %v1202 = vsel %vm222, %v1180, 0
      %v1205 = vsel %vm226, %v1198, 0
      %1207 = vmatpush.bf16.msra.mxu0 0
      %1208 = vmatpush.bf16.msra.mxu0 0
      %1209 = vmatpush.bf16.msra.mxu0 0
      %1210 = vmatpush.bf16.msra.mxu0 0
      %1211 = vmatpush.bf16.msra.mxu0 0
      %1212 = vmatpush.bf16.msra.mxu0 %v1205
      %1213 = vmatpush.bf16.msra.mxu0 %v1197
      %1214 = vmatpush.bf16.msra.mxu0 %v1196
      %1215 = vmatmul.bf16.gmra.mxu0 %v1202
      %v1216 = vpop.f32.mrf.mxu0
      %v1217 = vadd.f32 0.0, %v1216
      %v1218 = vpop.f32.mrf.mxu0
      %1219 = vdwg.mxu0
      %v1220 = vadd.f32 %v1175, %v1217
      %v1221 = vpack.c.bf16 %v1179, %v1178
      %v1222 = vld [vmem:[%s368] sm:$0xf]
      %v1223 = vld [vmem:[%s368 + $0x4] sm:$0xf]
      %v1224 = vld [vmem:[%s368 + $0x8] sm:$0xf]
      %v1225 = vld [vmem:[%s368 + $0xc] sm:$0xf]
      %v1226 = vld [vmem:[%s368 + $0x10] sm:$0xf]
      %v1228 = vshrl.u32 %v1221, 16
      %v1230 = vshll.u32 %v1221, 16
      %v1232 = vrot.slane %v1230, 1
      %v1233 = vor.u32 %v1228, %v1232
      %v1239 = vunpack.c.l.b16 %v1222
      %v1240 = vunpack.c.l.b16 %v1223
      %v1241 = vunpack.c.l.b16 %v1224
      %v1242 = vunpack.c.l.b16 %v1225
      %v1243 = vunpack.c.l.b16 %v1226
      %v1244 = vpack.c.b16 %v1240, %v1239
      %v1245 = vpack.c.b16 %v1242, %v1241
      %v1246 = vpack.c.b16 %v1243, %v1243
      %v1250 = vsel %vm222, %v1233, 0
      %v1253 = vsel %vm226, %v1246, 0
      %1255 = vmatpush.bf16.msra.mxu0 0
      %1256 = vmatpush.bf16.msra.mxu0 0
      %1257 = vmatpush.bf16.msra.mxu0 0
      %1258 = vmatpush.bf16.msra.mxu0 0
      %1259 = vmatpush.bf16.msra.mxu0 0
      %1260 = vmatpush.bf16.msra.mxu0 %v1253
      %1261 = vmatpush.bf16.msra.mxu0 %v1245
      %1262 = vmatpush.bf16.msra.mxu0 %v1244
      %1263 = vmatmul.bf16.gmra.mxu0 %v1250
      %v1264 = vpop.f32.mrf.mxu0
      %v1265 = vadd.f32 0.0, %v1264
      %v1266 = vpop.f32.mrf.mxu0
      %1267 = vdwg.mxu0
      %v1268 = vadd.f32 %v1220, %v1265
      %v1269 = vld [vmem:[%s416] sm:$0xf]
      %v1270 = vld [vmem:[%s416 + $0x4] sm:$0xf]
      %v1271 = vld [vmem:[%s416 + $0x8] sm:$0xf]
      %v1272 = vld [vmem:[%s416 + $0xc] sm:$0xf]
      %v1273 = vld [vmem:[%s416 + $0x10] sm:$0xf]
      %v1275 = vrot.slane %v1221, 1
      %v1281 = vunpack.c.l.b16 %v1269
      %v1282 = vunpack.c.l.b16 %v1270
      %v1283 = vunpack.c.l.b16 %v1271
      %v1284 = vunpack.c.l.b16 %v1272
      %v1285 = vunpack.c.l.b16 %v1273
      %v1286 = vpack.c.b16 %v1282, %v1281
      %v1287 = vpack.c.b16 %v1284, %v1283
      %v1288 = vpack.c.b16 %v1285, %v1285
      %v1292 = vsel %vm222, %v1275, 0
      %v1295 = vsel %vm226, %v1288, 0
      %1297 = vmatpush.bf16.msra.mxu0 0
      %1298 = vmatpush.bf16.msra.mxu0 0
      %1299 = vmatpush.bf16.msra.mxu0 0
      %1300 = vmatpush.bf16.msra.mxu0 0
      %1301 = vmatpush.bf16.msra.mxu0 0
      %1302 = vmatpush.bf16.msra.mxu0 %v1295
      %1303 = vmatpush.bf16.msra.mxu0 %v1287
      %1304 = vmatpush.bf16.msra.mxu0 %v1286
      %1305 = vmatmul.bf16.gmra.mxu0 %v1292
      %v1306 = vpop.f32.mrf.mxu0
      %v1307 = vadd.f32 0.0, %v1306
      %v1308 = vpop.f32.mrf.mxu0
      %1309 = vdwg.mxu0
      %v1310 = vadd.f32 %v1268, %v1307
      %s1311 = scalar_lea.vmem %s172, 32
      %v1312 = vld [vmem:[%s1311] sm:$0xf]
      %v1313 = vld [vmem:[%s1311 + $0x4] sm:$0x1]
      %v1314 = vunpack.c.l.bf16 %v1312
      %v1315 = vunpack.c.l.bf16 %v1313
      %v1316 = vpack.c.bf16 %v1314, %v1314
      %v1317 = vld [vmem:[%s465] sm:$0xf]
      %v1318 = vld [vmem:[%s465 + $0x4] sm:$0xf]
      %v1319 = vld [vmem:[%s465 + $0x8] sm:$0xf]
      %v1320 = vld [vmem:[%s465 + $0xc] sm:$0xf]
      %v1321 = vld [vmem:[%s465 + $0x10] sm:$0xf]
      %v1327 = vunpack.c.l.b16 %v1317
      %v1328 = vunpack.c.l.b16 %v1318
      %v1329 = vunpack.c.l.b16 %v1319
      %v1330 = vunpack.c.l.b16 %v1320
      %v1331 = vunpack.c.l.b16 %v1321
      %v1332 = vpack.c.b16 %v1328, %v1327
      %v1333 = vpack.c.b16 %v1330, %v1329
      %v1334 = vpack.c.b16 %v1331, %v1331
      %v1338 = vsel %vm222, %v1316, 0
      %v1341 = vsel %vm226, %v1334, 0
      %1343 = vmatpush.bf16.msra.mxu0 0
      %1344 = vmatpush.bf16.msra.mxu0 0
      %1345 = vmatpush.bf16.msra.mxu0 0
      %1346 = vmatpush.bf16.msra.mxu0 0
      %1347 = vmatpush.bf16.msra.mxu0 0
      %1348 = vmatpush.bf16.msra.mxu0 %v1341
      %1349 = vmatpush.bf16.msra.mxu0 %v1333
      %1350 = vmatpush.bf16.msra.mxu0 %v1332
      %1351 = vmatmul.bf16.gmra.mxu0 %v1338
      %v1352 = vpop.f32.mrf.mxu0
      %v1353 = vadd.f32 0.0, %v1352
      %v1354 = vpop.f32.mrf.mxu0
      %1355 = vdwg.mxu0
      %v1356 = vadd.f32 %v1310, %v1353
      %v1357 = vpack.c.bf16 %v1315, %v1314
      %v1358 = vld [vmem:[%s507] sm:$0xf]
      %v1359 = vld [vmem:[%s507 + $0x4] sm:$0xf]
      %v1360 = vld [vmem:[%s507 + $0x8] sm:$0xf]
      %v1361 = vld [vmem:[%s507 + $0xc] sm:$0xf]
      %v1362 = vld [vmem:[%s507 + $0x10] sm:$0xf]
      %v1364 = vshrl.u32 %v1357, 16
      %v1366 = vshll.u32 %v1357, 16
      %v1368 = vrot.slane %v1366, 1
      %v1369 = vor.u32 %v1364, %v1368
      %v1375 = vunpack.c.l.b16 %v1358
      %v1376 = vunpack.c.l.b16 %v1359
      %v1377 = vunpack.c.l.b16 %v1360
      %v1378 = vunpack.c.l.b16 %v1361
      %v1379 = vunpack.c.l.b16 %v1362
      %v1380 = vpack.c.b16 %v1376, %v1375
      %v1381 = vpack.c.b16 %v1378, %v1377
      %v1382 = vpack.c.b16 %v1379, %v1379
      %v1386 = vsel %vm222, %v1369, 0
      %v1389 = vsel %vm226, %v1382, 0
      %1391 = vmatpush.bf16.msra.mxu0 0
      %1392 = vmatpush.bf16.msra.mxu0 0
      %1393 = vmatpush.bf16.msra.mxu0 0
      %1394 = vmatpush.bf16.msra.mxu0 0
      %1395 = vmatpush.bf16.msra.mxu0 0
      %1396 = vmatpush.bf16.msra.mxu0 %v1389
      %1397 = vmatpush.bf16.msra.mxu0 %v1381
      %1398 = vmatpush.bf16.msra.mxu0 %v1380
      %1399 = vmatmul.bf16.gmra.mxu0 %v1386
      %v1400 = vpop.f32.mrf.mxu0
      %v1401 = vadd.f32 0.0, %v1400
      %v1402 = vpop.f32.mrf.mxu0
      %1403 = vdwg.mxu0
      %v1404 = vadd.f32 %v1356, %v1401
      %v1405 = vld [vmem:[%s555] sm:$0xf]
      %v1406 = vld [vmem:[%s555 + $0x4] sm:$0xf]
      %v1407 = vld [vmem:[%s555 + $0x8] sm:$0xf]
      %v1408 = vld [vmem:[%s555 + $0xc] sm:$0xf]
      %v1409 = vld [vmem:[%s555 + $0x10] sm:$0xf]
      %v1411 = vrot.slane %v1357, 1
      %v1417 = vunpack.c.l.b16 %v1405
      %v1418 = vunpack.c.l.b16 %v1406
      %v1419 = vunpack.c.l.b16 %v1407
      %v1420 = vunpack.c.l.b16 %v1408
      %v1421 = vunpack.c.l.b16 %v1409
      %v1422 = vpack.c.b16 %v1418, %v1417
      %v1423 = vpack.c.b16 %v1420, %v1419
      %v1424 = vpack.c.b16 %v1421, %v1421
      %v1428 = vsel %vm222, %v1411, 0
      %v1431 = vsel %vm226, %v1424, 0
      %1433 = vmatpush.bf16.msra.mxu0 0
      %1434 = vmatpush.bf16.msra.mxu0 0
      %1435 = vmatpush.bf16.msra.mxu0 0
      %1436 = vmatpush.bf16.msra.mxu0 0
      %1437 = vmatpush.bf16.msra.mxu0 0
      %1438 = vmatpush.bf16.msra.mxu0 %v1431
      %1439 = vmatpush.bf16.msra.mxu0 %v1423
      %1440 = vmatpush.bf16.msra.mxu0 %v1422
      %1441 = vmatmul.bf16.gmra.mxu0 %v1428
      %v1442 = vpop.f32.mrf.mxu0
      %v1443 = vadd.f32 0.0, %v1442
      %v1444 = vpop.f32.mrf.mxu0
      %1445 = vdwg.mxu0
      %v1446 = vadd.f32 %v1404, %v1443
      %v1447 = vpack.c.bf16 %v1446, %v1446
      %s1448 = scalar_lea.vmem %s177, 8
      %1449 = vst.msk [vmem:[%s1448] sm:$0xf] %vm599, %v1447
      %v1450 = vsel %vm601, %v1446, 0.0
      %v1451 = vrot.slane %v1450, 4
      %v1452 = vadd.f32 %v1450, %v1451
      %v1453 = vrot.slane %v1452, 2
      %v1454 = vadd.f32 %v1452, %v1453
      %v1455 = vrot.slane %v1454, 1
      %v1456 = vadd.f32 %v1454, %v1455
      %v1457 = vadd.f32 %v1033, %v1456
      %v1458 = vmul.f32 %v1446, %v1446
      %v1459 = vsel %vm601, %v1458, 0.0
      %v1460 = vrot.slane %v1459, 4
      %v1461 = vadd.f32 %v1459, %v1460
      %v1462 = vrot.slane %v1461, 2
      %v1463 = vadd.f32 %v1461, %v1462
      %v1464 = vrot.slane %v1463, 1
      %v1465 = vadd.f32 %v1463, %v1464
      %v1466 = vadd.f32 %v1042, %v1465
      %v1467 = vld [vmem:[%s887] sm:$0xf]
      %v1468 = vld [vmem:[%s887 + $0x4] sm:$0x1]
      %v1469 = vunpack.c.l.bf16 %v1467
      %v1470 = vunpack.c.l.bf16 %v1468
      %v1471 = vpack.c.bf16 %v1469, %v1469
      %v1472 = vld [vmem:[%s1] sm:$0xf]
      %v1473 = vld [vmem:[%s1 + $0x4] sm:$0xf]
      %v1474 = vld [vmem:[%s1 + $0x8] sm:$0xf]
      %v1475 = vld [vmem:[%s1 + $0xc] sm:$0xf]
      %v1476 = vld [vmem:[%s1 + $0x10] sm:$0xf]
      %v1477 = vpack.c.bf16 %v1470, %v1469
      %v1478 = vld [vmem:[%s194] sm:$0xf]
      %v1479 = vld [vmem:[%s194 + $0x4] sm:$0xf]
      %v1480 = vld [vmem:[%s194 + $0x8] sm:$0xf]
      %v1481 = vld [vmem:[%s194 + $0xc] sm:$0xf]
      %v1482 = vld [vmem:[%s194 + $0x10] sm:$0xf]
      %v1484 = vshrl.u32 %v1477, 16
      %v1486 = vshll.u32 %v1477, 16
      %v1488 = vrot.slane %v1486, 1
      %v1489 = vor.u32 %v1484, %v1488
      %v1495 = vunpack.c.l.b16 %v1478
      %v1496 = vunpack.c.l.b16 %v1479
      %v1497 = vunpack.c.l.b16 %v1480
      %v1498 = vunpack.c.l.b16 %v1481
      %v1499 = vunpack.c.l.b16 %v1482
      %v1500 = vpack.c.b16 %v1496, %v1495
      %v1501 = vpack.c.b16 %v1498, %v1497
      %v1502 = vpack.c.b16 %v1499, %v1499
      %v1506 = vsel %vm222, %v1489, 0
      %v1509 = vsel %vm226, %v1502, 0
      %1511 = vmatpush.bf16.msra.mxu0 0
      %1512 = vmatpush.bf16.msra.mxu0 0
      %1513 = vmatpush.bf16.msra.mxu0 0
      %1514 = vmatpush.bf16.msra.mxu0 0
      %1515 = vmatpush.bf16.msra.mxu0 0
      %1516 = vmatpush.bf16.msra.mxu0 %v1509
      %1517 = vmatpush.bf16.msra.mxu0 %v1501
      %1518 = vmatpush.bf16.msra.mxu0 %v1500
      %1519 = vmatmul.bf16.gmra.mxu0 %v1506
      %v1520 = vpop.f32.mrf.mxu0
      %v1521 = vadd.f32 0.0, %v1520
      %v1522 = vpop.f32.mrf.mxu0
      %1523 = vdwg.mxu0
      %v1529 = vunpack.c.l.b16 %v1472
      %v1530 = vunpack.c.l.b16 %v1473
      %v1531 = vunpack.c.l.b16 %v1474
      %v1532 = vunpack.c.l.b16 %v1475
      %v1533 = vunpack.c.l.b16 %v1476
      %v1534 = vpack.c.b16 %v1530, %v1529
      %v1535 = vpack.c.b16 %v1532, %v1531
      %v1536 = vpack.c.b16 %v1533, %v1533
      %v1540 = vsel %vm222, %v1471, 0
      %v1543 = vsel %vm226, %v1536, 0
      %1545 = vmatpush.bf16.msra.mxu0 0
      %1546 = vmatpush.bf16.msra.mxu0 0
      %1547 = vmatpush.bf16.msra.mxu0 0
      %1548 = vmatpush.bf16.msra.mxu0 0
      %1549 = vmatpush.bf16.msra.mxu0 0
      %1550 = vmatpush.bf16.msra.mxu0 %v1543
      %1551 = vmatpush.bf16.msra.mxu0 %v1535
      %1552 = vmatpush.bf16.msra.mxu0 %v1534
      %1553 = vmatmul.bf16.gmra.mxu0 %v1540
      %v1554 = vpop.f32.mrf.mxu0
      %v1555 = vadd.f32 %v1521, %v1554
      %v1556 = vpop.f32.mrf.mxu0
      %1557 = vdwg.mxu0
      %v1558 = vld [vmem:[%s277] sm:$0xf]
      %v1559 = vld [vmem:[%s277 + $0x4] sm:$0xf]
      %v1560 = vld [vmem:[%s277 + $0x8] sm:$0xf]
      %v1561 = vld [vmem:[%s277 + $0xc] sm:$0xf]
      %v1562 = vld [vmem:[%s277 + $0x10] sm:$0xf]
      %v1564 = vrot.slane %v1477, 1
      %v1570 = vunpack.c.l.b16 %v1558
      %v1571 = vunpack.c.l.b16 %v1559
      %v1572 = vunpack.c.l.b16 %v1560
      %v1573 = vunpack.c.l.b16 %v1561
      %v1574 = vunpack.c.l.b16 %v1562
      %v1575 = vpack.c.b16 %v1571, %v1570
      %v1576 = vpack.c.b16 %v1573, %v1572
      %v1577 = vpack.c.b16 %v1574, %v1574
      %v1581 = vsel %vm222, %v1564, 0
      %v1584 = vsel %vm226, %v1577, 0
      %1586 = vmatpush.bf16.msra.mxu0 0
      %1587 = vmatpush.bf16.msra.mxu0 0
      %1588 = vmatpush.bf16.msra.mxu0 0
      %1589 = vmatpush.bf16.msra.mxu0 0
      %1590 = vmatpush.bf16.msra.mxu0 0
      %1591 = vmatpush.bf16.msra.mxu0 %v1584
      %1592 = vmatpush.bf16.msra.mxu0 %v1576
      %1593 = vmatpush.bf16.msra.mxu0 %v1575
      %1594 = vmatmul.bf16.gmra.mxu0 %v1581
      %v1595 = vpop.f32.mrf.mxu0
      %v1596 = vadd.f32 0.0, %v1595
      %v1597 = vpop.f32.mrf.mxu0
      %1598 = vdwg.mxu0
      %v1599 = vadd.f32 %v1555, %v1596
      %v1600 = vld [vmem:[%s1311] sm:$0xf]
      %v1601 = vld [vmem:[%s1311 + $0x4] sm:$0x1]
      %v1602 = vunpack.c.l.bf16 %v1600
      %v1603 = vunpack.c.l.bf16 %v1601
      %v1604 = vpack.c.bf16 %v1602, %v1602
      %v1605 = vld [vmem:[%s326] sm:$0xf]
      %v1606 = vld [vmem:[%s326 + $0x4] sm:$0xf]
      %v1607 = vld [vmem:[%s326 + $0x8] sm:$0xf]
      %v1608 = vld [vmem:[%s326 + $0xc] sm:$0xf]
      %v1609 = vld [vmem:[%s326 + $0x10] sm:$0xf]
      %v1615 = vunpack.c.l.b16 %v1605
      %v1616 = vunpack.c.l.b16 %v1606
      %v1617 = vunpack.c.l.b16 %v1607
      %v1618 = vunpack.c.l.b16 %v1608
      %v1619 = vunpack.c.l.b16 %v1609
      %v1620 = vpack.c.b16 %v1616, %v1615
      %v1621 = vpack.c.b16 %v1618, %v1617
      %v1622 = vpack.c.b16 %v1619, %v1619
      %v1626 = vsel %vm222, %v1604, 0
      %v1629 = vsel %vm226, %v1622, 0
      %1631 = vmatpush.bf16.msra.mxu0 0
      %1632 = vmatpush.bf16.msra.mxu0 0
      %1633 = vmatpush.bf16.msra.mxu0 0
      %1634 = vmatpush.bf16.msra.mxu0 0
      %1635 = vmatpush.bf16.msra.mxu0 0
      %1636 = vmatpush.bf16.msra.mxu0 %v1629
      %1637 = vmatpush.bf16.msra.mxu0 %v1621
      %1638 = vmatpush.bf16.msra.mxu0 %v1620
      %1639 = vmatmul.bf16.gmra.mxu0 %v1626
      %v1640 = vpop.f32.mrf.mxu0
      %v1641 = vadd.f32 0.0, %v1640
      %v1642 = vpop.f32.mrf.mxu0
      %1643 = vdwg.mxu0
      %v1644 = vadd.f32 %v1599, %v1641
      %v1645 = vpack.c.bf16 %v1603, %v1602
      %v1646 = vld [vmem:[%s368] sm:$0xf]
      %v1647 = vld [vmem:[%s368 + $0x4] sm:$0xf]
      %v1648 = vld [vmem:[%s368 + $0x8] sm:$0xf]
      %v1649 = vld [vmem:[%s368 + $0xc] sm:$0xf]
      %v1650 = vld [vmem:[%s368 + $0x10] sm:$0xf]
      %v1652 = vshrl.u32 %v1645, 16
      %v1654 = vshll.u32 %v1645, 16
      %v1656 = vrot.slane %v1654, 1
      %v1657 = vor.u32 %v1652, %v1656
      %v1663 = vunpack.c.l.b16 %v1646
      %v1664 = vunpack.c.l.b16 %v1647
      %v1665 = vunpack.c.l.b16 %v1648
      %v1666 = vunpack.c.l.b16 %v1649
      %v1667 = vunpack.c.l.b16 %v1650
      %v1668 = vpack.c.b16 %v1664, %v1663
      %v1669 = vpack.c.b16 %v1666, %v1665
      %v1670 = vpack.c.b16 %v1667, %v1667
      %v1674 = vsel %vm222, %v1657, 0
      %v1677 = vsel %vm226, %v1670, 0
      %1679 = vmatpush.bf16.msra.mxu0 0
      %1680 = vmatpush.bf16.msra.mxu0 0
      %1681 = vmatpush.bf16.msra.mxu0 0
      %1682 = vmatpush.bf16.msra.mxu0 0
      %1683 = vmatpush.bf16.msra.mxu0 0
      %1684 = vmatpush.bf16.msra.mxu0 %v1677
      %1685 = vmatpush.bf16.msra.mxu0 %v1669
      %1686 = vmatpush.bf16.msra.mxu0 %v1668
      %1687 = vmatmul.bf16.gmra.mxu0 %v1674
      %v1688 = vpop.f32.mrf.mxu0
      %v1689 = vadd.f32 0.0, %v1688
      %v1690 = vpop.f32.mrf.mxu0
      %1691 = vdwg.mxu0
      %v1692 = vadd.f32 %v1644, %v1689
      %v1693 = vld [vmem:[%s416] sm:$0xf]
      %v1694 = vld [vmem:[%s416 + $0x4] sm:$0xf]
      %v1695 = vld [vmem:[%s416 + $0x8] sm:$0xf]
      %v1696 = vld [vmem:[%s416 + $0xc] sm:$0xf]
      %v1697 = vld [vmem:[%s416 + $0x10] sm:$0xf]
      %v1699 = vrot.slane %v1645, 1
      %v1705 = vunpack.c.l.b16 %v1693
      %v1706 = vunpack.c.l.b16 %v1694
      %v1707 = vunpack.c.l.b16 %v1695
      %v1708 = vunpack.c.l.b16 %v1696
      %v1709 = vunpack.c.l.b16 %v1697
      %v1710 = vpack.c.b16 %v1706, %v1705
      %v1711 = vpack.c.b16 %v1708, %v1707
      %v1712 = vpack.c.b16 %v1709, %v1709
      %v1716 = vsel %vm222, %v1699, 0
      %v1719 = vsel %vm226, %v1712, 0
      %1721 = vmatpush.bf16.msra.mxu0 0
      %1722 = vmatpush.bf16.msra.mxu0 0
      %1723 = vmatpush.bf16.msra.mxu0 0
      %1724 = vmatpush.bf16.msra.mxu0 0
      %1725 = vmatpush.bf16.msra.mxu0 0
      %1726 = vmatpush.bf16.msra.mxu0 %v1719
      %1727 = vmatpush.bf16.msra.mxu0 %v1711
      %1728 = vmatpush.bf16.msra.mxu0 %v1710
      %1729 = vmatmul.bf16.gmra.mxu0 %v1716
      %v1730 = vpop.f32.mrf.mxu0
      %v1731 = vadd.f32 0.0, %v1730
      %v1732 = vpop.f32.mrf.mxu0
      %1733 = vdwg.mxu0
      %v1734 = vadd.f32 %v1692, %v1731
      %s1735 = scalar_lea.vmem %s172, 40
      %v1736 = vld [vmem:[%s1735] sm:$0xf]
      %v1737 = vld [vmem:[%s1735 + $0x4] sm:$0x1]
      %v1738 = vunpack.c.l.bf16 %v1736
      %v1739 = vunpack.c.l.bf16 %v1737
      %v1740 = vpack.c.bf16 %v1738, %v1738
      %v1741 = vld [vmem:[%s465] sm:$0xf]
      %v1742 = vld [vmem:[%s465 + $0x4] sm:$0xf]
      %v1743 = vld [vmem:[%s465 + $0x8] sm:$0xf]
      %v1744 = vld [vmem:[%s465 + $0xc] sm:$0xf]
      %v1745 = vld [vmem:[%s465 + $0x10] sm:$0xf]
      %v1751 = vunpack.c.l.b16 %v1741
      %v1752 = vunpack.c.l.b16 %v1742
      %v1753 = vunpack.c.l.b16 %v1743
      %v1754 = vunpack.c.l.b16 %v1744
      %v1755 = vunpack.c.l.b16 %v1745
      %v1756 = vpack.c.b16 %v1752, %v1751
      %v1757 = vpack.c.b16 %v1754, %v1753
      %v1758 = vpack.c.b16 %v1755, %v1755
      %v1762 = vsel %vm222, %v1740, 0
      %v1765 = vsel %vm226, %v1758, 0
      %1767 = vmatpush.bf16.msra.mxu0 0
      %1768 = vmatpush.bf16.msra.mxu0 0
      %1769 = vmatpush.bf16.msra.mxu0 0
      %1770 = vmatpush.bf16.msra.mxu0 0
      %1771 = vmatpush.bf16.msra.mxu0 0
      %1772 = vmatpush.bf16.msra.mxu0 %v1765
      %1773 = vmatpush.bf16.msra.mxu0 %v1757
      %1774 = vmatpush.bf16.msra.mxu0 %v1756
      %1775 = vmatmul.bf16.gmra.mxu0 %v1762
      %v1776 = vpop.f32.mrf.mxu0
      %v1777 = vadd.f32 0.0, %v1776
      %v1778 = vpop.f32.mrf.mxu0
      %1779 = vdwg.mxu0
      %v1780 = vadd.f32 %v1734, %v1777
      %v1781 = vpack.c.bf16 %v1739, %v1738
      %v1782 = vld [vmem:[%s507] sm:$0xf]
      %v1783 = vld [vmem:[%s507 + $0x4] sm:$0xf]
      %v1784 = vld [vmem:[%s507 + $0x8] sm:$0xf]
      %v1785 = vld [vmem:[%s507 + $0xc] sm:$0xf]
      %v1786 = vld [vmem:[%s507 + $0x10] sm:$0xf]
      %v1788 = vshrl.u32 %v1781, 16
      %v1790 = vshll.u32 %v1781, 16
      %v1792 = vrot.slane %v1790, 1
      %v1793 = vor.u32 %v1788, %v1792
      %v1799 = vunpack.c.l.b16 %v1782
      %v1800 = vunpack.c.l.b16 %v1783
      %v1801 = vunpack.c.l.b16 %v1784
      %v1802 = vunpack.c.l.b16 %v1785
      %v1803 = vunpack.c.l.b16 %v1786
      %v1804 = vpack.c.b16 %v1800, %v1799
      %v1805 = vpack.c.b16 %v1802, %v1801
      %v1806 = vpack.c.b16 %v1803, %v1803
      %v1810 = vsel %vm222, %v1793, 0
      %v1813 = vsel %vm226, %v1806, 0
      %1815 = vmatpush.bf16.msra.mxu0 0
      %1816 = vmatpush.bf16.msra.mxu0 0
      %1817 = vmatpush.bf16.msra.mxu0 0
      %1818 = vmatpush.bf16.msra.mxu0 0
      %1819 = vmatpush.bf16.msra.mxu0 0
      %1820 = vmatpush.bf16.msra.mxu0 %v1813
      %1821 = vmatpush.bf16.msra.mxu0 %v1805
      %1822 = vmatpush.bf16.msra.mxu0 %v1804
      %1823 = vmatmul.bf16.gmra.mxu0 %v1810
      %v1824 = vpop.f32.mrf.mxu0
      %v1825 = vadd.f32 0.0, %v1824
      %v1826 = vpop.f32.mrf.mxu0
      %1827 = vdwg.mxu0
      %v1828 = vadd.f32 %v1780, %v1825
      %v1829 = vld [vmem:[%s555] sm:$0xf]
      %v1830 = vld [vmem:[%s555 + $0x4] sm:$0xf]
      %v1831 = vld [vmem:[%s555 + $0x8] sm:$0xf]
      %v1832 = vld [vmem:[%s555 + $0xc] sm:$0xf]
      %v1833 = vld [vmem:[%s555 + $0x10] sm:$0xf]
      %v1835 = vrot.slane %v1781, 1
      %v1841 = vunpack.c.l.b16 %v1829
      %v1842 = vunpack.c.l.b16 %v1830
      %v1843 = vunpack.c.l.b16 %v1831
      %v1844 = vunpack.c.l.b16 %v1832
      %v1845 = vunpack.c.l.b16 %v1833
      %v1846 = vpack.c.b16 %v1842, %v1841
      %v1847 = vpack.c.b16 %v1844, %v1843
      %v1848 = vpack.c.b16 %v1845, %v1845
      %v1852 = vsel %vm222, %v1835, 0
      %v1855 = vsel %vm226, %v1848, 0
      %1857 = vmatpush.bf16.msra.mxu0 0
      %1858 = vmatpush.bf16.msra.mxu0 0
      %1859 = vmatpush.bf16.msra.mxu0 0
      %1860 = vmatpush.bf16.msra.mxu0 0
      %1861 = vmatpush.bf16.msra.mxu0 0
      %1862 = vmatpush.bf16.msra.mxu0 %v1855
      %1863 = vmatpush.bf16.msra.mxu0 %v1847
      %1864 = vmatpush.bf16.msra.mxu0 %v1846
      %1865 = vmatmul.bf16.gmra.mxu0 %v1852
      %v1866 = vpop.f32.mrf.mxu0
      %v1867 = vadd.f32 0.0, %v1866
      %v1868 = vpop.f32.mrf.mxu0
      %1869 = vdwg.mxu0
      %v1870 = vadd.f32 %v1828, %v1867
      %v1871 = vpack.c.bf16 %v1870, %v1870
      %s1872 = scalar_lea.vmem %s177, 12
      %1873 = vst.msk [vmem:[%s1872] sm:$0xf] %vm599, %v1871
      %v1874 = vsel %vm601, %v1870, 0.0
      %v1875 = vrot.slane %v1874, 4
      %v1876 = vadd.f32 %v1874, %v1875
      %v1877 = vrot.slane %v1876, 2
      %v1878 = vadd.f32 %v1876, %v1877
      %v1879 = vrot.slane %v1878, 1
      %v1880 = vadd.f32 %v1878, %v1879
      %v1881 = vadd.f32 %v1457, %v1880
      %v1882 = vmul.f32 %v1870, %v1870
      %v1883 = vsel %vm601, %v1882, 0.0
      %v1884 = vrot.slane %v1883, 4
      %v1885 = vadd.f32 %v1883, %v1884
      %v1886 = vrot.slane %v1885, 2
      %v1887 = vadd.f32 %v1885, %v1886
      %v1888 = vrot.slane %v1887, 1
      %v1889 = vadd.f32 %v1887, %v1888
      %v1890 = vadd.f32 %v1466, %v1889
      %v1891 = vld [vmem:[%s1311] sm:$0xf]
      %v1892 = vld [vmem:[%s1311 + $0x4] sm:$0x1]
      %v1893 = vunpack.c.l.bf16 %v1891
      %v1894 = vunpack.c.l.bf16 %v1892
      %v1895 = vpack.c.bf16 %v1893, %v1893
      %v1896 = vld [vmem:[%s1] sm:$0xf]
      %v1897 = vld [vmem:[%s1 + $0x4] sm:$0xf]
      %v1898 = vld [vmem:[%s1 + $0x8] sm:$0xf]
      %v1899 = vld [vmem:[%s1 + $0xc] sm:$0xf]
      %v1900 = vld [vmem:[%s1 + $0x10] sm:$0xf]
      %v1901 = vpack.c.bf16 %v1894, %v1893
      %v1902 = vld [vmem:[%s194] sm:$0xf]
      %v1903 = vld [vmem:[%s194 + $0x4] sm:$0xf]
      %v1904 = vld [vmem:[%s194 + $0x8] sm:$0xf]
      %v1905 = vld [vmem:[%s194 + $0xc] sm:$0xf]
      %v1906 = vld [vmem:[%s194 + $0x10] sm:$0xf]
      %v1908 = vshrl.u32 %v1901, 16
      %v1910 = vshll.u32 %v1901, 16
      %v1912 = vrot.slane %v1910, 1
      %v1913 = vor.u32 %v1908, %v1912
      %v1919 = vunpack.c.l.b16 %v1902
      %v1920 = vunpack.c.l.b16 %v1903
      %v1921 = vunpack.c.l.b16 %v1904
      %v1922 = vunpack.c.l.b16 %v1905
      %v1923 = vunpack.c.l.b16 %v1906
      %v1924 = vpack.c.b16 %v1920, %v1919
      %v1925 = vpack.c.b16 %v1922, %v1921
      %v1926 = vpack.c.b16 %v1923, %v1923
      %v1930 = vsel %vm222, %v1913, 0
      %v1933 = vsel %vm226, %v1926, 0
      %1935 = vmatpush.bf16.msra.mxu0 0
      %1936 = vmatpush.bf16.msra.mxu0 0
      %1937 = vmatpush.bf16.msra.mxu0 0
      %1938 = vmatpush.bf16.msra.mxu0 0
      %1939 = vmatpush.bf16.msra.mxu0 0
      %1940 = vmatpush.bf16.msra.mxu0 %v1933
      %1941 = vmatpush.bf16.msra.mxu0 %v1925
      %1942 = vmatpush.bf16.msra.mxu0 %v1924
      %1943 = vmatmul.bf16.gmra.mxu0 %v1930
      %v1944 = vpop.f32.mrf.mxu0
      %v1945 = vadd.f32 0.0, %v1944
      %v1946 = vpop.f32.mrf.mxu0
      %1947 = vdwg.mxu0
      %v1953 = vunpack.c.l.b16 %v1896
      %v1954 = vunpack.c.l.b16 %v1897
      %v1955 = vunpack.c.l.b16 %v1898
      %v1956 = vunpack.c.l.b16 %v1899
      %v1957 = vunpack.c.l.b16 %v1900
      %v1958 = vpack.c.b16 %v1954, %v1953
      %v1959 = vpack.c.b16 %v1956, %v1955
      %v1960 = vpack.c.b16 %v1957, %v1957
      %v1964 = vsel %vm222, %v1895, 0
      %v1967 = vsel %vm226, %v1960, 0
      %1969 = vmatpush.bf16.msra.mxu0 0
      %1970 = vmatpush.bf16.msra.mxu0 0
      %1971 = vmatpush.bf16.msra.mxu0 0
      %1972 = vmatpush.bf16.msra.mxu0 0
      %1973 = vmatpush.bf16.msra.mxu0 0
      %1974 = vmatpush.bf16.msra.mxu0 %v1967
      %1975 = vmatpush.bf16.msra.mxu0 %v1959
      %1976 = vmatpush.bf16.msra.mxu0 %v1958
      %1977 = vmatmul.bf16.gmra.mxu0 %v1964
      %v1978 = vpop.f32.mrf.mxu0
      %v1979 = vadd.f32 %v1945, %v1978
      %v1980 = vpop.f32.mrf.mxu0
      %1981 = vdwg.mxu0
      %v1982 = vld [vmem:[%s277] sm:$0xf]
      %v1983 = vld [vmem:[%s277 + $0x4] sm:$0xf]
      %v1984 = vld [vmem:[%s277 + $0x8] sm:$0xf]
      %v1985 = vld [vmem:[%s277 + $0xc] sm:$0xf]
      %v1986 = vld [vmem:[%s277 + $0x10] sm:$0xf]
      %v1988 = vrot.slane %v1901, 1
      %v1994 = vunpack.c.l.b16 %v1982
      %v1995 = vunpack.c.l.b16 %v1983
      %v1996 = vunpack.c.l.b16 %v1984
      %v1997 = vunpack.c.l.b16 %v1985
      %v1998 = vunpack.c.l.b16 %v1986
      %v1999 = vpack.c.b16 %v1995, %v1994
      %v2000 = vpack.c.b16 %v1997, %v1996
      %v2001 = vpack.c.b16 %v1998, %v1998
      %v2005 = vsel %vm222, %v1988, 0
      %v2008 = vsel %vm226, %v2001, 0
      %2010 = vmatpush.bf16.msra.mxu0 0
      %2011 = vmatpush.bf16.msra.mxu0 0
      %2012 = vmatpush.bf16.msra.mxu0 0
      %2013 = vmatpush.bf16.msra.mxu0 0
      %2014 = vmatpush.bf16.msra.mxu0 0
      %2015 = vmatpush.bf16.msra.mxu0 %v2008
      %2016 = vmatpush.bf16.msra.mxu0 %v2000
      %2017 = vmatpush.bf16.msra.mxu0 %v1999
      %2018 = vmatmul.bf16.gmra.mxu0 %v2005
      %v2019 = vpop.f32.mrf.mxu0
      %v2020 = vadd.f32 0.0, %v2019
      %v2021 = vpop.f32.mrf.mxu0
      %2022 = vdwg.mxu0
      %v2023 = vadd.f32 %v1979, %v2020
      %v2024 = vld [vmem:[%s1735] sm:$0xf]
      %v2025 = vld [vmem:[%s1735 + $0x4] sm:$0x1]
      %v2026 = vunpack.c.l.bf16 %v2024
      %v2027 = vunpack.c.l.bf16 %v2025
      %v2028 = vpack.c.bf16 %v2026, %v2026
      %v2029 = vld [vmem:[%s326] sm:$0xf]
      %v2030 = vld [vmem:[%s326 + $0x4] sm:$0xf]
      %v2031 = vld [vmem:[%s326 + $0x8] sm:$0xf]
      %v2032 = vld [vmem:[%s326 + $0xc] sm:$0xf]
      %v2033 = vld [vmem:[%s326 + $0x10] sm:$0xf]
      %v2039 = vunpack.c.l.b16 %v2029
      %v2040 = vunpack.c.l.b16 %v2030
      %v2041 = vunpack.c.l.b16 %v2031
      %v2042 = vunpack.c.l.b16 %v2032
      %v2043 = vunpack.c.l.b16 %v2033
      %v2044 = vpack.c.b16 %v2040, %v2039
      %v2045 = vpack.c.b16 %v2042, %v2041
      %v2046 = vpack.c.b16 %v2043, %v2043
      %v2050 = vsel %vm222, %v2028, 0
      %v2053 = vsel %vm226, %v2046, 0
      %2055 = vmatpush.bf16.msra.mxu0 0
      %2056 = vmatpush.bf16.msra.mxu0 0
      %2057 = vmatpush.bf16.msra.mxu0 0
      %2058 = vmatpush.bf16.msra.mxu0 0
      %2059 = vmatpush.bf16.msra.mxu0 0
      %2060 = vmatpush.bf16.msra.mxu0 %v2053
      %2061 = vmatpush.bf16.msra.mxu0 %v2045
      %2062 = vmatpush.bf16.msra.mxu0 %v2044
      %2063 = vmatmul.bf16.gmra.mxu0 %v2050
      %v2064 = vpop.f32.mrf.mxu0
      %v2065 = vadd.f32 0.0, %v2064
      %v2066 = vpop.f32.mrf.mxu0
      %2067 = vdwg.mxu0
      %v2068 = vadd.f32 %v2023, %v2065
      %v2069 = vpack.c.bf16 %v2027, %v2026
      %v2070 = vld [vmem:[%s368] sm:$0xf]
      %v2071 = vld [vmem:[%s368 + $0x4] sm:$0xf]
      %v2072 = vld [vmem:[%s368 + $0x8] sm:$0xf]
      %v2073 = vld [vmem:[%s368 + $0xc] sm:$0xf]
      %v2074 = vld [vmem:[%s368 + $0x10] sm:$0xf]
      %v2076 = vshrl.u32 %v2069, 16
      %v2078 = vshll.u32 %v2069, 16
      %v2080 = vrot.slane %v2078, 1
      %v2081 = vor.u32 %v2076, %v2080
      %v2087 = vunpack.c.l.b16 %v2070
      %v2088 = vunpack.c.l.b16 %v2071
      %v2089 = vunpack.c.l.b16 %v2072
      %v2090 = vunpack.c.l.b16 %v2073
      %v2091 = vunpack.c.l.b16 %v2074
      %v2092 = vpack.c.b16 %v2088, %v2087
      %v2093 = vpack.c.b16 %v2090, %v2089
      %v2094 = vpack.c.b16 %v2091, %v2091
      %v2098 = vsel %vm222, %v2081, 0
      %v2101 = vsel %vm226, %v2094, 0
      %2103 = vmatpush.bf16.msra.mxu0 0
      %2104 = vmatpush.bf16.msra.mxu0 0
      %2105 = vmatpush.bf16.msra.mxu0 0
      %2106 = vmatpush.bf16.msra.mxu0 0
      %2107 = vmatpush.bf16.msra.mxu0 0
      %2108 = vmatpush.bf16.msra.mxu0 %v2101
      %2109 = vmatpush.bf16.msra.mxu0 %v2093
      %2110 = vmatpush.bf16.msra.mxu0 %v2092
      %2111 = vmatmul.bf16.gmra.mxu0 %v2098
      %v2112 = vpop.f32.mrf.mxu0
      %v2113 = vadd.f32 0.0, %v2112
      %v2114 = vpop.f32.mrf.mxu0
      %2115 = vdwg.mxu0
      %v2116 = vadd.f32 %v2068, %v2113
      %v2117 = vld [vmem:[%s416] sm:$0xf]
      %v2118 = vld [vmem:[%s416 + $0x4] sm:$0xf]
      %v2119 = vld [vmem:[%s416 + $0x8] sm:$0xf]
      %v2120 = vld [vmem:[%s416 + $0xc] sm:$0xf]
      %v2121 = vld [vmem:[%s416 + $0x10] sm:$0xf]
      %v2123 = vrot.slane %v2069, 1
      %v2129 = vunpack.c.l.b16 %v2117
      %v2130 = vunpack.c.l.b16 %v2118
      %v2131 = vunpack.c.l.b16 %v2119
      %v2132 = vunpack.c.l.b16 %v2120
      %v2133 = vunpack.c.l.b16 %v2121
      %v2134 = vpack.c.b16 %v2130, %v2129
      %v2135 = vpack.c.b16 %v2132, %v2131
      %v2136 = vpack.c.b16 %v2133, %v2133
      %v2140 = vsel %vm222, %v2123, 0
      %v2143 = vsel %vm226, %v2136, 0
      %2145 = vmatpush.bf16.msra.mxu0 0
      %2146 = vmatpush.bf16.msra.mxu0 0
      %2147 = vmatpush.bf16.msra.mxu0 0
      %2148 = vmatpush.bf16.msra.mxu0 0
      %2149 = vmatpush.bf16.msra.mxu0 0
      %2150 = vmatpush.bf16.msra.mxu0 %v2143
      %2151 = vmatpush.bf16.msra.mxu0 %v2135
      %2152 = vmatpush.bf16.msra.mxu0 %v2134
      %2153 = vmatmul.bf16.gmra.mxu0 %v2140
      %v2154 = vpop.f32.mrf.mxu0
      %v2155 = vadd.f32 0.0, %v2154
      %v2156 = vpop.f32.mrf.mxu0
      %2157 = vdwg.mxu0
      %v2158 = vadd.f32 %v2116, %v2155
      %s2159 = scalar_lea.vmem %s172, 48
      %v2160 = vld [vmem:[%s2159] sm:$0xf]
      %v2161 = vld [vmem:[%s2159 + $0x4] sm:$0x1]
      %v2162 = vunpack.c.l.bf16 %v2160
      %v2163 = vunpack.c.l.bf16 %v2161
      %v2164 = vpack.c.bf16 %v2162, %v2162
      %v2165 = vld [vmem:[%s465] sm:$0xf]
      %v2166 = vld [vmem:[%s465 + $0x4] sm:$0xf]
      %v2167 = vld [vmem:[%s465 + $0x8] sm:$0xf]
      %v2168 = vld [vmem:[%s465 + $0xc] sm:$0xf]
      %v2169 = vld [vmem:[%s465 + $0x10] sm:$0xf]
      %v2175 = vunpack.c.l.b16 %v2165
      %v2176 = vunpack.c.l.b16 %v2166
      %v2177 = vunpack.c.l.b16 %v2167
      %v2178 = vunpack.c.l.b16 %v2168
      %v2179 = vunpack.c.l.b16 %v2169
      %v2180 = vpack.c.b16 %v2176, %v2175
      %v2181 = vpack.c.b16 %v2178, %v2177
      %v2182 = vpack.c.b16 %v2179, %v2179
      %v2186 = vsel %vm222, %v2164, 0
      %v2189 = vsel %vm226, %v2182, 0
      %2191 = vmatpush.bf16.msra.mxu0 0
      %2192 = vmatpush.bf16.msra.mxu0 0
      %2193 = vmatpush.bf16.msra.mxu0 0
      %2194 = vmatpush.bf16.msra.mxu0 0
      %2195 = vmatpush.bf16.msra.mxu0 0
      %2196 = vmatpush.bf16.msra.mxu0 %v2189
      %2197 = vmatpush.bf16.msra.mxu0 %v2181
      %2198 = vmatpush.bf16.msra.mxu0 %v2180
      %2199 = vmatmul.bf16.gmra.mxu0 %v2186
      %v2200 = vpop.f32.mrf.mxu0
      %v2201 = vadd.f32 0.0, %v2200
      %v2202 = vpop.f32.mrf.mxu0
      %2203 = vdwg.mxu0
      %v2204 = vadd.f32 %v2158, %v2201
      %v2205 = vpack.c.bf16 %v2163, %v2162
      %v2206 = vld [vmem:[%s507] sm:$0xf]
      %v2207 = vld [vmem:[%s507 + $0x4] sm:$0xf]
      %v2208 = vld [vmem:[%s507 + $0x8] sm:$0xf]
      %v2209 = vld [vmem:[%s507 + $0xc] sm:$0xf]
      %v2210 = vld [vmem:[%s507 + $0x10] sm:$0xf]
      %v2212 = vshrl.u32 %v2205, 16
      %v2214 = vshll.u32 %v2205, 16
      %v2216 = vrot.slane %v2214, 1
      %v2217 = vor.u32 %v2212, %v2216
      %v2223 = vunpack.c.l.b16 %v2206
      %v2224 = vunpack.c.l.b16 %v2207
      %v2225 = vunpack.c.l.b16 %v2208
      %v2226 = vunpack.c.l.b16 %v2209
      %v2227 = vunpack.c.l.b16 %v2210
      %v2228 = vpack.c.b16 %v2224, %v2223
      %v2229 = vpack.c.b16 %v2226, %v2225
      %v2230 = vpack.c.b16 %v2227, %v2227
      %v2234 = vsel %vm222, %v2217, 0
      %v2237 = vsel %vm226, %v2230, 0
      %2239 = vmatpush.bf16.msra.mxu0 0
      %2240 = vmatpush.bf16.msra.mxu0 0
      %2241 = vmatpush.bf16.msra.mxu0 0
      %2242 = vmatpush.bf16.msra.mxu0 0
      %2243 = vmatpush.bf16.msra.mxu0 0
      %2244 = vmatpush.bf16.msra.mxu0 %v2237
      %2245 = vmatpush.bf16.msra.mxu0 %v2229
      %2246 = vmatpush.bf16.msra.mxu0 %v2228
      %2247 = vmatmul.bf16.gmra.mxu0 %v2234
      %v2248 = vpop.f32.mrf.mxu0
      %v2249 = vadd.f32 0.0, %v2248
      %v2250 = vpop.f32.mrf.mxu0
      %2251 = vdwg.mxu0
      %v2252 = vadd.f32 %v2204, %v2249
      %v2253 = vld [vmem:[%s555] sm:$0xf]
      %v2254 = vld [vmem:[%s555 + $0x4] sm:$0xf]
      %v2255 = vld [vmem:[%s555 + $0x8] sm:$0xf]
      %v2256 = vld [vmem:[%s555 + $0xc] sm:$0xf]
      %v2257 = vld [vmem:[%s555 + $0x10] sm:$0xf]
      %v2259 = vrot.slane %v2205, 1
      %v2265 = vunpack.c.l.b16 %v2253
      %v2266 = vunpack.c.l.b16 %v2254
      %v2267 = vunpack.c.l.b16 %v2255
      %v2268 = vunpack.c.l.b16 %v2256
      %v2269 = vunpack.c.l.b16 %v2257
      %v2270 = vpack.c.b16 %v2266, %v2265
      %v2271 = vpack.c.b16 %v2268, %v2267
      %v2272 = vpack.c.b16 %v2269, %v2269
      %v2276 = vsel %vm222, %v2259, 0
      %v2279 = vsel %vm226, %v2272, 0
      %2281 = vmatpush.bf16.msra.mxu0 0
      %2282 = vmatpush.bf16.msra.mxu0 0
      %2283 = vmatpush.bf16.msra.mxu0 0
      %2284 = vmatpush.bf16.msra.mxu0 0
      %2285 = vmatpush.bf16.msra.mxu0 0
      %2286 = vmatpush.bf16.msra.mxu0 %v2279
      %2287 = vmatpush.bf16.msra.mxu0 %v2271
      %2288 = vmatpush.bf16.msra.mxu0 %v2270
      %2289 = vmatmul.bf16.gmra.mxu0 %v2276
      %v2290 = vpop.f32.mrf.mxu0
      %v2291 = vadd.f32 0.0, %v2290
      %v2292 = vpop.f32.mrf.mxu0
      %2293 = vdwg.mxu0
      %v2294 = vadd.f32 %v2252, %v2291
      %v2295 = vpack.c.bf16 %v2294, %v2294
      %s2296 = scalar_lea.vmem %s177, 16
      %2297 = vst.msk [vmem:[%s2296] sm:$0xf] %vm599, %v2295
      %v2298 = vsel %vm601, %v2294, 0.0
      %v2299 = vrot.slane %v2298, 4
      %v2300 = vadd.f32 %v2298, %v2299
      %v2301 = vrot.slane %v2300, 2
      %v2302 = vadd.f32 %v2300, %v2301
      %v2303 = vrot.slane %v2302, 1
      %v2304 = vadd.f32 %v2302, %v2303
      %v2305 = vadd.f32 %v1881, %v2304
      %v2306 = vmul.f32 %v2294, %v2294
      %v2307 = vsel %vm601, %v2306, 0.0
      %v2308 = vrot.slane %v2307, 4
      %v2309 = vadd.f32 %v2307, %v2308
      %v2310 = vrot.slane %v2309, 2
      %v2311 = vadd.f32 %v2309, %v2310
      %v2312 = vrot.slane %v2311, 1
      %v2313 = vadd.f32 %v2311, %v2312
      %v2314 = vadd.f32 %v1890, %v2313
      %v2315 = vld [vmem:[%s1735] sm:$0xf]
      %v2316 = vld [vmem:[%s1735 + $0x4] sm:$0x1]
      %v2317 = vunpack.c.l.bf16 %v2315
      %v2318 = vunpack.c.l.bf16 %v2316
      %v2319 = vpack.c.bf16 %v2317, %v2317
      %v2320 = vld [vmem:[%s1] sm:$0xf]
      %v2321 = vld [vmem:[%s1 + $0x4] sm:$0xf]
      %v2322 = vld [vmem:[%s1 + $0x8] sm:$0xf]
      %v2323 = vld [vmem:[%s1 + $0xc] sm:$0xf]
      %v2324 = vld [vmem:[%s1 + $0x10] sm:$0xf]
      %v2325 = vpack.c.bf16 %v2318, %v2317
      %v2326 = vld [vmem:[%s194] sm:$0xf]
      %v2327 = vld [vmem:[%s194 + $0x4] sm:$0xf]
      %v2328 = vld [vmem:[%s194 + $0x8] sm:$0xf]
      %v2329 = vld [vmem:[%s194 + $0xc] sm:$0xf]
      %v2330 = vld [vmem:[%s194 + $0x10] sm:$0xf]
      %v2332 = vshrl.u32 %v2325, 16
      %v2334 = vshll.u32 %v2325, 16
      %v2336 = vrot.slane %v2334, 1
      %v2337 = vor.u32 %v2332, %v2336
      %v2343 = vunpack.c.l.b16 %v2326
      %v2344 = vunpack.c.l.b16 %v2327
      %v2345 = vunpack.c.l.b16 %v2328
      %v2346 = vunpack.c.l.b16 %v2329
      %v2347 = vunpack.c.l.b16 %v2330
      %v2348 = vpack.c.b16 %v2344, %v2343
      %v2349 = vpack.c.b16 %v2346, %v2345
      %v2350 = vpack.c.b16 %v2347, %v2347
      %v2354 = vsel %vm222, %v2337, 0
      %v2357 = vsel %vm226, %v2350, 0
      %2359 = vmatpush.bf16.msra.mxu0 0
      %2360 = vmatpush.bf16.msra.mxu0 0
      %2361 = vmatpush.bf16.msra.mxu0 0
      %2362 = vmatpush.bf16.msra.mxu0 0
      %2363 = vmatpush.bf16.msra.mxu0 0
      %2364 = vmatpush.bf16.msra.mxu0 %v2357
      %2365 = vmatpush.bf16.msra.mxu0 %v2349
      %2366 = vmatpush.bf16.msra.mxu0 %v2348
      %2367 = vmatmul.bf16.gmra.mxu0 %v2354
      %v2368 = vpop.f32.mrf.mxu0
      %v2369 = vadd.f32 0.0, %v2368
      %v2370 = vpop.f32.mrf.mxu0
      %2371 = vdwg.mxu0
      %v2377 = vunpack.c.l.b16 %v2320
      %v2378 = vunpack.c.l.b16 %v2321
      %v2379 = vunpack.c.l.b16 %v2322
      %v2380 = vunpack.c.l.b16 %v2323
      %v2381 = vunpack.c.l.b16 %v2324
      %v2382 = vpack.c.b16 %v2378, %v2377
      %v2383 = vpack.c.b16 %v2380, %v2379
      %v2384 = vpack.c.b16 %v2381, %v2381
      %v2388 = vsel %vm222, %v2319, 0
      %v2391 = vsel %vm226, %v2384, 0
      %2393 = vmatpush.bf16.msra.mxu0 0
      %2394 = vmatpush.bf16.msra.mxu0 0
      %2395 = vmatpush.bf16.msra.mxu0 0
      %2396 = vmatpush.bf16.msra.mxu0 0
      %2397 = vmatpush.bf16.msra.mxu0 0
      %2398 = vmatpush.bf16.msra.mxu0 %v2391
      %2399 = vmatpush.bf16.msra.mxu0 %v2383
      %2400 = vmatpush.bf16.msra.mxu0 %v2382
      %2401 = vmatmul.bf16.gmra.mxu0 %v2388
      %v2402 = vpop.f32.mrf.mxu0
      %v2403 = vadd.f32 %v2369, %v2402
      %v2404 = vpop.f32.mrf.mxu0
      %2405 = vdwg.mxu0
      %v2406 = vld [vmem:[%s277] sm:$0xf]
      %v2407 = vld [vmem:[%s277 + $0x4] sm:$0xf]
      %v2408 = vld [vmem:[%s277 + $0x8] sm:$0xf]
      %v2409 = vld [vmem:[%s277 + $0xc] sm:$0xf]
      %v2410 = vld [vmem:[%s277 + $0x10] sm:$0xf]
      %v2412 = vrot.slane %v2325, 1
      %v2418 = vunpack.c.l.b16 %v2406
      %v2419 = vunpack.c.l.b16 %v2407
      %v2420 = vunpack.c.l.b16 %v2408
      %v2421 = vunpack.c.l.b16 %v2409
      %v2422 = vunpack.c.l.b16 %v2410
      %v2423 = vpack.c.b16 %v2419, %v2418
      %v2424 = vpack.c.b16 %v2421, %v2420
      %v2425 = vpack.c.b16 %v2422, %v2422
      %v2429 = vsel %vm222, %v2412, 0
      %v2432 = vsel %vm226, %v2425, 0
      %2434 = vmatpush.bf16.msra.mxu0 0
      %2435 = vmatpush.bf16.msra.mxu0 0
      %2436 = vmatpush.bf16.msra.mxu0 0
      %2437 = vmatpush.bf16.msra.mxu0 0
      %2438 = vmatpush.bf16.msra.mxu0 0
      %2439 = vmatpush.bf16.msra.mxu0 %v2432
      %2440 = vmatpush.bf16.msra.mxu0 %v2424
      %2441 = vmatpush.bf16.msra.mxu0 %v2423
      %2442 = vmatmul.bf16.gmra.mxu0 %v2429
      %v2443 = vpop.f32.mrf.mxu0
      %v2444 = vadd.f32 0.0, %v2443
      %v2445 = vpop.f32.mrf.mxu0
      %2446 = vdwg.mxu0
      %v2447 = vadd.f32 %v2403, %v2444
      %v2448 = vld [vmem:[%s2159] sm:$0xf]
      %v2449 = vld [vmem:[%s2159 + $0x4] sm:$0x1]
      %v2450 = vunpack.c.l.bf16 %v2448
      %v2451 = vunpack.c.l.bf16 %v2449
      %v2452 = vpack.c.bf16 %v2450, %v2450
      %v2453 = vld [vmem:[%s326] sm:$0xf]
      %v2454 = vld [vmem:[%s326 + $0x4] sm:$0xf]
      %v2455 = vld [vmem:[%s326 + $0x8] sm:$0xf]
      %v2456 = vld [vmem:[%s326 + $0xc] sm:$0xf]
      %v2457 = vld [vmem:[%s326 + $0x10] sm:$0xf]
      %v2463 = vunpack.c.l.b16 %v2453
      %v2464 = vunpack.c.l.b16 %v2454
      %v2465 = vunpack.c.l.b16 %v2455
      %v2466 = vunpack.c.l.b16 %v2456
      %v2467 = vunpack.c.l.b16 %v2457
      %v2468 = vpack.c.b16 %v2464, %v2463
      %v2469 = vpack.c.b16 %v2466, %v2465
      %v2470 = vpack.c.b16 %v2467, %v2467
      %v2474 = vsel %vm222, %v2452, 0
      %v2477 = vsel %vm226, %v2470, 0
      %2479 = vmatpush.bf16.msra.mxu0 0
      %2480 = vmatpush.bf16.msra.mxu0 0
      %2481 = vmatpush.bf16.msra.mxu0 0
      %2482 = vmatpush.bf16.msra.mxu0 0
      %2483 = vmatpush.bf16.msra.mxu0 0
      %2484 = vmatpush.bf16.msra.mxu0 %v2477
      %2485 = vmatpush.bf16.msra.mxu0 %v2469
      %2486 = vmatpush.bf16.msra.mxu0 %v2468
      %2487 = vmatmul.bf16.gmra.mxu0 %v2474
      %v2488 = vpop.f32.mrf.mxu0
      %v2489 = vadd.f32 0.0, %v2488
      %v2490 = vpop.f32.mrf.mxu0
      %2491 = vdwg.mxu0
      %v2492 = vadd.f32 %v2447, %v2489
      %v2493 = vpack.c.bf16 %v2451, %v2450
      %v2494 = vld [vmem:[%s368] sm:$0xf]
      %v2495 = vld [vmem:[%s368 + $0x4] sm:$0xf]
      %v2496 = vld [vmem:[%s368 + $0x8] sm:$0xf]
      %v2497 = vld [vmem:[%s368 + $0xc] sm:$0xf]
      %v2498 = vld [vmem:[%s368 + $0x10] sm:$0xf]
      %v2500 = vshrl.u32 %v2493, 16
      %v2502 = vshll.u32 %v2493, 16
      %v2504 = vrot.slane %v2502, 1
      %v2505 = vor.u32 %v2500, %v2504
      %v2511 = vunpack.c.l.b16 %v2494
      %v2512 = vunpack.c.l.b16 %v2495
      %v2513 = vunpack.c.l.b16 %v2496
      %v2514 = vunpack.c.l.b16 %v2497
      %v2515 = vunpack.c.l.b16 %v2498
      %v2516 = vpack.c.b16 %v2512, %v2511
      %v2517 = vpack.c.b16 %v2514, %v2513
      %v2518 = vpack.c.b16 %v2515, %v2515
      %v2522 = vsel %vm222, %v2505, 0
      %v2525 = vsel %vm226, %v2518, 0
      %2527 = vmatpush.bf16.msra.mxu0 0
      %2528 = vmatpush.bf16.msra.mxu0 0
      %2529 = vmatpush.bf16.msra.mxu0 0
      %2530 = vmatpush.bf16.msra.mxu0 0
      %2531 = vmatpush.bf16.msra.mxu0 0
      %2532 = vmatpush.bf16.msra.mxu0 %v2525
      %2533 = vmatpush.bf16.msra.mxu0 %v2517
      %2534 = vmatpush.bf16.msra.mxu0 %v2516
      %2535 = vmatmul.bf16.gmra.mxu0 %v2522
      %v2536 = vpop.f32.mrf.mxu0
      %v2537 = vadd.f32 0.0, %v2536
      %v2538 = vpop.f32.mrf.mxu0
      %2539 = vdwg.mxu0
      %v2540 = vadd.f32 %v2492, %v2537
      %v2541 = vld [vmem:[%s416] sm:$0xf]
      %v2542 = vld [vmem:[%s416 + $0x4] sm:$0xf]
      %v2543 = vld [vmem:[%s416 + $0x8] sm:$0xf]
      %v2544 = vld [vmem:[%s416 + $0xc] sm:$0xf]
      %v2545 = vld [vmem:[%s416 + $0x10] sm:$0xf]
      %v2547 = vrot.slane %v2493, 1
      %v2553 = vunpack.c.l.b16 %v2541
      %v2554 = vunpack.c.l.b16 %v2542
      %v2555 = vunpack.c.l.b16 %v2543
      %v2556 = vunpack.c.l.b16 %v2544
      %v2557 = vunpack.c.l.b16 %v2545
      %v2558 = vpack.c.b16 %v2554, %v2553
      %v2559 = vpack.c.b16 %v2556, %v2555
      %v2560 = vpack.c.b16 %v2557, %v2557
      %v2564 = vsel %vm222, %v2547, 0
      %v2567 = vsel %vm226, %v2560, 0
      %2569 = vmatpush.bf16.msra.mxu0 0
      %2570 = vmatpush.bf16.msra.mxu0 0
      %2571 = vmatpush.bf16.msra.mxu0 0
      %2572 = vmatpush.bf16.msra.mxu0 0
      %2573 = vmatpush.bf16.msra.mxu0 0
      %2574 = vmatpush.bf16.msra.mxu0 %v2567
      %2575 = vmatpush.bf16.msra.mxu0 %v2559
      %2576 = vmatpush.bf16.msra.mxu0 %v2558
      %2577 = vmatmul.bf16.gmra.mxu0 %v2564
      %v2578 = vpop.f32.mrf.mxu0
      %v2579 = vadd.f32 0.0, %v2578
      %v2580 = vpop.f32.mrf.mxu0
      %2581 = vdwg.mxu0
      %v2582 = vadd.f32 %v2540, %v2579
      %s2583 = scalar_lea.vmem %s172, 56
      %v2584 = vld [vmem:[%s2583] sm:$0xf]
      %v2585 = vld [vmem:[%s2583 + $0x4] sm:$0x1]
      %v2586 = vunpack.c.l.bf16 %v2584
      %v2587 = vunpack.c.l.bf16 %v2585
      %v2588 = vpack.c.bf16 %v2586, %v2586
      %v2589 = vld [vmem:[%s465] sm:$0xf]
      %v2590 = vld [vmem:[%s465 + $0x4] sm:$0xf]
      %v2591 = vld [vmem:[%s465 + $0x8] sm:$0xf]
      %v2592 = vld [vmem:[%s465 + $0xc] sm:$0xf]
      %v2593 = vld [vmem:[%s465 + $0x10] sm:$0xf]
      %v2599 = vunpack.c.l.b16 %v2589
      %v2600 = vunpack.c.l.b16 %v2590
      %v2601 = vunpack.c.l.b16 %v2591
      %v2602 = vunpack.c.l.b16 %v2592
      %v2603 = vunpack.c.l.b16 %v2593
      %v2604 = vpack.c.b16 %v2600, %v2599
      %v2605 = vpack.c.b16 %v2602, %v2601
      %v2606 = vpack.c.b16 %v2603, %v2603
      %v2610 = vsel %vm222, %v2588, 0
      %v2613 = vsel %vm226, %v2606, 0
      %2615 = vmatpush.bf16.msra.mxu0 0
      %2616 = vmatpush.bf16.msra.mxu0 0
      %2617 = vmatpush.bf16.msra.mxu0 0
      %2618 = vmatpush.bf16.msra.mxu0 0
      %2619 = vmatpush.bf16.msra.mxu0 0
      %2620 = vmatpush.bf16.msra.mxu0 %v2613
      %2621 = vmatpush.bf16.msra.mxu0 %v2605
      %2622 = vmatpush.bf16.msra.mxu0 %v2604
      %2623 = vmatmul.bf16.gmra.mxu0 %v2610
      %v2624 = vpop.f32.mrf.mxu0
      %v2625 = vadd.f32 0.0, %v2624
      %v2626 = vpop.f32.mrf.mxu0
      %2627 = vdwg.mxu0
      %v2628 = vadd.f32 %v2582, %v2625
      %v2629 = vpack.c.bf16 %v2587, %v2586
      %v2630 = vld [vmem:[%s507] sm:$0xf]
      %v2631 = vld [vmem:[%s507 + $0x4] sm:$0xf]
      %v2632 = vld [vmem:[%s507 + $0x8] sm:$0xf]
      %v2633 = vld [vmem:[%s507 + $0xc] sm:$0xf]
      %v2634 = vld [vmem:[%s507 + $0x10] sm:$0xf]
      %v2636 = vshrl.u32 %v2629, 16
      %v2638 = vshll.u32 %v2629, 16
      %v2640 = vrot.slane %v2638, 1
      %v2641 = vor.u32 %v2636, %v2640
      %v2647 = vunpack.c.l.b16 %v2630
      %v2648 = vunpack.c.l.b16 %v2631
      %v2649 = vunpack.c.l.b16 %v2632
      %v2650 = vunpack.c.l.b16 %v2633
      %v2651 = vunpack.c.l.b16 %v2634
      %v2652 = vpack.c.b16 %v2648, %v2647
      %v2653 = vpack.c.b16 %v2650, %v2649
      %v2654 = vpack.c.b16 %v2651, %v2651
      %v2658 = vsel %vm222, %v2641, 0
      %v2661 = vsel %vm226, %v2654, 0
      %2663 = vmatpush.bf16.msra.mxu0 0
      %2664 = vmatpush.bf16.msra.mxu0 0
      %2665 = vmatpush.bf16.msra.mxu0 0
      %2666 = vmatpush.bf16.msra.mxu0 0
      %2667 = vmatpush.bf16.msra.mxu0 0
      %2668 = vmatpush.bf16.msra.mxu0 %v2661
      %2669 = vmatpush.bf16.msra.mxu0 %v2653
      %2670 = vmatpush.bf16.msra.mxu0 %v2652
      %2671 = vmatmul.bf16.gmra.mxu0 %v2658
      %v2672 = vpop.f32.mrf.mxu0
      %v2673 = vadd.f32 0.0, %v2672
      %v2674 = vpop.f32.mrf.mxu0
      %2675 = vdwg.mxu0
      %v2676 = vadd.f32 %v2628, %v2673
      %v2677 = vld [vmem:[%s555] sm:$0xf]
      %v2678 = vld [vmem:[%s555 + $0x4] sm:$0xf]
      %v2679 = vld [vmem:[%s555 + $0x8] sm:$0xf]
      %v2680 = vld [vmem:[%s555 + $0xc] sm:$0xf]
      %v2681 = vld [vmem:[%s555 + $0x10] sm:$0xf]
      %v2683 = vrot.slane %v2629, 1
      %v2689 = vunpack.c.l.b16 %v2677
      %v2690 = vunpack.c.l.b16 %v2678
      %v2691 = vunpack.c.l.b16 %v2679
      %v2692 = vunpack.c.l.b16 %v2680
      %v2693 = vunpack.c.l.b16 %v2681
      %v2694 = vpack.c.b16 %v2690, %v2689
      %v2695 = vpack.c.b16 %v2692, %v2691
      %v2696 = vpack.c.b16 %v2693, %v2693
      %v2700 = vsel %vm222, %v2683, 0
      %v2703 = vsel %vm226, %v2696, 0
      %2705 = vmatpush.bf16.msra.mxu0 0
      %2706 = vmatpush.bf16.msra.mxu0 0
      %2707 = vmatpush.bf16.msra.mxu0 0
      %2708 = vmatpush.bf16.msra.mxu0 0
      %2709 = vmatpush.bf16.msra.mxu0 0
      %2710 = vmatpush.bf16.msra.mxu0 %v2703
      %2711 = vmatpush.bf16.msra.mxu0 %v2695
      %2712 = vmatpush.bf16.msra.mxu0 %v2694
      %2713 = vmatmul.bf16.gmra.mxu0 %v2700
      %v2714 = vpop.f32.mrf.mxu0
      %v2715 = vadd.f32 0.0, %v2714
      %v2716 = vpop.f32.mrf.mxu0
      %2717 = vdwg.mxu0
      %v2718 = vadd.f32 %v2676, %v2715
      %v2719 = vpack.c.bf16 %v2718, %v2718
      %s2720 = scalar_lea.vmem %s177, 20
      %2721 = vst.msk [vmem:[%s2720] sm:$0xf] %vm599, %v2719
      %v2722 = vsel %vm601, %v2718, 0.0
      %v2723 = vrot.slane %v2722, 4
      %v2724 = vadd.f32 %v2722, %v2723
      %v2725 = vrot.slane %v2724, 2
      %v2726 = vadd.f32 %v2724, %v2725
      %v2727 = vrot.slane %v2726, 1
      %v2728 = vadd.f32 %v2726, %v2727
      %v2729 = vadd.f32 %v2305, %v2728
      %v2730 = vmul.f32 %v2718, %v2718
      %v2731 = vsel %vm601, %v2730, 0.0
      %v2732 = vrot.slane %v2731, 4
      %v2733 = vadd.f32 %v2731, %v2732
      %v2734 = vrot.slane %v2733, 2
      %v2735 = vadd.f32 %v2733, %v2734
      %v2736 = vrot.slane %v2735, 1
      %v2737 = vadd.f32 %v2735, %v2736
      %v2738 = vadd.f32 %v2314, %v2737
      %v2739 = vld [vmem:[%s2159] sm:$0xf]
      %v2740 = vld [vmem:[%s2159 + $0x4] sm:$0x1]
      %v2741 = vunpack.c.l.bf16 %v2739
      %v2742 = vunpack.c.l.bf16 %v2740
      %v2743 = vpack.c.bf16 %v2741, %v2741
      %v2744 = vld [vmem:[%s1] sm:$0xf]
      %v2745 = vld [vmem:[%s1 + $0x4] sm:$0xf]
      %v2746 = vld [vmem:[%s1 + $0x8] sm:$0xf]
      %v2747 = vld [vmem:[%s1 + $0xc] sm:$0xf]
      %v2748 = vld [vmem:[%s1 + $0x10] sm:$0xf]
      %v2749 = vpack.c.bf16 %v2742, %v2741
      %v2750 = vld [vmem:[%s194] sm:$0xf]
      %v2751 = vld [vmem:[%s194 + $0x4] sm:$0xf]
      %v2752 = vld [vmem:[%s194 + $0x8] sm:$0xf]
      %v2753 = vld [vmem:[%s194 + $0xc] sm:$0xf]
      %v2754 = vld [vmem:[%s194 + $0x10] sm:$0xf]
      %v2756 = vshrl.u32 %v2749, 16
      %v2758 = vshll.u32 %v2749, 16
      %v2760 = vrot.slane %v2758, 1
      %v2761 = vor.u32 %v2756, %v2760
      %v2767 = vunpack.c.l.b16 %v2750
      %v2768 = vunpack.c.l.b16 %v2751
      %v2769 = vunpack.c.l.b16 %v2752
      %v2770 = vunpack.c.l.b16 %v2753
      %v2771 = vunpack.c.l.b16 %v2754
      %v2772 = vpack.c.b16 %v2768, %v2767
      %v2773 = vpack.c.b16 %v2770, %v2769
      %v2774 = vpack.c.b16 %v2771, %v2771
      %v2778 = vsel %vm222, %v2761, 0
      %v2781 = vsel %vm226, %v2774, 0
      %2783 = vmatpush.bf16.msra.mxu0 0
      %2784 = vmatpush.bf16.msra.mxu0 0
      %2785 = vmatpush.bf16.msra.mxu0 0
      %2786 = vmatpush.bf16.msra.mxu0 0
      %2787 = vmatpush.bf16.msra.mxu0 0
      %2788 = vmatpush.bf16.msra.mxu0 %v2781
      %2789 = vmatpush.bf16.msra.mxu0 %v2773
      %2790 = vmatpush.bf16.msra.mxu0 %v2772
      %2791 = vmatmul.bf16.gmra.mxu0 %v2778
      %v2792 = vpop.f32.mrf.mxu0
      %v2793 = vadd.f32 0.0, %v2792
      %v2794 = vpop.f32.mrf.mxu0
      %2795 = vdwg.mxu0
      %v2801 = vunpack.c.l.b16 %v2744
      %v2802 = vunpack.c.l.b16 %v2745
      %v2803 = vunpack.c.l.b16 %v2746
      %v2804 = vunpack.c.l.b16 %v2747
      %v2805 = vunpack.c.l.b16 %v2748
      %v2806 = vpack.c.b16 %v2802, %v2801
      %v2807 = vpack.c.b16 %v2804, %v2803
      %v2808 = vpack.c.b16 %v2805, %v2805
      %v2812 = vsel %vm222, %v2743, 0
      %v2815 = vsel %vm226, %v2808, 0
      %2817 = vmatpush.bf16.msra.mxu0 0
      %2818 = vmatpush.bf16.msra.mxu0 0
      %2819 = vmatpush.bf16.msra.mxu0 0
      %2820 = vmatpush.bf16.msra.mxu0 0
      %2821 = vmatpush.bf16.msra.mxu0 0
      %2822 = vmatpush.bf16.msra.mxu0 %v2815
      %2823 = vmatpush.bf16.msra.mxu0 %v2807
      %2824 = vmatpush.bf16.msra.mxu0 %v2806
      %2825 = vmatmul.bf16.gmra.mxu0 %v2812
      %v2826 = vpop.f32.mrf.mxu0
      %v2827 = vadd.f32 %v2793, %v2826
      %v2828 = vpop.f32.mrf.mxu0
      %2829 = vdwg.mxu0
      %v2830 = vld [vmem:[%s277] sm:$0xf]
      %v2831 = vld [vmem:[%s277 + $0x4] sm:$0xf]
      %v2832 = vld [vmem:[%s277 + $0x8] sm:$0xf]
      %v2833 = vld [vmem:[%s277 + $0xc] sm:$0xf]
      %v2834 = vld [vmem:[%s277 + $0x10] sm:$0xf]
      %v2836 = vrot.slane %v2749, 1
      %v2842 = vunpack.c.l.b16 %v2830
      %v2843 = vunpack.c.l.b16 %v2831
      %v2844 = vunpack.c.l.b16 %v2832
      %v2845 = vunpack.c.l.b16 %v2833
      %v2846 = vunpack.c.l.b16 %v2834
      %v2847 = vpack.c.b16 %v2843, %v2842
      %v2848 = vpack.c.b16 %v2845, %v2844
      %v2849 = vpack.c.b16 %v2846, %v2846
      %v2853 = vsel %vm222, %v2836, 0
      %v2856 = vsel %vm226, %v2849, 0
      %2858 = vmatpush.bf16.msra.mxu0 0
      %2859 = vmatpush.bf16.msra.mxu0 0
      %2860 = vmatpush.bf16.msra.mxu0 0
      %2861 = vmatpush.bf16.msra.mxu0 0
      %2862 = vmatpush.bf16.msra.mxu0 0
      %2863 = vmatpush.bf16.msra.mxu0 %v2856
      %2864 = vmatpush.bf16.msra.mxu0 %v2848
      %2865 = vmatpush.bf16.msra.mxu0 %v2847
      %2866 = vmatmul.bf16.gmra.mxu0 %v2853
      %v2867 = vpop.f32.mrf.mxu0
      %v2868 = vadd.f32 0.0, %v2867
      %v2869 = vpop.f32.mrf.mxu0
      %2870 = vdwg.mxu0
      %v2871 = vadd.f32 %v2827, %v2868
      %v2872 = vld [vmem:[%s2583] sm:$0xf]
      %v2873 = vld [vmem:[%s2583 + $0x4] sm:$0x1]
      %v2874 = vunpack.c.l.bf16 %v2872
      %v2875 = vunpack.c.l.bf16 %v2873
      %v2876 = vpack.c.bf16 %v2874, %v2874
      %v2877 = vld [vmem:[%s326] sm:$0xf]
      %v2878 = vld [vmem:[%s326 + $0x4] sm:$0xf]
      %v2879 = vld [vmem:[%s326 + $0x8] sm:$0xf]
      %v2880 = vld [vmem:[%s326 + $0xc] sm:$0xf]
      %v2881 = vld [vmem:[%s326 + $0x10] sm:$0xf]
      %v2887 = vunpack.c.l.b16 %v2877
      %v2888 = vunpack.c.l.b16 %v2878
      %v2889 = vunpack.c.l.b16 %v2879
      %v2890 = vunpack.c.l.b16 %v2880
      %v2891 = vunpack.c.l.b16 %v2881
      %v2892 = vpack.c.b16 %v2888, %v2887
      %v2893 = vpack.c.b16 %v2890, %v2889
      %v2894 = vpack.c.b16 %v2891, %v2891
      %v2898 = vsel %vm222, %v2876, 0
      %v2901 = vsel %vm226, %v2894, 0
      %2903 = vmatpush.bf16.msra.mxu0 0
      %2904 = vmatpush.bf16.msra.mxu0 0
      %2905 = vmatpush.bf16.msra.mxu0 0
      %2906 = vmatpush.bf16.msra.mxu0 0
      %2907 = vmatpush.bf16.msra.mxu0 0
      %2908 = vmatpush.bf16.msra.mxu0 %v2901
      %2909 = vmatpush.bf16.msra.mxu0 %v2893
      %2910 = vmatpush.bf16.msra.mxu0 %v2892
      %2911 = vmatmul.bf16.gmra.mxu0 %v2898
      %v2912 = vpop.f32.mrf.mxu0
      %v2913 = vadd.f32 0.0, %v2912
      %v2914 = vpop.f32.mrf.mxu0
      %2915 = vdwg.mxu0
      %v2916 = vadd.f32 %v2871, %v2913
      %v2917 = vpack.c.bf16 %v2875, %v2874
      %v2918 = vld [vmem:[%s368] sm:$0xf]
      %v2919 = vld [vmem:[%s368 + $0x4] sm:$0xf]
      %v2920 = vld [vmem:[%s368 + $0x8] sm:$0xf]
      %v2921 = vld [vmem:[%s368 + $0xc] sm:$0xf]
      %v2922 = vld [vmem:[%s368 + $0x10] sm:$0xf]
      %v2924 = vshrl.u32 %v2917, 16
      %v2926 = vshll.u32 %v2917, 16
      %v2928 = vrot.slane %v2926, 1
      %v2929 = vor.u32 %v2924, %v2928
      %v2935 = vunpack.c.l.b16 %v2918
      %v2936 = vunpack.c.l.b16 %v2919
      %v2937 = vunpack.c.l.b16 %v2920
      %v2938 = vunpack.c.l.b16 %v2921
      %v2939 = vunpack.c.l.b16 %v2922
      %v2940 = vpack.c.b16 %v2936, %v2935
      %v2941 = vpack.c.b16 %v2938, %v2937
      %v2942 = vpack.c.b16 %v2939, %v2939
      %v2946 = vsel %vm222, %v2929, 0
      %v2949 = vsel %vm226, %v2942, 0
      %2951 = vmatpush.bf16.msra.mxu0 0
      %2952 = vmatpush.bf16.msra.mxu0 0
      %2953 = vmatpush.bf16.msra.mxu0 0
      %2954 = vmatpush.bf16.msra.mxu0 0
      %2955 = vmatpush.bf16.msra.mxu0 0
      %2956 = vmatpush.bf16.msra.mxu0 %v2949
      %2957 = vmatpush.bf16.msra.mxu0 %v2941
      %2958 = vmatpush.bf16.msra.mxu0 %v2940
      %2959 = vmatmul.bf16.gmra.mxu0 %v2946
      %v2960 = vpop.f32.mrf.mxu0
      %v2961 = vadd.f32 0.0, %v2960
      %v2962 = vpop.f32.mrf.mxu0
      %2963 = vdwg.mxu0
      %v2964 = vadd.f32 %v2916, %v2961
      %v2965 = vld [vmem:[%s416] sm:$0xf]
      %v2966 = vld [vmem:[%s416 + $0x4] sm:$0xf]
      %v2967 = vld [vmem:[%s416 + $0x8] sm:$0xf]
      %v2968 = vld [vmem:[%s416 + $0xc] sm:$0xf]
      %v2969 = vld [vmem:[%s416 + $0x10] sm:$0xf]
      %v2971 = vrot.slane %v2917, 1
      %v2977 = vunpack.c.l.b16 %v2965
      %v2978 = vunpack.c.l.b16 %v2966
      %v2979 = vunpack.c.l.b16 %v2967
      %v2980 = vunpack.c.l.b16 %v2968
      %v2981 = vunpack.c.l.b16 %v2969
      %v2982 = vpack.c.b16 %v2978, %v2977
      %v2983 = vpack.c.b16 %v2980, %v2979
      %v2984 = vpack.c.b16 %v2981, %v2981
      %v2988 = vsel %vm222, %v2971, 0
      %v2991 = vsel %vm226, %v2984, 0
      %2993 = vmatpush.bf16.msra.mxu0 0
      %2994 = vmatpush.bf16.msra.mxu0 0
      %2995 = vmatpush.bf16.msra.mxu0 0
      %2996 = vmatpush.bf16.msra.mxu0 0
      %2997 = vmatpush.bf16.msra.mxu0 0
      %2998 = vmatpush.bf16.msra.mxu0 %v2991
      %2999 = vmatpush.bf16.msra.mxu0 %v2983
      %3000 = vmatpush.bf16.msra.mxu0 %v2982
      %3001 = vmatmul.bf16.gmra.mxu0 %v2988
      %v3002 = vpop.f32.mrf.mxu0
      %v3003 = vadd.f32 0.0, %v3002
      %v3004 = vpop.f32.mrf.mxu0
      %3005 = vdwg.mxu0
      %v3006 = vadd.f32 %v2964, %v3003
      %s3007 = scalar_lea.vmem %s172, 64
      %v3008 = vld [vmem:[%s3007] sm:$0xf]
      %v3009 = vld [vmem:[%s3007 + $0x4] sm:$0x1]
      %v3010 = vunpack.c.l.bf16 %v3008
      %v3011 = vunpack.c.l.bf16 %v3009
      %v3012 = vpack.c.bf16 %v3010, %v3010
      %v3013 = vld [vmem:[%s465] sm:$0xf]
      %v3014 = vld [vmem:[%s465 + $0x4] sm:$0xf]
      %v3015 = vld [vmem:[%s465 + $0x8] sm:$0xf]
      %v3016 = vld [vmem:[%s465 + $0xc] sm:$0xf]
      %v3017 = vld [vmem:[%s465 + $0x10] sm:$0xf]
      %v3023 = vunpack.c.l.b16 %v3013
      %v3024 = vunpack.c.l.b16 %v3014
      %v3025 = vunpack.c.l.b16 %v3015
      %v3026 = vunpack.c.l.b16 %v3016
      %v3027 = vunpack.c.l.b16 %v3017
      %v3028 = vpack.c.b16 %v3024, %v3023
      %v3029 = vpack.c.b16 %v3026, %v3025
      %v3030 = vpack.c.b16 %v3027, %v3027
      %v3034 = vsel %vm222, %v3012, 0
      %v3037 = vsel %vm226, %v3030, 0
      %3039 = vmatpush.bf16.msra.mxu0 0
      %3040 = vmatpush.bf16.msra.mxu0 0
      %3041 = vmatpush.bf16.msra.mxu0 0
      %3042 = vmatpush.bf16.msra.mxu0 0
      %3043 = vmatpush.bf16.msra.mxu0 0
      %3044 = vmatpush.bf16.msra.mxu0 %v3037
      %3045 = vmatpush.bf16.msra.mxu0 %v3029
      %3046 = vmatpush.bf16.msra.mxu0 %v3028
      %3047 = vmatmul.bf16.gmra.mxu0 %v3034
      %v3048 = vpop.f32.mrf.mxu0
      %v3049 = vadd.f32 0.0, %v3048
      %v3050 = vpop.f32.mrf.mxu0
      %3051 = vdwg.mxu0
      %v3052 = vadd.f32 %v3006, %v3049
      %v3053 = vpack.c.bf16 %v3011, %v3010
      %v3054 = vld [vmem:[%s507] sm:$0xf]
      %v3055 = vld [vmem:[%s507 + $0x4] sm:$0xf]
      %v3056 = vld [vmem:[%s507 + $0x8] sm:$0xf]
      %v3057 = vld [vmem:[%s507 + $0xc] sm:$0xf]
      %v3058 = vld [vmem:[%s507 + $0x10] sm:$0xf]
      %v3060 = vshrl.u32 %v3053, 16
      %v3062 = vshll.u32 %v3053, 16
      %v3064 = vrot.slane %v3062, 1
      %v3065 = vor.u32 %v3060, %v3064
      %v3071 = vunpack.c.l.b16 %v3054
      %v3072 = vunpack.c.l.b16 %v3055
      %v3073 = vunpack.c.l.b16 %v3056
      %v3074 = vunpack.c.l.b16 %v3057
      %v3075 = vunpack.c.l.b16 %v3058
      %v3076 = vpack.c.b16 %v3072, %v3071
      %v3077 = vpack.c.b16 %v3074, %v3073
      %v3078 = vpack.c.b16 %v3075, %v3075
      %v3082 = vsel %vm222, %v3065, 0
      %v3085 = vsel %vm226, %v3078, 0
      %3087 = vmatpush.bf16.msra.mxu0 0
      %3088 = vmatpush.bf16.msra.mxu0 0
      %3089 = vmatpush.bf16.msra.mxu0 0
      %3090 = vmatpush.bf16.msra.mxu0 0
      %3091 = vmatpush.bf16.msra.mxu0 0
      %3092 = vmatpush.bf16.msra.mxu0 %v3085
      %3093 = vmatpush.bf16.msra.mxu0 %v3077
      %3094 = vmatpush.bf16.msra.mxu0 %v3076
      %3095 = vmatmul.bf16.gmra.mxu0 %v3082
      %v3096 = vpop.f32.mrf.mxu0
      %v3097 = vadd.f32 0.0, %v3096
      %v3098 = vpop.f32.mrf.mxu0
      %3099 = vdwg.mxu0
      %v3100 = vadd.f32 %v3052, %v3097
      %v3101 = vld [vmem:[%s555] sm:$0xf]
      %v3102 = vld [vmem:[%s555 + $0x4] sm:$0xf]
      %v3103 = vld [vmem:[%s555 + $0x8] sm:$0xf]
      %v3104 = vld [vmem:[%s555 + $0xc] sm:$0xf]
      %v3105 = vld [vmem:[%s555 + $0x10] sm:$0xf]
      %v3107 = vrot.slane %v3053, 1
      %v3113 = vunpack.c.l.b16 %v3101
      %v3114 = vunpack.c.l.b16 %v3102
      %v3115 = vunpack.c.l.b16 %v3103
      %v3116 = vunpack.c.l.b16 %v3104
      %v3117 = vunpack.c.l.b16 %v3105
      %v3118 = vpack.c.b16 %v3114, %v3113
      %v3119 = vpack.c.b16 %v3116, %v3115
      %v3120 = vpack.c.b16 %v3117, %v3117
      %v3124 = vsel %vm222, %v3107, 0
      %v3127 = vsel %vm226, %v3120, 0
      %3129 = vmatpush.bf16.msra.mxu0 0
      %3130 = vmatpush.bf16.msra.mxu0 0
      %3131 = vmatpush.bf16.msra.mxu0 0
      %3132 = vmatpush.bf16.msra.mxu0 0
      %3133 = vmatpush.bf16.msra.mxu0 0
      %3134 = vmatpush.bf16.msra.mxu0 %v3127
      %3135 = vmatpush.bf16.msra.mxu0 %v3119
      %3136 = vmatpush.bf16.msra.mxu0 %v3118
      %3137 = vmatmul.bf16.gmra.mxu0 %v3124
      %v3138 = vpop.f32.mrf.mxu0
      %v3139 = vadd.f32 0.0, %v3138
      %v3140 = vpop.f32.mrf.mxu0
      %3141 = vdwg.mxu0
      %v3142 = vadd.f32 %v3100, %v3139
      %v3143 = vpack.c.bf16 %v3142, %v3142
      %s3144 = scalar_lea.vmem %s177, 24
      %3145 = vst.msk [vmem:[%s3144] sm:$0xf] %vm599, %v3143
      %v3146 = vsel %vm601, %v3142, 0.0
      %v3147 = vrot.slane %v3146, 4
      %v3148 = vadd.f32 %v3146, %v3147
      %v3149 = vrot.slane %v3148, 2
      %v3150 = vadd.f32 %v3148, %v3149
      %v3151 = vrot.slane %v3150, 1
      %v3152 = vadd.f32 %v3150, %v3151
      %v3153 = vadd.f32 %v2729, %v3152
      %v3154 = vmul.f32 %v3142, %v3142
      %v3155 = vsel %vm601, %v3154, 0.0
      %v3156 = vrot.slane %v3155, 4
      %v3157 = vadd.f32 %v3155, %v3156
      %v3158 = vrot.slane %v3157, 2
      %v3159 = vadd.f32 %v3157, %v3158
      %v3160 = vrot.slane %v3159, 1
      %v3161 = vadd.f32 %v3159, %v3160
      %v3162 = vadd.f32 %v2738, %v3161
      %v3163 = vld [vmem:[%s2583] sm:$0xf]
      %v3164 = vld [vmem:[%s2583 + $0x4] sm:$0x1]
      %v3165 = vunpack.c.l.bf16 %v3163
      %v3166 = vunpack.c.l.bf16 %v3164
      %v3167 = vpack.c.bf16 %v3165, %v3165
      %v3168 = vld [vmem:[%s1] sm:$0xf]
      %v3169 = vld [vmem:[%s1 + $0x4] sm:$0xf]
      %v3170 = vld [vmem:[%s1 + $0x8] sm:$0xf]
      %v3171 = vld [vmem:[%s1 + $0xc] sm:$0xf]
      %v3172 = vld [vmem:[%s1 + $0x10] sm:$0xf]
      %v3173 = vpack.c.bf16 %v3166, %v3165
      %v3174 = vld [vmem:[%s194] sm:$0xf]
      %v3175 = vld [vmem:[%s194 + $0x4] sm:$0xf]
      %v3176 = vld [vmem:[%s194 + $0x8] sm:$0xf]
      %v3177 = vld [vmem:[%s194 + $0xc] sm:$0xf]
      %v3178 = vld [vmem:[%s194 + $0x10] sm:$0xf]
      %v3180 = vshrl.u32 %v3173, 16
      %v3182 = vshll.u32 %v3173, 16
      %v3184 = vrot.slane %v3182, 1
      %v3185 = vor.u32 %v3180, %v3184
      %v3191 = vunpack.c.l.b16 %v3174
      %v3192 = vunpack.c.l.b16 %v3175
      %v3193 = vunpack.c.l.b16 %v3176
      %v3194 = vunpack.c.l.b16 %v3177
      %v3195 = vunpack.c.l.b16 %v3178
      %v3196 = vpack.c.b16 %v3192, %v3191
      %v3197 = vpack.c.b16 %v3194, %v3193
      %v3198 = vpack.c.b16 %v3195, %v3195
      %v3202 = vsel %vm222, %v3185, 0
      %v3205 = vsel %vm226, %v3198, 0
      %3207 = vmatpush.bf16.msra.mxu0 0
      %3208 = vmatpush.bf16.msra.mxu0 0
      %3209 = vmatpush.bf16.msra.mxu0 0
      %3210 = vmatpush.bf16.msra.mxu0 0
      %3211 = vmatpush.bf16.msra.mxu0 0
      %3212 = vmatpush.bf16.msra.mxu0 %v3205
      %3213 = vmatpush.bf16.msra.mxu0 %v3197
      %3214 = vmatpush.bf16.msra.mxu0 %v3196
      %3215 = vmatmul.bf16.gmra.mxu0 %v3202
      %v3216 = vpop.f32.mrf.mxu0
      %v3217 = vadd.f32 0.0, %v3216
      %v3218 = vpop.f32.mrf.mxu0
      %3219 = vdwg.mxu0
      %v3225 = vunpack.c.l.b16 %v3168
      %v3226 = vunpack.c.l.b16 %v3169
      %v3227 = vunpack.c.l.b16 %v3170
      %v3228 = vunpack.c.l.b16 %v3171
      %v3229 = vunpack.c.l.b16 %v3172
      %v3230 = vpack.c.b16 %v3226, %v3225
      %v3231 = vpack.c.b16 %v3228, %v3227
      %v3232 = vpack.c.b16 %v3229, %v3229
      %v3236 = vsel %vm222, %v3167, 0
      %v3239 = vsel %vm226, %v3232, 0
      %3241 = vmatpush.bf16.msra.mxu0 0
      %3242 = vmatpush.bf16.msra.mxu0 0
      %3243 = vmatpush.bf16.msra.mxu0 0
      %3244 = vmatpush.bf16.msra.mxu0 0
      %3245 = vmatpush.bf16.msra.mxu0 0
      %3246 = vmatpush.bf16.msra.mxu0 %v3239
      %3247 = vmatpush.bf16.msra.mxu0 %v3231
      %3248 = vmatpush.bf16.msra.mxu0 %v3230
      %3249 = vmatmul.bf16.gmra.mxu0 %v3236
      %v3250 = vpop.f32.mrf.mxu0
      %v3251 = vadd.f32 %v3217, %v3250
      %v3252 = vpop.f32.mrf.mxu0
      %3253 = vdwg.mxu0
      %v3254 = vld [vmem:[%s277] sm:$0xf]
      %v3255 = vld [vmem:[%s277 + $0x4] sm:$0xf]
      %v3256 = vld [vmem:[%s277 + $0x8] sm:$0xf]
      %v3257 = vld [vmem:[%s277 + $0xc] sm:$0xf]
      %v3258 = vld [vmem:[%s277 + $0x10] sm:$0xf]
      %v3260 = vrot.slane %v3173, 1
      %v3266 = vunpack.c.l.b16 %v3254
      %v3267 = vunpack.c.l.b16 %v3255
      %v3268 = vunpack.c.l.b16 %v3256
      %v3269 = vunpack.c.l.b16 %v3257
      %v3270 = vunpack.c.l.b16 %v3258
      %v3271 = vpack.c.b16 %v3267, %v3266
      %v3272 = vpack.c.b16 %v3269, %v3268
      %v3273 = vpack.c.b16 %v3270, %v3270
      %v3277 = vsel %vm222, %v3260, 0
      %v3280 = vsel %vm226, %v3273, 0
      %3282 = vmatpush.bf16.msra.mxu0 0
      %3283 = vmatpush.bf16.msra.mxu0 0
      %3284 = vmatpush.bf16.msra.mxu0 0
      %3285 = vmatpush.bf16.msra.mxu0 0
      %3286 = vmatpush.bf16.msra.mxu0 0
      %3287 = vmatpush.bf16.msra.mxu0 %v3280
      %3288 = vmatpush.bf16.msra.mxu0 %v3272
      %3289 = vmatpush.bf16.msra.mxu0 %v3271
      %3290 = vmatmul.bf16.gmra.mxu0 %v3277
      %v3291 = vpop.f32.mrf.mxu0
      %v3292 = vadd.f32 0.0, %v3291
      %v3293 = vpop.f32.mrf.mxu0
      %3294 = vdwg.mxu0
      %v3295 = vadd.f32 %v3251, %v3292
      %v3296 = vld [vmem:[%s3007] sm:$0xf]
      %v3297 = vld [vmem:[%s3007 + $0x4] sm:$0x1]
      %v3298 = vunpack.c.l.bf16 %v3296
      %v3299 = vunpack.c.l.bf16 %v3297
      %v3300 = vpack.c.bf16 %v3298, %v3298
      %v3301 = vld [vmem:[%s326] sm:$0xf]
      %v3302 = vld [vmem:[%s326 + $0x4] sm:$0xf]
      %v3303 = vld [vmem:[%s326 + $0x8] sm:$0xf]
      %v3304 = vld [vmem:[%s326 + $0xc] sm:$0xf]
      %v3305 = vld [vmem:[%s326 + $0x10] sm:$0xf]
      %v3311 = vunpack.c.l.b16 %v3301
      %v3312 = vunpack.c.l.b16 %v3302
      %v3313 = vunpack.c.l.b16 %v3303
      %v3314 = vunpack.c.l.b16 %v3304
      %v3315 = vunpack.c.l.b16 %v3305
      %v3316 = vpack.c.b16 %v3312, %v3311
      %v3317 = vpack.c.b16 %v3314, %v3313
      %v3318 = vpack.c.b16 %v3315, %v3315
      %v3322 = vsel %vm222, %v3300, 0
      %v3325 = vsel %vm226, %v3318, 0
      %3327 = vmatpush.bf16.msra.mxu0 0
      %3328 = vmatpush.bf16.msra.mxu0 0
      %3329 = vmatpush.bf16.msra.mxu0 0
      %3330 = vmatpush.bf16.msra.mxu0 0
      %3331 = vmatpush.bf16.msra.mxu0 0
      %3332 = vmatpush.bf16.msra.mxu0 %v3325
      %3333 = vmatpush.bf16.msra.mxu0 %v3317
      %3334 = vmatpush.bf16.msra.mxu0 %v3316
      %3335 = vmatmul.bf16.gmra.mxu0 %v3322
      %v3336 = vpop.f32.mrf.mxu0
      %v3337 = vadd.f32 0.0, %v3336
      %v3338 = vpop.f32.mrf.mxu0
      %3339 = vdwg.mxu0
      %v3340 = vadd.f32 %v3295, %v3337
      %v3341 = vpack.c.bf16 %v3299, %v3298
      %v3342 = vld [vmem:[%s368] sm:$0xf]
      %v3343 = vld [vmem:[%s368 + $0x4] sm:$0xf]
      %v3344 = vld [vmem:[%s368 + $0x8] sm:$0xf]
      %v3345 = vld [vmem:[%s368 + $0xc] sm:$0xf]
      %v3346 = vld [vmem:[%s368 + $0x10] sm:$0xf]
      %v3348 = vshrl.u32 %v3341, 16
      %v3350 = vshll.u32 %v3341, 16
      %v3352 = vrot.slane %v3350, 1
      %v3353 = vor.u32 %v3348, %v3352
      %v3359 = vunpack.c.l.b16 %v3342
      %v3360 = vunpack.c.l.b16 %v3343
      %v3361 = vunpack.c.l.b16 %v3344
      %v3362 = vunpack.c.l.b16 %v3345
      %v3363 = vunpack.c.l.b16 %v3346
      %v3364 = vpack.c.b16 %v3360, %v3359
      %v3365 = vpack.c.b16 %v3362, %v3361
      %v3366 = vpack.c.b16 %v3363, %v3363
      %v3370 = vsel %vm222, %v3353, 0
      %v3373 = vsel %vm226, %v3366, 0
      %3375 = vmatpush.bf16.msra.mxu0 0
      %3376 = vmatpush.bf16.msra.mxu0 0
      %3377 = vmatpush.bf16.msra.mxu0 0
      %3378 = vmatpush.bf16.msra.mxu0 0
      %3379 = vmatpush.bf16.msra.mxu0 0
      %3380 = vmatpush.bf16.msra.mxu0 %v3373
      %3381 = vmatpush.bf16.msra.mxu0 %v3365
      %3382 = vmatpush.bf16.msra.mxu0 %v3364
      %3383 = vmatmul.bf16.gmra.mxu0 %v3370
      %v3384 = vpop.f32.mrf.mxu0
      %v3385 = vadd.f32 0.0, %v3384
      %v3386 = vpop.f32.mrf.mxu0
      %3387 = vdwg.mxu0
      %v3388 = vadd.f32 %v3340, %v3385
      %v3389 = vld [vmem:[%s416] sm:$0xf]
      %v3390 = vld [vmem:[%s416 + $0x4] sm:$0xf]
      %v3391 = vld [vmem:[%s416 + $0x8] sm:$0xf]
      %v3392 = vld [vmem:[%s416 + $0xc] sm:$0xf]
      %v3393 = vld [vmem:[%s416 + $0x10] sm:$0xf]
      %v3395 = vrot.slane %v3341, 1
      %v3401 = vunpack.c.l.b16 %v3389
      %v3402 = vunpack.c.l.b16 %v3390
      %v3403 = vunpack.c.l.b16 %v3391
      %v3404 = vunpack.c.l.b16 %v3392
      %v3405 = vunpack.c.l.b16 %v3393
      %v3406 = vpack.c.b16 %v3402, %v3401
      %v3407 = vpack.c.b16 %v3404, %v3403
      %v3408 = vpack.c.b16 %v3405, %v3405
      %v3412 = vsel %vm222, %v3395, 0
      %v3415 = vsel %vm226, %v3408, 0
      %3417 = vmatpush.bf16.msra.mxu0 0
      %3418 = vmatpush.bf16.msra.mxu0 0
      %3419 = vmatpush.bf16.msra.mxu0 0
      %3420 = vmatpush.bf16.msra.mxu0 0
      %3421 = vmatpush.bf16.msra.mxu0 0
      %3422 = vmatpush.bf16.msra.mxu0 %v3415
      %3423 = vmatpush.bf16.msra.mxu0 %v3407
      %3424 = vmatpush.bf16.msra.mxu0 %v3406
      %3425 = vmatmul.bf16.gmra.mxu0 %v3412
      %v3426 = vpop.f32.mrf.mxu0
      %v3427 = vadd.f32 0.0, %v3426
      %v3428 = vpop.f32.mrf.mxu0
      %3429 = vdwg.mxu0
      %v3430 = vadd.f32 %v3388, %v3427
      %s3431 = scalar_lea.vmem %s172, 72
      %v3432 = vld [vmem:[%s3431] sm:$0xf]
      %v3433 = vld [vmem:[%s3431 + $0x4] sm:$0x1]
      %v3434 = vunpack.c.l.bf16 %v3432
      %v3435 = vunpack.c.l.bf16 %v3433
      %v3436 = vpack.c.bf16 %v3434, %v3434
      %v3437 = vld [vmem:[%s465] sm:$0xf]
      %v3438 = vld [vmem:[%s465 + $0x4] sm:$0xf]
      %v3439 = vld [vmem:[%s465 + $0x8] sm:$0xf]
      %v3440 = vld [vmem:[%s465 + $0xc] sm:$0xf]
      %v3441 = vld [vmem:[%s465 + $0x10] sm:$0xf]
      %v3447 = vunpack.c.l.b16 %v3437
      %v3448 = vunpack.c.l.b16 %v3438
      %v3449 = vunpack.c.l.b16 %v3439
      %v3450 = vunpack.c.l.b16 %v3440
      %v3451 = vunpack.c.l.b16 %v3441
      %v3452 = vpack.c.b16 %v3448, %v3447
      %v3453 = vpack.c.b16 %v3450, %v3449
      %v3454 = vpack.c.b16 %v3451, %v3451
      %v3458 = vsel %vm222, %v3436, 0
      %v3461 = vsel %vm226, %v3454, 0
      %3463 = vmatpush.bf16.msra.mxu0 0
      %3464 = vmatpush.bf16.msra.mxu0 0
      %3465 = vmatpush.bf16.msra.mxu0 0
      %3466 = vmatpush.bf16.msra.mxu0 0
      %3467 = vmatpush.bf16.msra.mxu0 0
      %3468 = vmatpush.bf16.msra.mxu0 %v3461
      %3469 = vmatpush.bf16.msra.mxu0 %v3453
      %3470 = vmatpush.bf16.msra.mxu0 %v3452
      %3471 = vmatmul.bf16.gmra.mxu0 %v3458
      %v3472 = vpop.f32.mrf.mxu0
      %v3473 = vadd.f32 0.0, %v3472
      %v3474 = vpop.f32.mrf.mxu0
      %3475 = vdwg.mxu0
      %v3476 = vadd.f32 %v3430, %v3473
      %v3477 = vpack.c.bf16 %v3435, %v3434
      %v3478 = vld [vmem:[%s507] sm:$0xf]
      %v3479 = vld [vmem:[%s507 + $0x4] sm:$0xf]
      %v3480 = vld [vmem:[%s507 + $0x8] sm:$0xf]
      %v3481 = vld [vmem:[%s507 + $0xc] sm:$0xf]
      %v3482 = vld [vmem:[%s507 + $0x10] sm:$0xf]
      %v3484 = vshrl.u32 %v3477, 16
      %v3486 = vshll.u32 %v3477, 16
      %v3488 = vrot.slane %v3486, 1
      %v3489 = vor.u32 %v3484, %v3488
      %v3495 = vunpack.c.l.b16 %v3478
      %v3496 = vunpack.c.l.b16 %v3479
      %v3497 = vunpack.c.l.b16 %v3480
      %v3498 = vunpack.c.l.b16 %v3481
      %v3499 = vunpack.c.l.b16 %v3482
      %v3500 = vpack.c.b16 %v3496, %v3495
      %v3501 = vpack.c.b16 %v3498, %v3497
      %v3502 = vpack.c.b16 %v3499, %v3499
      %v3506 = vsel %vm222, %v3489, 0
      %v3509 = vsel %vm226, %v3502, 0
      %3511 = vmatpush.bf16.msra.mxu0 0
      %3512 = vmatpush.bf16.msra.mxu0 0
      %3513 = vmatpush.bf16.msra.mxu0 0
      %3514 = vmatpush.bf16.msra.mxu0 0
      %3515 = vmatpush.bf16.msra.mxu0 0
      %3516 = vmatpush.bf16.msra.mxu0 %v3509
      %3517 = vmatpush.bf16.msra.mxu0 %v3501
      %3518 = vmatpush.bf16.msra.mxu0 %v3500
      %3519 = vmatmul.bf16.gmra.mxu0 %v3506
      %v3520 = vpop.f32.mrf.mxu0
      %v3521 = vadd.f32 0.0, %v3520
      %v3522 = vpop.f32.mrf.mxu0
      %3523 = vdwg.mxu0
      %v3524 = vadd.f32 %v3476, %v3521
      %v3525 = vld [vmem:[%s555] sm:$0xf]
      %v3526 = vld [vmem:[%s555 + $0x4] sm:$0xf]
      %v3527 = vld [vmem:[%s555 + $0x8] sm:$0xf]
      %v3528 = vld [vmem:[%s555 + $0xc] sm:$0xf]
      %v3529 = vld [vmem:[%s555 + $0x10] sm:$0xf]
      %v3531 = vrot.slane %v3477, 1
      %v3537 = vunpack.c.l.b16 %v3525
      %v3538 = vunpack.c.l.b16 %v3526
      %v3539 = vunpack.c.l.b16 %v3527
      %v3540 = vunpack.c.l.b16 %v3528
      %v3541 = vunpack.c.l.b16 %v3529
      %v3542 = vpack.c.b16 %v3538, %v3537
      %v3543 = vpack.c.b16 %v3540, %v3539
      %v3544 = vpack.c.b16 %v3541, %v3541
      %v3548 = vsel %vm222, %v3531, 0
      %v3551 = vsel %vm226, %v3544, 0
      %3553 = vmatpush.bf16.msra.mxu0 0
      %3554 = vmatpush.bf16.msra.mxu0 0
      %3555 = vmatpush.bf16.msra.mxu0 0
      %3556 = vmatpush.bf16.msra.mxu0 0
      %3557 = vmatpush.bf16.msra.mxu0 0
      %3558 = vmatpush.bf16.msra.mxu0 %v3551
      %3559 = vmatpush.bf16.msra.mxu0 %v3543
      %3560 = vmatpush.bf16.msra.mxu0 %v3542
      %3561 = vmatmul.bf16.gmra.mxu0 %v3548
      %v3562 = vpop.f32.mrf.mxu0
      %v3563 = vadd.f32 0.0, %v3562
      %v3564 = vpop.f32.mrf.mxu0
      %3565 = vdwg.mxu0
      %v3566 = vadd.f32 %v3524, %v3563
      %v3567 = vpack.c.bf16 %v3566, %v3566
      %s3568 = scalar_lea.vmem %s177, 28
      %3569 = vst.msk [vmem:[%s3568] sm:$0xf] %vm599, %v3567
      %v3570 = vsel %vm601, %v3566, 0.0
      %v3571 = vrot.slane %v3570, 4
      %v3572 = vadd.f32 %v3570, %v3571
      %v3573 = vrot.slane %v3572, 2
      %v3574 = vadd.f32 %v3572, %v3573
      %v3575 = vrot.slane %v3574, 1
      %v3576 = vadd.f32 %v3574, %v3575
      %v3577 = vadd.f32 %v3153, %v3576
      %v3578 = vmul.f32 %v3566, %v3566
      %v3579 = vsel %vm601, %v3578, 0.0
      %v3580 = vrot.slane %v3579, 4
      %v3581 = vadd.f32 %v3579, %v3580
      %v3582 = vrot.slane %v3581, 2
      %v3583 = vadd.f32 %v3581, %v3582
      %v3584 = vrot.slane %v3583, 1
      %v3585 = vadd.f32 %v3583, %v3584
      %v3586 = vadd.f32 %v3162, %v3585
      %vm3587 = vcmask 516096
      %3588 = vst.msk [vmem:[%s181] sm:$0x1] %vm3587, %v3577
      %3589 = vst.msk [vmem:[%s181 + $0x1] sm:$0x1] %vm3587, %v3586
      %p3590 = scmp.lt.s32.totalorder %s15, 1
      %s3591 = scalar_select %p3590, %s15, 1
      %s3592 = smul.addr %s3591, 8
      %s3593 = smul.addr %s3592, 4
      %s3594 = scalar_lea.vmem %s2, %s3593
      %p3595 = scmp.lt.s32.totalorder %s15, 1
      %s3596 = scalar_select %p3595, %s15, 1
      %s3597 = smul.addr %s3596, 2
      %s3598 = scalar_lea.vmem %s3, %s3597
      // Predicated region
      $region29: #{double_conv_forward.4} parent=27 // pred_check
        %p3599 = pneg %p80
      $region30: #{double_conv_forward.4} parent=27 // pred_check_branch
        %3601 = sbr.rel (%p3599) target = $region32
      $region31: #{double_conv_forward.4} parent=27 // pred_region
        _
      $region32: #{double_conv_forward.4} parent=27 // pred_fallthru
        _
      // Predicated region
      $region33: #{double_conv_forward.4} parent=27 // pred_check
        %p3602 = pneg %p106
      $region34: #{double_conv_forward.4} parent=27 // pred_check_branch
        %3604 = sbr.rel (%p3602) target = $region36
      $region35: #{double_conv_forward.4} parent=27 // pred_region
        _
      $region36: #{double_conv_forward.4} parent=27 // pred_fallthru
        _
    $region28: #{double_conv_forward.4} parent=5 // pred_fallthru
      _
    %p3605 = scmp.le.s32.totalorder 2, %s10
    // Predicated region
    $region37: #{double_conv_forward.4} parent=5 // pred_check
      %p3606 = pneg %p3605
    $region38: #{double_conv_forward.4} parent=5 // pred_check_branch
      %3608 = sbr.rel (%p3606) target = $region40
    $region39: #{double_conv_forward.4} parent=5 // pred_region
      %s3609 = ssub.s32 %s10, 2
      // Predicated region
      $region41: #{double_conv_forward.4} parent=39 // pred_check
        %p3610 = pneg %p86
      $region42: #{double_conv_forward.4} parent=39 // pred_check_branch
        %3612 = sbr.rel (%p3610) target = $region44
      $region43: #{double_conv_forward.4} parent=39 // pred_region
        %p3613 = scmp.lt.s32.totalorder %s16, 1
        %s3614 = scalar_select %p3613, %s16, 1
        %s3615 = smul.addr %s3614, 8
        %s3616 = smul.addr %s3615, 4
        %s3617 = scalar_lea.vmem %s2, %s3616
      $region44: #{double_conv_forward.4} parent=39 // pred_fallthru
        _
      // Predicated region
      $region45: #{double_conv_forward.4} parent=39 // pred_check
        %p3618 = pneg %p112
      $region46: #{double_conv_forward.4} parent=39 // pred_check_branch
        %3620 = sbr.rel (%p3618) target = $region48
      $region47: #{double_conv_forward.4} parent=39 // pred_region
        %p3621 = scmp.lt.s32.totalorder %s16, 1
        %s3622 = scalar_select %p3621, %s16, 1
        %s3623 = smul.addr %s3622, 2
        %s3624 = scalar_lea.vmem %s3, %s3623
      $region48: #{double_conv_forward.4} parent=39 // pred_fallthru
        _
    $region40: #{double_conv_forward.4} parent=5 // pred_fallthru
      _
  $region6: #{double_conv_forward.4} parent=0 // loop_footer
    %s14 = sadd.s32 1, %s10
  $region7: #{double_conv_forward.4} parent=0 // loop_footer_branch
    %9 = sbr.rel target = $region3
  $region8: #{double_conv_forward.4} parent=0 // loop_exit
    _

// kernel: double_conv_forward.7
$region0: #{double_conv_forward.7}
  #allocation0 [shape = 'u32[]', space=smem, size = 0x4, offset = 0x4, fixed_abs, tag = 'smem constant byte address 0x4 - core index']
  #allocation1 [shape = 'u32[72,128]{1,0:T(1,128)}', space=vmem, size = 0x9000, scoped, tag = 'internal scratch']
  %s0 = inlined_call_operand.vmem [shape: bf16[2,8,8,64], index: 0, kind: input, shape index: {}]
  %s1 = inlined_call_operand.vmem [shape: f32[1,64], index: 1, kind: input, shape index: {}]
  %s2 = inlined_call_operand.vmem [shape: f32[1,64], index: 2, kind: input, shape index: {}]
  %s3 = inlined_call_operand.vmem [shape: f32[2,8,8,64], index: 3, kind: output, shape index: {}]
  %s4 = sld [smem:[#allocation0]]
  $region45: #{double_conv_forward.7} parent=0
    _
  %s6 = ssub.s32 1, %s4
  %s7 = scalar_select 0, %s6, %s4
  loop: start=0, step=1, limit=4
  $region2: #{double_conv_forward.7} parent=0 // loop_pre_header
    _
  $region3: #{double_conv_forward.7} parent=0 // loop_header
    %s9 = sphi 0, %s13
    %p10 = scmp.ge.s32.totalorder %s9, 4
    %s19 = sphi 0, %s21
    %s22 = sphi 0, %s19
    %s23 = sphi 0, %s22
    %s39 = sphi 0, %s23
    %s43 = sphi 0, %s43
    %s45 = sphi 0, %s43
    %s46 = sphi 0, %s45
    %s60 = sphi 0, %s46
    %s64 = sphi 0, %s64
    %s66 = sphi 0, %s64
    %s67 = sphi 0, %s66
    %s81 = sphi 0, %s67
    %s87 = sphi 0, %s89
    %s90 = sphi 0, %s87
    %s91 = sphi 0, %s90
    %s107 = sphi 0, %s91
  $region4: #{double_conv_forward.7} parent=0 // loop_header_branch
    %12 = sbr.rel (%p10) target = $region8
  $region5: #{double_conv_forward.7} parent=0 // loop_body
    %s14 = ssub.s32 %s9, 1
    %s15 = ssub.s32 %s9, 2
    %s16 = sadd.s32 %s9, 1
    %s17 = ssub.s32 %s9, %s16
    %p18 = scmp.eq.s32.totalorder %s17, 0
    %s20 = sadd.s32 %s19, 1
    %s21 = scalar_select %p18, %s19, %s20
    %p24 = pneg %p18
    %p25 = scmp.eq.s32.totalorder %s9, 1
    %p26 = por %p24, %p25
    %p27 = scmp.ne.s32.totalorder %s19, %s22
    %p28 = scmp.eq.s32.totalorder %s9, 0
    %p29 = por %p27, %p28
    %p30 = scmp.ne.s32.totalorder %s19, %s22
    %p31 = scmp.eq.s32.totalorder %s14, 1
    %p32 = por %p30, %p31
    %p33 = scmp.ne.s32.totalorder %s22, %s23
    %p34 = scmp.eq.s32.totalorder %s14, 0
    %p35 = por %p33, %p34
    %p36 = scmp.ne.s32.totalorder %s22, %s23
    %p37 = scmp.eq.s32.totalorder %s15, 1
    %p38 = por %p36, %p37
    %p40 = scmp.ne.s32.totalorder %s23, %s39
    %p41 = scmp.eq.s32.totalorder %s15, 0
    %p42 = por %p40, %p41
    %s44 = sadd.s32 %s43, 1
    %p47 = scmp.eq.s32.totalorder %s9, 1
    %p48 = scmp.ne.s32.totalorder %s43, %s45
    %p49 = scmp.eq.s32.totalorder %s9, 0
    %p50 = por %p48, %p49
    %p51 = scmp.ne.s32.totalorder %s43, %s45
    %p52 = scmp.eq.s32.totalorder %s14, 1
    %p53 = por %p51, %p52
    %p54 = scmp.ne.s32.totalorder %s45, %s46
    %p55 = scmp.eq.s32.totalorder %s14, 0
    %p56 = por %p54, %p55
    %p57 = scmp.ne.s32.totalorder %s45, %s46
    %p58 = scmp.eq.s32.totalorder %s15, 1
    %p59 = por %p57, %p58
    %p61 = scmp.ne.s32.totalorder %s46, %s60
    %p62 = scmp.eq.s32.totalorder %s15, 0
    %p63 = por %p61, %p62
    %s65 = sadd.s32 %s64, 1
    %p68 = scmp.eq.s32.totalorder %s9, 1
    %p69 = scmp.ne.s32.totalorder %s64, %s66
    %p70 = scmp.eq.s32.totalorder %s9, 0
    %p71 = por %p69, %p70
    %p72 = scmp.ne.s32.totalorder %s64, %s66
    %p73 = scmp.eq.s32.totalorder %s14, 1
    %p74 = por %p72, %p73
    %p75 = scmp.ne.s32.totalorder %s66, %s67
    %p76 = scmp.eq.s32.totalorder %s14, 0
    %p77 = por %p75, %p76
    %p78 = scmp.ne.s32.totalorder %s66, %s67
    %p79 = scmp.eq.s32.totalorder %s15, 1
    %p80 = por %p78, %p79
    %p82 = scmp.ne.s32.totalorder %s67, %s81
    %p83 = scmp.eq.s32.totalorder %s15, 0
    %p84 = por %p82, %p83
    %s85 = ssub.s32 %s9, %s16
    %p86 = scmp.eq.s32.totalorder %s85, 0
    %s88 = sadd.s32 %s87, 1
    %s89 = scalar_select %p86, %s87, %s88
    %p92 = pneg %p86
    %p93 = scmp.eq.s32.totalorder %s9, 1
    %p94 = por %p92, %p93
    %p95 = scmp.ne.s32.totalorder %s87, %s90
    %p96 = scmp.eq.s32.totalorder %s9, 0
    %p97 = por %p95, %p96
    %p98 = scmp.ne.s32.totalorder %s87, %s90
    %p99 = scmp.eq.s32.totalorder %s14, 1
    %p100 = por %p98, %p99
    %p101 = scmp.ne.s32.totalorder %s90, %s91
    %p102 = scmp.eq.s32.totalorder %s14, 0
    %p103 = por %p101, %p102
    %p104 = scmp.ne.s32.totalorder %s90, %s91
    %p105 = scmp.eq.s32.totalorder %s15, 1
    %p106 = por %p104, %p105
    %p108 = scmp.ne.s32.totalorder %s91, %s107
    %p109 = scmp.eq.s32.totalorder %s15, 0
    %p110 = por %p108, %p109
    %p111 = scmp.le.s32.totalorder 1, %s9
    %p112 = scmp.lt.s32.totalorder %s9, 3
    %p113 = pnand %p111, %p112
    %p114 = pneg %p113
    // Predicated region
    $region9: #{double_conv_forward.7} parent=5 // pred_check
      _
    $region10: #{double_conv_forward.7} parent=5 // pred_check_branch
      %116 = sbr.rel (%p113) target = $region12
    $region11: #{double_conv_forward.7} parent=5 // pred_region
      %s117 = ssub.s32 %s9, 1
      // Predicated region
      $region13: #{double_conv_forward.7} parent=11 // pred_check
        %p118 = pneg %p56
      $region14: #{double_conv_forward.7} parent=11 // pred_check_branch
        %120 = sbr.rel (%p118) target = $region16
      $region15: #{double_conv_forward.7} parent=11 // pred_region
        _
      $region16: #{double_conv_forward.7} parent=11 // pred_fallthru
        _
      // Predicated region
      $region17: #{double_conv_forward.7} parent=11 // pred_check
        %p121 = pneg %p77
      $region18: #{double_conv_forward.7} parent=11 // pred_check_branch
        %123 = sbr.rel (%p121) target = $region20
      $region19: #{double_conv_forward.7} parent=11 // pred_region
        _
      $region20: #{double_conv_forward.7} parent=11 // pred_fallthru
        _
    $region12: #{double_conv_forward.7} parent=5 // pred_fallthru
      _
    %p124 = scmp.lt.s32.totalorder %s9, 2
    // Predicated region
    $region21: #{double_conv_forward.7} parent=5 // pred_check
      %p125 = pneg %p124
    $region22: #{double_conv_forward.7} parent=5 // pred_check_branch
      %127 = sbr.rel (%p125) target = $region24
    $region23: #{double_conv_forward.7} parent=5 // pred_region
      // Predicated region
      $region25: #{double_conv_forward.7} parent=23 // pred_check
        %p128 = pneg %p29
      $region26: #{double_conv_forward.7} parent=23 // pred_check_branch
        %130 = sbr.rel (%p128) target = $region28
      $region27: #{double_conv_forward.7} parent=23 // pred_region
        %p131 = scmp.lt.s32.totalorder %s9, 1
        %s132 = scalar_select %p131, %s9, 1
        %s133 = smul.addr %s132, 8
        %s134 = smul.addr %s133, 4
        %s135 = scalar_lea.vmem %s0, %s134
      $region28: #{double_conv_forward.7} parent=23 // pred_fallthru
        _
    $region24: #{double_conv_forward.7} parent=5 // pred_fallthru
      _
    %p136 = scmp.le.s32.totalorder 1, %s9
    %p137 = scmp.lt.s32.totalorder %s9, 3
    %p138 = pnand %p136, %p137
    %p139 = pneg %p138
    // Predicated region
    $region29: #{double_conv_forward.7} parent=5 // pred_check
      _
    $region30: #{double_conv_forward.7} parent=5 // pred_check_branch
      %141 = sbr.rel (%p138) target = $region32
    $region31: #{double_conv_forward.7} parent=5 // pred_region
      %s142 = ssub.s32 %s9, 1
      %p143 = scmp.lt.s32.totalorder %s14, 1
      %s144 = scalar_select %p143, %s14, 1
      %s145 = smul.addr %s144, 8
      %s146 = smul.addr %s145, 4
      %s147 = scalar_lea.vmem %s0, %s146
      %p148 = pneg %p35
      %p149 = pneg %p32
      %p150 = pneg %p56
      %p151 = pneg %p53
      %p152 = pneg %p77
      %p153 = pneg %p74
      %p154 = pneg %p103
      %p155 = pneg %p100
      %p156 = scmp.lt.s32.totalorder %s14, 1
      %s157 = scalar_select %p156, %s14, 1
      %s158 = smul.addr %s157, 8
      %s159 = smul.addr %s158, 8
      %s160 = scalar_lea.vmem %s3, %s159
      %p161 = scmp.lt.s32.totalorder %s14, 1
      %s162 = scalar_select %p161, %s14, 1
      %s163 = smul.addr %s162, 8
      %s164 = smul.addr %s163, 4
      %s165 = scalar_lea.vmem %s0, %s164
      %p166 = scmp.lt.s32.totalorder %s14, 1
      %s167 = scalar_select %p166, %s14, 1
      %s168 = smul.addr %s167, 8
      %s169 = smul.addr %s168, 8
      %s170 = scalar_lea.vmem %s3, %s169
      %v171 = vld [vmem:[%s165] sm:$0xf]
      %v172 = vld [vmem:[%s165 + $0x4] sm:$0xf]
      %v173 = vld [vmem:[%s165 + $0x8] sm:$0xf]
      %v174 = vld [vmem:[%s165 + $0xc] sm:$0xf]
      %v175 = vld [vmem:[%s165 + $0x10] sm:$0xf]
      %v176 = vld [vmem:[%s165 + $0x14] sm:$0xf]
      %v177 = vld [vmem:[%s165 + $0x18] sm:$0xf]
      %v178 = vld [vmem:[%s165 + $0x1c] sm:$0xf]
      %v179 = vunpack.c.l.bf16 %v171
      %v180 = vunpack.c.l.bf16 %v172
      %v181 = vunpack.c.l.bf16 %v173
      %v182 = vunpack.c.l.bf16 %v174
      %v183 = vunpack.c.l.bf16 %v175
      %v184 = vunpack.c.l.bf16 %v176
      %v185 = vunpack.c.l.bf16 %v177
      %v186 = vunpack.c.l.bf16 %v178
      %v187 = vld [vmem:[%s1] sm:$0x1]
      %v189 = vperm.slane %v187, 0
      %v191 = vmul.f32 %v179, %v189
      %v192 = vmul.f32 %v180, %v189
      %v193 = vmul.f32 %v181, %v189
      %v194 = vmul.f32 %v182, %v189
      %v195 = vmul.f32 %v183, %v189
      %v196 = vmul.f32 %v184, %v189
      %v197 = vmul.f32 %v185, %v189
      %v198 = vmul.f32 %v186, %v189
      %v199 = vld [vmem:[%s2] sm:$0x1]
      %v201 = vperm.slane %v199, 0
      %v203 = vadd.f32 %v191, %v201
      %v204 = vadd.f32 %v192, %v201
      %v205 = vadd.f32 %v193, %v201
      %v206 = vadd.f32 %v194, %v201
      %v207 = vadd.f32 %v195, %v201
      %v208 = vadd.f32 %v196, %v201
      %v209 = vadd.f32 %v197, %v201
      %v210 = vadd.f32 %v198, %v201
      %v211 = vmax.f32 %v203, 0.0
      %v212 = vmax.f32 %v204, 0.0
      %v213 = vmax.f32 %v205, 0.0
      %v214 = vmax.f32 %v206, 0.0
      %v215 = vmax.f32 %v207, 0.0
      %v216 = vmax.f32 %v208, 0.0
      %v217 = vmax.f32 %v209, 0.0
      %v218 = vmax.f32 %v210, 0.0
      %vm219 = vcmask 523264
      %220 = vst.msk [vmem:[%s170] sm:$0xff] %vm219, %v211
      %221 = vst.msk [vmem:[%s170 + $0x8] sm:$0xff] %vm219, %v212
      %222 = vst.msk [vmem:[%s170 + $0x10] sm:$0xff] %vm219, %v213
      %223 = vst.msk [vmem:[%s170 + $0x18] sm:$0xff] %vm219, %v214
      %224 = vst.msk [vmem:[%s170 + $0x20] sm:$0xff] %vm219, %v215
      %225 = vst.msk [vmem:[%s170 + $0x28] sm:$0xff] %vm219, %v216
      %226 = vst.msk [vmem:[%s170 + $0x30] sm:$0xff] %vm219, %v217
      %227 = vst.msk [vmem:[%s170 + $0x38] sm:$0xff] %vm219, %v218
      %p228 = scmp.lt.s32.totalorder %s14, 1
      %s229 = scalar_select %p228, %s14, 1
      %s230 = smul.addr %s229, 8
      %s231 = smul.addr %s230, 8
      %s232 = scalar_lea.vmem %s3, %s231
      // Predicated region
      $region33: #{double_conv_forward.7} parent=31 // pred_check
        %p233 = pneg %p100
      $region34: #{double_conv_forward.7} parent=31 // pred_check_branch
        %235 = sbr.rel (%p233) target = $region36
      $region35: #{double_conv_forward.7} parent=31 // pred_region
        _
      $region36: #{double_conv_forward.7} parent=31 // pred_fallthru
        _
    $region32: #{double_conv_forward.7} parent=5 // pred_fallthru
      _
    %p236 = scmp.le.s32.totalorder 2, %s9
    // Predicated region
    $region37: #{double_conv_forward.7} parent=5 // pred_check
      %p237 = pneg %p236
    $region38: #{double_conv_forward.7} parent=5 // pred_check_branch
      %239 = sbr.rel (%p237) target = $region40
    $region39: #{double_conv_forward.7} parent=5 // pred_region
      %s240 = ssub.s32 %s9, 2
      // Predicated region
      $region41: #{double_conv_forward.7} parent=39 // pred_check
        %p241 = pneg %p106
      $region42: #{double_conv_forward.7} parent=39 // pred_check_branch
        %243 = sbr.rel (%p241) target = $region44
      $region43: #{double_conv_forward.7} parent=39 // pred_region
        %p244 = scmp.lt.s32.totalorder %s15, 1
        %s245 = scalar_select %p244, %s15, 1
        %s246 = smul.addr %s245, 8
        %s247 = smul.addr %s246, 8
        %s248 = scalar_lea.vmem %s3, %s247
      $region44: #{double_conv_forward.7} parent=39 // pred_fallthru
        _
    $region40: #{double_conv_forward.7} parent=5 // pred_fallthru
      _
  $region6: #{double_conv_forward.7} parent=0 // loop_footer
    %s13 = sadd.s32 1, %s9
  $region7: #{double_conv_forward.7} parent=0 // loop_footer_branch
    %8 = sbr.rel target = $region3
  $region8: #{double_conv_forward.7} parent=0 // loop_exit
    _

// kernel: double_conv_forward.6
$region0: #{double_conv_forward.6}
  #allocation0 [shape = 'u32[]', space=smem, size = 0x4, offset = 0x4, fixed_abs, tag = 'smem constant byte address 0x4 - core index']
  #allocation1 [shape = 'u32[72,128]{1,0:T(1,128)}', space=vmem, size = 0x9000, scoped, tag = 'internal scratch']
  %s0 = inlined_call_operand.vmem [shape: bf16[2,10,10,80], index: 0, kind: input, shape index: {}]
  %s1 = inlined_call_operand.vmem [shape: bf16[9,80,64], index: 1, kind: input, shape index: {}]
  %s2 = inlined_call_operand.vmem [shape: bf16[2,8,8,64], index: 2, kind: output, shape index: {0}]
  %s3 = inlined_call_operand.vmem [shape: f32[2,2,64], index: 3, kind: output, shape index: {1}]
  %4 = xla_tuple %s2, %s3
  %s5 = sld [smem:[#allocation0]]
  $region49: #{double_conv_forward.6} parent=0
    _
  %s7 = ssub.s32 1, %s5
  %s8 = scalar_select 0, %s7, %s5
  loop: start=0, step=1, limit=4
  $region2: #{double_conv_forward.6} parent=0 // loop_pre_header
    _
  $region3: #{double_conv_forward.6} parent=0 // loop_header
    %s10 = sphi 0, %s14
    %p11 = scmp.ge.s32.totalorder %s10, 4
    %s20 = sphi 0, %s22
    %s23 = sphi 0, %s20
    %s24 = sphi 0, %s23
    %s40 = sphi 0, %s24
    %s44 = sphi 0, %s44
    %s46 = sphi 0, %s44
    %s47 = sphi 0, %s46
    %s61 = sphi 0, %s47
    %s67 = sphi 0, %s69
    %s70 = sphi 0, %s67
    %s71 = sphi 0, %s70
    %s87 = sphi 0, %s71
    %s93 = sphi 0, %s95
    %s96 = sphi 0, %s93
    %s97 = sphi 0, %s96
    %s113 = sphi 0, %s97
  $region4: #{double_conv_forward.6} parent=0 // loop_header_branch
    %13 = sbr.rel (%p11) target = $region8
  $region5: #{double_conv_forward.6} parent=0 // loop_body
    %s15 = ssub.s32 %s10, 1
    %s16 = ssub.s32 %s10, 2
    %s17 = sadd.s32 %s10, 1
    %s18 = ssub.s32 %s10, %s17
    %p19 = scmp.eq.s32.totalorder %s18, 0
    %s21 = sadd.s32 %s20, 1
    %s22 = scalar_select %p19, %s20, %s21
    %p25 = pneg %p19
    %p26 = scmp.eq.s32.totalorder %s10, 1
    %p27 = por %p25, %p26
    %p28 = scmp.ne.s32.totalorder %s20, %s23
    %p29 = scmp.eq.s32.totalorder %s10, 0
    %p30 = por %p28, %p29
    %p31 = scmp.ne.s32.totalorder %s20, %s23
    %p32 = scmp.eq.s32.totalorder %s15, 1
    %p33 = por %p31, %p32
    %p34 = scmp.ne.s32.totalorder %s23, %s24
    %p35 = scmp.eq.s32.totalorder %s15, 0
    %p36 = por %p34, %p35
    %p37 = scmp.ne.s32.totalorder %s23, %s24
    %p38 = scmp.eq.s32.totalorder %s16, 1
    %p39 = por %p37, %p38
    %p41 = scmp.ne.s32.totalorder %s24, %s40
    %p42 = scmp.eq.s32.totalorder %s16, 0
    %p43 = por %p41, %p42
    %s45 = sadd.s32 %s44, 1
    %p48 = scmp.eq.s32.totalorder %s10, 1
    %p49 = scmp.ne.s32.totalorder %s44, %s46
    %p50 = scmp.eq.s32.totalorder %s10, 0
    %p51 = por %p49, %p50
    %p52 = scmp.ne.s32.totalorder %s44, %s46
    %p53 = scmp.eq.s32.totalorder %s15, 1
    %p54 = por %p52, %p53
    %p55 = scmp.ne.s32.totalorder %s46, %s47
    %p56 = scmp.eq.s32.totalorder %s15, 0
    %p57 = por %p55, %p56
    %p58 = scmp.ne.s32.totalorder %s46, %s47
    %p59 = scmp.eq.s32.totalorder %s16, 1
    %p60 = por %p58, %p59
    %p62 = scmp.ne.s32.totalorder %s47, %s61
    %p63 = scmp.eq.s32.totalorder %s16, 0
    %p64 = por %p62, %p63
    %s65 = ssub.s32 %s10, %s17
    %p66 = scmp.eq.s32.totalorder %s65, 0
    %s68 = sadd.s32 %s67, 1
    %s69 = scalar_select %p66, %s67, %s68
    %p72 = pneg %p66
    %p73 = scmp.eq.s32.totalorder %s10, 1
    %p74 = por %p72, %p73
    %p75 = scmp.ne.s32.totalorder %s67, %s70
    %p76 = scmp.eq.s32.totalorder %s10, 0
    %p77 = por %p75, %p76
    %p78 = scmp.ne.s32.totalorder %s67, %s70
    %p79 = scmp.eq.s32.totalorder %s15, 1
    %p80 = por %p78, %p79
    %p81 = scmp.ne.s32.totalorder %s70, %s71
    %p82 = scmp.eq.s32.totalorder %s15, 0
    %p83 = por %p81, %p82
    %p84 = scmp.ne.s32.totalorder %s70, %s71
    %p85 = scmp.eq.s32.totalorder %s16, 1
    %p86 = por %p84, %p85
    %p88 = scmp.ne.s32.totalorder %s71, %s87
    %p89 = scmp.eq.s32.totalorder %s16, 0
    %p90 = por %p88, %p89
    %s91 = ssub.s32 %s10, %s17
    %p92 = scmp.eq.s32.totalorder %s91, 0
    %s94 = sadd.s32 %s93, 1
    %s95 = scalar_select %p92, %s93, %s94
    %p98 = pneg %p92
    %p99 = scmp.eq.s32.totalorder %s10, 1
    %p100 = por %p98, %p99
    %p101 = scmp.ne.s32.totalorder %s93, %s96
    %p102 = scmp.eq.s32.totalorder %s10, 0
    %p103 = por %p101, %p102
    %p104 = scmp.ne.s32.totalorder %s93, %s96
    %p105 = scmp.eq.s32.totalorder %s15, 1
    %p106 = por %p104, %p105
    %p107 = scmp.ne.s32.totalorder %s96, %s97
    %p108 = scmp.eq.s32.totalorder %s15, 0
    %p109 = por %p107, %p108
    %p110 = scmp.ne.s32.totalorder %s96, %s97
    %p111 = scmp.eq.s32.totalorder %s16, 1
    %p112 = por %p110, %p111
    %p114 = scmp.ne.s32.totalorder %s97, %s113
    %p115 = scmp.eq.s32.totalorder %s16, 0
    %p116 = por %p114, %p115
    %p117 = scmp.le.s32.totalorder 1, %s10
    %p118 = scmp.lt.s32.totalorder %s10, 3
    %p119 = pnand %p117, %p118
    %p120 = pneg %p119
    // Predicated region
    $region9: #{double_conv_forward.6} parent=5 // pred_check
      _
    $region10: #{double_conv_forward.6} parent=5 // pred_check_branch
      %122 = sbr.rel (%p119) target = $region12
    $region11: #{double_conv_forward.6} parent=5 // pred_region
      %s123 = ssub.s32 %s10, 1
      // Predicated region
      $region13: #{double_conv_forward.6} parent=11 // pred_check
        %p124 = pneg %p57
      $region14: #{double_conv_forward.6} parent=11 // pred_check_branch
        %126 = sbr.rel (%p124) target = $region16
      $region15: #{double_conv_forward.6} parent=11 // pred_region
        _
      $region16: #{double_conv_forward.6} parent=11 // pred_fallthru
        _
    $region12: #{double_conv_forward.6} parent=5 // pred_fallthru
      _
    %p127 = scmp.lt.s32.totalorder %s10, 2
    // Predicated region
    $region17: #{double_conv_forward.6} parent=5 // pred_check
      %p128 = pneg %p127
    $region18: #{double_conv_forward.6} parent=5 // pred_check_branch
      %130 = sbr.rel (%p128) target = $region20
    $region19: #{double_conv_forward.6} parent=5 // pred_region
      // Predicated region
      $region21: #{double_conv_forward.6} parent=19 // pred_check
        %p131 = pneg %p30
      $region22: #{double_conv_forward.6} parent=19 // pred_check_branch
        %133 = sbr.rel (%p131) target = $region24
      $region23: #{double_conv_forward.6} parent=19 // pred_region
        %p134 = scmp.lt.s32.totalorder %s10, 1
        %s135 = scalar_select %p134, %s10, 1
        %s136 = smul.addr %s135, 20
        %s137 = smul.addr %s136, 4
        %s138 = scalar_lea.vmem %s0, %s137
      $region24: #{double_conv_forward.6} parent=19 // pred_fallthru
        _
    $region20: #{double_conv_forward.6} parent=5 // pred_fallthru
      _
    %p139 = scmp.le.s32.totalorder 1, %s10
    %p140 = scmp.lt.s32.totalorder %s10, 3
    %p141 = pnand %p139, %p140
    %p142 = pneg %p141
    // Predicated region
    $region25: #{double_conv_forward.6} parent=5 // pred_check
      _
    $region26: #{double_conv_forward.6} parent=5 // pred_check_branch
      %144 = sbr.rel (%p141) target = $region28
    $region27: #{double_conv_forward.6} parent=5 // pred_region
      %s145 = ssub.s32 %s10, 1
      %p146 = scmp.lt.s32.totalorder %s15, 1
      %s147 = scalar_select %p146, %s15, 1
      %s148 = smul.addr %s147, 20
      %s149 = smul.addr %s148, 4
      %s150 = scalar_lea.vmem %s0, %s149
      %p151 = pneg %p36
      %p152 = pneg %p33
      %p153 = pneg %p57
      %p154 = pneg %p54
      %p155 = pneg %p83
      %p156 = pneg %p80
      %p157 = scmp.lt.s32.totalorder %s15, 1
      %s158 = scalar_select %p157, %s15, 1
      %s159 = smul.addr %s158, 8
      %s160 = smul.addr %s159, 4
      %s161 = scalar_lea.vmem %s2, %s160
      %p162 = pneg %p109
      %p163 = pneg %p106
      %p164 = scmp.lt.s32.totalorder %s15, 1
      %s165 = scalar_select %p164, %s15, 1
      %s166 = smul.addr %s165, 2
      %s167 = scalar_lea.vmem %s3, %s166
      %p168 = scmp.lt.s32.totalorder %s15, 1
      %s169 = scalar_select %p168, %s15, 1
      %s170 = smul.addr %s169, 20
      %s171 = smul.addr %s170, 4
      %s172 = scalar_lea.vmem %s0, %s171
      %p173 = scmp.lt.s32.totalorder %s15, 1
      %s174 = scalar_select %p173, %s15, 1
      %s175 = smul.addr %s174, 8
      %s176 = smul.addr %s175, 4
      %s177 = scalar_lea.vmem %s2, %s176
      %p178 = scmp.lt.s32.totalorder %s15, 1
      %s179 = scalar_select %p178, %s15, 1
      %s180 = smul.addr %s179, 2
      %s181 = scalar_lea.vmem %s3, %s180
      %v183 = vld [vmem:[%s172] sm:$0xf]
      %v184 = vld [vmem:[%s172 + $0x4] sm:$0x1]
      %v185 = vunpack.c.l.bf16 %v183
      %v186 = vunpack.c.l.bf16 %v184
      %v187 = vpack.c.bf16 %v185, %v185
      %v188 = vld [vmem:[%s1] sm:$0xf]
      %v189 = vld [vmem:[%s1 + $0x4] sm:$0xf]
      %v190 = vld [vmem:[%s1 + $0x8] sm:$0xf]
      %v191 = vld [vmem:[%s1 + $0xc] sm:$0xf]
      %v192 = vld [vmem:[%s1 + $0x10] sm:$0xf]
      %v193 = vld [vmem:[%s1 + $0x14] sm:$0xf]
      %v194 = vld [vmem:[%s1 + $0x18] sm:$0xf]
      %v195 = vld [vmem:[%s1 + $0x1c] sm:$0xf]
      %v196 = vld [vmem:[%s1 + $0x20] sm:$0xf]
      %v197 = vld [vmem:[%s1 + $0x24] sm:$0xf]
      %v198 = vpack.c.bf16 %v186, %v185
      %s199 = scalar_lea.vmem %s1, 40
      %v200 = vld [vmem:[%s199] sm:$0xf]
      %v201 = vld [vmem:[%s199 + $0x4] sm:$0xf]
      %v202 = vld [vmem:[%s199 + $0x8] sm:$0xf]
      %v203 = vld [vmem:[%s199 + $0xc] sm:$0xf]
      %v204 = vld [vmem:[%s199 + $0x10] sm:$0xf]
      %v205 = vld [vmem:[%s199 + $0x14] sm:$0xf]
      %v206 = vld [vmem:[%s199 + $0x18] sm:$0xf]
      %v207 = vld [vmem:[%s199 + $0x1c] sm:$0xf]
      %v208 = vld [vmem:[%s199 + $0x20] sm:$0xf]
      %v209 = vld [vmem:[%s199 + $0x24] sm:$0xf]
      %v211 = vshrl.u32 %v198, 16
      %v213 = vshll.u32 %v198, 16
      %v215 = vrot.slane %v213, 1
      %v216 = vor.u32 %v211, %v215
      %v227 = vunpack.c.l.b16 %v200
      %v228 = vunpack.c.l.b16 %v201
      %v229 = vunpack.c.l.b16 %v202
      %v230 = vunpack.c.l.b16 %v203
      %v231 = vunpack.c.l.b16 %v204
      %v232 = vunpack.c.l.b16 %v205
      %v233 = vunpack.c.l.b16 %v206
      %v234 = vunpack.c.l.b16 %v207
      %v235 = vunpack.c.l.b16 %v208
      %v236 = vunpack.c.l.b16 %v209
      %v237 = vpack.c.b16 %v228, %v227
      %v238 = vpack.c.b16 %v230, %v229
      %v239 = vpack.c.b16 %v232, %v231
      %v240 = vpack.c.b16 %v234, %v233
      %v241 = vpack.c.b16 %v236, %v235
      %vm247 = vcmask 654336
      %v249 = vsel %vm247, %v216, 0
      %251 = vmatpush.bf16.msra.mxu0 0
      %252 = vmatpush.bf16.msra.mxu0 0
      %253 = vmatpush.bf16.msra.mxu0 0
      %254 = vmatpush.bf16.msra.mxu0 %v241
      %255 = vmatpush.bf16.msra.mxu0 %v240
      %256 = vmatpush.bf16.msra.mxu0 %v239
      %257 = vmatpush.bf16.msra.mxu0 %v238
      %258 = vmatpush.bf16.msra.mxu0 %v237
      %259 = vmatmul.bf16.gmra.mxu0 %v249
      %v260 = vpop.f32.mrf.mxu0
      %v261 = vadd.f32 0.0, %v260
      %v262 = vpop.f32.mrf.mxu0
      %263 = vdwg.mxu0
      %v274 = vunpack.c.l.b16 %v188
      %v275 = vunpack.c.l.b16 %v189
      %v276 = vunpack.c.l.b16 %v190
      %v277 = vunpack.c.l.b16 %v191
      %v278 = vunpack.c.l.b16 %v192
      %v279 = vunpack.c.l.b16 %v193
      %v280 = vunpack.c.l.b16 %v194
      %v281 = vunpack.c.l.b16 %v195
      %v282 = vunpack.c.l.b16 %v196
      %v283 = vunpack.c.l.b16 %v197
      %v284 = vpack.c.b16 %v275, %v274
      %v285 = vpack.c.b16 %v277, %v276
      %v286 = vpack.c.b16 %v279, %v278
      %v287 = vpack.c.b16 %v281, %v280
      %v288 = vpack.c.b16 %v283, %v282
      %v295 = vsel %vm247, %v187, 0
      %297 = vmatpush.bf16.msra.mxu0 0
      %298 = vmatpush.bf16.msra.mxu0 0
      %299 = vmatpush.bf16.msra.mxu0 0
      %300 = vmatpush.bf16.msra.mxu0 %v288
      %301 = vmatpush.bf16.msra.mxu0 %v287
      %302 = vmatpush.bf16.msra.mxu0 %v286
      %303 = vmatpush.bf16.msra.mxu0 %v285
      %304 = vmatpush.bf16.msra.mxu0 %v284
      %305 = vmatmul.bf16.gmra.mxu0 %v295
      %v306 = vpop.f32.mrf.mxu0
      %v307 = vadd.f32 %v261, %v306
      %v308 = vpop.f32.mrf.mxu0
      %309 = vdwg.mxu0
      %s310 = scalar_lea.vmem %s1, 80
      %v311 = vld [vmem:[%s310] sm:$0xf]
      %v312 = vld [vmem:[%s310 + $0x4] sm:$0xf]
      %v313 = vld [vmem:[%s310 + $0x8] sm:$0xf]
      %v314 = vld [vmem:[%s310 + $0xc] sm:$0xf]
      %v315 = vld [vmem:[%s310 + $0x10] sm:$0xf]
      %v316 = vld [vmem:[%s310 + $0x14] sm:$0xf]
      %v317 = vld [vmem:[%s310 + $0x18] sm:$0xf]
      %v318 = vld [vmem:[%s310 + $0x1c] sm:$0xf]
      %v319 = vld [vmem:[%s310 + $0x20] sm:$0xf]
      %v320 = vld [vmem:[%s310 + $0x24] sm:$0xf]
      %v322 = vrot.slane %v198, 1
      %v333 = vunpack.c.l.b16 %v311
      %v334 = vunpack.c.l.b16 %v312
      %v335 = vunpack.c.l.b16 %v313
      %v336 = vunpack.c.l.b16 %v314
      %v337 = vunpack.c.l.b16 %v315
      %v338 = vunpack.c.l.b16 %v316
      %v339 = vunpack.c.l.b16 %v317
      %v340 = vunpack.c.l.b16 %v318
      %v341 = vunpack.c.l.b16 %v319
      %v342 = vunpack.c.l.b16 %v320
      %v343 = vpack.c.b16 %v334, %v333
      %v344 = vpack.c.b16 %v336, %v335
      %v345 = vpack.c.b16 %v338, %v337
      %v346 = vpack.c.b16 %v340, %v339
      %v347 = vpack.c.b16 %v342, %v341
      %v354 = vsel %vm247, %v322, 0
      %356 = vmatpush.bf16.msra.mxu0 0
      %357 = vmatpush.bf16.msra.mxu0 0
      %358 = vmatpush.bf16.msra.mxu0 0
      %359 = vmatpush.bf16.msra.mxu0 %v347
      %360 = vmatpush.bf16.msra.mxu0 %v346
      %361 = vmatpush.bf16.msra.mxu0 %v345
      %362 = vmatpush.bf16.msra.mxu0 %v344
      %363 = vmatpush.bf16.msra.mxu0 %v343
      %364 = vmatmul.bf16.gmra.mxu0 %v354
      %v365 = vpop.f32.mrf.mxu0
      %v366 = vadd.f32 0.0, %v365
      %v367 = vpop.f32.mrf.mxu0
      %368 = vdwg.mxu0
      %v369 = vadd.f32 %v307, %v366
      %s370 = scalar_lea.vmem %s172, 8
      %v371 = vld [vmem:[%s370] sm:$0xf]
      %v372 = vld [vmem:[%s370 + $0x4] sm:$0x1]
      %v373 = vunpack.c.l.bf16 %v371
      %v374 = vunpack.c.l.bf16 %v372
      %v375 = vpack.c.bf16 %v373, %v373
      %s376 = scalar_lea.vmem %s1, 120
      %v377 = vld [vmem:[%s376] sm:$0xf]
      %v378 = vld [vmem:[%s376 + $0x4] sm:$0xf]
      %v379 = vld [vmem:[%s376 + $0x8] sm:$0xf]
      %v380 = vld [vmem:[%s376 + $0xc] sm:$0xf]
      %v381 = vld [vmem:[%s376 + $0x10] sm:$0xf]
      %v382 = vld [vmem:[%s376 + $0x14] sm:$0xf]
      %v383 = vld [vmem:[%s376 + $0x18] sm:$0xf]
      %v384 = vld [vmem:[%s376 + $0x1c] sm:$0xf]
      %v385 = vld [vmem:[%s376 + $0x20] sm:$0xf]
      %v386 = vld [vmem:[%s376 + $0x24] sm:$0xf]
      %v397 = vunpack.c.l.b16 %v377
      %v398 = vunpack.c.l.b16 %v378
      %v399 = vunpack.c.l.b16 %v379
      %v400 = vunpack.c.l.b16 %v380
      %v401 = vunpack.c.l.b16 %v381
      %v402 = vunpack.c.l.b16 %v382
      %v403 = vunpack.c.l.b16 %v383
      %v404 = vunpack.c.l.b16 %v384
      %v405 = vunpack.c.l.b16 %v385
      %v406 = vunpack.c.l.b16 %v386
      %v407 = vpack.c.b16 %v398, %v397
      %v408 = vpack.c.b16 %v400, %v399
      %v409 = vpack.c.b16 %v402, %v401
      %v410 = vpack.c.b16 %v404, %v403
      %v411 = vpack.c.b16 %v406, %v405
      %v418 = vsel %vm247, %v375, 0
      %420 = vmatpush.bf16.msra.mxu0 0
      %421 = vmatpush.bf16.msra.mxu0 0
      %422 = vmatpush.bf16.msra.mxu0 0
      %423 = vmatpush.bf16.msra.mxu0 %v411
      %424 = vmatpush.bf16.msra.mxu0 %v410
      %425 = vmatpush.bf16.msra.mxu0 %v409
      %426 = vmatpush.bf16.msra.mxu0 %v408
      %427 = vmatpush.bf16.msra.mxu0 %v407
      %428 = vmatmul.bf16.gmra.mxu0 %v418
      %v429 = vpop.f32.mrf.mxu0
      %v430 = vadd.f32 0.0, %v429
      %v431 = vpop.f32.mrf.mxu0
      %432 = vdwg.mxu0
      %v433 = vadd.f32 %v369, %v430
      %v434 = vpack.c.bf16 %v374, %v373
      %s435 = scalar_lea.vmem %s1, 160
      %v436 = vld [vmem:[%s435] sm:$0xf]
      %v437 = vld [vmem:[%s435 + $0x4] sm:$0xf]
      %v438 = vld [vmem:[%s435 + $0x8] sm:$0xf]
      %v439 = vld [vmem:[%s435 + $0xc] sm:$0xf]
      %v440 = vld [vmem:[%s435 + $0x10] sm:$0xf]
      %v441 = vld [vmem:[%s435 + $0x14] sm:$0xf]
      %v442 = vld [vmem:[%s435 + $0x18] sm:$0xf]
      %v443 = vld [vmem:[%s435 + $0x1c] sm:$0xf]
      %v444 = vld [vmem:[%s435 + $0x20] sm:$0xf]
      %v445 = vld [vmem:[%s435 + $0x24] sm:$0xf]
      %v447 = vshrl.u32 %v434, 16
      %v449 = vshll.u32 %v434, 16
      %v451 = vrot.slane %v449, 1
      %v452 = vor.u32 %v447, %v451
      %v463 = vunpack.c.l.b16 %v436
      %v464 = vunpack.c.l.b16 %v437
      %v465 = vunpack.c.l.b16 %v438
      %v466 = vunpack.c.l.b16 %v439
      %v467 = vunpack.c.l.b16 %v440
      %v468 = vunpack.c.l.b16 %v441
      %v469 = vunpack.c.l.b16 %v442
      %v470 = vunpack.c.l.b16 %v443
      %v471 = vunpack.c.l.b16 %v444
      %v472 = vunpack.c.l.b16 %v445
      %v473 = vpack.c.b16 %v464, %v463
      %v474 = vpack.c.b16 %v466, %v465
      %v475 = vpack.c.b16 %v468, %v467
      %v476 = vpack.c.b16 %v470, %v469
      %v477 = vpack.c.b16 %v472, %v471
      %v484 = vsel %vm247, %v452, 0
      %486 = vmatpush.bf16.msra.mxu0 0
      %487 = vmatpush.bf16.msra.mxu0 0
      %488 = vmatpush.bf16.msra.mxu0 0
      %489 = vmatpush.bf16.msra.mxu0 %v477
      %490 = vmatpush.bf16.msra.mxu0 %v476
      %491 = vmatpush.bf16.msra.mxu0 %v475
      %492 = vmatpush.bf16.msra.mxu0 %v474
      %493 = vmatpush.bf16.msra.mxu0 %v473
      %494 = vmatmul.bf16.gmra.mxu0 %v484
      %v495 = vpop.f32.mrf.mxu0
      %v496 = vadd.f32 0.0, %v495
      %v497 = vpop.f32.mrf.mxu0
      %498 = vdwg.mxu0
      %v499 = vadd.f32 %v433, %v496
      %s500 = scalar_lea.vmem %s1, 200
      %v501 = vld [vmem:[%s500] sm:$0xf]
      %v502 = vld [vmem:[%s500 + $0x4] sm:$0xf]
      %v503 = vld [vmem:[%s500 + $0x8] sm:$0xf]
      %v504 = vld [vmem:[%s500 + $0xc] sm:$0xf]
      %v505 = vld [vmem:[%s500 + $0x10] sm:$0xf]
      %v506 = vld [vmem:[%s500 + $0x14] sm:$0xf]
      %v507 = vld [vmem:[%s500 + $0x18] sm:$0xf]
      %v508 = vld [vmem:[%s500 + $0x1c] sm:$0xf]
      %v509 = vld [vmem:[%s500 + $0x20] sm:$0xf]
      %v510 = vld [vmem:[%s500 + $0x24] sm:$0xf]
      %v512 = vrot.slane %v434, 1
      %v523 = vunpack.c.l.b16 %v501
      %v524 = vunpack.c.l.b16 %v502
      %v525 = vunpack.c.l.b16 %v503
      %v526 = vunpack.c.l.b16 %v504
      %v527 = vunpack.c.l.b16 %v505
      %v528 = vunpack.c.l.b16 %v506
      %v529 = vunpack.c.l.b16 %v507
      %v530 = vunpack.c.l.b16 %v508
      %v531 = vunpack.c.l.b16 %v509
      %v532 = vunpack.c.l.b16 %v510
      %v533 = vpack.c.b16 %v524, %v523
      %v534 = vpack.c.b16 %v526, %v525
      %v535 = vpack.c.b16 %v528, %v527
      %v536 = vpack.c.b16 %v530, %v529
      %v537 = vpack.c.b16 %v532, %v531
      %v544 = vsel %vm247, %v512, 0
      %546 = vmatpush.bf16.msra.mxu0 0
      %547 = vmatpush.bf16.msra.mxu0 0
      %548 = vmatpush.bf16.msra.mxu0 0
      %549 = vmatpush.bf16.msra.mxu0 %v537
      %550 = vmatpush.bf16.msra.mxu0 %v536
      %551 = vmatpush.bf16.msra.mxu0 %v535
      %552 = vmatpush.bf16.msra.mxu0 %v534
      %553 = vmatpush.bf16.msra.mxu0 %v533
      %554 = vmatmul.bf16.gmra.mxu0 %v544
      %v555 = vpop.f32.mrf.mxu0
      %v556 = vadd.f32 0.0, %v555
      %v557 = vpop.f32.mrf.mxu0
      %558 = vdwg.mxu0
      %v559 = vadd.f32 %v499, %v556
      %s560 = scalar_lea.vmem %s172, 16
      %v561 = vld [vmem:[%s560] sm:$0xf]
      %v562 = vld [vmem:[%s560 + $0x4] sm:$0x1]
      %v563 = vunpack.c.l.bf16 %v561
      %v564 = vunpack.c.l.bf16 %v562
      %v565 = vpack.c.bf16 %v563, %v563
      %s566 = scalar_lea.vmem %s1, 240
      %v567 = vld [vmem:[%s566] sm:$0xf]
      %v568 = vld [vmem:[%s566 + $0x4] sm:$0xf]
      %v569 = vld [vmem:[%s566 + $0x8] sm:$0xf]
      %v570 = vld [vmem:[%s566 + $0xc] sm:$0xf]
      %v571 = vld [vmem:[%s566 + $0x10] sm:$0xf]
      %v572 = vld [vmem:[%s566 + $0x14] sm:$0xf]
      %v573 = vld [vmem:[%s566 + $0x18] sm:$0xf]
      %v574 = vld [vmem:[%s566 + $0x1c] sm:$0xf]
      %v575 = vld [vmem:[%s566 + $0x20] sm:$0xf]
      %v576 = vld [vmem:[%s566 + $0x24] sm:$0xf]
      %v587 = vunpack.c.l.b16 %v567
      %v588 = vunpack.c.l.b16 %v568
      %v589 = vunpack.c.l.b16 %v569
      %v590 = vunpack.c.l.b16 %v570
      %v591 = vunpack.c.l.b16 %v571
      %v592 = vunpack.c.l.b16 %v572
      %v593 = vunpack.c.l.b16 %v573
      %v594 = vunpack.c.l.b16 %v574
      %v595 = vunpack.c.l.b16 %v575
      %v596 = vunpack.c.l.b16 %v576
      %v597 = vpack.c.b16 %v588, %v587
      %v598 = vpack.c.b16 %v590, %v589
      %v599 = vpack.c.b16 %v592, %v591
      %v600 = vpack.c.b16 %v594, %v593
      %v601 = vpack.c.b16 %v596, %v595
      %v608 = vsel %vm247, %v565, 0
      %610 = vmatpush.bf16.msra.mxu0 0
      %611 = vmatpush.bf16.msra.mxu0 0
      %612 = vmatpush.bf16.msra.mxu0 0
      %613 = vmatpush.bf16.msra.mxu0 %v601
      %614 = vmatpush.bf16.msra.mxu0 %v600
      %615 = vmatpush.bf16.msra.mxu0 %v599
      %616 = vmatpush.bf16.msra.mxu0 %v598
      %617 = vmatpush.bf16.msra.mxu0 %v597
      %618 = vmatmul.bf16.gmra.mxu0 %v608
      %v619 = vpop.f32.mrf.mxu0
      %v620 = vadd.f32 0.0, %v619
      %v621 = vpop.f32.mrf.mxu0
      %622 = vdwg.mxu0
      %v623 = vadd.f32 %v559, %v620
      %v624 = vpack.c.bf16 %v564, %v563
      %s625 = scalar_lea.vmem %s1, 280
      %v626 = vld [vmem:[%s625] sm:$0xf]
      %v627 = vld [vmem:[%s625 + $0x4] sm:$0xf]
      %v628 = vld [vmem:[%s625 + $0x8] sm:$0xf]
      %v629 = vld [vmem:[%s625 + $0xc] sm:$0xf]
      %v630 = vld [vmem:[%s625 + $0x10] sm:$0xf]
      %v631 = vld [vmem:[%s625 + $0x14] sm:$0xf]
      %v632 = vld [vmem:[%s625 + $0x18] sm:$0xf]
      %v633 = vld [vmem:[%s625 + $0x1c] sm:$0xf]
      %v634 = vld [vmem:[%s625 + $0x20] sm:$0xf]
      %v635 = vld [vmem:[%s625 + $0x24] sm:$0xf]
      %v637 = vshrl.u32 %v624, 16
      %v639 = vshll.u32 %v624, 16
      %v641 = vrot.slane %v639, 1
      %v642 = vor.u32 %v637, %v641
      %v653 = vunpack.c.l.b16 %v626
      %v654 = vunpack.c.l.b16 %v627
      %v655 = vunpack.c.l.b16 %v628
      %v656 = vunpack.c.l.b16 %v629
      %v657 = vunpack.c.l.b16 %v630
      %v658 = vunpack.c.l.b16 %v631
      %v659 = vunpack.c.l.b16 %v632
      %v660 = vunpack.c.l.b16 %v633
      %v661 = vunpack.c.l.b16 %v634
      %v662 = vunpack.c.l.b16 %v635
      %v663 = vpack.c.b16 %v654, %v653
      %v664 = vpack.c.b16 %v656, %v655
      %v665 = vpack.c.b16 %v658, %v657
      %v666 = vpack.c.b16 %v660, %v659
      %v667 = vpack.c.b16 %v662, %v661
      %v674 = vsel %vm247, %v642, 0
      %676 = vmatpush.bf16.msra.mxu0 0
      %677 = vmatpush.bf16.msra.mxu0 0
      %678 = vmatpush.bf16.msra.mxu0 0
      %679 = vmatpush.bf16.msra.mxu0 %v667
      %680 = vmatpush.bf16.msra.mxu0 %v666
      %681 = vmatpush.bf16.msra.mxu0 %v665
      %682 = vmatpush.bf16.msra.mxu0 %v664
      %683 = vmatpush.bf16.msra.mxu0 %v663
      %684 = vmatmul.bf16.gmra.mxu0 %v674
      %v685 = vpop.f32.mrf.mxu0
      %v686 = vadd.f32 0.0, %v685
      %v687 = vpop.f32.mrf.mxu0
      %688 = vdwg.mxu0
      %v689 = vadd.f32 %v623, %v686
      %s690 = scalar_lea.vmem %s1, 320
      %v691 = vld [vmem:[%s690] sm:$0xf]
      %v692 = vld [vmem:[%s690 + $0x4] sm:$0xf]
      %v693 = vld [vmem:[%s690 + $0x8] sm:$0xf]
      %v694 = vld [vmem:[%s690 + $0xc] sm:$0xf]
      %v695 = vld [vmem:[%s690 + $0x10] sm:$0xf]
      %v696 = vld [vmem:[%s690 + $0x14] sm:$0xf]
      %v697 = vld [vmem:[%s690 + $0x18] sm:$0xf]
      %v698 = vld [vmem:[%s690 + $0x1c] sm:$0xf]
      %v699 = vld [vmem:[%s690 + $0x20] sm:$0xf]
      %v700 = vld [vmem:[%s690 + $0x24] sm:$0xf]
      %v702 = vrot.slane %v624, 1
      %v713 = vunpack.c.l.b16 %v691
      %v714 = vunpack.c.l.b16 %v692
      %v715 = vunpack.c.l.b16 %v693
      %v716 = vunpack.c.l.b16 %v694
      %v717 = vunpack.c.l.b16 %v695
      %v718 = vunpack.c.l.b16 %v696
      %v719 = vunpack.c.l.b16 %v697
      %v720 = vunpack.c.l.b16 %v698
      %v721 = vunpack.c.l.b16 %v699
      %v722 = vunpack.c.l.b16 %v700
      %v723 = vpack.c.b16 %v714, %v713
      %v724 = vpack.c.b16 %v716, %v715
      %v725 = vpack.c.b16 %v718, %v717
      %v726 = vpack.c.b16 %v720, %v719
      %v727 = vpack.c.b16 %v722, %v721
      %v734 = vsel %vm247, %v702, 0
      %736 = vmatpush.bf16.msra.mxu0 0
      %737 = vmatpush.bf16.msra.mxu0 0
      %738 = vmatpush.bf16.msra.mxu0 0
      %739 = vmatpush.bf16.msra.mxu0 %v727
      %740 = vmatpush.bf16.msra.mxu0 %v726
      %741 = vmatpush.bf16.msra.mxu0 %v725
      %742 = vmatpush.bf16.msra.mxu0 %v724
      %743 = vmatpush.bf16.msra.mxu0 %v723
      %744 = vmatmul.bf16.gmra.mxu0 %v734
      %v745 = vpop.f32.mrf.mxu0
      %v746 = vadd.f32 0.0, %v745
      %v747 = vpop.f32.mrf.mxu0
      %748 = vdwg.mxu0
      %v749 = vadd.f32 %v689, %v746
      %v750 = vpack.c.bf16 %v749, %v749
      %vm751 = vcmask 519168
      %752 = vst.msk [vmem:[%s177] sm:$0xf] %vm751, %v750
      %vm753 = vcmask 523264
      %v754 = vsel %vm753, %v749, 0.0
      %v755 = vrot.slane %v754, 4
      %v756 = vadd.f32 %v754, %v755
      %v757 = vrot.slane %v756, 2
      %v758 = vadd.f32 %v756, %v757
      %v759 = vrot.slane %v758, 1
      %v760 = vadd.f32 %v758, %v759
      %v761 = vadd.f32 %v760, 0.0
      %v762 = vmul.f32 %v749, %v749
      %v763 = vsel %vm753, %v762, 0.0
      %v764 = vrot.slane %v763, 4
      %v765 = vadd.f32 %v763, %v764
      %v766 = vrot.slane %v765, 2
      %v767 = vadd.f32 %v765, %v766
      %v768 = vrot.slane %v767, 1
      %v769 = vadd.f32 %v767, %v768
      %v770 = vadd.f32 %v769, 0.0
      %v771 = vld [vmem:[%s370] sm:$0xf]
      %v772 = vld [vmem:[%s370 + $0x4] sm:$0x1]
      %v773 = vunpack.c.l.bf16 %v771
      %v774 = vunpack.c.l.bf16 %v772
      %v775 = vpack.c.bf16 %v773, %v773
      %v776 = vld [vmem:[%s1] sm:$0xf]
      %v777 = vld [vmem:[%s1 + $0x4] sm:$0xf]
      %v778 = vld [vmem:[%s1 + $0x8] sm:$0xf]
      %v779 = vld [vmem:[%s1 + $0xc] sm:$0xf]
      %v780 = vld [vmem:[%s1 + $0x10] sm:$0xf]
      %v781 = vld [vmem:[%s1 + $0x14] sm:$0xf]
      %v782 = vld [vmem:[%s1 + $0x18] sm:$0xf]
      %v783 = vld [vmem:[%s1 + $0x1c] sm:$0xf]
      %v784 = vld [vmem:[%s1 + $0x20] sm:$0xf]
      %v785 = vld [vmem:[%s1 + $0x24] sm:$0xf]
      %v786 = vpack.c.bf16 %v774, %v773
      %v787 = vld [vmem:[%s199] sm:$0xf]
      %v788 = vld [vmem:[%s199 + $0x4] sm:$0xf]
      %v789 = vld [vmem:[%s199 + $0x8] sm:$0xf]
      %v790 = vld [vmem:[%s199 + $0xc] sm:$0xf]
      %v791 = vld [vmem:[%s199 + $0x10] sm:$0xf]
      %v792 = vld [vmem:[%s199 + $0x14] sm:$0xf]
      %v793 = vld [vmem:[%s199 + $0x18] sm:$0xf]
      %v794 = vld [vmem:[%s199 + $0x1c] sm:$0xf]
      %v795 = vld [vmem:[%s199 + $0x20] sm:$0xf]
      %v796 = vld [vmem:[%s199 + $0x24] sm:$0xf]
      %v798 = vshrl.u32 %v786, 16
      %v800 = vshll.u32 %v786, 16
      %v802 = vrot.slane %v800, 1
      %v803 = vor.u32 %v798, %v802
      %v814 = vunpack.c.l.b16 %v787
      %v815 = vunpack.c.l.b16 %v788
      %v816 = vunpack.c.l.b16 %v789
      %v817 = vunpack.c.l.b16 %v790
      %v818 = vunpack.c.l.b16 %v791
      %v819 = vunpack.c.l.b16 %v792
      %v820 = vunpack.c.l.b16 %v793
      %v821 = vunpack.c.l.b16 %v794
      %v822 = vunpack.c.l.b16 %v795
      %v823 = vunpack.c.l.b16 %v796
      %v824 = vpack.c.b16 %v815, %v814
      %v825 = vpack.c.b16 %v817, %v816
      %v826 = vpack.c.b16 %v819, %v818
      %v827 = vpack.c.b16 %v821, %v820
      %v828 = vpack.c.b16 %v823, %v822
      %v835 = vsel %vm247, %v803, 0
      %837 = vmatpush.bf16.msra.mxu0 0
      %838 = vmatpush.bf16.msra.mxu0 0
      %839 = vmatpush.bf16.msra.mxu0 0
      %840 = vmatpush.bf16.msra.mxu0 %v828
      %841 = vmatpush.bf16.msra.mxu0 %v827
      %842 = vmatpush.bf16.msra.mxu0 %v826
      %843 = vmatpush.bf16.msra.mxu0 %v825
      %844 = vmatpush.bf16.msra.mxu0 %v824
      %845 = vmatmul.bf16.gmra.mxu0 %v835
      %v846 = vpop.f32.mrf.mxu0
      %v847 = vadd.f32 0.0, %v846
      %v848 = vpop.f32.mrf.mxu0
      %849 = vdwg.mxu0
      %v860 = vunpack.c.l.b16 %v776
      %v861 = vunpack.c.l.b16 %v777
      %v862 = vunpack.c.l.b16 %v778
      %v863 = vunpack.c.l.b16 %v779
      %v864 = vunpack.c.l.b16 %v780
      %v865 = vunpack.c.l.b16 %v781
      %v866 = vunpack.c.l.b16 %v782
      %v867 = vunpack.c.l.b16 %v783
      %v868 = vunpack.c.l.b16 %v784
      %v869 = vunpack.c.l.b16 %v785
      %v870 = vpack.c.b16 %v861, %v860
      %v871 = vpack.c.b16 %v863, %v862
      %v872 = vpack.c.b16 %v865, %v864
      %v873 = vpack.c.b16 %v867, %v866
      %v874 = vpack.c.b16 %v869, %v868
      %v881 = vsel %vm247, %v775, 0
      %883 = vmatpush.bf16.msra.mxu0 0
      %884 = vmatpush.bf16.msra.mxu0 0
      %885 = vmatpush.bf16.msra.mxu0 0
      %886 = vmatpush.bf16.msra.mxu0 %v874
      %887 = vmatpush.bf16.msra.mxu0 %v873
      %888 = vmatpush.bf16.msra.mxu0 %v872
      %889 = vmatpush.bf16.msra.mxu0 %v871
      %890 = vmatpush.bf16.msra.mxu0 %v870
      %891 = vmatmul.bf16.gmra.mxu0 %v881
      %v892 = vpop.f32.mrf.mxu0
      %v893 = vadd.f32 %v847, %v892
      %v894 = vpop.f32.mrf.mxu0
      %895 = vdwg.mxu0
      %v896 = vld [vmem:[%s310] sm:$0xf]
      %v897 = vld [vmem:[%s310 + $0x4] sm:$0xf]
      %v898 = vld [vmem:[%s310 + $0x8] sm:$0xf]
      %v899 = vld [vmem:[%s310 + $0xc] sm:$0xf]
      %v900 = vld [vmem:[%s310 + $0x10] sm:$0xf]
      %v901 = vld [vmem:[%s310 + $0x14] sm:$0xf]
      %v902 = vld [vmem:[%s310 + $0x18] sm:$0xf]
      %v903 = vld [vmem:[%s310 + $0x1c] sm:$0xf]
      %v904 = vld [vmem:[%s310 + $0x20] sm:$0xf]
      %v905 = vld [vmem:[%s310 + $0x24] sm:$0xf]
      %v907 = vrot.slane %v786, 1
      %v918 = vunpack.c.l.b16 %v896
      %v919 = vunpack.c.l.b16 %v897
      %v920 = vunpack.c.l.b16 %v898
      %v921 = vunpack.c.l.b16 %v899
      %v922 = vunpack.c.l.b16 %v900
      %v923 = vunpack.c.l.b16 %v901
      %v924 = vunpack.c.l.b16 %v902
      %v925 = vunpack.c.l.b16 %v903
      %v926 = vunpack.c.l.b16 %v904
      %v927 = vunpack.c.l.b16 %v905
      %v928 = vpack.c.b16 %v919, %v918
      %v929 = vpack.c.b16 %v921, %v920
      %v930 = vpack.c.b16 %v923, %v922
      %v931 = vpack.c.b16 %v925, %v924
      %v932 = vpack.c.b16 %v927, %v926
      %v939 = vsel %vm247, %v907, 0
      %941 = vmatpush.bf16.msra.mxu0 0
      %942 = vmatpush.bf16.msra.mxu0 0
      %943 = vmatpush.bf16.msra.mxu0 0
      %944 = vmatpush.bf16.msra.mxu0 %v932
      %945 = vmatpush.bf16.msra.mxu0 %v931
      %946 = vmatpush.bf16.msra.mxu0 %v930
      %947 = vmatpush.bf16.msra.mxu0 %v929
      %948 = vmatpush.bf16.msra.mxu0 %v928
      %949 = vmatmul.bf16.gmra.mxu0 %v939
      %v950 = vpop.f32.mrf.mxu0
      %v951 = vadd.f32 0.0, %v950
      %v952 = vpop.f32.mrf.mxu0
      %953 = vdwg.mxu0
      %v954 = vadd.f32 %v893, %v951
      %v955 = vld [vmem:[%s560] sm:$0xf]
      %v956 = vld [vmem:[%s560 + $0x4] sm:$0x1]
      %v957 = vunpack.c.l.bf16 %v955
      %v958 = vunpack.c.l.bf16 %v956
      %v959 = vpack.c.bf16 %v957, %v957
      %v960 = vld [vmem:[%s376] sm:$0xf]
      %v961 = vld [vmem:[%s376 + $0x4] sm:$0xf]
      %v962 = vld [vmem:[%s376 + $0x8] sm:$0xf]
      %v963 = vld [vmem:[%s376 + $0xc] sm:$0xf]
      %v964 = vld [vmem:[%s376 + $0x10] sm:$0xf]
      %v965 = vld [vmem:[%s376 + $0x14] sm:$0xf]
      %v966 = vld [vmem:[%s376 + $0x18] sm:$0xf]
      %v967 = vld [vmem:[%s376 + $0x1c] sm:$0xf]
      %v968 = vld [vmem:[%s376 + $0x20] sm:$0xf]
      %v969 = vld [vmem:[%s376 + $0x24] sm:$0xf]
      %v980 = vunpack.c.l.b16 %v960
      %v981 = vunpack.c.l.b16 %v961
      %v982 = vunpack.c.l.b16 %v962
      %v983 = vunpack.c.l.b16 %v963
      %v984 = vunpack.c.l.b16 %v964
      %v985 = vunpack.c.l.b16 %v965
      %v986 = vunpack.c.l.b16 %v966
      %v987 = vunpack.c.l.b16 %v967
      %v988 = vunpack.c.l.b16 %v968
      %v989 = vunpack.c.l.b16 %v969
      %v990 = vpack.c.b16 %v981, %v980
      %v991 = vpack.c.b16 %v983, %v982
      %v992 = vpack.c.b16 %v985, %v984
      %v993 = vpack.c.b16 %v987, %v986
      %v994 = vpack.c.b16 %v989, %v988
      %v1001 = vsel %vm247, %v959, 0
      %1003 = vmatpush.bf16.msra.mxu0 0
      %1004 = vmatpush.bf16.msra.mxu0 0
      %1005 = vmatpush.bf16.msra.mxu0 0
      %1006 = vmatpush.bf16.msra.mxu0 %v994
      %1007 = vmatpush.bf16.msra.mxu0 %v993
      %1008 = vmatpush.bf16.msra.mxu0 %v992
      %1009 = vmatpush.bf16.msra.mxu0 %v991
      %1010 = vmatpush.bf16.msra.mxu0 %v990
      %1011 = vmatmul.bf16.gmra.mxu0 %v1001
      %v1012 = vpop.f32.mrf.mxu0
      %v1013 = vadd.f32 0.0, %v1012
      %v1014 = vpop.f32.mrf.mxu0
      %1015 = vdwg.mxu0
      %v1016 = vadd.f32 %v954, %v1013
      %v1017 = vpack.c.bf16 %v958, %v957
      %v1018 = vld [vmem:[%s435] sm:$0xf]
      %v1019 = vld [vmem:[%s435 + $0x4] sm:$0xf]
      %v1020 = vld [vmem:[%s435 + $0x8] sm:$0xf]
      %v1021 = vld [vmem:[%s435 + $0xc] sm:$0xf]
      %v1022 = vld [vmem:[%s435 + $0x10] sm:$0xf]
      %v1023 = vld [vmem:[%s435 + $0x14] sm:$0xf]
      %v1024 = vld [vmem:[%s435 + $0x18] sm:$0xf]
      %v1025 = vld [vmem:[%s435 + $0x1c] sm:$0xf]
      %v1026 = vld [vmem:[%s435 + $0x20] sm:$0xf]
      %v1027 = vld [vmem:[%s435 + $0x24] sm:$0xf]
      %v1029 = vshrl.u32 %v1017, 16
      %v1031 = vshll.u32 %v1017, 16
      %v1033 = vrot.slane %v1031, 1
      %v1034 = vor.u32 %v1029, %v1033
      %v1045 = vunpack.c.l.b16 %v1018
      %v1046 = vunpack.c.l.b16 %v1019
      %v1047 = vunpack.c.l.b16 %v1020
      %v1048 = vunpack.c.l.b16 %v1021
      %v1049 = vunpack.c.l.b16 %v1022
      %v1050 = vunpack.c.l.b16 %v1023
      %v1051 = vunpack.c.l.b16 %v1024
      %v1052 = vunpack.c.l.b16 %v1025
      %v1053 = vunpack.c.l.b16 %v1026
      %v1054 = vunpack.c.l.b16 %v1027
      %v1055 = vpack.c.b16 %v1046, %v1045
      %v1056 = vpack.c.b16 %v1048, %v1047
      %v1057 = vpack.c.b16 %v1050, %v1049
      %v1058 = vpack.c.b16 %v1052, %v1051
      %v1059 = vpack.c.b16 %v1054, %v1053
      %v1066 = vsel %vm247, %v1034, 0
      %1068 = vmatpush.bf16.msra.mxu0 0
      %1069 = vmatpush.bf16.msra.mxu0 0
      %1070 = vmatpush.bf16.msra.mxu0 0
      %1071 = vmatpush.bf16.msra.mxu0 %v1059
      %1072 = vmatpush.bf16.msra.mxu0 %v1058
      %1073 = vmatpush.bf16.msra.mxu0 %v1057
      %1074 = vmatpush.bf16.msra.mxu0 %v1056
      %1075 = vmatpush.bf16.msra.mxu0 %v1055
      %1076 = vmatmul.bf16.gmra.mxu0 %v1066
      %v1077 = vpop.f32.mrf.mxu0
      %v1078 = vadd.f32 0.0, %v1077
      %v1079 = vpop.f32.mrf.mxu0
      %1080 = vdwg.mxu0
      %v1081 = vadd.f32 %v1016, %v1078
      %v1082 = vld [vmem:[%s500] sm:$0xf]
      %v1083 = vld [vmem:[%s500 + $0x4] sm:$0xf]
      %v1084 = vld [vmem:[%s500 + $0x8] sm:$0xf]
      %v1085 = vld [vmem:[%s500 + $0xc] sm:$0xf]
      %v1086 = vld [vmem:[%s500 + $0x10] sm:$0xf]
      %v1087 = vld [vmem:[%s500 + $0x14] sm:$0xf]
      %v1088 = vld [vmem:[%s500 + $0x18] sm:$0xf]
      %v1089 = vld [vmem:[%s500 + $0x1c] sm:$0xf]
      %v1090 = vld [vmem:[%s500 + $0x20] sm:$0xf]
      %v1091 = vld [vmem:[%s500 + $0x24] sm:$0xf]
      %v1093 = vrot.slane %v1017, 1
      %v1104 = vunpack.c.l.b16 %v1082
      %v1105 = vunpack.c.l.b16 %v1083
      %v1106 = vunpack.c.l.b16 %v1084
      %v1107 = vunpack.c.l.b16 %v1085
      %v1108 = vunpack.c.l.b16 %v1086
      %v1109 = vunpack.c.l.b16 %v1087
      %v1110 = vunpack.c.l.b16 %v1088
      %v1111 = vunpack.c.l.b16 %v1089
      %v1112 = vunpack.c.l.b16 %v1090
      %v1113 = vunpack.c.l.b16 %v1091
      %v1114 = vpack.c.b16 %v1105, %v1104
      %v1115 = vpack.c.b16 %v1107, %v1106
      %v1116 = vpack.c.b16 %v1109, %v1108
      %v1117 = vpack.c.b16 %v1111, %v1110
      %v1118 = vpack.c.b16 %v1113, %v1112
      %v1125 = vsel %vm247, %v1093, 0
      %1127 = vmatpush.bf16.msra.mxu0 0
      %1128 = vmatpush.bf16.msra.mxu0 0
      %1129 = vmatpush.bf16.msra.mxu0 0
      %1130 = vmatpush.bf16.msra.mxu0 %v1118
      %1131 = vmatpush.bf16.msra.mxu0 %v1117
      %1132 = vmatpush.bf16.msra.mxu0 %v1116
      %1133 = vmatpush.bf16.msra.mxu0 %v1115
      %1134 = vmatpush.bf16.msra.mxu0 %v1114
      %1135 = vmatmul.bf16.gmra.mxu0 %v1125
      %v1136 = vpop.f32.mrf.mxu0
      %v1137 = vadd.f32 0.0, %v1136
      %v1138 = vpop.f32.mrf.mxu0
      %1139 = vdwg.mxu0
      %v1140 = vadd.f32 %v1081, %v1137
      %s1141 = scalar_lea.vmem %s172, 24
      %v1142 = vld [vmem:[%s1141] sm:$0xf]
      %v1143 = vld [vmem:[%s1141 + $0x4] sm:$0x1]
      %v1144 = vunpack.c.l.bf16 %v1142
      %v1145 = vunpack.c.l.bf16 %v1143
      %v1146 = vpack.c.bf16 %v1144, %v1144
      %v1147 = vld [vmem:[%s566] sm:$0xf]
      %v1148 = vld [vmem:[%s566 + $0x4] sm:$0xf]
      %v1149 = vld [vmem:[%s566 + $0x8] sm:$0xf]
      %v1150 = vld [vmem:[%s566 + $0xc] sm:$0xf]
      %v1151 = vld [vmem:[%s566 + $0x10] sm:$0xf]
      %v1152 = vld [vmem:[%s566 + $0x14] sm:$0xf]
      %v1153 = vld [vmem:[%s566 + $0x18] sm:$0xf]
      %v1154 = vld [vmem:[%s566 + $0x1c] sm:$0xf]
      %v1155 = vld [vmem:[%s566 + $0x20] sm:$0xf]
      %v1156 = vld [vmem:[%s566 + $0x24] sm:$0xf]
      %v1167 = vunpack.c.l.b16 %v1147
      %v1168 = vunpack.c.l.b16 %v1148
      %v1169 = vunpack.c.l.b16 %v1149
      %v1170 = vunpack.c.l.b16 %v1150
      %v1171 = vunpack.c.l.b16 %v1151
      %v1172 = vunpack.c.l.b16 %v1152
      %v1173 = vunpack.c.l.b16 %v1153
      %v1174 = vunpack.c.l.b16 %v1154
      %v1175 = vunpack.c.l.b16 %v1155
      %v1176 = vunpack.c.l.b16 %v1156
      %v1177 = vpack.c.b16 %v1168, %v1167
      %v1178 = vpack.c.b16 %v1170, %v1169
      %v1179 = vpack.c.b16 %v1172, %v1171
      %v1180 = vpack.c.b16 %v1174, %v1173
      %v1181 = vpack.c.b16 %v1176, %v1175
      %v1188 = vsel %vm247, %v1146, 0
      %1190 = vmatpush.bf16.msra.mxu0 0
      %1191 = vmatpush.bf16.msra.mxu0 0
      %1192 = vmatpush.bf16.msra.mxu0 0
      %1193 = vmatpush.bf16.msra.mxu0 %v1181
      %1194 = vmatpush.bf16.msra.mxu0 %v1180
      %1195 = vmatpush.bf16.msra.mxu0 %v1179
      %1196 = vmatpush.bf16.msra.mxu0 %v1178
      %1197 = vmatpush.bf16.msra.mxu0 %v1177
      %1198 = vmatmul.bf16.gmra.mxu0 %v1188
      %v1199 = vpop.f32.mrf.mxu0
      %v1200 = vadd.f32 0.0, %v1199
      %v1201 = vpop.f32.mrf.mxu0
      %1202 = vdwg.mxu0
      %v1203 = vadd.f32 %v1140, %v1200
      %v1204 = vpack.c.bf16 %v1145, %v1144
      %v1205 = vld [vmem:[%s625] sm:$0xf]
      %v1206 = vld [vmem:[%s625 + $0x4] sm:$0xf]
      %v1207 = vld [vmem:[%s625 + $0x8] sm:$0xf]
      %v1208 = vld [vmem:[%s625 + $0xc] sm:$0xf]
      %v1209 = vld [vmem:[%s625 + $0x10] sm:$0xf]
      %v1210 = vld [vmem:[%s625 + $0x14] sm:$0xf]
      %v1211 = vld [vmem:[%s625 + $0x18] sm:$0xf]
      %v1212 = vld [vmem:[%s625 + $0x1c] sm:$0xf]
      %v1213 = vld [vmem:[%s625 + $0x20] sm:$0xf]
      %v1214 = vld [vmem:[%s625 + $0x24] sm:$0xf]
      %v1216 = vshrl.u32 %v1204, 16
      %v1218 = vshll.u32 %v1204, 16
      %v1220 = vrot.slane %v1218, 1
      %v1221 = vor.u32 %v1216, %v1220
      %v1232 = vunpack.c.l.b16 %v1205
      %v1233 = vunpack.c.l.b16 %v1206
      %v1234 = vunpack.c.l.b16 %v1207
      %v1235 = vunpack.c.l.b16 %v1208
      %v1236 = vunpack.c.l.b16 %v1209
      %v1237 = vunpack.c.l.b16 %v1210
      %v1238 = vunpack.c.l.b16 %v1211
      %v1239 = vunpack.c.l.b16 %v1212
      %v1240 = vunpack.c.l.b16 %v1213
      %v1241 = vunpack.c.l.b16 %v1214
      %v1242 = vpack.c.b16 %v1233, %v1232
      %v1243 = vpack.c.b16 %v1235, %v1234
      %v1244 = vpack.c.b16 %v1237, %v1236
      %v1245 = vpack.c.b16 %v1239, %v1238
      %v1246 = vpack.c.b16 %v1241, %v1240
      %v1253 = vsel %vm247, %v1221, 0
      %1255 = vmatpush.bf16.msra.mxu0 0
      %1256 = vmatpush.bf16.msra.mxu0 0
      %1257 = vmatpush.bf16.msra.mxu0 0
      %1258 = vmatpush.bf16.msra.mxu0 %v1246
      %1259 = vmatpush.bf16.msra.mxu0 %v1245
      %1260 = vmatpush.bf16.msra.mxu0 %v1244
      %1261 = vmatpush.bf16.msra.mxu0 %v1243
      %1262 = vmatpush.bf16.msra.mxu0 %v1242
      %1263 = vmatmul.bf16.gmra.mxu0 %v1253
      %v1264 = vpop.f32.mrf.mxu0
      %v1265 = vadd.f32 0.0, %v1264
      %v1266 = vpop.f32.mrf.mxu0
      %1267 = vdwg.mxu0
      %v1268 = vadd.f32 %v1203, %v1265
      %v1269 = vld [vmem:[%s690] sm:$0xf]
      %v1270 = vld [vmem:[%s690 + $0x4] sm:$0xf]
      %v1271 = vld [vmem:[%s690 + $0x8] sm:$0xf]
      %v1272 = vld [vmem:[%s690 + $0xc] sm:$0xf]
      %v1273 = vld [vmem:[%s690 + $0x10] sm:$0xf]
      %v1274 = vld [vmem:[%s690 + $0x14] sm:$0xf]
      %v1275 = vld [vmem:[%s690 + $0x18] sm:$0xf]
      %v1276 = vld [vmem:[%s690 + $0x1c] sm:$0xf]
      %v1277 = vld [vmem:[%s690 + $0x20] sm:$0xf]
      %v1278 = vld [vmem:[%s690 + $0x24] sm:$0xf]
      %v1280 = vrot.slane %v1204, 1
      %v1291 = vunpack.c.l.b16 %v1269
      %v1292 = vunpack.c.l.b16 %v1270
      %v1293 = vunpack.c.l.b16 %v1271
      %v1294 = vunpack.c.l.b16 %v1272
      %v1295 = vunpack.c.l.b16 %v1273
      %v1296 = vunpack.c.l.b16 %v1274
      %v1297 = vunpack.c.l.b16 %v1275
      %v1298 = vunpack.c.l.b16 %v1276
      %v1299 = vunpack.c.l.b16 %v1277
      %v1300 = vunpack.c.l.b16 %v1278
      %v1301 = vpack.c.b16 %v1292, %v1291
      %v1302 = vpack.c.b16 %v1294, %v1293
      %v1303 = vpack.c.b16 %v1296, %v1295
      %v1304 = vpack.c.b16 %v1298, %v1297
      %v1305 = vpack.c.b16 %v1300, %v1299
      %v1312 = vsel %vm247, %v1280, 0
      %1314 = vmatpush.bf16.msra.mxu0 0
      %1315 = vmatpush.bf16.msra.mxu0 0
      %1316 = vmatpush.bf16.msra.mxu0 0
      %1317 = vmatpush.bf16.msra.mxu0 %v1305
      %1318 = vmatpush.bf16.msra.mxu0 %v1304
      %1319 = vmatpush.bf16.msra.mxu0 %v1303
      %1320 = vmatpush.bf16.msra.mxu0 %v1302
      %1321 = vmatpush.bf16.msra.mxu0 %v1301
      %1322 = vmatmul.bf16.gmra.mxu0 %v1312
      %v1323 = vpop.f32.mrf.mxu0
      %v1324 = vadd.f32 0.0, %v1323
      %v1325 = vpop.f32.mrf.mxu0
      %1326 = vdwg.mxu0
      %v1327 = vadd.f32 %v1268, %v1324
      %v1328 = vpack.c.bf16 %v1327, %v1327
      %s1329 = scalar_lea.vmem %s177, 4
      %1330 = vst.msk [vmem:[%s1329] sm:$0xf] %vm751, %v1328
      %v1331 = vsel %vm753, %v1327, 0.0
      %v1332 = vrot.slane %v1331, 4
      %v1333 = vadd.f32 %v1331, %v1332
      %v1334 = vrot.slane %v1333, 2
      %v1335 = vadd.f32 %v1333, %v1334
      %v1336 = vrot.slane %v1335, 1
      %v1337 = vadd.f32 %v1335, %v1336
      %v1338 = vadd.f32 %v761, %v1337
      %v1339 = vmul.f32 %v1327, %v1327
      %v1340 = vsel %vm753, %v1339, 0.0
      %v1341 = vrot.slane %v1340, 4
      %v1342 = vadd.f32 %v1340, %v1341
      %v1343 = vrot.slane %v1342, 2
      %v1344 = vadd.f32 %v1342, %v1343
      %v1345 = vrot.slane %v1344, 1
      %v1346 = vadd.f32 %v1344, %v1345
      %v1347 = vadd.f32 %v770, %v1346
      %v1348 = vld [vmem:[%s560] sm:$0xf]
      %v1349 = vld [vmem:[%s560 + $0x4] sm:$0x1]
      %v1350 = vunpack.c.l.bf16 %v1348
      %v1351 = vunpack.c.l.bf16 %v1349
      %v1352 = vpack.c.bf16 %v1350, %v1350
      %v1353 = vld [vmem:[%s1] sm:$0xf]
      %v1354 = vld [vmem:[%s1 + $0x4] sm:$0xf]
      %v1355 = vld [vmem:[%s1 + $0x8] sm:$0xf]
      %v1356 = vld [vmem:[%s1 + $0xc] sm:$0xf]
      %v1357 = vld [vmem:[%s1 + $0x10] sm:$0xf]
      %v1358 = vld [vmem:[%s1 + $0x14] sm:$0xf]
      %v1359 = vld [vmem:[%s1 + $0x18] sm:$0xf]
      %v1360 = vld [vmem:[%s1 + $0x1c] sm:$0xf]
      %v1361 = vld [vmem:[%s1 + $0x20] sm:$0xf]
      %v1362 = vld [vmem:[%s1 + $0x24] sm:$0xf]
      %v1363 = vpack.c.bf16 %v1351, %v1350
      %v1364 = vld [vmem:[%s199] sm:$0xf]
      %v1365 = vld [vmem:[%s199 + $0x4] sm:$0xf]
      %v1366 = vld [vmem:[%s199 + $0x8] sm:$0xf]
      %v1367 = vld [vmem:[%s199 + $0xc] sm:$0xf]
      %v1368 = vld [vmem:[%s199 + $0x10] sm:$0xf]
      %v1369 = vld [vmem:[%s199 + $0x14] sm:$0xf]
      %v1370 = vld [vmem:[%s199 + $0x18] sm:$0xf]
      %v1371 = vld [vmem:[%s199 + $0x1c] sm:$0xf]
      %v1372 = vld [vmem:[%s199 + $0x20] sm:$0xf]
      %v1373 = vld [vmem:[%s199 + $0x24] sm:$0xf]
      %v1375 = vshrl.u32 %v1363, 16
      %v1377 = vshll.u32 %v1363, 16
      %v1379 = vrot.slane %v1377, 1
      %v1380 = vor.u32 %v1375, %v1379
      %v1391 = vunpack.c.l.b16 %v1364
      %v1392 = vunpack.c.l.b16 %v1365
      %v1393 = vunpack.c.l.b16 %v1366
      %v1394 = vunpack.c.l.b16 %v1367
      %v1395 = vunpack.c.l.b16 %v1368
      %v1396 = vunpack.c.l.b16 %v1369
      %v1397 = vunpack.c.l.b16 %v1370
      %v1398 = vunpack.c.l.b16 %v1371
      %v1399 = vunpack.c.l.b16 %v1372
      %v1400 = vunpack.c.l.b16 %v1373
      %v1401 = vpack.c.b16 %v1392, %v1391
      %v1402 = vpack.c.b16 %v1394, %v1393
      %v1403 = vpack.c.b16 %v1396, %v1395
      %v1404 = vpack.c.b16 %v1398, %v1397
      %v1405 = vpack.c.b16 %v1400, %v1399
      %v1412 = vsel %vm247, %v1380, 0
      %1414 = vmatpush.bf16.msra.mxu0 0
      %1415 = vmatpush.bf16.msra.mxu0 0
      %1416 = vmatpush.bf16.msra.mxu0 0
      %1417 = vmatpush.bf16.msra.mxu0 %v1405
      %1418 = vmatpush.bf16.msra.mxu0 %v1404
      %1419 = vmatpush.bf16.msra.mxu0 %v1403
      %1420 = vmatpush.bf16.msra.mxu0 %v1402
      %1421 = vmatpush.bf16.msra.mxu0 %v1401
      %1422 = vmatmul.bf16.gmra.mxu0 %v1412
      %v1423 = vpop.f32.mrf.mxu0
      %v1424 = vadd.f32 0.0, %v1423
      %v1425 = vpop.f32.mrf.mxu0
      %1426 = vdwg.mxu0
      %v1437 = vunpack.c.l.b16 %v1353
      %v1438 = vunpack.c.l.b16 %v1354
      %v1439 = vunpack.c.l.b16 %v1355
      %v1440 = vunpack.c.l.b16 %v1356
      %v1441 = vunpack.c.l.b16 %v1357
      %v1442 = vunpack.c.l.b16 %v1358
      %v1443 = vunpack.c.l.b16 %v1359
      %v1444 = vunpack.c.l.b16 %v1360
      %v1445 = vunpack.c.l.b16 %v1361
      %v1446 = vunpack.c.l.b16 %v1362
      %v1447 = vpack.c.b16 %v1438, %v1437
      %v1448 = vpack.c.b16 %v1440, %v1439
      %v1449 = vpack.c.b16 %v1442, %v1441
      %v1450 = vpack.c.b16 %v1444, %v1443
      %v1451 = vpack.c.b16 %v1446, %v1445
      %v1458 = vsel %vm247, %v1352, 0
      %1460 = vmatpush.bf16.msra.mxu0 0
      %1461 = vmatpush.bf16.msra.mxu0 0
      %1462 = vmatpush.bf16.msra.mxu0 0
      %1463 = vmatpush.bf16.msra.mxu0 %v1451
      %1464 = vmatpush.bf16.msra.mxu0 %v1450
      %1465 = vmatpush.bf16.msra.mxu0 %v1449
      %1466 = vmatpush.bf16.msra.mxu0 %v1448
      %1467 = vmatpush.bf16.msra.mxu0 %v1447
      %1468 = vmatmul.bf16.gmra.mxu0 %v1458
      %v1469 = vpop.f32.mrf.mxu0
      %v1470 = vadd.f32 %v1424, %v1469
      %v1471 = vpop.f32.mrf.mxu0
      %1472 = vdwg.mxu0
      %v1473 = vld [vmem:[%s310] sm:$0xf]
      %v1474 = vld [vmem:[%s310 + $0x4] sm:$0xf]
      %v1475 = vld [vmem:[%s310 + $0x8] sm:$0xf]
      %v1476 = vld [vmem:[%s310 + $0xc] sm:$0xf]
      %v1477 = vld [vmem:[%s310 + $0x10] sm:$0xf]
      %v1478 = vld [vmem:[%s310 + $0x14] sm:$0xf]
      %v1479 = vld [vmem:[%s310 + $0x18] sm:$0xf]
      %v1480 = vld [vmem:[%s310 + $0x1c] sm:$0xf]
      %v1481 = vld [vmem:[%s310 + $0x20] sm:$0xf]
      %v1482 = vld [vmem:[%s310 + $0x24] sm:$0xf]
      %v1484 = vrot.slane %v1363, 1
      %v1495 = vunpack.c.l.b16 %v1473
      %v1496 = vunpack.c.l.b16 %v1474
      %v1497 = vunpack.c.l.b16 %v1475
      %v1498 = vunpack.c.l.b16 %v1476
      %v1499 = vunpack.c.l.b16 %v1477
      %v1500 = vunpack.c.l.b16 %v1478
      %v1501 = vunpack.c.l.b16 %v1479
      %v1502 = vunpack.c.l.b16 %v1480
      %v1503 = vunpack.c.l.b16 %v1481
      %v1504 = vunpack.c.l.b16 %v1482
      %v1505 = vpack.c.b16 %v1496, %v1495
      %v1506 = vpack.c.b16 %v1498, %v1497
      %v1507 = vpack.c.b16 %v1500, %v1499
      %v1508 = vpack.c.b16 %v1502, %v1501
      %v1509 = vpack.c.b16 %v1504, %v1503
      %v1516 = vsel %vm247, %v1484, 0
      %1518 = vmatpush.bf16.msra.mxu0 0
      %1519 = vmatpush.bf16.msra.mxu0 0
      %1520 = vmatpush.bf16.msra.mxu0 0
      %1521 = vmatpush.bf16.msra.mxu0 %v1509
      %1522 = vmatpush.bf16.msra.mxu0 %v1508
      %1523 = vmatpush.bf16.msra.mxu0 %v1507
      %1524 = vmatpush.bf16.msra.mxu0 %v1506
      %1525 = vmatpush.bf16.msra.mxu0 %v1505
      %1526 = vmatmul.bf16.gmra.mxu0 %v1516
      %v1527 = vpop.f32.mrf.mxu0
      %v1528 = vadd.f32 0.0, %v1527
      %v1529 = vpop.f32.mrf.mxu0
      %1530 = vdwg.mxu0
      %v1531 = vadd.f32 %v1470, %v1528
      %v1532 = vld [vmem:[%s1141] sm:$0xf]
      %v1533 = vld [vmem:[%s1141 + $0x4] sm:$0x1]
      %v1534 = vunpack.c.l.bf16 %v1532
      %v1535 = vunpack.c.l.bf16 %v1533
      %v1536 = vpack.c.bf16 %v1534, %v1534
      %v1537 = vld [vmem:[%s376] sm:$0xf]
      %v1538 = vld [vmem:[%s376 + $0x4] sm:$0xf]
      %v1539 = vld [vmem:[%s376 + $0x8] sm:$0xf]
      %v1540 = vld [vmem:[%s376 + $0xc] sm:$0xf]
      %v1541 = vld [vmem:[%s376 + $0x10] sm:$0xf]
      %v1542 = vld [vmem:[%s376 + $0x14] sm:$0xf]
      %v1543 = vld [vmem:[%s376 + $0x18] sm:$0xf]
      %v1544 = vld [vmem:[%s376 + $0x1c] sm:$0xf]
      %v1545 = vld [vmem:[%s376 + $0x20] sm:$0xf]
      %v1546 = vld [vmem:[%s376 + $0x24] sm:$0xf]
      %v1557 = vunpack.c.l.b16 %v1537
      %v1558 = vunpack.c.l.b16 %v1538
      %v1559 = vunpack.c.l.b16 %v1539
      %v1560 = vunpack.c.l.b16 %v1540
      %v1561 = vunpack.c.l.b16 %v1541
      %v1562 = vunpack.c.l.b16 %v1542
      %v1563 = vunpack.c.l.b16 %v1543
      %v1564 = vunpack.c.l.b16 %v1544
      %v1565 = vunpack.c.l.b16 %v1545
      %v1566 = vunpack.c.l.b16 %v1546
      %v1567 = vpack.c.b16 %v1558, %v1557
      %v1568 = vpack.c.b16 %v1560, %v1559
      %v1569 = vpack.c.b16 %v1562, %v1561
      %v1570 = vpack.c.b16 %v1564, %v1563
      %v1571 = vpack.c.b16 %v1566, %v1565
      %v1578 = vsel %vm247, %v1536, 0
      %1580 = vmatpush.bf16.msra.mxu0 0
      %1581 = vmatpush.bf16.msra.mxu0 0
      %1582 = vmatpush.bf16.msra.mxu0 0
      %1583 = vmatpush.bf16.msra.mxu0 %v1571
      %1584 = vmatpush.bf16.msra.mxu0 %v1570
      %1585 = vmatpush.bf16.msra.mxu0 %v1569
      %1586 = vmatpush.bf16.msra.mxu0 %v1568
      %1587 = vmatpush.bf16.msra.mxu0 %v1567
      %1588 = vmatmul.bf16.gmra.mxu0 %v1578
      %v1589 = vpop.f32.mrf.mxu0
      %v1590 = vadd.f32 0.0, %v1589
      %v1591 = vpop.f32.mrf.mxu0
      %1592 = vdwg.mxu0
      %v1593 = vadd.f32 %v1531, %v1590
      %v1594 = vpack.c.bf16 %v1535, %v1534
      %v1595 = vld [vmem:[%s435] sm:$0xf]
      %v1596 = vld [vmem:[%s435 + $0x4] sm:$0xf]
      %v1597 = vld [vmem:[%s435 + $0x8] sm:$0xf]
      %v1598 = vld [vmem:[%s435 + $0xc] sm:$0xf]
      %v1599 = vld [vmem:[%s435 + $0x10] sm:$0xf]
      %v1600 = vld [vmem:[%s435 + $0x14] sm:$0xf]
      %v1601 = vld [vmem:[%s435 + $0x18] sm:$0xf]
      %v1602 = vld [vmem:[%s435 + $0x1c] sm:$0xf]
      %v1603 = vld [vmem:[%s435 + $0x20] sm:$0xf]
      %v1604 = vld [vmem:[%s435 + $0x24] sm:$0xf]
      %v1606 = vshrl.u32 %v1594, 16
      %v1608 = vshll.u32 %v1594, 16
      %v1610 = vrot.slane %v1608, 1
      %v1611 = vor.u32 %v1606, %v1610
      %v1622 = vunpack.c.l.b16 %v1595
      %v1623 = vunpack.c.l.b16 %v1596
      %v1624 = vunpack.c.l.b16 %v1597
      %v1625 = vunpack.c.l.b16 %v1598
      %v1626 = vunpack.c.l.b16 %v1599
      %v1627 = vunpack.c.l.b16 %v1600
      %v1628 = vunpack.c.l.b16 %v1601
      %v1629 = vunpack.c.l.b16 %v1602
      %v1630 = vunpack.c.l.b16 %v1603
      %v1631 = vunpack.c.l.b16 %v1604
      %v1632 = vpack.c.b16 %v1623, %v1622
      %v1633 = vpack.c.b16 %v1625, %v1624
      %v1634 = vpack.c.b16 %v1627, %v1626
      %v1635 = vpack.c.b16 %v1629, %v1628
      %v1636 = vpack.c.b16 %v1631, %v1630
      %v1643 = vsel %vm247, %v1611, 0
      %1645 = vmatpush.bf16.msra.mxu0 0
      %1646 = vmatpush.bf16.msra.mxu0 0
      %1647 = vmatpush.bf16.msra.mxu0 0
      %1648 = vmatpush.bf16.msra.mxu0 %v1636
      %1649 = vmatpush.bf16.msra.mxu0 %v1635
      %1650 = vmatpush.bf16.msra.mxu0 %v1634
      %1651 = vmatpush.bf16.msra.mxu0 %v1633
      %1652 = vmatpush.bf16.msra.mxu0 %v1632
      %1653 = vmatmul.bf16.gmra.mxu0 %v1643
      %v1654 = vpop.f32.mrf.mxu0
      %v1655 = vadd.f32 0.0, %v1654
      %v1656 = vpop.f32.mrf.mxu0
      %1657 = vdwg.mxu0
      %v1658 = vadd.f32 %v1593, %v1655
      %v1659 = vld [vmem:[%s500] sm:$0xf]
      %v1660 = vld [vmem:[%s500 + $0x4] sm:$0xf]
      %v1661 = vld [vmem:[%s500 + $0x8] sm:$0xf]
      %v1662 = vld [vmem:[%s500 + $0xc] sm:$0xf]
      %v1663 = vld [vmem:[%s500 + $0x10] sm:$0xf]
      %v1664 = vld [vmem:[%s500 + $0x14] sm:$0xf]
      %v1665 = vld [vmem:[%s500 + $0x18] sm:$0xf]
      %v1666 = vld [vmem:[%s500 + $0x1c] sm:$0xf]
      %v1667 = vld [vmem:[%s500 + $0x20] sm:$0xf]
      %v1668 = vld [vmem:[%s500 + $0x24] sm:$0xf]
      %v1670 = vrot.slane %v1594, 1
      %v1681 = vunpack.c.l.b16 %v1659
      %v1682 = vunpack.c.l.b16 %v1660
      %v1683 = vunpack.c.l.b16 %v1661
      %v1684 = vunpack.c.l.b16 %v1662
      %v1685 = vunpack.c.l.b16 %v1663
      %v1686 = vunpack.c.l.b16 %v1664
      %v1687 = vunpack.c.l.b16 %v1665
      %v1688 = vunpack.c.l.b16 %v1666
      %v1689 = vunpack.c.l.b16 %v1667
      %v1690 = vunpack.c.l.b16 %v1668
      %v1691 = vpack.c.b16 %v1682, %v1681
      %v1692 = vpack.c.b16 %v1684, %v1683
      %v1693 = vpack.c.b16 %v1686, %v1685
      %v1694 = vpack.c.b16 %v1688, %v1687
      %v1695 = vpack.c.b16 %v1690, %v1689
      %v1702 = vsel %vm247, %v1670, 0
      %1704 = vmatpush.bf16.msra.mxu0 0
      %1705 = vmatpush.bf16.msra.mxu0 0
      %1706 = vmatpush.bf16.msra.mxu0 0
      %1707 = vmatpush.bf16.msra.mxu0 %v1695
      %1708 = vmatpush.bf16.msra.mxu0 %v1694
      %1709 = vmatpush.bf16.msra.mxu0 %v1693
      %1710 = vmatpush.bf16.msra.mxu0 %v1692
      %1711 = vmatpush.bf16.msra.mxu0 %v1691
      %1712 = vmatmul.bf16.gmra.mxu0 %v1702
      %v1713 = vpop.f32.mrf.mxu0
      %v1714 = vadd.f32 0.0, %v1713
      %v1715 = vpop.f32.mrf.mxu0
      %1716 = vdwg.mxu0
      %v1717 = vadd.f32 %v1658, %v1714
      %s1718 = scalar_lea.vmem %s172, 32
      %v1719 = vld [vmem:[%s1718] sm:$0xf]
      %v1720 = vld [vmem:[%s1718 + $0x4] sm:$0x1]
      %v1721 = vunpack.c.l.bf16 %v1719
      %v1722 = vunpack.c.l.bf16 %v1720
      %v1723 = vpack.c.bf16 %v1721, %v1721
      %v1724 = vld [vmem:[%s566] sm:$0xf]
      %v1725 = vld [vmem:[%s566 + $0x4] sm:$0xf]
      %v1726 = vld [vmem:[%s566 + $0x8] sm:$0xf]
      %v1727 = vld [vmem:[%s566 + $0xc] sm:$0xf]
      %v1728 = vld [vmem:[%s566 + $0x10] sm:$0xf]
      %v1729 = vld [vmem:[%s566 + $0x14] sm:$0xf]
      %v1730 = vld [vmem:[%s566 + $0x18] sm:$0xf]
      %v1731 = vld [vmem:[%s566 + $0x1c] sm:$0xf]
      %v1732 = vld [vmem:[%s566 + $0x20] sm:$0xf]
      %v1733 = vld [vmem:[%s566 + $0x24] sm:$0xf]
      %v1744 = vunpack.c.l.b16 %v1724
      %v1745 = vunpack.c.l.b16 %v1725
      %v1746 = vunpack.c.l.b16 %v1726
      %v1747 = vunpack.c.l.b16 %v1727
      %v1748 = vunpack.c.l.b16 %v1728
      %v1749 = vunpack.c.l.b16 %v1729
      %v1750 = vunpack.c.l.b16 %v1730
      %v1751 = vunpack.c.l.b16 %v1731
      %v1752 = vunpack.c.l.b16 %v1732
      %v1753 = vunpack.c.l.b16 %v1733
      %v1754 = vpack.c.b16 %v1745, %v1744
      %v1755 = vpack.c.b16 %v1747, %v1746
      %v1756 = vpack.c.b16 %v1749, %v1748
      %v1757 = vpack.c.b16 %v1751, %v1750
      %v1758 = vpack.c.b16 %v1753, %v1752
      %v1765 = vsel %vm247, %v1723, 0
      %1767 = vmatpush.bf16.msra.mxu0 0
      %1768 = vmatpush.bf16.msra.mxu0 0
      %1769 = vmatpush.bf16.msra.mxu0 0
      %1770 = vmatpush.bf16.msra.mxu0 %v1758
      %1771 = vmatpush.bf16.msra.mxu0 %v1757
      %1772 = vmatpush.bf16.msra.mxu0 %v1756
      %1773 = vmatpush.bf16.msra.mxu0 %v1755
      %1774 = vmatpush.bf16.msra.mxu0 %v1754
      %1775 = vmatmul.bf16.gmra.mxu0 %v1765
      %v1776 = vpop.f32.mrf.mxu0
      %v1777 = vadd.f32 0.0, %v1776
      %v1778 = vpop.f32.mrf.mxu0
      %1779 = vdwg.mxu0
      %v1780 = vadd.f32 %v1717, %v1777
      %v1781 = vpack.c.bf16 %v1722, %v1721
      %v1782 = vld [vmem:[%s625] sm:$0xf]
      %v1783 = vld [vmem:[%s625 + $0x4] sm:$0xf]
      %v1784 = vld [vmem:[%s625 + $0x8] sm:$0xf]
      %v1785 = vld [vmem:[%s625 + $0xc] sm:$0xf]
      %v1786 = vld [vmem:[%s625 + $0x10] sm:$0xf]
      %v1787 = vld [vmem:[%s625 + $0x14] sm:$0xf]
      %v1788 = vld [vmem:[%s625 + $0x18] sm:$0xf]
      %v1789 = vld [vmem:[%s625 + $0x1c] sm:$0xf]
      %v1790 = vld [vmem:[%s625 + $0x20] sm:$0xf]
      %v1791 = vld [vmem:[%s625 + $0x24] sm:$0xf]
      %v1793 = vshrl.u32 %v1781, 16
      %v1795 = vshll.u32 %v1781, 16
      %v1797 = vrot.slane %v1795, 1
      %v1798 = vor.u32 %v1793, %v1797
      %v1809 = vunpack.c.l.b16 %v1782
      %v1810 = vunpack.c.l.b16 %v1783
      %v1811 = vunpack.c.l.b16 %v1784
      %v1812 = vunpack.c.l.b16 %v1785
      %v1813 = vunpack.c.l.b16 %v1786
      %v1814 = vunpack.c.l.b16 %v1787
      %v1815 = vunpack.c.l.b16 %v1788
      %v1816 = vunpack.c.l.b16 %v1789
      %v1817 = vunpack.c.l.b16 %v1790
      %v1818 = vunpack.c.l.b16 %v1791
      %v1819 = vpack.c.b16 %v1810, %v1809
      %v1820 = vpack.c.b16 %v1812, %v1811
      %v1821 = vpack.c.b16 %v1814, %v1813
      %v1822 = vpack.c.b16 %v1816, %v1815
      %v1823 = vpack.c.b16 %v1818, %v1817
      %v1830 = vsel %vm247, %v1798, 0
      %1832 = vmatpush.bf16.msra.mxu0 0
      %1833 = vmatpush.bf16.msra.mxu0 0
      %1834 = vmatpush.bf16.msra.mxu0 0
      %1835 = vmatpush.bf16.msra.mxu0 %v1823
      %1836 = vmatpush.bf16.msra.mxu0 %v1822
      %1837 = vmatpush.bf16.msra.mxu0 %v1821
      %1838 = vmatpush.bf16.msra.mxu0 %v1820
      %1839 = vmatpush.bf16.msra.mxu0 %v1819
      %1840 = vmatmul.bf16.gmra.mxu0 %v1830
      %v1841 = vpop.f32.mrf.mxu0
      %v1842 = vadd.f32 0.0, %v1841
      %v1843 = vpop.f32.mrf.mxu0
      %1844 = vdwg.mxu0
      %v1845 = vadd.f32 %v1780, %v1842
      %v1846 = vld [vmem:[%s690] sm:$0xf]
      %v1847 = vld [vmem:[%s690 + $0x4] sm:$0xf]
      %v1848 = vld [vmem:[%s690 + $0x8] sm:$0xf]
      %v1849 = vld [vmem:[%s690 + $0xc] sm:$0xf]
      %v1850 = vld [vmem:[%s690 + $0x10] sm:$0xf]
      %v1851 = vld [vmem:[%s690 + $0x14] sm:$0xf]
      %v1852 = vld [vmem:[%s690 + $0x18] sm:$0xf]
      %v1853 = vld [vmem:[%s690 + $0x1c] sm:$0xf]
      %v1854 = vld [vmem:[%s690 + $0x20] sm:$0xf]
      %v1855 = vld [vmem:[%s690 + $0x24] sm:$0xf]
      %v1857 = vrot.slane %v1781, 1
      %v1868 = vunpack.c.l.b16 %v1846
      %v1869 = vunpack.c.l.b16 %v1847
      %v1870 = vunpack.c.l.b16 %v1848
      %v1871 = vunpack.c.l.b16 %v1849
      %v1872 = vunpack.c.l.b16 %v1850
      %v1873 = vunpack.c.l.b16 %v1851
      %v1874 = vunpack.c.l.b16 %v1852
      %v1875 = vunpack.c.l.b16 %v1853
      %v1876 = vunpack.c.l.b16 %v1854
      %v1877 = vunpack.c.l.b16 %v1855
      %v1878 = vpack.c.b16 %v1869, %v1868
      %v1879 = vpack.c.b16 %v1871, %v1870
      %v1880 = vpack.c.b16 %v1873, %v1872
      %v1881 = vpack.c.b16 %v1875, %v1874
      %v1882 = vpack.c.b16 %v1877, %v1876
      %v1889 = vsel %vm247, %v1857, 0
      %1891 = vmatpush.bf16.msra.mxu0 0
      %1892 = vmatpush.bf16.msra.mxu0 0
      %1893 = vmatpush.bf16.msra.mxu0 0
      %1894 = vmatpush.bf16.msra.mxu0 %v1882
      %1895 = vmatpush.bf16.msra.mxu0 %v1881
      %1896 = vmatpush.bf16.msra.mxu0 %v1880
      %1897 = vmatpush.bf16.msra.mxu0 %v1879
      %1898 = vmatpush.bf16.msra.mxu0 %v1878
      %1899 = vmatmul.bf16.gmra.mxu0 %v1889
      %v1900 = vpop.f32.mrf.mxu0
      %v1901 = vadd.f32 0.0, %v1900
      %v1902 = vpop.f32.mrf.mxu0
      %1903 = vdwg.mxu0
      %v1904 = vadd.f32 %v1845, %v1901
      %v1905 = vpack.c.bf16 %v1904, %v1904
      %s1906 = scalar_lea.vmem %s177, 8
      %1907 = vst.msk [vmem:[%s1906] sm:$0xf] %vm751, %v1905
      %v1908 = vsel %vm753, %v1904, 0.0
      %v1909 = vrot.slane %v1908, 4
      %v1910 = vadd.f32 %v1908, %v1909
      %v1911 = vrot.slane %v1910, 2
      %v1912 = vadd.f32 %v1910, %v1911
      %v1913 = vrot.slane %v1912, 1
      %v1914 = vadd.f32 %v1912, %v1913
      %v1915 = vadd.f32 %v1338, %v1914
      %v1916 = vmul.f32 %v1904, %v1904
      %v1917 = vsel %vm753, %v1916, 0.0
      %v1918 = vrot.slane %v1917, 4
      %v1919 = vadd.f32 %v1917, %v1918
      %v1920 = vrot.slane %v1919, 2
      %v1921 = vadd.f32 %v1919, %v1920
      %v1922 = vrot.slane %v1921, 1
      %v1923 = vadd.f32 %v1921, %v1922
      %v1924 = vadd.f32 %v1347, %v1923
      %v1925 = vld [vmem:[%s1141] sm:$0xf]
      %v1926 = vld [vmem:[%s1141 + $0x4] sm:$0x1]
      %v1927 = vunpack.c.l.bf16 %v1925
      %v1928 = vunpack.c.l.bf16 %v1926
      %v1929 = vpack.c.bf16 %v1927, %v1927
      %v1930 = vld [vmem:[%s1] sm:$0xf]
      %v1931 = vld [vmem:[%s1 + $0x4] sm:$0xf]
      %v1932 = vld [vmem:[%s1 + $0x8] sm:$0xf]
      %v1933 = vld [vmem:[%s1 + $0xc] sm:$0xf]
      %v1934 = vld [vmem:[%s1 + $0x10] sm:$0xf]
      %v1935 = vld [vmem:[%s1 + $0x14] sm:$0xf]
      %v1936 = vld [vmem:[%s1 + $0x18] sm:$0xf]
      %v1937 = vld [vmem:[%s1 + $0x1c] sm:$0xf]
      %v1938 = vld [vmem:[%s1 + $0x20] sm:$0xf]
      %v1939 = vld [vmem:[%s1 + $0x24] sm:$0xf]
      %v1940 = vpack.c.bf16 %v1928, %v1927
      %v1941 = vld [vmem:[%s199] sm:$0xf]
      %v1942 = vld [vmem:[%s199 + $0x4] sm:$0xf]
      %v1943 = vld [vmem:[%s199 + $0x8] sm:$0xf]
      %v1944 = vld [vmem:[%s199 + $0xc] sm:$0xf]
      %v1945 = vld [vmem:[%s199 + $0x10] sm:$0xf]
      %v1946 = vld [vmem:[%s199 + $0x14] sm:$0xf]
      %v1947 = vld [vmem:[%s199 + $0x18] sm:$0xf]
      %v1948 = vld [vmem:[%s199 + $0x1c] sm:$0xf]
      %v1949 = vld [vmem:[%s199 + $0x20] sm:$0xf]
      %v1950 = vld [vmem:[%s199 + $0x24] sm:$0xf]
      %v1952 = vshrl.u32 %v1940, 16
      %v1954 = vshll.u32 %v1940, 16
      %v1956 = vrot.slane %v1954, 1
      %v1957 = vor.u32 %v1952, %v1956
      %v1968 = vunpack.c.l.b16 %v1941
      %v1969 = vunpack.c.l.b16 %v1942
      %v1970 = vunpack.c.l.b16 %v1943
      %v1971 = vunpack.c.l.b16 %v1944
      %v1972 = vunpack.c.l.b16 %v1945
      %v1973 = vunpack.c.l.b16 %v1946
      %v1974 = vunpack.c.l.b16 %v1947
      %v1975 = vunpack.c.l.b16 %v1948
      %v1976 = vunpack.c.l.b16 %v1949
      %v1977 = vunpack.c.l.b16 %v1950
      %v1978 = vpack.c.b16 %v1969, %v1968
      %v1979 = vpack.c.b16 %v1971, %v1970
      %v1980 = vpack.c.b16 %v1973, %v1972
      %v1981 = vpack.c.b16 %v1975, %v1974
      %v1982 = vpack.c.b16 %v1977, %v1976
      %v1989 = vsel %vm247, %v1957, 0
      %1991 = vmatpush.bf16.msra.mxu0 0
      %1992 = vmatpush.bf16.msra.mxu0 0
      %1993 = vmatpush.bf16.msra.mxu0 0
      %1994 = vmatpush.bf16.msra.mxu0 %v1982
      %1995 = vmatpush.bf16.msra.mxu0 %v1981
      %1996 = vmatpush.bf16.msra.mxu0 %v1980
      %1997 = vmatpush.bf16.msra.mxu0 %v1979
      %1998 = vmatpush.bf16.msra.mxu0 %v1978
      %1999 = vmatmul.bf16.gmra.mxu0 %v1989
      %v2000 = vpop.f32.mrf.mxu0
      %v2001 = vadd.f32 0.0, %v2000
      %v2002 = vpop.f32.mrf.mxu0
      %2003 = vdwg.mxu0
      %v2014 = vunpack.c.l.b16 %v1930
      %v2015 = vunpack.c.l.b16 %v1931
      %v2016 = vunpack.c.l.b16 %v1932
      %v2017 = vunpack.c.l.b16 %v1933
      %v2018 = vunpack.c.l.b16 %v1934
      %v2019 = vunpack.c.l.b16 %v1935
      %v2020 = vunpack.c.l.b16 %v1936
      %v2021 = vunpack.c.l.b16 %v1937
      %v2022 = vunpack.c.l.b16 %v1938
      %v2023 = vunpack.c.l.b16 %v1939
      %v2024 = vpack.c.b16 %v2015, %v2014
      %v2025 = vpack.c.b16 %v2017, %v2016
      %v2026 = vpack.c.b16 %v2019, %v2018
      %v2027 = vpack.c.b16 %v2021, %v2020
      %v2028 = vpack.c.b16 %v2023, %v2022
      %v2035 = vsel %vm247, %v1929, 0
      %2037 = vmatpush.bf16.msra.mxu0 0
      %2038 = vmatpush.bf16.msra.mxu0 0
      %2039 = vmatpush.bf16.msra.mxu0 0
      %2040 = vmatpush.bf16.msra.mxu0 %v2028
      %2041 = vmatpush.bf16.msra.mxu0 %v2027
      %2042 = vmatpush.bf16.msra.mxu0 %v2026
      %2043 = vmatpush.bf16.msra.mxu0 %v2025
      %2044 = vmatpush.bf16.msra.mxu0 %v2024
      %2045 = vmatmul.bf16.gmra.mxu0 %v2035
      %v2046 = vpop.f32.mrf.mxu0
      %v2047 = vadd.f32 %v2001, %v2046
      %v2048 = vpop.f32.mrf.mxu0
      %2049 = vdwg.mxu0
      %v2050 = vld [vmem:[%s310] sm:$0xf]
      %v2051 = vld [vmem:[%s310 + $0x4] sm:$0xf]
      %v2052 = vld [vmem:[%s310 + $0x8] sm:$0xf]
      %v2053 = vld [vmem:[%s310 + $0xc] sm:$0xf]
      %v2054 = vld [vmem:[%s310 + $0x10] sm:$0xf]
      %v2055 = vld [vmem:[%s310 + $0x14] sm:$0xf]
      %v2056 = vld [vmem:[%s310 + $0x18] sm:$0xf]
      %v2057 = vld [vmem:[%s310 + $0x1c] sm:$0xf]
      %v2058 = vld [vmem:[%s310 + $0x20] sm:$0xf]
      %v2059 = vld [vmem:[%s310 + $0x24] sm:$0xf]
      %v2061 = vrot.slane %v1940, 1
      %v2072 = vunpack.c.l.b16 %v2050
      %v2073 = vunpack.c.l.b16 %v2051
      %v2074 = vunpack.c.l.b16 %v2052
      %v2075 = vunpack.c.l.b16 %v2053
      %v2076 = vunpack.c.l.b16 %v2054
      %v2077 = vunpack.c.l.b16 %v2055
      %v2078 = vunpack.c.l.b16 %v2056
      %v2079 = vunpack.c.l.b16 %v2057
      %v2080 = vunpack.c.l.b16 %v2058
      %v2081 = vunpack.c.l.b16 %v2059
      %v2082 = vpack.c.b16 %v2073, %v2072
      %v2083 = vpack.c.b16 %v2075, %v2074
      %v2084 = vpack.c.b16 %v2077, %v2076
      %v2085 = vpack.c.b16 %v2079, %v2078
      %v2086 = vpack.c.b16 %v2081, %v2080
      %v2093 = vsel %vm247, %v2061, 0
      %2095 = vmatpush.bf16.msra.mxu0 0
      %2096 = vmatpush.bf16.msra.mxu0 0
      %2097 = vmatpush.bf16.msra.mxu0 0
      %2098 = vmatpush.bf16.msra.mxu0 %v2086
      %2099 = vmatpush.bf16.msra.mxu0 %v2085
      %2100 = vmatpush.bf16.msra.mxu0 %v2084
      %2101 = vmatpush.bf16.msra.mxu0 %v2083
      %2102 = vmatpush.bf16.msra.mxu0 %v2082
      %2103 = vmatmul.bf16.gmra.mxu0 %v2093
      %v2104 = vpop.f32.mrf.mxu0
      %v2105 = vadd.f32 0.0, %v2104
      %v2106 = vpop.f32.mrf.mxu0
      %2107 = vdwg.mxu0
      %v2108 = vadd.f32 %v2047, %v2105
      %v2109 = vld [vmem:[%s1718] sm:$0xf]
      %v2110 = vld [vmem:[%s1718 + $0x4] sm:$0x1]
      %v2111 = vunpack.c.l.bf16 %v2109
      %v2112 = vunpack.c.l.bf16 %v2110
      %v2113 = vpack.c.bf16 %v2111, %v2111
      %v2114 = vld [vmem:[%s376] sm:$0xf]
      %v2115 = vld [vmem:[%s376 + $0x4] sm:$0xf]
      %v2116 = vld [vmem:[%s376 + $0x8] sm:$0xf]
      %v2117 = vld [vmem:[%s376 + $0xc] sm:$0xf]
      %v2118 = vld [vmem:[%s376 + $0x10] sm:$0xf]
      %v2119 = vld [vmem:[%s376 + $0x14] sm:$0xf]
      %v2120 = vld [vmem:[%s376 + $0x18] sm:$0xf]
      %v2121 = vld [vmem:[%s376 + $0x1c] sm:$0xf]
      %v2122 = vld [vmem:[%s376 + $0x20] sm:$0xf]
      %v2123 = vld [vmem:[%s376 + $0x24] sm:$0xf]
      %v2134 = vunpack.c.l.b16 %v2114
      %v2135 = vunpack.c.l.b16 %v2115
      %v2136 = vunpack.c.l.b16 %v2116
      %v2137 = vunpack.c.l.b16 %v2117
      %v2138 = vunpack.c.l.b16 %v2118
      %v2139 = vunpack.c.l.b16 %v2119
      %v2140 = vunpack.c.l.b16 %v2120
      %v2141 = vunpack.c.l.b16 %v2121
      %v2142 = vunpack.c.l.b16 %v2122
      %v2143 = vunpack.c.l.b16 %v2123
      %v2144 = vpack.c.b16 %v2135, %v2134
      %v2145 = vpack.c.b16 %v2137, %v2136
      %v2146 = vpack.c.b16 %v2139, %v2138
      %v2147 = vpack.c.b16 %v2141, %v2140
      %v2148 = vpack.c.b16 %v2143, %v2142
      %v2155 = vsel %vm247, %v2113, 0
      %2157 = vmatpush.bf16.msra.mxu0 0
      %2158 = vmatpush.bf16.msra.mxu0 0
      %2159 = vmatpush.bf16.msra.mxu0 0
      %2160 = vmatpush.bf16.msra.mxu0 %v2148
      %2161 = vmatpush.bf16.msra.mxu0 %v2147
      %2162 = vmatpush.bf16.msra.mxu0 %v2146
      %2163 = vmatpush.bf16.msra.mxu0 %v2145
      %2164 = vmatpush.bf16.msra.mxu0 %v2144
      %2165 = vmatmul.bf16.gmra.mxu0 %v2155
      %v2166 = vpop.f32.mrf.mxu0
      %v2167 = vadd.f32 0.0, %v2166
      %v2168 = vpop.f32.mrf.mxu0
      %2169 = vdwg.mxu0
      %v2170 = vadd.f32 %v2108, %v2167
      %v2171 = vpack.c.bf16 %v2112, %v2111
      %v2172 = vld [vmem:[%s435] sm:$0xf]
      %v2173 = vld [vmem:[%s435 + $0x4] sm:$0xf]
      %v2174 = vld [vmem:[%s435 + $0x8] sm:$0xf]
      %v2175 = vld [vmem:[%s435 + $0xc] sm:$0xf]
      %v2176 = vld [vmem:[%s435 + $0x10] sm:$0xf]
      %v2177 = vld [vmem:[%s435 + $0x14] sm:$0xf]
      %v2178 = vld [vmem:[%s435 + $0x18] sm:$0xf]
      %v2179 = vld [vmem:[%s435 + $0x1c] sm:$0xf]
      %v2180 = vld [vmem:[%s435 + $0x20] sm:$0xf]
      %v2181 = vld [vmem:[%s435 + $0x24] sm:$0xf]
      %v2183 = vshrl.u32 %v2171, 16
      %v2185 = vshll.u32 %v2171, 16
      %v2187 = vrot.slane %v2185, 1
      %v2188 = vor.u32 %v2183, %v2187
      %v2199 = vunpack.c.l.b16 %v2172
      %v2200 = vunpack.c.l.b16 %v2173
      %v2201 = vunpack.c.l.b16 %v2174
      %v2202 = vunpack.c.l.b16 %v2175
      %v2203 = vunpack.c.l.b16 %v2176
      %v2204 = vunpack.c.l.b16 %v2177
      %v2205 = vunpack.c.l.b16 %v2178
      %v2206 = vunpack.c.l.b16 %v2179
      %v2207 = vunpack.c.l.b16 %v2180
      %v2208 = vunpack.c.l.b16 %v2181
      %v2209 = vpack.c.b16 %v2200, %v2199
      %v2210 = vpack.c.b16 %v2202, %v2201
      %v2211 = vpack.c.b16 %v2204, %v2203
      %v2212 = vpack.c.b16 %v2206, %v2205
      %v2213 = vpack.c.b16 %v2208, %v2207
      %v2220 = vsel %vm247, %v2188, 0
      %2222 = vmatpush.bf16.msra.mxu0 0
      %2223 = vmatpush.bf16.msra.mxu0 0
      %2224 = vmatpush.bf16.msra.mxu0 0
      %2225 = vmatpush.bf16.msra.mxu0 %v2213
      %2226 = vmatpush.bf16.msra.mxu0 %v2212
      %2227 = vmatpush.bf16.msra.mxu0 %v2211
      %2228 = vmatpush.bf16.msra.mxu0 %v2210
      %2229 = vmatpush.bf16.msra.mxu0 %v2209
      %2230 = vmatmul.bf16.gmra.mxu0 %v2220
      %v2231 = vpop.f32.mrf.mxu0
      %v2232 = vadd.f32 0.0, %v2231
      %v2233 = vpop.f32.mrf.mxu0
      %2234 = vdwg.mxu0
      %v2235 = vadd.f32 %v2170, %v2232
      %v2236 = vld [vmem:[%s500] sm:$0xf]
      %v2237 = vld [vmem:[%s500 + $0x4] sm:$0xf]
      %v2238 = vld [vmem:[%s500 + $0x8] sm:$0xf]
      %v2239 = vld [vmem:[%s500 + $0xc] sm:$0xf]
      %v2240 = vld [vmem:[%s500 + $0x10] sm:$0xf]
      %v2241 = vld [vmem:[%s500 + $0x14] sm:$0xf]
      %v2242 = vld [vmem:[%s500 + $0x18] sm:$0xf]
      %v2243 = vld [vmem:[%s500 + $0x1c] sm:$0xf]
      %v2244 = vld [vmem:[%s500 + $0x20] sm:$0xf]
      %v2245 = vld [vmem:[%s500 + $0x24] sm:$0xf]
      %v2247 = vrot.slane %v2171, 1
      %v2258 = vunpack.c.l.b16 %v2236
      %v2259 = vunpack.c.l.b16 %v2237
      %v2260 = vunpack.c.l.b16 %v2238
      %v2261 = vunpack.c.l.b16 %v2239
      %v2262 = vunpack.c.l.b16 %v2240
      %v2263 = vunpack.c.l.b16 %v2241
      %v2264 = vunpack.c.l.b16 %v2242
      %v2265 = vunpack.c.l.b16 %v2243
      %v2266 = vunpack.c.l.b16 %v2244
      %v2267 = vunpack.c.l.b16 %v2245
      %v2268 = vpack.c.b16 %v2259, %v2258
      %v2269 = vpack.c.b16 %v2261, %v2260
      %v2270 = vpack.c.b16 %v2263, %v2262
      %v2271 = vpack.c.b16 %v2265, %v2264
      %v2272 = vpack.c.b16 %v2267, %v2266
      %v2279 = vsel %vm247, %v2247, 0
      %2281 = vmatpush.bf16.msra.mxu0 0
      %2282 = vmatpush.bf16.msra.mxu0 0
      %2283 = vmatpush.bf16.msra.mxu0 0
      %2284 = vmatpush.bf16.msra.mxu0 %v2272
      %2285 = vmatpush.bf16.msra.mxu0 %v2271
      %2286 = vmatpush.bf16.msra.mxu0 %v2270
      %2287 = vmatpush.bf16.msra.mxu0 %v2269
      %2288 = vmatpush.bf16.msra.mxu0 %v2268
      %2289 = vmatmul.bf16.gmra.mxu0 %v2279
      %v2290 = vpop.f32.mrf.mxu0
      %v2291 = vadd.f32 0.0, %v2290
      %v2292 = vpop.f32.mrf.mxu0
      %2293 = vdwg.mxu0
      %v2294 = vadd.f32 %v2235, %v2291
      %s2295 = scalar_lea.vmem %s172, 40
      %v2296 = vld [vmem:[%s2295] sm:$0xf]
      %v2297 = vld [vmem:[%s2295 + $0x4] sm:$0x1]
      %v2298 = vunpack.c.l.bf16 %v2296
      %v2299 = vunpack.c.l.bf16 %v2297
      %v2300 = vpack.c.bf16 %v2298, %v2298
      %v2301 = vld [vmem:[%s566] sm:$0xf]
      %v2302 = vld [vmem:[%s566 + $0x4] sm:$0xf]
      %v2303 = vld [vmem:[%s566 + $0x8] sm:$0xf]
      %v2304 = vld [vmem:[%s566 + $0xc] sm:$0xf]
      %v2305 = vld [vmem:[%s566 + $0x10] sm:$0xf]
      %v2306 = vld [vmem:[%s566 + $0x14] sm:$0xf]
      %v2307 = vld [vmem:[%s566 + $0x18] sm:$0xf]
      %v2308 = vld [vmem:[%s566 + $0x1c] sm:$0xf]
      %v2309 = vld [vmem:[%s566 + $0x20] sm:$0xf]
      %v2310 = vld [vmem:[%s566 + $0x24] sm:$0xf]
      %v2321 = vunpack.c.l.b16 %v2301
      %v2322 = vunpack.c.l.b16 %v2302
      %v2323 = vunpack.c.l.b16 %v2303
      %v2324 = vunpack.c.l.b16 %v2304
      %v2325 = vunpack.c.l.b16 %v2305
      %v2326 = vunpack.c.l.b16 %v2306
      %v2327 = vunpack.c.l.b16 %v2307
      %v2328 = vunpack.c.l.b16 %v2308
      %v2329 = vunpack.c.l.b16 %v2309
      %v2330 = vunpack.c.l.b16 %v2310
      %v2331 = vpack.c.b16 %v2322, %v2321
      %v2332 = vpack.c.b16 %v2324, %v2323
      %v2333 = vpack.c.b16 %v2326, %v2325
      %v2334 = vpack.c.b16 %v2328, %v2327
      %v2335 = vpack.c.b16 %v2330, %v2329
      %v2342 = vsel %vm247, %v2300, 0
      %2344 = vmatpush.bf16.msra.mxu0 0
      %2345 = vmatpush.bf16.msra.mxu0 0
      %2346 = vmatpush.bf16.msra.mxu0 0
      %2347 = vmatpush.bf16.msra.mxu0 %v2335
      %2348 = vmatpush.bf16.msra.mxu0 %v2334
      %2349 = vmatpush.bf16.msra.mxu0 %v2333
      %2350 = vmatpush.bf16.msra.mxu0 %v2332
      %2351 = vmatpush.bf16.msra.mxu0 %v2331
      %2352 = vmatmul.bf16.gmra.mxu0 %v2342
      %v2353 = vpop.f32.mrf.mxu0
      %v2354 = vadd.f32 0.0, %v2353
      %v2355 = vpop.f32.mrf.mxu0
      %2356 = vdwg.mxu0
      %v2357 = vadd.f32 %v2294, %v2354
      %v2358 = vpack.c.bf16 %v2299, %v2298
      %v2359 = vld [vmem:[%s625] sm:$0xf]
      %v2360 = vld [vmem:[%s625 + $0x4] sm:$0xf]
      %v2361 = vld [vmem:[%s625 + $0x8] sm:$0xf]
      %v2362 = vld [vmem:[%s625 + $0xc] sm:$0xf]
      %v2363 = vld [vmem:[%s625 + $0x10] sm:$0xf]
      %v2364 = vld [vmem:[%s625 + $0x14] sm:$0xf]
      %v2365 = vld [vmem:[%s625 + $0x18] sm:$0xf]
      %v2366 = vld [vmem:[%s625 + $0x1c] sm:$0xf]
      %v2367 = vld [vmem:[%s625 + $0x20] sm:$0xf]
      %v2368 = vld [vmem:[%s625 + $0x24] sm:$0xf]
      %v2370 = vshrl.u32 %v2358, 16
      %v2372 = vshll.u32 %v2358, 16
      %v2374 = vrot.slane %v2372, 1
      %v2375 = vor.u32 %v2370, %v2374
      %v2386 = vunpack.c.l.b16 %v2359
      %v2387 = vunpack.c.l.b16 %v2360
      %v2388 = vunpack.c.l.b16 %v2361
      %v2389 = vunpack.c.l.b16 %v2362
      %v2390 = vunpack.c.l.b16 %v2363
      %v2391 = vunpack.c.l.b16 %v2364
      %v2392 = vunpack.c.l.b16 %v2365
      %v2393 = vunpack.c.l.b16 %v2366
      %v2394 = vunpack.c.l.b16 %v2367
      %v2395 = vunpack.c.l.b16 %v2368
      %v2396 = vpack.c.b16 %v2387, %v2386
      %v2397 = vpack.c.b16 %v2389, %v2388
      %v2398 = vpack.c.b16 %v2391, %v2390
      %v2399 = vpack.c.b16 %v2393, %v2392
      %v2400 = vpack.c.b16 %v2395, %v2394
      %v2407 = vsel %vm247, %v2375, 0
      %2409 = vmatpush.bf16.msra.mxu0 0
      %2410 = vmatpush.bf16.msra.mxu0 0
      %2411 = vmatpush.bf16.msra.mxu0 0
      %2412 = vmatpush.bf16.msra.mxu0 %v2400
      %2413 = vmatpush.bf16.msra.mxu0 %v2399
      %2414 = vmatpush.bf16.msra.mxu0 %v2398
      %2415 = vmatpush.bf16.msra.mxu0 %v2397
      %2416 = vmatpush.bf16.msra.mxu0 %v2396
      %2417 = vmatmul.bf16.gmra.mxu0 %v2407
      %v2418 = vpop.f32.mrf.mxu0
      %v2419 = vadd.f32 0.0, %v2418
      %v2420 = vpop.f32.mrf.mxu0
      %2421 = vdwg.mxu0
      %v2422 = vadd.f32 %v2357, %v2419
      %v2423 = vld [vmem:[%s690] sm:$0xf]
      %v2424 = vld [vmem:[%s690 + $0x4] sm:$0xf]
      %v2425 = vld [vmem:[%s690 + $0x8] sm:$0xf]
      %v2426 = vld [vmem:[%s690 + $0xc] sm:$0xf]
      %v2427 = vld [vmem:[%s690 + $0x10] sm:$0xf]
      %v2428 = vld [vmem:[%s690 + $0x14] sm:$0xf]
      %v2429 = vld [vmem:[%s690 + $0x18] sm:$0xf]
      %v2430 = vld [vmem:[%s690 + $0x1c] sm:$0xf]
      %v2431 = vld [vmem:[%s690 + $0x20] sm:$0xf]
      %v2432 = vld [vmem:[%s690 + $0x24] sm:$0xf]
      %v2434 = vrot.slane %v2358, 1
      %v2445 = vunpack.c.l.b16 %v2423
      %v2446 = vunpack.c.l.b16 %v2424
      %v2447 = vunpack.c.l.b16 %v2425
      %v2448 = vunpack.c.l.b16 %v2426
      %v2449 = vunpack.c.l.b16 %v2427
      %v2450 = vunpack.c.l.b16 %v2428
      %v2451 = vunpack.c.l.b16 %v2429
      %v2452 = vunpack.c.l.b16 %v2430
      %v2453 = vunpack.c.l.b16 %v2431
      %v2454 = vunpack.c.l.b16 %v2432
      %v2455 = vpack.c.b16 %v2446, %v2445
      %v2456 = vpack.c.b16 %v2448, %v2447
      %v2457 = vpack.c.b16 %v2450, %v2449
      %v2458 = vpack.c.b16 %v2452, %v2451
      %v2459 = vpack.c.b16 %v2454, %v2453
      %v2466 = vsel %vm247, %v2434, 0
      %2468 = vmatpush.bf16.msra.mxu0 0
      %2469 = vmatpush.bf16.msra.mxu0 0
      %2470 = vmatpush.bf16.msra.mxu0 0
      %2471 = vmatpush.bf16.msra.mxu0 %v2459
      %2472 = vmatpush.bf16.msra.mxu0 %v2458
      %2473 = vmatpush.bf16.msra.mxu0 %v2457
      %2474 = vmatpush.bf16.msra.mxu0 %v2456
      %2475 = vmatpush.bf16.msra.mxu0 %v2455
      %2476 = vmatmul.bf16.gmra.mxu0 %v2466
      %v2477 = vpop.f32.mrf.mxu0
      %v2478 = vadd.f32 0.0, %v2477
      %v2479 = vpop.f32.mrf.mxu0
      %2480 = vdwg.mxu0
      %v2481 = vadd.f32 %v2422, %v2478
      %v2482 = vpack.c.bf16 %v2481, %v2481
      %s2483 = scalar_lea.vmem %s177, 12
      %2484 = vst.msk [vmem:[%s2483] sm:$0xf] %vm751, %v2482
      %v2485 = vsel %vm753, %v2481, 0.0
      %v2486 = vrot.slane %v2485, 4
      %v2487 = vadd.f32 %v2485, %v2486
      %v2488 = vrot.slane %v2487, 2
      %v2489 = vadd.f32 %v2487, %v2488
      %v2490 = vrot.slane %v2489, 1
      %v2491 = vadd.f32 %v2489, %v2490
      %v2492 = vadd.f32 %v1915, %v2491
      %v2493 = vmul.f32 %v2481, %v2481
      %v2494 = vsel %vm753, %v2493, 0.0
      %v2495 = vrot.slane %v2494, 4
      %v2496 = vadd.f32 %v2494, %v2495
      %v2497 = vrot.slane %v2496, 2
      %v2498 = vadd.f32 %v2496, %v2497
      %v2499 = vrot.slane %v2498, 1
      %v2500 = vadd.f32 %v2498, %v2499
      %v2501 = vadd.f32 %v1924, %v2500
      %v2502 = vld [vmem:[%s1718] sm:$0xf]
      %v2503 = vld [vmem:[%s1718 + $0x4] sm:$0x1]
      %v2504 = vunpack.c.l.bf16 %v2502
      %v2505 = vunpack.c.l.bf16 %v2503
      %v2506 = vpack.c.bf16 %v2504, %v2504
      %v2507 = vld [vmem:[%s1] sm:$0xf]
      %v2508 = vld [vmem:[%s1 + $0x4] sm:$0xf]
      %v2509 = vld [vmem:[%s1 + $0x8] sm:$0xf]
      %v2510 = vld [vmem:[%s1 + $0xc] sm:$0xf]
      %v2511 = vld [vmem:[%s1 + $0x10] sm:$0xf]
      %v2512 = vld [vmem:[%s1 + $0x14] sm:$0xf]
      %v2513 = vld [vmem:[%s1 + $0x18] sm:$0xf]
      %v2514 = vld [vmem:[%s1 + $0x1c] sm:$0xf]
      %v2515 = vld [vmem:[%s1 + $0x20] sm:$0xf]
      %v2516 = vld [vmem:[%s1 + $0x24] sm:$0xf]
      %v2517 = vpack.c.bf16 %v2505, %v2504
      %v2518 = vld [vmem:[%s199] sm:$0xf]
      %v2519 = vld [vmem:[%s199 + $0x4] sm:$0xf]
      %v2520 = vld [vmem:[%s199 + $0x8] sm:$0xf]
      %v2521 = vld [vmem:[%s199 + $0xc] sm:$0xf]
      %v2522 = vld [vmem:[%s199 + $0x10] sm:$0xf]
      %v2523 = vld [vmem:[%s199 + $0x14] sm:$0xf]
      %v2524 = vld [vmem:[%s199 + $0x18] sm:$0xf]
      %v2525 = vld [vmem:[%s199 + $0x1c] sm:$0xf]
      %v2526 = vld [vmem:[%s199 + $0x20] sm:$0xf]
      %v2527 = vld [vmem:[%s199 + $0x24] sm:$0xf]
      %v2529 = vshrl.u32 %v2517, 16
      %v2531 = vshll.u32 %v2517, 16
      %v2533 = vrot.slane %v2531, 1
      %v2534 = vor.u32 %v2529, %v2533
      %v2545 = vunpack.c.l.b16 %v2518
      %v2546 = vunpack.c.l.b16 %v2519
      %v2547 = vunpack.c.l.b16 %v2520
      %v2548 = vunpack.c.l.b16 %v2521
      %v2549 = vunpack.c.l.b16 %v2522
      %v2550 = vunpack.c.l.b16 %v2523
      %v2551 = vunpack.c.l.b16 %v2524
      %v2552 = vunpack.c.l.b16 %v2525
      %v2553 = vunpack.c.l.b16 %v2526
      %v2554 = vunpack.c.l.b16 %v2527
      %v2555 = vpack.c.b16 %v2546, %v2545
      %v2556 = vpack.c.b16 %v2548, %v2547
      %v2557 = vpack.c.b16 %v2550, %v2549
      %v2558 = vpack.c.b16 %v2552, %v2551
      %v2559 = vpack.c.b16 %v2554, %v2553
      %v2566 = vsel %vm247, %v2534, 0
      %2568 = vmatpush.bf16.msra.mxu0 0
      %2569 = vmatpush.bf16.msra.mxu0 0
      %2570 = vmatpush.bf16.msra.mxu0 0
      %2571 = vmatpush.bf16.msra.mxu0 %v2559
      %2572 = vmatpush.bf16.msra.mxu0 %v2558
      %2573 = vmatpush.bf16.msra.mxu0 %v2557
      %2574 = vmatpush.bf16.msra.mxu0 %v2556
      %2575 = vmatpush.bf16.msra.mxu0 %v2555
      %2576 = vmatmul.bf16.gmra.mxu0 %v2566
      %v2577 = vpop.f32.mrf.mxu0
      %v2578 = vadd.f32 0.0, %v2577
      %v2579 = vpop.f32.mrf.mxu0
      %2580 = vdwg.mxu0
      %v2591 = vunpack.c.l.b16 %v2507
      %v2592 = vunpack.c.l.b16 %v2508
      %v2593 = vunpack.c.l.b16 %v2509
      %v2594 = vunpack.c.l.b16 %v2510
      %v2595 = vunpack.c.l.b16 %v2511
      %v2596 = vunpack.c.l.b16 %v2512
      %v2597 = vunpack.c.l.b16 %v2513
      %v2598 = vunpack.c.l.b16 %v2514
      %v2599 = vunpack.c.l.b16 %v2515
      %v2600 = vunpack.c.l.b16 %v2516
      %v2601 = vpack.c.b16 %v2592, %v2591
      %v2602 = vpack.c.b16 %v2594, %v2593
      %v2603 = vpack.c.b16 %v2596, %v2595
      %v2604 = vpack.c.b16 %v2598, %v2597
      %v2605 = vpack.c.b16 %v2600, %v2599
      %v2612 = vsel %vm247, %v2506, 0
      %2614 = vmatpush.bf16.msra.mxu0 0
      %2615 = vmatpush.bf16.msra.mxu0 0
      %2616 = vmatpush.bf16.msra.mxu0 0
      %2617 = vmatpush.bf16.msra.mxu0 %v2605
      %2618 = vmatpush.bf16.msra.mxu0 %v2604
      %2619 = vmatpush.bf16.msra.mxu0 %v2603
      %2620 = vmatpush.bf16.msra.mxu0 %v2602
      %2621 = vmatpush.bf16.msra.mxu0 %v2601
      %2622 = vmatmul.bf16.gmra.mxu0 %v2612
      %v2623 = vpop.f32.mrf.mxu0
      %v2624 = vadd.f32 %v2578, %v2623
      %v2625 = vpop.f32.mrf.mxu0
      %2626 = vdwg.mxu0
      %v2627 = vld [vmem:[%s310] sm:$0xf]
      %v2628 = vld [vmem:[%s310 + $0x4] sm:$0xf]
      %v2629 = vld [vmem:[%s310 + $0x8] sm:$0xf]
      %v2630 = vld [vmem:[%s310 + $0xc] sm:$0xf]
      %v2631 = vld [vmem:[%s310 + $0x10] sm:$0xf]
      %v2632 = vld [vmem:[%s310 + $0x14] sm:$0xf]
      %v2633 = vld [vmem:[%s310 + $0x18] sm:$0xf]
      %v2634 = vld [vmem:[%s310 + $0x1c] sm:$0xf]
      %v2635 = vld [vmem:[%s310 + $0x20] sm:$0xf]
      %v2636 = vld [vmem:[%s310 + $0x24] sm:$0xf]
      %v2638 = vrot.slane %v2517, 1
      %v2649 = vunpack.c.l.b16 %v2627
      %v2650 = vunpack.c.l.b16 %v2628
      %v2651 = vunpack.c.l.b16 %v2629
      %v2652 = vunpack.c.l.b16 %v2630
      %v2653 = vunpack.c.l.b16 %v2631
      %v2654 = vunpack.c.l.b16 %v2632
      %v2655 = vunpack.c.l.b16 %v2633
      %v2656 = vunpack.c.l.b16 %v2634
      %v2657 = vunpack.c.l.b16 %v2635
      %v2658 = vunpack.c.l.b16 %v2636
      %v2659 = vpack.c.b16 %v2650, %v2649
      %v2660 = vpack.c.b16 %v2652, %v2651
      %v2661 = vpack.c.b16 %v2654, %v2653
      %v2662 = vpack.c.b16 %v2656, %v2655
      %v2663 = vpack.c.b16 %v2658, %v2657
      %v2670 = vsel %vm247, %v2638, 0
      %2672 = vmatpush.bf16.msra.mxu0 0
      %2673 = vmatpush.bf16.msra.mxu0 0
      %2674 = vmatpush.bf16.msra.mxu0 0
      %2675 = vmatpush.bf16.msra.mxu0 %v2663
      %2676 = vmatpush.bf16.msra.mxu0 %v2662
      %2677 = vmatpush.bf16.msra.mxu0 %v2661
      %2678 = vmatpush.bf16.msra.mxu0 %v2660
      %2679 = vmatpush.bf16.msra.mxu0 %v2659
      %2680 = vmatmul.bf16.gmra.mxu0 %v2670
      %v2681 = vpop.f32.mrf.mxu0
      %v2682 = vadd.f32 0.0, %v2681
      %v2683 = vpop.f32.mrf.mxu0
      %2684 = vdwg.mxu0
      %v2685 = vadd.f32 %v2624, %v2682
      %v2686 = vld [vmem:[%s2295] sm:$0xf]
      %v2687 = vld [vmem:[%s2295 + $0x4] sm:$0x1]
      %v2688 = vunpack.c.l.bf16 %v2686
      %v2689 = vunpack.c.l.bf16 %v2687
      %v2690 = vpack.c.bf16 %v2688, %v2688
      %v2691 = vld [vmem:[%s376] sm:$0xf]
      %v2692 = vld [vmem:[%s376 + $0x4] sm:$0xf]
      %v2693 = vld [vmem:[%s376 + $0x8] sm:$0xf]
      %v2694 = vld [vmem:[%s376 + $0xc] sm:$0xf]
      %v2695 = vld [vmem:[%s376 + $0x10] sm:$0xf]
      %v2696 = vld [vmem:[%s376 + $0x14] sm:$0xf]
      %v2697 = vld [vmem:[%s376 + $0x18] sm:$0xf]
      %v2698 = vld [vmem:[%s376 + $0x1c] sm:$0xf]
      %v2699 = vld [vmem:[%s376 + $0x20] sm:$0xf]
      %v2700 = vld [vmem:[%s376 + $0x24] sm:$0xf]
      %v2711 = vunpack.c.l.b16 %v2691
      %v2712 = vunpack.c.l.b16 %v2692
      %v2713 = vunpack.c.l.b16 %v2693
      %v2714 = vunpack.c.l.b16 %v2694
      %v2715 = vunpack.c.l.b16 %v2695
      %v2716 = vunpack.c.l.b16 %v2696
      %v2717 = vunpack.c.l.b16 %v2697
      %v2718 = vunpack.c.l.b16 %v2698
      %v2719 = vunpack.c.l.b16 %v2699
      %v2720 = vunpack.c.l.b16 %v2700
      %v2721 = vpack.c.b16 %v2712, %v2711
      %v2722 = vpack.c.b16 %v2714, %v2713
      %v2723 = vpack.c.b16 %v2716, %v2715
      %v2724 = vpack.c.b16 %v2718, %v2717
      %v2725 = vpack.c.b16 %v2720, %v2719
      %v2732 = vsel %vm247, %v2690, 0
      %2734 = vmatpush.bf16.msra.mxu0 0
      %2735 = vmatpush.bf16.msra.mxu0 0
      %2736 = vmatpush.bf16.msra.mxu0 0
      %2737 = vmatpush.bf16.msra.mxu0 %v2725
      %2738 = vmatpush.bf16.msra.mxu0 %v2724
      %2739 = vmatpush.bf16.msra.mxu0 %v2723
      %2740 = vmatpush.bf16.msra.mxu0 %v2722
      %2741 = vmatpush.bf16.msra.mxu0 %v2721
      %2742 = vmatmul.bf16.gmra.mxu0 %v2732
      %v2743 = vpop.f32.mrf.mxu0
      %v2744 = vadd.f32 0.0, %v2743
      %v2745 = vpop.f32.mrf.mxu0
      %2746 = vdwg.mxu0
      %v2747 = vadd.f32 %v2685, %v2744
      %v2748 = vpack.c.bf16 %v2689, %v2688
      %v2749 = vld [vmem:[%s435] sm:$0xf]
      %v2750 = vld [vmem:[%s435 + $0x4] sm:$0xf]
      %v2751 = vld [vmem:[%s435 + $0x8] sm:$0xf]
      %v2752 = vld [vmem:[%s435 + $0xc] sm:$0xf]
      %v2753 = vld [vmem:[%s435 + $0x10] sm:$0xf]
      %v2754 = vld [vmem:[%s435 + $0x14] sm:$0xf]
      %v2755 = vld [vmem:[%s435 + $0x18] sm:$0xf]
      %v2756 = vld [vmem:[%s435 + $0x1c] sm:$0xf]
      %v2757 = vld [vmem:[%s435 + $0x20] sm:$0xf]
      %v2758 = vld [vmem:[%s435 + $0x24] sm:$0xf]
      %v2760 = vshrl.u32 %v2748, 16
      %v2762 = vshll.u32 %v2748, 16
      %v2764 = vrot.slane %v2762, 1
      %v2765 = vor.u32 %v2760, %v2764
      %v2776 = vunpack.c.l.b16 %v2749
      %v2777 = vunpack.c.l.b16 %v2750
      %v2778 = vunpack.c.l.b16 %v2751
      %v2779 = vunpack.c.l.b16 %v2752
      %v2780 = vunpack.c.l.b16 %v2753
      %v2781 = vunpack.c.l.b16 %v2754
      %v2782 = vunpack.c.l.b16 %v2755
      %v2783 = vunpack.c.l.b16 %v2756
      %v2784 = vunpack.c.l.b16 %v2757
      %v2785 = vunpack.c.l.b16 %v2758
      %v2786 = vpack.c.b16 %v2777, %v2776
      %v2787 = vpack.c.b16 %v2779, %v2778
      %v2788 = vpack.c.b16 %v2781, %v2780
      %v2789 = vpack.c.b16 %v2783, %v2782
      %v2790 = vpack.c.b16 %v2785, %v2784
      %v2797 = vsel %vm247, %v2765, 0
      %2799 = vmatpush.bf16.msra.mxu0 0
      %2800 = vmatpush.bf16.msra.mxu0 0
      %2801 = vmatpush.bf16.msra.mxu0 0
      %2802 = vmatpush.bf16.msra.mxu0 %v2790
      %2803 = vmatpush.bf16.msra.mxu0 %v2789
      %2804 = vmatpush.bf16.msra.mxu0 %v2788
      %2805 = vmatpush.bf16.msra.mxu0 %v2787
      %2806 = vmatpush.bf16.msra.mxu0 %v2786
      %2807 = vmatmul.bf16.gmra.mxu0 %v2797
      %v2808 = vpop.f32.mrf.mxu0
      %v2809 = vadd.f32 0.0, %v2808
      %v2810 = vpop.f32.mrf.mxu0
      %2811 = vdwg.mxu0
      %v2812 = vadd.f32 %v2747, %v2809
      %v2813 = vld [vmem:[%s500] sm:$0xf]
      %v2814 = vld [vmem:[%s500 + $0x4] sm:$0xf]
      %v2815 = vld [vmem:[%s500 + $0x8] sm:$0xf]
      %v2816 = vld [vmem:[%s500 + $0xc] sm:$0xf]
      %v2817 = vld [vmem:[%s500 + $0x10] sm:$0xf]
      %v2818 = vld [vmem:[%s500 + $0x14] sm:$0xf]
      %v2819 = vld [vmem:[%s500 + $0x18] sm:$0xf]
      %v2820 = vld [vmem:[%s500 + $0x1c] sm:$0xf]
      %v2821 = vld [vmem:[%s500 + $0x20] sm:$0xf]
      %v2822 = vld [vmem:[%s500 + $0x24] sm:$0xf]
      %v2824 = vrot.slane %v2748, 1
      %v2835 = vunpack.c.l.b16 %v2813
      %v2836 = vunpack.c.l.b16 %v2814
      %v2837 = vunpack.c.l.b16 %v2815
      %v2838 = vunpack.c.l.b16 %v2816
      %v2839 = vunpack.c.l.b16 %v2817
      %v2840 = vunpack.c.l.b16 %v2818
      %v2841 = vunpack.c.l.b16 %v2819
      %v2842 = vunpack.c.l.b16 %v2820
      %v2843 = vunpack.c.l.b16 %v2821
      %v2844 = vunpack.c.l.b16 %v2822
      %v2845 = vpack.c.b16 %v2836, %v2835
      %v2846 = vpack.c.b16 %v2838, %v2837
      %v2847 = vpack.c.b16 %v2840, %v2839
      %v2848 = vpack.c.b16 %v2842, %v2841
      %v2849 = vpack.c.b16 %v2844, %v2843
      %v2856 = vsel %vm247, %v2824, 0
      %2858 = vmatpush.bf16.msra.mxu0 0
      %2859 = vmatpush.bf16.msra.mxu0 0
      %2860 = vmatpush.bf16.msra.mxu0 0
      %2861 = vmatpush.bf16.msra.mxu0 %v2849
      %2862 = vmatpush.bf16.msra.mxu0 %v2848
      %2863 = vmatpush.bf16.msra.mxu0 %v2847
      %2864 = vmatpush.bf16.msra.mxu0 %v2846
      %2865 = vmatpush.bf16.msra.mxu0 %v2845
      %2866 = vmatmul.bf16.gmra.mxu0 %v2856
      %v2867 = vpop.f32.mrf.mxu0
      %v2868 = vadd.f32 0.0, %v2867
      %v2869 = vpop.f32.mrf.mxu0
      %2870 = vdwg.mxu0
      %v2871 = vadd.f32 %v2812, %v2868
      %s2872 = scalar_lea.vmem %s172, 48
      %v2873 = vld [vmem:[%s2872] sm:$0xf]
      %v2874 = vld [vmem:[%s2872 + $0x4] sm:$0x1]
      %v2875 = vunpack.c.l.bf16 %v2873
      %v2876 = vunpack.c.l.bf16 %v2874
      %v2877 = vpack.c.bf16 %v2875, %v2875
      %v2878 = vld [vmem:[%s566] sm:$0xf]
      %v2879 = vld [vmem:[%s566 + $0x4] sm:$0xf]
      %v2880 = vld [vmem:[%s566 + $0x8] sm:$0xf]
      %v2881 = vld [vmem:[%s566 + $0xc] sm:$0xf]
      %v2882 = vld [vmem:[%s566 + $0x10] sm:$0xf]
      %v2883 = vld [vmem:[%s566 + $0x14] sm:$0xf]
      %v2884 = vld [vmem:[%s566 + $0x18] sm:$0xf]
      %v2885 = vld [vmem:[%s566 + $0x1c] sm:$0xf]
      %v2886 = vld [vmem:[%s566 + $0x20] sm:$0xf]
      %v2887 = vld [vmem:[%s566 + $0x24] sm:$0xf]
      %v2898 = vunpack.c.l.b16 %v2878
      %v2899 = vunpack.c.l.b16 %v2879
      %v2900 = vunpack.c.l.b16 %v2880
      %v2901 = vunpack.c.l.b16 %v2881
      %v2902 = vunpack.c.l.b16 %v2882
      %v2903 = vunpack.c.l.b16 %v2883
      %v2904 = vunpack.c.l.b16 %v2884
      %v2905 = vunpack.c.l.b16 %v2885
      %v2906 = vunpack.c.l.b16 %v2886
      %v2907 = vunpack.c.l.b16 %v2887
      %v2908 = vpack.c.b16 %v2899, %v2898
      %v2909 = vpack.c.b16 %v2901, %v2900
      %v2910 = vpack.c.b16 %v2903, %v2902
      %v2911 = vpack.c.b16 %v2905, %v2904
      %v2912 = vpack.c.b16 %v2907, %v2906
      %v2919 = vsel %vm247, %v2877, 0
      %2921 = vmatpush.bf16.msra.mxu0 0
      %2922 = vmatpush.bf16.msra.mxu0 0
      %2923 = vmatpush.bf16.msra.mxu0 0
      %2924 = vmatpush.bf16.msra.mxu0 %v2912
      %2925 = vmatpush.bf16.msra.mxu0 %v2911
      %2926 = vmatpush.bf16.msra.mxu0 %v2910
      %2927 = vmatpush.bf16.msra.mxu0 %v2909
      %2928 = vmatpush.bf16.msra.mxu0 %v2908
      %2929 = vmatmul.bf16.gmra.mxu0 %v2919
      %v2930 = vpop.f32.mrf.mxu0
      %v2931 = vadd.f32 0.0, %v2930
      %v2932 = vpop.f32.mrf.mxu0
      %2933 = vdwg.mxu0
      %v2934 = vadd.f32 %v2871, %v2931
      %v2935 = vpack.c.bf16 %v2876, %v2875
      %v2936 = vld [vmem:[%s625] sm:$0xf]
      %v2937 = vld [vmem:[%s625 + $0x4] sm:$0xf]
      %v2938 = vld [vmem:[%s625 + $0x8] sm:$0xf]
      %v2939 = vld [vmem:[%s625 + $0xc] sm:$0xf]
      %v2940 = vld [vmem:[%s625 + $0x10] sm:$0xf]
      %v2941 = vld [vmem:[%s625 + $0x14] sm:$0xf]
      %v2942 = vld [vmem:[%s625 + $0x18] sm:$0xf]
      %v2943 = vld [vmem:[%s625 + $0x1c] sm:$0xf]
      %v2944 = vld [vmem:[%s625 + $0x20] sm:$0xf]
      %v2945 = vld [vmem:[%s625 + $0x24] sm:$0xf]
      %v2947 = vshrl.u32 %v2935, 16
      %v2949 = vshll.u32 %v2935, 16
      %v2951 = vrot.slane %v2949, 1
      %v2952 = vor.u32 %v2947, %v2951
      %v2963 = vunpack.c.l.b16 %v2936
      %v2964 = vunpack.c.l.b16 %v2937
      %v2965 = vunpack.c.l.b16 %v2938
      %v2966 = vunpack.c.l.b16 %v2939
      %v2967 = vunpack.c.l.b16 %v2940
      %v2968 = vunpack.c.l.b16 %v2941
      %v2969 = vunpack.c.l.b16 %v2942
      %v2970 = vunpack.c.l.b16 %v2943
      %v2971 = vunpack.c.l.b16 %v2944
      %v2972 = vunpack.c.l.b16 %v2945
      %v2973 = vpack.c.b16 %v2964, %v2963
      %v2974 = vpack.c.b16 %v2966, %v2965
      %v2975 = vpack.c.b16 %v2968, %v2967
      %v2976 = vpack.c.b16 %v2970, %v2969
      %v2977 = vpack.c.b16 %v2972, %v2971
      %v2984 = vsel %vm247, %v2952, 0
      %2986 = vmatpush.bf16.msra.mxu0 0
      %2987 = vmatpush.bf16.msra.mxu0 0
      %2988 = vmatpush.bf16.msra.mxu0 0
      %2989 = vmatpush.bf16.msra.mxu0 %v2977
      %2990 = vmatpush.bf16.msra.mxu0 %v2976
      %2991 = vmatpush.bf16.msra.mxu0 %v2975
      %2992 = vmatpush.bf16.msra.mxu0 %v2974
      %2993 = vmatpush.bf16.msra.mxu0 %v2973
      %2994 = vmatmul.bf16.gmra.mxu0 %v2984
      %v2995 = vpop.f32.mrf.mxu0
      %v2996 = vadd.f32 0.0, %v2995
      %v2997 = vpop.f32.mrf.mxu0
      %2998 = vdwg.mxu0
      %v2999 = vadd.f32 %v2934, %v2996
      %v3000 = vld [vmem:[%s690] sm:$0xf]
      %v3001 = vld [vmem:[%s690 + $0x4] sm:$0xf]
      %v3002 = vld [vmem:[%s690 + $0x8] sm:$0xf]
      %v3003 = vld [vmem:[%s690 + $0xc] sm:$0xf]
      %v3004 = vld [vmem:[%s690 + $0x10] sm:$0xf]
      %v3005 = vld [vmem:[%s690 + $0x14] sm:$0xf]
      %v3006 = vld [vmem:[%s690 + $0x18] sm:$0xf]
      %v3007 = vld [vmem:[%s690 + $0x1c] sm:$0xf]
      %v3008 = vld [vmem:[%s690 + $0x20] sm:$0xf]
      %v3009 = vld [vmem:[%s690 + $0x24] sm:$0xf]
      %v3011 = vrot.slane %v2935, 1
      %v3022 = vunpack.c.l.b16 %v3000
      %v3023 = vunpack.c.l.b16 %v3001
      %v3024 = vunpack.c.l.b16 %v3002
      %v3025 = vunpack.c.l.b16 %v3003
      %v3026 = vunpack.c.l.b16 %v3004
      %v3027 = vunpack.c.l.b16 %v3005
      %v3028 = vunpack.c.l.b16 %v3006
      %v3029 = vunpack.c.l.b16 %v3007
      %v3030 = vunpack.c.l.b16 %v3008
      %v3031 = vunpack.c.l.b16 %v3009
      %v3032 = vpack.c.b16 %v3023, %v3022
      %v3033 = vpack.c.b16 %v3025, %v3024
      %v3034 = vpack.c.b16 %v3027, %v3026
      %v3035 = vpack.c.b16 %v3029, %v3028
      %v3036 = vpack.c.b16 %v3031, %v3030
      %v3043 = vsel %vm247, %v3011, 0
      %3045 = vmatpush.bf16.msra.mxu0 0
      %3046 = vmatpush.bf16.msra.mxu0 0
      %3047 = vmatpush.bf16.msra.mxu0 0
      %3048 = vmatpush.bf16.msra.mxu0 %v3036
      %3049 = vmatpush.bf16.msra.mxu0 %v3035
      %3050 = vmatpush.bf16.msra.mxu0 %v3034
      %3051 = vmatpush.bf16.msra.mxu0 %v3033
      %3052 = vmatpush.bf16.msra.mxu0 %v3032
      %3053 = vmatmul.bf16.gmra.mxu0 %v3043
      %v3054 = vpop.f32.mrf.mxu0
      %v3055 = vadd.f32 0.0, %v3054
      %v3056 = vpop.f32.mrf.mxu0
      %3057 = vdwg.mxu0
      %v3058 = vadd.f32 %v2999, %v3055
      %v3059 = vpack.c.bf16 %v3058, %v3058
      %s3060 = scalar_lea.vmem %s177, 16
      %3061 = vst.msk [vmem:[%s3060] sm:$0xf] %vm751, %v3059
      %v3062 = vsel %vm753, %v3058, 0.0
      %v3063 = vrot.slane %v3062, 4
      %v3064 = vadd.f32 %v3062, %v3063
      %v3065 = vrot.slane %v3064, 2
      %v3066 = vadd.f32 %v3064, %v3065
      %v3067 = vrot.slane %v3066, 1
      %v3068 = vadd.f32 %v3066, %v3067
      %v3069 = vadd.f32 %v2492, %v3068
      %v3070 = vmul.f32 %v3058, %v3058
      %v3071 = vsel %vm753, %v3070, 0.0
      %v3072 = vrot.slane %v3071, 4
      %v3073 = vadd.f32 %v3071, %v3072
      %v3074 = vrot.slane %v3073, 2
      %v3075 = vadd.f32 %v3073, %v3074
      %v3076 = vrot.slane %v3075, 1
      %v3077 = vadd.f32 %v3075, %v3076
      %v3078 = vadd.f32 %v2501, %v3077
      %v3079 = vld [vmem:[%s2295] sm:$0xf]
      %v3080 = vld [vmem:[%s2295 + $0x4] sm:$0x1]
      %v3081 = vunpack.c.l.bf16 %v3079
      %v3082 = vunpack.c.l.bf16 %v3080
      %v3083 = vpack.c.bf16 %v3081, %v3081
      %v3084 = vld [vmem:[%s1] sm:$0xf]
      %v3085 = vld [vmem:[%s1 + $0x4] sm:$0xf]
      %v3086 = vld [vmem:[%s1 + $0x8] sm:$0xf]
      %v3087 = vld [vmem:[%s1 + $0xc] sm:$0xf]
      %v3088 = vld [vmem:[%s1 + $0x10] sm:$0xf]
      %v3089 = vld [vmem:[%s1 + $0x14] sm:$0xf]
      %v3090 = vld [vmem:[%s1 + $0x18] sm:$0xf]
      %v3091 = vld [vmem:[%s1 + $0x1c] sm:$0xf]
      %v3092 = vld [vmem:[%s1 + $0x20] sm:$0xf]
      %v3093 = vld [vmem:[%s1 + $0x24] sm:$0xf]
      %v3094 = vpack.c.bf16 %v3082, %v3081
      %v3095 = vld [vmem:[%s199] sm:$0xf]
      %v3096 = vld [vmem:[%s199 + $0x4] sm:$0xf]
      %v3097 = vld [vmem:[%s199 + $0x8] sm:$0xf]
      %v3098 = vld [vmem:[%s199 + $0xc] sm:$0xf]
      %v3099 = vld [vmem:[%s199 + $0x10] sm:$0xf]
      %v3100 = vld [vmem:[%s199 + $0x14] sm:$0xf]
      %v3101 = vld [vmem:[%s199 + $0x18] sm:$0xf]
      %v3102 = vld [vmem:[%s199 + $0x1c] sm:$0xf]
      %v3103 = vld [vmem:[%s199 + $0x20] sm:$0xf]
      %v3104 = vld [vmem:[%s199 + $0x24] sm:$0xf]
      %v3106 = vshrl.u32 %v3094, 16
      %v3108 = vshll.u32 %v3094, 16
      %v3110 = vrot.slane %v3108, 1
      %v3111 = vor.u32 %v3106, %v3110
      %v3122 = vunpack.c.l.b16 %v3095
      %v3123 = vunpack.c.l.b16 %v3096
      %v3124 = vunpack.c.l.b16 %v3097
      %v3125 = vunpack.c.l.b16 %v3098
      %v3126 = vunpack.c.l.b16 %v3099
      %v3127 = vunpack.c.l.b16 %v3100
      %v3128 = vunpack.c.l.b16 %v3101
      %v3129 = vunpack.c.l.b16 %v3102
      %v3130 = vunpack.c.l.b16 %v3103
      %v3131 = vunpack.c.l.b16 %v3104
      %v3132 = vpack.c.b16 %v3123, %v3122
      %v3133 = vpack.c.b16 %v3125, %v3124
      %v3134 = vpack.c.b16 %v3127, %v3126
      %v3135 = vpack.c.b16 %v3129, %v3128
      %v3136 = vpack.c.b16 %v3131, %v3130
      %v3143 = vsel %vm247, %v3111, 0
      %3145 = vmatpush.bf16.msra.mxu0 0
      %3146 = vmatpush.bf16.msra.mxu0 0
      %3147 = vmatpush.bf16.msra.mxu0 0
      %3148 = vmatpush.bf16.msra.mxu0 %v3136
      %3149 = vmatpush.bf16.msra.mxu0 %v3135
      %3150 = vmatpush.bf16.msra.mxu0 %v3134
      %3151 = vmatpush.bf16.msra.mxu0 %v3133
      %3152 = vmatpush.bf16.msra.mxu0 %v3132
      %3153 = vmatmul.bf16.gmra.mxu0 %v3143
      %v3154 = vpop.f32.mrf.mxu0
      %v3155 = vadd.f32 0.0, %v3154
      %v3156 = vpop.f32.mrf.mxu0
      %3157 = vdwg.mxu0
      %v3168 = vunpack.c.l.b16 %v3084
      %v3169 = vunpack.c.l.b16 %v3085
      %v3170 = vunpack.c.l.b16 %v3086
      %v3171 = vunpack.c.l.b16 %v3087
      %v3172 = vunpack.c.l.b16 %v3088
      %v3173 = vunpack.c.l.b16 %v3089
      %v3174 = vunpack.c.l.b16 %v3090
      %v3175 = vunpack.c.l.b16 %v3091
      %v3176 = vunpack.c.l.b16 %v3092
      %v3177 = vunpack.c.l.b16 %v3093
      %v3178 = vpack.c.b16 %v3169, %v3168
      %v3179 = vpack.c.b16 %v3171, %v3170
      %v3180 = vpack.c.b16 %v3173, %v3172
      %v3181 = vpack.c.b16 %v3175, %v3174
      %v3182 = vpack.c.b16 %v3177, %v3176
      %v3189 = vsel %vm247, %v3083, 0
      %3191 = vmatpush.bf16.msra.mxu0 0
      %3192 = vmatpush.bf16.msra.mxu0 0
      %3193 = vmatpush.bf16.msra.mxu0 0
      %3194 = vmatpush.bf16.msra.mxu0 %v3182
      %3195 = vmatpush.bf16.msra.mxu0 %v3181
      %3196 = vmatpush.bf16.msra.mxu0 %v3180
      %3197 = vmatpush.bf16.msra.mxu0 %v3179
      %3198 = vmatpush.bf16.msra.mxu0 %v3178
      %3199 = vmatmul.bf16.gmra.mxu0 %v3189
      %v3200 = vpop.f32.mrf.mxu0
      %v3201 = vadd.f32 %v3155, %v3200
      %v3202 = vpop.f32.mrf.mxu0
      %3203 = vdwg.mxu0
      %v3204 = vld [vmem:[%s310] sm:$0xf]
      %v3205 = vld [vmem:[%s310 + $0x4] sm:$0xf]
      %v3206 = vld [vmem:[%s310 + $0x8] sm:$0xf]
      %v3207 = vld [vmem:[%s310 + $0xc] sm:$0xf]
      %v3208 = vld [vmem:[%s310 + $0x10] sm:$0xf]
      %v3209 = vld [vmem:[%s310 + $0x14] sm:$0xf]
      %v3210 = vld [vmem:[%s310 + $0x18] sm:$0xf]
      %v3211 = vld [vmem:[%s310 + $0x1c] sm:$0xf]
      %v3212 = vld [vmem:[%s310 + $0x20] sm:$0xf]
      %v3213 = vld [vmem:[%s310 + $0x24] sm:$0xf]
      %v3215 = vrot.slane %v3094, 1
      %v3226 = vunpack.c.l.b16 %v3204
      %v3227 = vunpack.c.l.b16 %v3205
      %v3228 = vunpack.c.l.b16 %v3206
      %v3229 = vunpack.c.l.b16 %v3207
      %v3230 = vunpack.c.l.b16 %v3208
      %v3231 = vunpack.c.l.b16 %v3209
      %v3232 = vunpack.c.l.b16 %v3210
      %v3233 = vunpack.c.l.b16 %v3211
      %v3234 = vunpack.c.l.b16 %v3212
      %v3235 = vunpack.c.l.b16 %v3213
      %v3236 = vpack.c.b16 %v3227, %v3226
      %v3237 = vpack.c.b16 %v3229, %v3228
      %v3238 = vpack.c.b16 %v3231, %v3230
      %v3239 = vpack.c.b16 %v3233, %v3232
      %v3240 = vpack.c.b16 %v3235, %v3234
      %v3247 = vsel %vm247, %v3215, 0
      %3249 = vmatpush.bf16.msra.mxu0 0
      %3250 = vmatpush.bf16.msra.mxu0 0
      %3251 = vmatpush.bf16.msra.mxu0 0
      %3252 = vmatpush.bf16.msra.mxu0 %v3240
      %3253 = vmatpush.bf16.msra.mxu0 %v3239
      %3254 = vmatpush.bf16.msra.mxu0 %v3238
      %3255 = vmatpush.bf16.msra.mxu0 %v3237
      %3256 = vmatpush.bf16.msra.mxu0 %v3236
      %3257 = vmatmul.bf16.gmra.mxu0 %v3247
      %v3258 = vpop.f32.mrf.mxu0
      %v3259 = vadd.f32 0.0, %v3258
      %v3260 = vpop.f32.mrf.mxu0
      %3261 = vdwg.mxu0
      %v3262 = vadd.f32 %v3201, %v3259
      %v3263 = vld [vmem:[%s2872] sm:$0xf]
      %v3264 = vld [vmem:[%s2872 + $0x4] sm:$0x1]
      %v3265 = vunpack.c.l.bf16 %v3263
      %v3266 = vunpack.c.l.bf16 %v3264
      %v3267 = vpack.c.bf16 %v3265, %v3265
      %v3268 = vld [vmem:[%s376] sm:$0xf]
      %v3269 = vld [vmem:[%s376 + $0x4] sm:$0xf]
      %v3270 = vld [vmem:[%s376 + $0x8] sm:$0xf]
      %v3271 = vld [vmem:[%s376 + $0xc] sm:$0xf]
      %v3272 = vld [vmem:[%s376 + $0x10] sm:$0xf]
      %v3273 = vld [vmem:[%s376 + $0x14] sm:$0xf]
      %v3274 = vld [vmem:[%s376 + $0x18] sm:$0xf]
      %v3275 = vld [vmem:[%s376 + $0x1c] sm:$0xf]
      %v3276 = vld [vmem:[%s376 + $0x20] sm:$0xf]
      %v3277 = vld [vmem:[%s376 + $0x24] sm:$0xf]
      %v3288 = vunpack.c.l.b16 %v3268
      %v3289 = vunpack.c.l.b16 %v3269
      %v3290 = vunpack.c.l.b16 %v3270
      %v3291 = vunpack.c.l.b16 %v3271
      %v3292 = vunpack.c.l.b16 %v3272
      %v3293 = vunpack.c.l.b16 %v3273
      %v3294 = vunpack.c.l.b16 %v3274
      %v3295 = vunpack.c.l.b16 %v3275
      %v3296 = vunpack.c.l.b16 %v3276
      %v3297 = vunpack.c.l.b16 %v3277
      %v3298 = vpack.c.b16 %v3289, %v3288
      %v3299 = vpack.c.b16 %v3291, %v3290
      %v3300 = vpack.c.b16 %v3293, %v3292
      %v3301 = vpack.c.b16 %v3295, %v3294
      %v3302 = vpack.c.b16 %v3297, %v3296
      %v3309 = vsel %vm247, %v3267, 0
      %3311 = vmatpush.bf16.msra.mxu0 0
      %3312 = vmatpush.bf16.msra.mxu0 0
      %3313 = vmatpush.bf16.msra.mxu0 0
      %3314 = vmatpush.bf16.msra.mxu0 %v3302
      %3315 = vmatpush.bf16.msra.mxu0 %v3301
      %3316 = vmatpush.bf16.msra.mxu0 %v3300
      %3317 = vmatpush.bf16.msra.mxu0 %v3299
      %3318 = vmatpush.bf16.msra.mxu0 %v3298
      %3319 = vmatmul.bf16.gmra.mxu0 %v3309
      %v3320 = vpop.f32.mrf.mxu0
      %v3321 = vadd.f32 0.0, %v3320
      %v3322 = vpop.f32.mrf.mxu0
      %3323 = vdwg.mxu0
      %v3324 = vadd.f32 %v3262, %v3321
      %v3325 = vpack.c.bf16 %v3266, %v3265
      %v3326 = vld [vmem:[%s435] sm:$0xf]
      %v3327 = vld [vmem:[%s435 + $0x4] sm:$0xf]
      %v3328 = vld [vmem:[%s435 + $0x8] sm:$0xf]
      %v3329 = vld [vmem:[%s435 + $0xc] sm:$0xf]
      %v3330 = vld [vmem:[%s435 + $0x10] sm:$0xf]
      %v3331 = vld [vmem:[%s435 + $0x14] sm:$0xf]
      %v3332 = vld [vmem:[%s435 + $0x18] sm:$0xf]
      %v3333 = vld [vmem:[%s435 + $0x1c] sm:$0xf]
      %v3334 = vld [vmem:[%s435 + $0x20] sm:$0xf]
      %v3335 = vld [vmem:[%s435 + $0x24] sm:$0xf]
      %v3337 = vshrl.u32 %v3325, 16
      %v3339 = vshll.u32 %v3325, 16
      %v3341 = vrot.slane %v3339, 1
      %v3342 = vor.u32 %v3337, %v3341
      %v3353 = vunpack.c.l.b16 %v3326
      %v3354 = vunpack.c.l.b16 %v3327
      %v3355 = vunpack.c.l.b16 %v3328
      %v3356 = vunpack.c.l.b16 %v3329
      %v3357 = vunpack.c.l.b16 %v3330
      %v3358 = vunpack.c.l.b16 %v3331
      %v3359 = vunpack.c.l.b16 %v3332
      %v3360 = vunpack.c.l.b16 %v3333
      %v3361 = vunpack.c.l.b16 %v3334
      %v3362 = vunpack.c.l.b16 %v3335
      %v3363 = vpack.c.b16 %v3354, %v3353
      %v3364 = vpack.c.b16 %v3356, %v3355
      %v3365 = vpack.c.b16 %v3358, %v3357
      %v3366 = vpack.c.b16 %v3360, %v3359
      %v3367 = vpack.c.b16 %v3362, %v3361
      %v3374 = vsel %vm247, %v3342, 0
      %3376 = vmatpush.bf16.msra.mxu0 0
      %3377 = vmatpush.bf16.msra.mxu0 0
      %3378 = vmatpush.bf16.msra.mxu0 0
      %3379 = vmatpush.bf16.msra.mxu0 %v3367
      %3380 = vmatpush.bf16.msra.mxu0 %v3366
      %3381 = vmatpush.bf16.msra.mxu0 %v3365
      %3382 = vmatpush.bf16.msra.mxu0 %v3364
      %3383 = vmatpush.bf16.msra.mxu0 %v3363
      %3384 = vmatmul.bf16.gmra.mxu0 %v3374
      %v3385 = vpop.f32.mrf.mxu0
      %v3386 = vadd.f32 0.0, %v3385
      %v3387 = vpop.f32.mrf.mxu0
      %3388 = vdwg.mxu0
      %v3389 = vadd.f32 %v3324, %v3386
      %v3390 = vld [vmem:[%s500] sm:$0xf]
      %v3391 = vld [vmem:[%s500 + $0x4] sm:$0xf]
      %v3392 = vld [vmem:[%s500 + $0x8] sm:$0xf]
      %v3393 = vld [vmem:[%s500 + $0xc] sm:$0xf]
      %v3394 = vld [vmem:[%s500 + $0x10] sm:$0xf]
      %v3395 = vld [vmem:[%s500 + $0x14] sm:$0xf]
      %v3396 = vld [vmem:[%s500 + $0x18] sm:$0xf]
      %v3397 = vld [vmem:[%s500 + $0x1c] sm:$0xf]
      %v3398 = vld [vmem:[%s500 + $0x20] sm:$0xf]
      %v3399 = vld [vmem:[%s500 + $0x24] sm:$0xf]
      %v3401 = vrot.slane %v3325, 1
      %v3412 = vunpack.c.l.b16 %v3390
      %v3413 = vunpack.c.l.b16 %v3391
      %v3414 = vunpack.c.l.b16 %v3392
      %v3415 = vunpack.c.l.b16 %v3393
      %v3416 = vunpack.c.l.b16 %v3394
      %v3417 = vunpack.c.l.b16 %v3395
      %v3418 = vunpack.c.l.b16 %v3396
      %v3419 = vunpack.c.l.b16 %v3397
      %v3420 = vunpack.c.l.b16 %v3398
      %v3421 = vunpack.c.l.b16 %v3399
      %v3422 = vpack.c.b16 %v3413, %v3412
      %v3423 = vpack.c.b16 %v3415, %v3414
      %v3424 = vpack.c.b16 %v3417, %v3416
      %v3425 = vpack.c.b16 %v3419, %v3418
      %v3426 = vpack.c.b16 %v3421, %v3420
      %v3433 = vsel %vm247, %v3401, 0
      %3435 = vmatpush.bf16.msra.mxu0 0
      %3436 = vmatpush.bf16.msra.mxu0 0
      %3437 = vmatpush.bf16.msra.mxu0 0
      %3438 = vmatpush.bf16.msra.mxu0 %v3426
      %3439 = vmatpush.bf16.msra.mxu0 %v3425
      %3440 = vmatpush.bf16.msra.mxu0 %v3424
      %3441 = vmatpush.bf16.msra.mxu0 %v3423
      %3442 = vmatpush.bf16.msra.mxu0 %v3422
      %3443 = vmatmul.bf16.gmra.mxu0 %v3433
      %v3444 = vpop.f32.mrf.mxu0
      %v3445 = vadd.f32 0.0, %v3444
      %v3446 = vpop.f32.mrf.mxu0
      %3447 = vdwg.mxu0
      %v3448 = vadd.f32 %v3389, %v3445
      %s3449 = scalar_lea.vmem %s172, 56
      %v3450 = vld [vmem:[%s3449] sm:$0xf]
      %v3451 = vld [vmem:[%s3449 + $0x4] sm:$0x1]
      %v3452 = vunpack.c.l.bf16 %v3450
      %v3453 = vunpack.c.l.bf16 %v3451
      %v3454 = vpack.c.bf16 %v3452, %v3452
      %v3455 = vld [vmem:[%s566] sm:$0xf]
      %v3456 = vld [vmem:[%s566 + $0x4] sm:$0xf]
      %v3457 = vld [vmem:[%s566 + $0x8] sm:$0xf]
      %v3458 = vld [vmem:[%s566 + $0xc] sm:$0xf]
      %v3459 = vld [vmem:[%s566 + $0x10] sm:$0xf]
      %v3460 = vld [vmem:[%s566 + $0x14] sm:$0xf]
      %v3461 = vld [vmem:[%s566 + $0x18] sm:$0xf]
      %v3462 = vld [vmem:[%s566 + $0x1c] sm:$0xf]
      %v3463 = vld [vmem:[%s566 + $0x20] sm:$0xf]
      %v3464 = vld [vmem:[%s566 + $0x24] sm:$0xf]
      %v3475 = vunpack.c.l.b16 %v3455
      %v3476 = vunpack.c.l.b16 %v3456
      %v3477 = vunpack.c.l.b16 %v3457
      %v3478 = vunpack.c.l.b16 %v3458
      %v3479 = vunpack.c.l.b16 %v3459
      %v3480 = vunpack.c.l.b16 %v3460
      %v3481 = vunpack.c.l.b16 %v3461
      %v3482 = vunpack.c.l.b16 %v3462
      %v3483 = vunpack.c.l.b16 %v3463
      %v3484 = vunpack.c.l.b16 %v3464
      %v3485 = vpack.c.b16 %v3476, %v3475
      %v3486 = vpack.c.b16 %v3478, %v3477
      %v3487 = vpack.c.b16 %v3480, %v3479
      %v3488 = vpack.c.b16 %v3482, %v3481
      %v3489 = vpack.c.b16 %v3484, %v3483
      %v3496 = vsel %vm247, %v3454, 0
      %3498 = vmatpush.bf16.msra.mxu0 0
      %3499 = vmatpush.bf16.msra.mxu0 0
      %3500 = vmatpush.bf16.msra.mxu0 0
      %3501 = vmatpush.bf16.msra.mxu0 %v3489
      %3502 = vmatpush.bf16.msra.mxu0 %v3488
      %3503 = vmatpush.bf16.msra.mxu0 %v3487
      %3504 = vmatpush.bf16.msra.mxu0 %v3486
      %3505 = vmatpush.bf16.msra.mxu0 %v3485
      %3506 = vmatmul.bf16.gmra.mxu0 %v3496
      %v3507 = vpop.f32.mrf.mxu0
      %v3508 = vadd.f32 0.0, %v3507
      %v3509 = vpop.f32.mrf.mxu0
      %3510 = vdwg.mxu0
      %v3511 = vadd.f32 %v3448, %v3508
      %v3512 = vpack.c.bf16 %v3453, %v3452
      %v3513 = vld [vmem:[%s625] sm:$0xf]
      %v3514 = vld [vmem:[%s625 + $0x4] sm:$0xf]
      %v3515 = vld [vmem:[%s625 + $0x8] sm:$0xf]
      %v3516 = vld [vmem:[%s625 + $0xc] sm:$0xf]
      %v3517 = vld [vmem:[%s625 + $0x10] sm:$0xf]
      %v3518 = vld [vmem:[%s625 + $0x14] sm:$0xf]
      %v3519 = vld [vmem:[%s625 + $0x18] sm:$0xf]
      %v3520 = vld [vmem:[%s625 + $0x1c] sm:$0xf]
      %v3521 = vld [vmem:[%s625 + $0x20] sm:$0xf]
      %v3522 = vld [vmem:[%s625 + $0x24] sm:$0xf]
      %v3524 = vshrl.u32 %v3512, 16
      %v3526 = vshll.u32 %v3512, 16
      %v3528 = vrot.slane %v3526, 1
      %v3529 = vor.u32 %v3524, %v3528
      %v3540 = vunpack.c.l.b16 %v3513
      %v3541 = vunpack.c.l.b16 %v3514
      %v3542 = vunpack.c.l.b16 %v3515
      %v3543 = vunpack.c.l.b16 %v3516
      %v3544 = vunpack.c.l.b16 %v3517
      %v3545 = vunpack.c.l.b16 %v3518
      %v3546 = vunpack.c.l.b16 %v3519
      %v3547 = vunpack.c.l.b16 %v3520
      %v3548 = vunpack.c.l.b16 %v3521
      %v3549 = vunpack.c.l.b16 %v3522
      %v3550 = vpack.c.b16 %v3541, %v3540
      %v3551 = vpack.c.b16 %v3543, %v3542
      %v3552 = vpack.c.b16 %v3545, %v3544
      %v3553 = vpack.c.b16 %v3547, %v3546
      %v3554 = vpack.c.b16 %v3549, %v3548
      %v3561 = vsel %vm247, %v3529, 0
      %3563 = vmatpush.bf16.msra.mxu0 0
      %3564 = vmatpush.bf16.msra.mxu0 0
      %3565 = vmatpush.bf16.msra.mxu0 0
      %3566 = vmatpush.bf16.msra.mxu0 %v3554
      %3567 = vmatpush.bf16.msra.mxu0 %v3553
      %3568 = vmatpush.bf16.msra.mxu0 %v3552
      %3569 = vmatpush.bf16.msra.mxu0 %v3551
      %3570 = vmatpush.bf16.msra.mxu0 %v3550
      %3571 = vmatmul.bf16.gmra.mxu0 %v3561
      %v3572 = vpop.f32.mrf.mxu0
      %v3573 = vadd.f32 0.0, %v3572
      %v3574 = vpop.f32.mrf.mxu0
      %3575 = vdwg.mxu0
      %v3576 = vadd.f32 %v3511, %v3573
      %v3577 = vld [vmem:[%s690] sm:$0xf]
      %v3578 = vld [vmem:[%s690 + $0x4] sm:$0xf]
      %v3579 = vld [vmem:[%s690 + $0x8] sm:$0xf]
      %v3580 = vld [vmem:[%s690 + $0xc] sm:$0xf]
      %v3581 = vld [vmem:[%s690 + $0x10] sm:$0xf]
      %v3582 = vld [vmem:[%s690 + $0x14] sm:$0xf]
      %v3583 = vld [vmem:[%s690 + $0x18] sm:$0xf]
      %v3584 = vld [vmem:[%s690 + $0x1c] sm:$0xf]
      %v3585 = vld [vmem:[%s690 + $0x20] sm:$0xf]
      %v3586 = vld [vmem:[%s690 + $0x24] sm:$0xf]
      %v3588 = vrot.slane %v3512, 1
      %v3599 = vunpack.c.l.b16 %v3577
      %v3600 = vunpack.c.l.b16 %v3578
      %v3601 = vunpack.c.l.b16 %v3579
      %v3602 = vunpack.c.l.b16 %v3580
      %v3603 = vunpack.c.l.b16 %v3581
      %v3604 = vunpack.c.l.b16 %v3582
      %v3605 = vunpack.c.l.b16 %v3583
      %v3606 = vunpack.c.l.b16 %v3584
      %v3607 = vunpack.c.l.b16 %v3585
      %v3608 = vunpack.c.l.b16 %v3586
      %v3609 = vpack.c.b16 %v3600, %v3599
      %v3610 = vpack.c.b16 %v3602, %v3601
      %v3611 = vpack.c.b16 %v3604, %v3603
      %v3612 = vpack.c.b16 %v3606, %v3605
      %v3613 = vpack.c.b16 %v3608, %v3607
      %v3620 = vsel %vm247, %v3588, 0
      %3622 = vmatpush.bf16.msra.mxu0 0
      %3623 = vmatpush.bf16.msra.mxu0 0
      %3624 = vmatpush.bf16.msra.mxu0 0
      %3625 = vmatpush.bf16.msra.mxu0 %v3613
      %3626 = vmatpush.bf16.msra.mxu0 %v3612
      %3627 = vmatpush.bf16.msra.mxu0 %v3611
      %3628 = vmatpush.bf16.msra.mxu0 %v3610
      %3629 = vmatpush.bf16.msra.mxu0 %v3609
      %3630 = vmatmul.bf16.gmra.mxu0 %v3620
      %v3631 = vpop.f32.mrf.mxu0
      %v3632 = vadd.f32 0.0, %v3631
      %v3633 = vpop.f32.mrf.mxu0
      %3634 = vdwg.mxu0
      %v3635 = vadd.f32 %v3576, %v3632
      %v3636 = vpack.c.bf16 %v3635, %v3635
      %s3637 = scalar_lea.vmem %s177, 20
      %3638 = vst.msk [vmem:[%s3637] sm:$0xf] %vm751, %v3636
      %v3639 = vsel %vm753, %v3635, 0.0
      %v3640 = vrot.slane %v3639, 4
      %v3641 = vadd.f32 %v3639, %v3640
      %v3642 = vrot.slane %v3641, 2
      %v3643 = vadd.f32 %v3641, %v3642
      %v3644 = vrot.slane %v3643, 1
      %v3645 = vadd.f32 %v3643, %v3644
      %v3646 = vadd.f32 %v3069, %v3645
      %v3647 = vmul.f32 %v3635, %v3635
      %v3648 = vsel %vm753, %v3647, 0.0
      %v3649 = vrot.slane %v3648, 4
      %v3650 = vadd.f32 %v3648, %v3649
      %v3651 = vrot.slane %v3650, 2
      %v3652 = vadd.f32 %v3650, %v3651
      %v3653 = vrot.slane %v3652, 1
      %v3654 = vadd.f32 %v3652, %v3653
      %v3655 = vadd.f32 %v3078, %v3654
      %v3656 = vld [vmem:[%s2872] sm:$0xf]
      %v3657 = vld [vmem:[%s2872 + $0x4] sm:$0x1]
      %v3658 = vunpack.c.l.bf16 %v3656
      %v3659 = vunpack.c.l.bf16 %v3657
      %v3660 = vpack.c.bf16 %v3658, %v3658
      %v3661 = vld [vmem:[%s1] sm:$0xf]
      %v3662 = vld [vmem:[%s1 + $0x4] sm:$0xf]
      %v3663 = vld [vmem:[%s1 + $0x8] sm:$0xf]
      %v3664 = vld [vmem:[%s1 + $0xc] sm:$0xf]
      %v3665 = vld [vmem:[%s1 + $0x10] sm:$0xf]
      %v3666 = vld [vmem:[%s1 + $0x14] sm:$0xf]
      %v3667 = vld [vmem:[%s1 + $0x18] sm:$0xf]
      %v3668 = vld [vmem:[%s1 + $0x1c] sm:$0xf]
      %v3669 = vld [vmem:[%s1 + $0x20] sm:$0xf]
      %v3670 = vld [vmem:[%s1 + $0x24] sm:$0xf]
      %v3671 = vpack.c.bf16 %v3659, %v3658
      %v3672 = vld [vmem:[%s199] sm:$0xf]
      %v3673 = vld [vmem:[%s199 + $0x4] sm:$0xf]
      %v3674 = vld [vmem:[%s199 + $0x8] sm:$0xf]
      %v3675 = vld [vmem:[%s199 + $0xc] sm:$0xf]
      %v3676 = vld [vmem:[%s199 + $0x10] sm:$0xf]
      %v3677 = vld [vmem:[%s199 + $0x14] sm:$0xf]
      %v3678 = vld [vmem:[%s199 + $0x18] sm:$0xf]
      %v3679 = vld [vmem:[%s199 + $0x1c] sm:$0xf]
      %v3680 = vld [vmem:[%s199 + $0x20] sm:$0xf]
      %v3681 = vld [vmem:[%s199 + $0x24] sm:$0xf]
      %v3683 = vshrl.u32 %v3671, 16
      %v3685 = vshll.u32 %v3671, 16
      %v3687 = vrot.slane %v3685, 1
      %v3688 = vor.u32 %v3683, %v3687
      %v3699 = vunpack.c.l.b16 %v3672
      %v3700 = vunpack.c.l.b16 %v3673
      %v3701 = vunpack.c.l.b16 %v3674
      %v3702 = vunpack.c.l.b16 %v3675
      %v3703 = vunpack.c.l.b16 %v3676
      %v3704 = vunpack.c.l.b16 %v3677
      %v3705 = vunpack.c.l.b16 %v3678
      %v3706 = vunpack.c.l.b16 %v3679
      %v3707 = vunpack.c.l.b16 %v3680
      %v3708 = vunpack.c.l.b16 %v3681
      %v3709 = vpack.c.b16 %v3700, %v3699
      %v3710 = vpack.c.b16 %v3702, %v3701
      %v3711 = vpack.c.b16 %v3704, %v3703
      %v3712 = vpack.c.b16 %v3706, %v3705
      %v3713 = vpack.c.b16 %v3708, %v3707
      %v3720 = vsel %vm247, %v3688, 0
      %3722 = vmatpush.bf16.msra.mxu0 0
      %3723 = vmatpush.bf16.msra.mxu0 0
      %3724 = vmatpush.bf16.msra.mxu0 0
      %3725 = vmatpush.bf16.msra.mxu0 %v3713
      %3726 = vmatpush.bf16.msra.mxu0 %v3712
      %3727 = vmatpush.bf16.msra.mxu0 %v3711
      %3728 = vmatpush.bf16.msra.mxu0 %v3710
      %3729 = vmatpush.bf16.msra.mxu0 %v3709
      %3730 = vmatmul.bf16.gmra.mxu0 %v3720
      %v3731 = vpop.f32.mrf.mxu0
      %v3732 = vadd.f32 0.0, %v3731
      %v3733 = vpop.f32.mrf.mxu0
      %3734 = vdwg.mxu0
      %v3745 = vunpack.c.l.b16 %v3661
      %v3746 = vunpack.c.l.b16 %v3662
      %v3747 = vunpack.c.l.b16 %v3663
      %v3748 = vunpack.c.l.b16 %v3664
      %v3749 = vunpack.c.l.b16 %v3665
      %v3750 = vunpack.c.l.b16 %v3666
      %v3751 = vunpack.c.l.b16 %v3667
      %v3752 = vunpack.c.l.b16 %v3668
      %v3753 = vunpack.c.l.b16 %v3669
      %v3754 = vunpack.c.l.b16 %v3670
      %v3755 = vpack.c.b16 %v3746, %v3745
      %v3756 = vpack.c.b16 %v3748, %v3747
      %v3757 = vpack.c.b16 %v3750, %v3749
      %v3758 = vpack.c.b16 %v3752, %v3751
      %v3759 = vpack.c.b16 %v3754, %v3753
      %v3766 = vsel %vm247, %v3660, 0
      %3768 = vmatpush.bf16.msra.mxu0 0
      %3769 = vmatpush.bf16.msra.mxu0 0
      %3770 = vmatpush.bf16.msra.mxu0 0
      %3771 = vmatpush.bf16.msra.mxu0 %v3759
      %3772 = vmatpush.bf16.msra.mxu0 %v3758
      %3773 = vmatpush.bf16.msra.mxu0 %v3757
      %3774 = vmatpush.bf16.msra.mxu0 %v3756
      %3775 = vmatpush.bf16.msra.mxu0 %v3755
      %3776 = vmatmul.bf16.gmra.mxu0 %v3766
      %v3777 = vpop.f32.mrf.mxu0
      %v3778 = vadd.f32 %v3732, %v3777
      %v3779 = vpop.f32.mrf.mxu0
      %3780 = vdwg.mxu0
      %v3781 = vld [vmem:[%s310] sm:$0xf]
      %v3782 = vld [vmem:[%s310 + $0x4] sm:$0xf]
      %v3783 = vld [vmem:[%s310 + $0x8] sm:$0xf]
      %v3784 = vld [vmem:[%s310 + $0xc] sm:$0xf]
      %v3785 = vld [vmem:[%s310 + $0x10] sm:$0xf]
      %v3786 = vld [vmem:[%s310 + $0x14] sm:$0xf]
      %v3787 = vld [vmem:[%s310 + $0x18] sm:$0xf]
      %v3788 = vld [vmem:[%s310 + $0x1c] sm:$0xf]
      %v3789 = vld [vmem:[%s310 + $0x20] sm:$0xf]
      %v3790 = vld [vmem:[%s310 + $0x24] sm:$0xf]
      %v3792 = vrot.slane %v3671, 1
      %v3803 = vunpack.c.l.b16 %v3781
      %v3804 = vunpack.c.l.b16 %v3782
      %v3805 = vunpack.c.l.b16 %v3783
      %v3806 = vunpack.c.l.b16 %v3784
      %v3807 = vunpack.c.l.b16 %v3785
      %v3808 = vunpack.c.l.b16 %v3786
      %v3809 = vunpack.c.l.b16 %v3787
      %v3810 = vunpack.c.l.b16 %v3788
      %v3811 = vunpack.c.l.b16 %v3789
      %v3812 = vunpack.c.l.b16 %v3790
      %v3813 = vpack.c.b16 %v3804, %v3803
      %v3814 = vpack.c.b16 %v3806, %v3805
      %v3815 = vpack.c.b16 %v3808, %v3807
      %v3816 = vpack.c.b16 %v3810, %v3809
      %v3817 = vpack.c.b16 %v3812, %v3811
      %v3824 = vsel %vm247, %v3792, 0
      %3826 = vmatpush.bf16.msra.mxu0 0
      %3827 = vmatpush.bf16.msra.mxu0 0
      %3828 = vmatpush.bf16.msra.mxu0 0
      %3829 = vmatpush.bf16.msra.mxu0 %v3817
      %3830 = vmatpush.bf16.msra.mxu0 %v3816
      %3831 = vmatpush.bf16.msra.mxu0 %v3815
      %3832 = vmatpush.bf16.msra.mxu0 %v3814
      %3833 = vmatpush.bf16.msra.mxu0 %v3813
      %3834 = vmatmul.bf16.gmra.mxu0 %v3824
      %v3835 = vpop.f32.mrf.mxu0
      %v3836 = vadd.f32 0.0, %v3835
      %v3837 = vpop.f32.mrf.mxu0
      %3838 = vdwg.mxu0
      %v3839 = vadd.f32 %v3778, %v3836
      %v3840 = vld [vmem:[%s3449] sm:$0xf]
      %v3841 = vld [vmem:[%s3449 + $0x4] sm:$0x1]
      %v3842 = vunpack.c.l.bf16 %v3840
      %v3843 = vunpack.c.l.bf16 %v3841
      %v3844 = vpack.c.bf16 %v3842, %v3842
      %v3845 = vld [vmem:[%s376] sm:$0xf]
      %v3846 = vld [vmem:[%s376 + $0x4] sm:$0xf]
      %v3847 = vld [vmem:[%s376 + $0x8] sm:$0xf]
      %v3848 = vld [vmem:[%s376 + $0xc] sm:$0xf]
      %v3849 = vld [vmem:[%s376 + $0x10] sm:$0xf]
      %v3850 = vld [vmem:[%s376 + $0x14] sm:$0xf]
      %v3851 = vld [vmem:[%s376 + $0x18] sm:$0xf]
      %v3852 = vld [vmem:[%s376 + $0x1c] sm:$0xf]
      %v3853 = vld [vmem:[%s376 + $0x20] sm:$0xf]
      %v3854 = vld [vmem:[%s376 + $0x24] sm:$0xf]
      %v3865 = vunpack.c.l.b16 %v3845
      %v3866 = vunpack.c.l.b16 %v3846
      %v3867 = vunpack.c.l.b16 %v3847
      %v3868 = vunpack.c.l.b16 %v3848
      %v3869 = vunpack.c.l.b16 %v3849
      %v3870 = vunpack.c.l.b16 %v3850
      %v3871 = vunpack.c.l.b16 %v3851
      %v3872 = vunpack.c.l.b16 %v3852
      %v3873 = vunpack.c.l.b16 %v3853
      %v3874 = vunpack.c.l.b16 %v3854
      %v3875 = vpack.c.b16 %v3866, %v3865
      %v3876 = vpack.c.b16 %v3868, %v3867
      %v3877 = vpack.c.b16 %v3870, %v3869
      %v3878 = vpack.c.b16 %v3872, %v3871
      %v3879 = vpack.c.b16 %v3874, %v3873
      %v3886 = vsel %vm247, %v3844, 0
      %3888 = vmatpush.bf16.msra.mxu0 0
      %3889 = vmatpush.bf16.msra.mxu0 0
      %3890 = vmatpush.bf16.msra.mxu0 0
      %3891 = vmatpush.bf16.msra.mxu0 %v3879
      %3892 = vmatpush.bf16.msra.mxu0 %v3878
      %3893 = vmatpush.bf16.msra.mxu0 %v3877
      %3894 = vmatpush.bf16.msra.mxu0 %v3876
      %3895 = vmatpush.bf16.msra.mxu0 %v3875
      %3896 = vmatmul.bf16.gmra.mxu0 %v3886
      %v3897 = vpop.f32.mrf.mxu0
      %v3898 = vadd.f32 0.0, %v3897
      %v3899 = vpop.f32.mrf.mxu0
      %3900 = vdwg.mxu0
      %v3901 = vadd.f32 %v3839, %v3898
      %v3902 = vpack.c.bf16 %v3843, %v3842
      %v3903 = vld [vmem:[%s435] sm:$0xf]
      %v3904 = vld [vmem:[%s435 + $0x4] sm:$0xf]
      %v3905 = vld [vmem:[%s435 + $0x8] sm:$0xf]
      %v3906 = vld [vmem:[%s435 + $0xc] sm:$0xf]
      %v3907 = vld [vmem:[%s435 + $0x10] sm:$0xf]
      %v3908 = vld [vmem:[%s435 + $0x14] sm:$0xf]
      %v3909 = vld [vmem:[%s435 + $0x18] sm:$0xf]
      %v3910 = vld [vmem:[%s435 + $0x1c] sm:$0xf]
      %v3911 = vld [vmem:[%s435 + $0x20] sm:$0xf]
      %v3912 = vld [vmem:[%s435 + $0x24] sm:$0xf]
      %v3914 = vshrl.u32 %v3902, 16
      %v3916 = vshll.u32 %v3902, 16
      %v3918 = vrot.slane %v3916, 1
      %v3919 = vor.u32 %v3914, %v3918
      %v3930 = vunpack.c.l.b16 %v3903
      %v3931 = vunpack.c.l.b16 %v3904
      %v3932 = vunpack.c.l.b16 %v3905
      %v3933 = vunpack.c.l.b16 %v3906
      %v3934 = vunpack.c.l.b16 %v3907
      %v3935 = vunpack.c.l.b16 %v3908
      %v3936 = vunpack.c.l.b16 %v3909
      %v3937 = vunpack.c.l.b16 %v3910
      %v3938 = vunpack.c.l.b16 %v3911
      %v3939 = vunpack.c.l.b16 %v3912
      %v3940 = vpack.c.b16 %v3931, %v3930
      %v3941 = vpack.c.b16 %v3933, %v3932
      %v3942 = vpack.c.b16 %v3935, %v3934
      %v3943 = vpack.c.b16 %v3937, %v3936
      %v3944 = vpack.c.b16 %v3939, %v3938
      %v3951 = vsel %vm247, %v3919, 0
      %3953 = vmatpush.bf16.msra.mxu0 0
      %3954 = vmatpush.bf16.msra.mxu0 0
      %3955 = vmatpush.bf16.msra.mxu0 0
      %3956 = vmatpush.bf16.msra.mxu0 %v3944
      %3957 = vmatpush.bf16.msra.mxu0 %v3943
      %3958 = vmatpush.bf16.msra.mxu0 %v3942
      %3959 = vmatpush.bf16.msra.mxu0 %v3941
      %3960 = vmatpush.bf16.msra.mxu0 %v3940
      %3961 = vmatmul.bf16.gmra.mxu0 %v3951
      %v3962 = vpop.f32.mrf.mxu0
      %v3963 = vadd.f32 0.0, %v3962
      %v3964 = vpop.f32.mrf.mxu0
      %3965 = vdwg.mxu0
      %v3966 = vadd.f32 %v3901, %v3963
      %v3967 = vld [vmem:[%s500] sm:$0xf]
      %v3968 = vld [vmem:[%s500 + $0x4] sm:$0xf]
      %v3969 = vld [vmem:[%s500 + $0x8] sm:$0xf]
      %v3970 = vld [vmem:[%s500 + $0xc] sm:$0xf]
      %v3971 = vld [vmem:[%s500 + $0x10] sm:$0xf]
      %v3972 = vld [vmem:[%s500 + $0x14] sm:$0xf]
      %v3973 = vld [vmem:[%s500 + $0x18] sm:$0xf]
      %v3974 = vld [vmem:[%s500 + $0x1c] sm:$0xf]
      %v3975 = vld [vmem:[%s500 + $0x20] sm:$0xf]
      %v3976 = vld [vmem:[%s500 + $0x24] sm:$0xf]
      %v3978 = vrot.slane %v3902, 1
      %v3989 = vunpack.c.l.b16 %v3967
      %v3990 = vunpack.c.l.b16 %v3968
      %v3991 = vunpack.c.l.b16 %v3969
      %v3992 = vunpack.c.l.b16 %v3970
      %v3993 = vunpack.c.l.b16 %v3971
      %v3994 = vunpack.c.l.b16 %v3972
      %v3995 = vunpack.c.l.b16 %v3973
      %v3996 = vunpack.c.l.b16 %v3974
      %v3997 = vunpack.c.l.b16 %v3975
      %v3998 = vunpack.c.l.b16 %v3976
      %v3999 = vpack.c.b16 %v3990, %v3989
      %v4000 = vpack.c.b16 %v3992, %v3991
      %v4001 = vpack.c.b16 %v3994, %v3993
      %v4002 = vpack.c.b16 %v3996, %v3995
      %v4003 = vpack.c.b16 %v3998, %v3997
      %v4010 = vsel %vm247, %v3978, 0
      %4012 = vmatpush.bf16.msra.mxu0 0
      %4013 = vmatpush.bf16.msra.mxu0 0
      %4014 = vmatpush.bf16.msra.mxu0 0
      %4015 = vmatpush.bf16.msra.mxu0 %v4003
      %4016 = vmatpush.bf16.msra.mxu0 %v4002
      %4017 = vmatpush.bf16.msra.mxu0 %v4001
      %4018 = vmatpush.bf16.msra.mxu0 %v4000
      %4019 = vmatpush.bf16.msra.mxu0 %v3999
      %4020 = vmatmul.bf16.gmra.mxu0 %v4010
      %v4021 = vpop.f32.mrf.mxu0
      %v4022 = vadd.f32 0.0, %v4021
      %v4023 = vpop.f32.mrf.mxu0
      %4024 = vdwg.mxu0
      %v4025 = vadd.f32 %v3966, %v4022
      %s4026 = scalar_lea.vmem %s172, 64
      %v4027 = vld [vmem:[%s4026] sm:$0xf]
      %v4028 = vld [vmem:[%s4026 + $0x4] sm:$0x1]
      %v4029 = vunpack.c.l.bf16 %v4027
      %v4030 = vunpack.c.l.bf16 %v4028
      %v4031 = vpack.c.bf16 %v4029, %v4029
      %v4032 = vld [vmem:[%s566] sm:$0xf]
      %v4033 = vld [vmem:[%s566 + $0x4] sm:$0xf]
      %v4034 = vld [vmem:[%s566 + $0x8] sm:$0xf]
      %v4035 = vld [vmem:[%s566 + $0xc] sm:$0xf]
      %v4036 = vld [vmem:[%s566 + $0x10] sm:$0xf]
      %v4037 = vld [vmem:[%s566 + $0x14] sm:$0xf]
      %v4038 = vld [vmem:[%s566 + $0x18] sm:$0xf]
      %v4039 = vld [vmem:[%s566 + $0x1c] sm:$0xf]
      %v4040 = vld [vmem:[%s566 + $0x20] sm:$0xf]
      %v4041 = vld [vmem:[%s566 + $0x24] sm:$0xf]
      %v4052 = vunpack.c.l.b16 %v4032
      %v4053 = vunpack.c.l.b16 %v4033
      %v4054 = vunpack.c.l.b16 %v4034
      %v4055 = vunpack.c.l.b16 %v4035
      %v4056 = vunpack.c.l.b16 %v4036
      %v4057 = vunpack.c.l.b16 %v4037
      %v4058 = vunpack.c.l.b16 %v4038
      %v4059 = vunpack.c.l.b16 %v4039
      %v4060 = vunpack.c.l.b16 %v4040
      %v4061 = vunpack.c.l.b16 %v4041
      %v4062 = vpack.c.b16 %v4053, %v4052
      %v4063 = vpack.c.b16 %v4055, %v4054
      %v4064 = vpack.c.b16 %v4057, %v4056
      %v4065 = vpack.c.b16 %v4059, %v4058
      %v4066 = vpack.c.b16 %v4061, %v4060
      %v4073 = vsel %vm247, %v4031, 0
      %4075 = vmatpush.bf16.msra.mxu0 0
      %4076 = vmatpush.bf16.msra.mxu0 0
      %4077 = vmatpush.bf16.msra.mxu0 0
      %4078 = vmatpush.bf16.msra.mxu0 %v4066
      %4079 = vmatpush.bf16.msra.mxu0 %v4065
      %4080 = vmatpush.bf16.msra.mxu0 %v4064
      %4081 = vmatpush.bf16.msra.mxu0 %v4063
      %4082 = vmatpush.bf16.msra.mxu0 %v4062
      %4083 = vmatmul.bf16.gmra.mxu0 %v4073
      %v4084 = vpop.f32.mrf.mxu0
      %v4085 = vadd.f32 0.0, %v4084
      %v4086 = vpop.f32.mrf.mxu0
      %4087 = vdwg.mxu0
      %v4088 = vadd.f32 %v4025, %v4085
      %v4089 = vpack.c.bf16 %v4030, %v4029
      %v4090 = vld [vmem:[%s625] sm:$0xf]
      %v4091 = vld [vmem:[%s625 + $0x4] sm:$0xf]
      %v4092 = vld [vmem:[%s625 + $0x8] sm:$0xf]
      %v4093 = vld [vmem:[%s625 + $0xc] sm:$0xf]
      %v4094 = vld [vmem:[%s625 + $0x10] sm:$0xf]
      %v4095 = vld [vmem:[%s625 + $0x14] sm:$0xf]
      %v4096 = vld [vmem:[%s625 + $0x18] sm:$0xf]
      %v4097 = vld [vmem:[%s625 + $0x1c] sm:$0xf]
      %v4098 = vld [vmem:[%s625 + $0x20] sm:$0xf]
      %v4099 = vld [vmem:[%s625 + $0x24] sm:$0xf]
      %v4101 = vshrl.u32 %v4089, 16
      %v4103 = vshll.u32 %v4089, 16
      %v4105 = vrot.slane %v4103, 1
      %v4106 = vor.u32 %v4101, %v4105
      %v4117 = vunpack.c.l.b16 %v4090
      %v4118 = vunpack.c.l.b16 %v4091
      %v4119 = vunpack.c.l.b16 %v4092
      %v4120 = vunpack.c.l.b16 %v4093
      %v4121 = vunpack.c.l.b16 %v4094
      %v4122 = vunpack.c.l.b16 %v4095
      %v4123 = vunpack.c.l.b16 %v4096
      %v4124 = vunpack.c.l.b16 %v4097
      %v4125 = vunpack.c.l.b16 %v4098
      %v4126 = vunpack.c.l.b16 %v4099
      %v4127 = vpack.c.b16 %v4118, %v4117
      %v4128 = vpack.c.b16 %v4120, %v4119
      %v4129 = vpack.c.b16 %v4122, %v4121
      %v4130 = vpack.c.b16 %v4124, %v4123
      %v4131 = vpack.c.b16 %v4126, %v4125
      %v4138 = vsel %vm247, %v4106, 0
      %4140 = vmatpush.bf16.msra.mxu0 0
      %4141 = vmatpush.bf16.msra.mxu0 0
      %4142 = vmatpush.bf16.msra.mxu0 0
      %4143 = vmatpush.bf16.msra.mxu0 %v4131
      %4144 = vmatpush.bf16.msra.mxu0 %v4130
      %4145 = vmatpush.bf16.msra.mxu0 %v4129
      %4146 = vmatpush.bf16.msra.mxu0 %v4128
      %4147 = vmatpush.bf16.msra.mxu0 %v4127
      %4148 = vmatmul.bf16.gmra.mxu0 %v4138
      %v4149 = vpop.f32.mrf.mxu0
      %v4150 = vadd.f32 0.0, %v4149
      %v4151 = vpop.f32.mrf.mxu0
      %4152 = vdwg.mxu0
      %v4153 = vadd.f32 %v4088, %v4150
      %v4154 = vld [vmem:[%s690] sm:$0xf]
      %v4155 = vld [vmem:[%s690 + $0x4] sm:$0xf]
      %v4156 = vld [vmem:[%s690 + $0x8] sm:$0xf]
      %v4157 = vld [vmem:[%s690 + $0xc] sm:$0xf]
      %v4158 = vld [vmem:[%s690 + $0x10] sm:$0xf]
      %v4159 = vld [vmem:[%s690 + $0x14] sm:$0xf]
      %v4160 = vld [vmem:[%s690 + $0x18] sm:$0xf]
      %v4161 = vld [vmem:[%s690 + $0x1c] sm:$0xf]
      %v4162 = vld [vmem:[%s690 + $0x20] sm:$0xf]
      %v4163 = vld [vmem:[%s690 + $0x24] sm:$0xf]
      %v4165 = vrot.slane %v4089, 1
      %v4176 = vunpack.c.l.b16 %v4154
      %v4177 = vunpack.c.l.b16 %v4155
      %v4178 = vunpack.c.l.b16 %v4156
      %v4179 = vunpack.c.l.b16 %v4157
      %v4180 = vunpack.c.l.b16 %v4158
      %v4181 = vunpack.c.l.b16 %v4159
      %v4182 = vunpack.c.l.b16 %v4160
      %v4183 = vunpack.c.l.b16 %v4161
      %v4184 = vunpack.c.l.b16 %v4162
      %v4185 = vunpack.c.l.b16 %v4163
      %v4186 = vpack.c.b16 %v4177, %v4176
      %v4187 = vpack.c.b16 %v4179, %v4178
      %v4188 = vpack.c.b16 %v4181, %v4180
      %v4189 = vpack.c.b16 %v4183, %v4182
      %v4190 = vpack.c.b16 %v4185, %v4184
      %v4197 = vsel %vm247, %v4165, 0
      %4199 = vmatpush.bf16.msra.mxu0 0
      %4200 = vmatpush.bf16.msra.mxu0 0
      %4201 = vmatpush.bf16.msra.mxu0 0
      %4202 = vmatpush.bf16.msra.mxu0 %v4190
      %4203 = vmatpush.bf16.msra.mxu0 %v4189
      %4204 = vmatpush.bf16.msra.mxu0 %v4188
      %4205 = vmatpush.bf16.msra.mxu0 %v4187
      %4206 = vmatpush.bf16.msra.mxu0 %v4186
      %4207 = vmatmul.bf16.gmra.mxu0 %v4197
      %v4208 = vpop.f32.mrf.mxu0
      %v4209 = vadd.f32 0.0, %v4208
      %v4210 = vpop.f32.mrf.mxu0
      %4211 = vdwg.mxu0
      %v4212 = vadd.f32 %v4153, %v4209
      %v4213 = vpack.c.bf16 %v4212, %v4212
      %s4214 = scalar_lea.vmem %s177, 24
      %4215 = vst.msk [vmem:[%s4214] sm:$0xf] %vm751, %v4213
      %v4216 = vsel %vm753, %v4212, 0.0
      %v4217 = vrot.slane %v4216, 4
      %v4218 = vadd.f32 %v4216, %v4217
      %v4219 = vrot.slane %v4218, 2
      %v4220 = vadd.f32 %v4218, %v4219
      %v4221 = vrot.slane %v4220, 1
      %v4222 = vadd.f32 %v4220, %v4221
      %v4223 = vadd.f32 %v3646, %v4222
      %v4224 = vmul.f32 %v4212, %v4212
      %v4225 = vsel %vm753, %v4224, 0.0
      %v4226 = vrot.slane %v4225, 4
      %v4227 = vadd.f32 %v4225, %v4226
      %v4228 = vrot.slane %v4227, 2
      %v4229 = vadd.f32 %v4227, %v4228
      %v4230 = vrot.slane %v4229, 1
      %v4231 = vadd.f32 %v4229, %v4230
      %v4232 = vadd.f32 %v3655, %v4231
      %v4233 = vld [vmem:[%s3449] sm:$0xf]
      %v4234 = vld [vmem:[%s3449 + $0x4] sm:$0x1]
      %v4235 = vunpack.c.l.bf16 %v4233
      %v4236 = vunpack.c.l.bf16 %v4234
      %v4237 = vpack.c.bf16 %v4235, %v4235
      %v4238 = vld [vmem:[%s1] sm:$0xf]
      %v4239 = vld [vmem:[%s1 + $0x4] sm:$0xf]
      %v4240 = vld [vmem:[%s1 + $0x8] sm:$0xf]
      %v4241 = vld [vmem:[%s1 + $0xc] sm:$0xf]
      %v4242 = vld [vmem:[%s1 + $0x10] sm:$0xf]
      %v4243 = vld [vmem:[%s1 + $0x14] sm:$0xf]
      %v4244 = vld [vmem:[%s1 + $0x18] sm:$0xf]
      %v4245 = vld [vmem:[%s1 + $0x1c] sm:$0xf]
      %v4246 = vld [vmem:[%s1 + $0x20] sm:$0xf]
      %v4247 = vld [vmem:[%s1 + $0x24] sm:$0xf]
      %v4248 = vpack.c.bf16 %v4236, %v4235
      %v4249 = vld [vmem:[%s199] sm:$0xf]
      %v4250 = vld [vmem:[%s199 + $0x4] sm:$0xf]
      %v4251 = vld [vmem:[%s199 + $0x8] sm:$0xf]
      %v4252 = vld [vmem:[%s199 + $0xc] sm:$0xf]
      %v4253 = vld [vmem:[%s199 + $0x10] sm:$0xf]
      %v4254 = vld [vmem:[%s199 + $0x14] sm:$0xf]
      %v4255 = vld [vmem:[%s199 + $0x18] sm:$0xf]
      %v4256 = vld [vmem:[%s199 + $0x1c] sm:$0xf]
      %v4257 = vld [vmem:[%s199 + $0x20] sm:$0xf]
      %v4258 = vld [vmem:[%s199 + $0x24] sm:$0xf]
      %v4260 = vshrl.u32 %v4248, 16
      %v4262 = vshll.u32 %v4248, 16
      %v4264 = vrot.slane %v4262, 1
      %v4265 = vor.u32 %v4260, %v4264
      %v4276 = vunpack.c.l.b16 %v4249
      %v4277 = vunpack.c.l.b16 %v4250
      %v4278 = vunpack.c.l.b16 %v4251
      %v4279 = vunpack.c.l.b16 %v4252
      %v4280 = vunpack.c.l.b16 %v4253
      %v4281 = vunpack.c.l.b16 %v4254
      %v4282 = vunpack.c.l.b16 %v4255
      %v4283 = vunpack.c.l.b16 %v4256
      %v4284 = vunpack.c.l.b16 %v4257
      %v4285 = vunpack.c.l.b16 %v4258
      %v4286 = vpack.c.b16 %v4277, %v4276
      %v4287 = vpack.c.b16 %v4279, %v4278
      %v4288 = vpack.c.b16 %v4281, %v4280
      %v4289 = vpack.c.b16 %v4283, %v4282
      %v4290 = vpack.c.b16 %v4285, %v4284
      %v4297 = vsel %vm247, %v4265, 0
      %4299 = vmatpush.bf16.msra.mxu0 0
      %4300 = vmatpush.bf16.msra.mxu0 0
      %4301 = vmatpush.bf16.msra.mxu0 0
      %4302 = vmatpush.bf16.msra.mxu0 %v4290
      %4303 = vmatpush.bf16.msra.mxu0 %v4289
      %4304 = vmatpush.bf16.msra.mxu0 %v4288
      %4305 = vmatpush.bf16.msra.mxu0 %v4287
      %4306 = vmatpush.bf16.msra.mxu0 %v4286
      %4307 = vmatmul.bf16.gmra.mxu0 %v4297
      %v4308 = vpop.f32.mrf.mxu0
      %v4309 = vadd.f32 0.0, %v4308
      %v4310 = vpop.f32.mrf.mxu0
      %4311 = vdwg.mxu0
      %v4322 = vunpack.c.l.b16 %v4238
      %v4323 = vunpack.c.l.b16 %v4239
      %v4324 = vunpack.c.l.b16 %v4240
      %v4325 = vunpack.c.l.b16 %v4241
      %v4326 = vunpack.c.l.b16 %v4242
      %v4327 = vunpack.c.l.b16 %v4243
      %v4328 = vunpack.c.l.b16 %v4244
      %v4329 = vunpack.c.l.b16 %v4245
      %v4330 = vunpack.c.l.b16 %v4246
      %v4331 = vunpack.c.l.b16 %v4247
      %v4332 = vpack.c.b16 %v4323, %v4322
      %v4333 = vpack.c.b16 %v4325, %v4324
      %v4334 = vpack.c.b16 %v4327, %v4326
      %v4335 = vpack.c.b16 %v4329, %v4328
      %v4336 = vpack.c.b16 %v4331, %v4330
      %v4343 = vsel %vm247, %v4237, 0
      %4345 = vmatpush.bf16.msra.mxu0 0
      %4346 = vmatpush.bf16.msra.mxu0 0
      %4347 = vmatpush.bf16.msra.mxu0 0
      %4348 = vmatpush.bf16.msra.mxu0 %v4336
      %4349 = vmatpush.bf16.msra.mxu0 %v4335
      %4350 = vmatpush.bf16.msra.mxu0 %v4334
      %4351 = vmatpush.bf16.msra.mxu0 %v4333
      %4352 = vmatpush.bf16.msra.mxu0 %v4332
      %4353 = vmatmul.bf16.gmra.mxu0 %v4343
      %v4354 = vpop.f32.mrf.mxu0
      %v4355 = vadd.f32 %v4309, %v4354
      %v4356 = vpop.f32.mrf.mxu0
      %4357 = vdwg.mxu0
      %v4358 = vld [vmem:[%s310] sm:$0xf]
      %v4359 = vld [vmem:[%s310 + $0x4] sm:$0xf]
      %v4360 = vld [vmem:[%s310 + $0x8] sm:$0xf]
      %v4361 = vld [vmem:[%s310 + $0xc] sm:$0xf]
      %v4362 = vld [vmem:[%s310 + $0x10] sm:$0xf]
      %v4363 = vld [vmem:[%s310 + $0x14] sm:$0xf]
      %v4364 = vld [vmem:[%s310 + $0x18] sm:$0xf]
      %v4365 = vld [vmem:[%s310 + $0x1c] sm:$0xf]
      %v4366 = vld [vmem:[%s310 + $0x20] sm:$0xf]
      %v4367 = vld [vmem:[%s310 + $0x24] sm:$0xf]
      %v4369 = vrot.slane %v4248, 1
      %v4380 = vunpack.c.l.b16 %v4358
      %v4381 = vunpack.c.l.b16 %v4359
      %v4382 = vunpack.c.l.b16 %v4360
      %v4383 = vunpack.c.l.b16 %v4361
      %v4384 = vunpack.c.l.b16 %v4362
      %v4385 = vunpack.c.l.b16 %v4363
      %v4386 = vunpack.c.l.b16 %v4364
      %v4387 = vunpack.c.l.b16 %v4365
      %v4388 = vunpack.c.l.b16 %v4366
      %v4389 = vunpack.c.l.b16 %v4367
      %v4390 = vpack.c.b16 %v4381, %v4380
      %v4391 = vpack.c.b16 %v4383, %v4382
      %v4392 = vpack.c.b16 %v4385, %v4384
      %v4393 = vpack.c.b16 %v4387, %v4386
      %v4394 = vpack.c.b16 %v4389, %v4388
      %v4401 = vsel %vm247, %v4369, 0
      %4403 = vmatpush.bf16.msra.mxu0 0
      %4404 = vmatpush.bf16.msra.mxu0 0
      %4405 = vmatpush.bf16.msra.mxu0 0
      %4406 = vmatpush.bf16.msra.mxu0 %v4394
      %4407 = vmatpush.bf16.msra.mxu0 %v4393
      %4408 = vmatpush.bf16.msra.mxu0 %v4392
      %4409 = vmatpush.bf16.msra.mxu0 %v4391
      %4410 = vmatpush.bf16.msra.mxu0 %v4390
      %4411 = vmatmul.bf16.gmra.mxu0 %v4401
      %v4412 = vpop.f32.mrf.mxu0
      %v4413 = vadd.f32 0.0, %v4412
      %v4414 = vpop.f32.mrf.mxu0
      %4415 = vdwg.mxu0
      %v4416 = vadd.f32 %v4355, %v4413
      %v4417 = vld [vmem:[%s4026] sm:$0xf]
      %v4418 = vld [vmem:[%s4026 + $0x4] sm:$0x1]
      %v4419 = vunpack.c.l.bf16 %v4417
      %v4420 = vunpack.c.l.bf16 %v4418
      %v4421 = vpack.c.bf16 %v4419, %v4419
      %v4422 = vld [vmem:[%s376] sm:$0xf]
      %v4423 = vld [vmem:[%s376 + $0x4] sm:$0xf]
      %v4424 = vld [vmem:[%s376 + $0x8] sm:$0xf]
      %v4425 = vld [vmem:[%s376 + $0xc] sm:$0xf]
      %v4426 = vld [vmem:[%s376 + $0x10] sm:$0xf]
      %v4427 = vld [vmem:[%s376 + $0x14] sm:$0xf]
      %v4428 = vld [vmem:[%s376 + $0x18] sm:$0xf]
      %v4429 = vld [vmem:[%s376 + $0x1c] sm:$0xf]
      %v4430 = vld [vmem:[%s376 + $0x20] sm:$0xf]
      %v4431 = vld [vmem:[%s376 + $0x24] sm:$0xf]
      %v4442 = vunpack.c.l.b16 %v4422
      %v4443 = vunpack.c.l.b16 %v4423
      %v4444 = vunpack.c.l.b16 %v4424
      %v4445 = vunpack.c.l.b16 %v4425
      %v4446 = vunpack.c.l.b16 %v4426
      %v4447 = vunpack.c.l.b16 %v4427
      %v4448 = vunpack.c.l.b16 %v4428
      %v4449 = vunpack.c.l.b16 %v4429
      %v4450 = vunpack.c.l.b16 %v4430
      %v4451 = vunpack.c.l.b16 %v4431
      %v4452 = vpack.c.b16 %v4443, %v4442
      %v4453 = vpack.c.b16 %v4445, %v4444
      %v4454 = vpack.c.b16 %v4447, %v4446
      %v4455 = vpack.c.b16 %v4449, %v4448
      %v4456 = vpack.c.b16 %v4451, %v4450
      %v4463 = vsel %vm247, %v4421, 0
      %4465 = vmatpush.bf16.msra.mxu0 0
      %4466 = vmatpush.bf16.msra.mxu0 0
      %4467 = vmatpush.bf16.msra.mxu0 0
      %4468 = vmatpush.bf16.msra.mxu0 %v4456
      %4469 = vmatpush.bf16.msra.mxu0 %v4455
      %4470 = vmatpush.bf16.msra.mxu0 %v4454
      %4471 = vmatpush.bf16.msra.mxu0 %v4453
      %4472 = vmatpush.bf16.msra.mxu0 %v4452
      %4473 = vmatmul.bf16.gmra.mxu0 %v4463
      %v4474 = vpop.f32.mrf.mxu0
      %v4475 = vadd.f32 0.0, %v4474
      %v4476 = vpop.f32.mrf.mxu0
      %4477 = vdwg.mxu0
      %v4478 = vadd.f32 %v4416, %v4475
      %v4479 = vpack.c.bf16 %v4420, %v4419
      %v4480 = vld [vmem:[%s435] sm:$0xf]
      %v4481 = vld [vmem:[%s435 + $0x4] sm:$0xf]
      %v4482 = vld [vmem:[%s435 + $0x8] sm:$0xf]
      %v4483 = vld [vmem:[%s435 + $0xc] sm:$0xf]
      %v4484 = vld [vmem:[%s435 + $0x10] sm:$0xf]
      %v4485 = vld [vmem:[%s435 + $0x14] sm:$0xf]
      %v4486 = vld [vmem:[%s435 + $0x18] sm:$0xf]
      %v4487 = vld [vmem:[%s435 + $0x1c] sm:$0xf]
      %v4488 = vld [vmem:[%s435 + $0x20] sm:$0xf]
      %v4489 = vld [vmem:[%s435 + $0x24] sm:$0xf]
      %v4491 = vshrl.u32 %v4479, 16
      %v4493 = vshll.u32 %v4479, 16
      %v4495 = vrot.slane %v4493, 1
      %v4496 = vor.u32 %v4491, %v4495
      %v4507 = vunpack.c.l.b16 %v4480
      %v4508 = vunpack.c.l.b16 %v4481
      %v4509 = vunpack.c.l.b16 %v4482
      %v4510 = vunpack.c.l.b16 %v4483
      %v4511 = vunpack.c.l.b16 %v4484
      %v4512 = vunpack.c.l.b16 %v4485
      %v4513 = vunpack.c.l.b16 %v4486
      %v4514 = vunpack.c.l.b16 %v4487
      %v4515 = vunpack.c.l.b16 %v4488
      %v4516 = vunpack.c.l.b16 %v4489
      %v4517 = vpack.c.b16 %v4508, %v4507
      %v4518 = vpack.c.b16 %v4510, %v4509
      %v4519 = vpack.c.b16 %v4512, %v4511
      %v4520 = vpack.c.b16 %v4514, %v4513
      %v4521 = vpack.c.b16 %v4516, %v4515
      %v4528 = vsel %vm247, %v4496, 0
      %4530 = vmatpush.bf16.msra.mxu0 0
      %4531 = vmatpush.bf16.msra.mxu0 0
      %4532 = vmatpush.bf16.msra.mxu0 0
      %4533 = vmatpush.bf16.msra.mxu0 %v4521
      %4534 = vmatpush.bf16.msra.mxu0 %v4520
      %4535 = vmatpush.bf16.msra.mxu0 %v4519
      %4536 = vmatpush.bf16.msra.mxu0 %v4518
      %4537 = vmatpush.bf16.msra.mxu0 %v4517
      %4538 = vmatmul.bf16.gmra.mxu0 %v4528
      %v4539 = vpop.f32.mrf.mxu0
      %v4540 = vadd.f32 0.0, %v4539
      %v4541 = vpop.f32.mrf.mxu0
      %4542 = vdwg.mxu0
      %v4543 = vadd.f32 %v4478, %v4540
      %v4544 = vld [vmem:[%s500] sm:$0xf]
      %v4545 = vld [vmem:[%s500 + $0x4] sm:$0xf]
      %v4546 = vld [vmem:[%s500 + $0x8] sm:$0xf]
      %v4547 = vld [vmem:[%s500 + $0xc] sm:$0xf]
      %v4548 = vld [vmem:[%s500 + $0x10] sm:$0xf]
      %v4549 = vld [vmem:[%s500 + $0x14] sm:$0xf]
      %v4550 = vld [vmem:[%s500 + $0x18] sm:$0xf]
      %v4551 = vld [vmem:[%s500 + $0x1c] sm:$0xf]
      %v4552 = vld [vmem:[%s500 + $0x20] sm:$0xf]
      %v4553 = vld [vmem:[%s500 + $0x24] sm:$0xf]
      %v4555 = vrot.slane %v4479, 1
      %v4566 = vunpack.c.l.b16 %v4544
      %v4567 = vunpack.c.l.b16 %v4545
      %v4568 = vunpack.c.l.b16 %v4546
      %v4569 = vunpack.c.l.b16 %v4547
      %v4570 = vunpack.c.l.b16 %v4548
      %v4571 = vunpack.c.l.b16 %v4549
      %v4572 = vunpack.c.l.b16 %v4550
      %v4573 = vunpack.c.l.b16 %v4551
      %v4574 = vunpack.c.l.b16 %v4552
      %v4575 = vunpack.c.l.b16 %v4553
      %v4576 = vpack.c.b16 %v4567, %v4566
      %v4577 = vpack.c.b16 %v4569, %v4568
      %v4578 = vpack.c.b16 %v4571, %v4570
      %v4579 = vpack.c.b16 %v4573, %v4572
      %v4580 = vpack.c.b16 %v4575, %v4574
      %v4587 = vsel %vm247, %v4555, 0
      %4589 = vmatpush.bf16.msra.mxu0 0
      %4590 = vmatpush.bf16.msra.mxu0 0
      %4591 = vmatpush.bf16.msra.mxu0 0
      %4592 = vmatpush.bf16.msra.mxu0 %v4580
      %4593 = vmatpush.bf16.msra.mxu0 %v4579
      %4594 = vmatpush.bf16.msra.mxu0 %v4578
      %4595 = vmatpush.bf16.msra.mxu0 %v4577
      %4596 = vmatpush.bf16.msra.mxu0 %v4576
      %4597 = vmatmul.bf16.gmra.mxu0 %v4587
      %v4598 = vpop.f32.mrf.mxu0
      %v4599 = vadd.f32 0.0, %v4598
      %v4600 = vpop.f32.mrf.mxu0
      %4601 = vdwg.mxu0
      %v4602 = vadd.f32 %v4543, %v4599
      %s4603 = scalar_lea.vmem %s172, 72
      %v4604 = vld [vmem:[%s4603] sm:$0xf]
      %v4605 = vld [vmem:[%s4603 + $0x4] sm:$0x1]
      %v4606 = vunpack.c.l.bf16 %v4604
      %v4607 = vunpack.c.l.bf16 %v4605
      %v4608 = vpack.c.bf16 %v4606, %v4606
      %v4609 = vld [vmem:[%s566] sm:$0xf]
      %v4610 = vld [vmem:[%s566 + $0x4] sm:$0xf]
      %v4611 = vld [vmem:[%s566 + $0x8] sm:$0xf]
      %v4612 = vld [vmem:[%s566 + $0xc] sm:$0xf]
      %v4613 = vld [vmem:[%s566 + $0x10] sm:$0xf]
      %v4614 = vld [vmem:[%s566 + $0x14] sm:$0xf]
      %v4615 = vld [vmem:[%s566 + $0x18] sm:$0xf]
      %v4616 = vld [vmem:[%s566 + $0x1c] sm:$0xf]
      %v4617 = vld [vmem:[%s566 + $0x20] sm:$0xf]
      %v4618 = vld [vmem:[%s566 + $0x24] sm:$0xf]
      %v4629 = vunpack.c.l.b16 %v4609
      %v4630 = vunpack.c.l.b16 %v4610
      %v4631 = vunpack.c.l.b16 %v4611
      %v4632 = vunpack.c.l.b16 %v4612
      %v4633 = vunpack.c.l.b16 %v4613
      %v4634 = vunpack.c.l.b16 %v4614
      %v4635 = vunpack.c.l.b16 %v4615
      %v4636 = vunpack.c.l.b16 %v4616
      %v4637 = vunpack.c.l.b16 %v4617
      %v4638 = vunpack.c.l.b16 %v4618
      %v4639 = vpack.c.b16 %v4630, %v4629
      %v4640 = vpack.c.b16 %v4632, %v4631
      %v4641 = vpack.c.b16 %v4634, %v4633
      %v4642 = vpack.c.b16 %v4636, %v4635
      %v4643 = vpack.c.b16 %v4638, %v4637
      %v4650 = vsel %vm247, %v4608, 0
      %4652 = vmatpush.bf16.msra.mxu0 0
      %4653 = vmatpush.bf16.msra.mxu0 0
      %4654 = vmatpush.bf16.msra.mxu0 0
      %4655 = vmatpush.bf16.msra.mxu0 %v4643
      %4656 = vmatpush.bf16.msra.mxu0 %v4642
      %4657 = vmatpush.bf16.msra.mxu0 %v4641
      %4658 = vmatpush.bf16.msra.mxu0 %v4640
      %4659 = vmatpush.bf16.msra.mxu0 %v4639
      %4660 = vmatmul.bf16.gmra.mxu0 %v4650
      %v4661 = vpop.f32.mrf.mxu0
      %v4662 = vadd.f32 0.0, %v4661
      %v4663 = vpop.f32.mrf.mxu0
      %4664 = vdwg.mxu0
      %v4665 = vadd.f32 %v4602, %v4662
      %v4666 = vpack.c.bf16 %v4607, %v4606
      %v4667 = vld [vmem:[%s625] sm:$0xf]
      %v4668 = vld [vmem:[%s625 + $0x4] sm:$0xf]
      %v4669 = vld [vmem:[%s625 + $0x8] sm:$0xf]
      %v4670 = vld [vmem:[%s625 + $0xc] sm:$0xf]
      %v4671 = vld [vmem:[%s625 + $0x10] sm:$0xf]
      %v4672 = vld [vmem:[%s625 + $0x14] sm:$0xf]
      %v4673 = vld [vmem:[%s625 + $0x18] sm:$0xf]
      %v4674 = vld [vmem:[%s625 + $0x1c] sm:$0xf]
      %v4675 = vld [vmem:[%s625 + $0x20] sm:$0xf]
      %v4676 = vld [vmem:[%s625 + $0x24] sm:$0xf]
      %v4678 = vshrl.u32 %v4666, 16
      %v4680 = vshll.u32 %v4666, 16
      %v4682 = vrot.slane %v4680, 1
      %v4683 = vor.u32 %v4678, %v4682
      %v4694 = vunpack.c.l.b16 %v4667
      %v4695 = vunpack.c.l.b16 %v4668
      %v4696 = vunpack.c.l.b16 %v4669
      %v4697 = vunpack.c.l.b16 %v4670
      %v4698 = vunpack.c.l.b16 %v4671
      %v4699 = vunpack.c.l.b16 %v4672
      %v4700 = vunpack.c.l.b16 %v4673
      %v4701 = vunpack.c.l.b16 %v4674
      %v4702 = vunpack.c.l.b16 %v4675
      %v4703 = vunpack.c.l.b16 %v4676
      %v4704 = vpack.c.b16 %v4695, %v4694
      %v4705 = vpack.c.b16 %v4697, %v4696
      %v4706 = vpack.c.b16 %v4699, %v4698
      %v4707 = vpack.c.b16 %v4701, %v4700
      %v4708 = vpack.c.b16 %v4703, %v4702
      %v4715 = vsel %vm247, %v4683, 0
      %4717 = vmatpush.bf16.msra.mxu0 0
      %4718 = vmatpush.bf16.msra.mxu0 0
      %4719 = vmatpush.bf16.msra.mxu0 0
      %4720 = vmatpush.bf16.msra.mxu0 %v4708
      %4721 = vmatpush.bf16.msra.mxu0 %v4707
      %4722 = vmatpush.bf16.msra.mxu0 %v4706
      %4723 = vmatpush.bf16.msra.mxu0 %v4705
      %4724 = vmatpush.bf16.msra.mxu0 %v4704
      %4725 = vmatmul.bf16.gmra.mxu0 %v4715
      %v4726 = vpop.f32.mrf.mxu0
      %v4727 = vadd.f32 0.0, %v4726
      %v4728 = vpop.f32.mrf.mxu0
      %4729 = vdwg.mxu0
      %v4730 = vadd.f32 %v4665, %v4727
      %v4731 = vld [vmem:[%s690] sm:$0xf]
      %v4732 = vld [vmem:[%s690 + $0x4] sm:$0xf]
      %v4733 = vld [vmem:[%s690 + $0x8] sm:$0xf]
      %v4734 = vld [vmem:[%s690 + $0xc] sm:$0xf]
      %v4735 = vld [vmem:[%s690 + $0x10] sm:$0xf]
      %v4736 = vld [vmem:[%s690 + $0x14] sm:$0xf]
      %v4737 = vld [vmem:[%s690 + $0x18] sm:$0xf]
      %v4738 = vld [vmem:[%s690 + $0x1c] sm:$0xf]
      %v4739 = vld [vmem:[%s690 + $0x20] sm:$0xf]
      %v4740 = vld [vmem:[%s690 + $0x24] sm:$0xf]
      %v4742 = vrot.slane %v4666, 1
      %v4753 = vunpack.c.l.b16 %v4731
      %v4754 = vunpack.c.l.b16 %v4732
      %v4755 = vunpack.c.l.b16 %v4733
      %v4756 = vunpack.c.l.b16 %v4734
      %v4757 = vunpack.c.l.b16 %v4735
      %v4758 = vunpack.c.l.b16 %v4736
      %v4759 = vunpack.c.l.b16 %v4737
      %v4760 = vunpack.c.l.b16 %v4738
      %v4761 = vunpack.c.l.b16 %v4739
      %v4762 = vunpack.c.l.b16 %v4740
      %v4763 = vpack.c.b16 %v4754, %v4753
      %v4764 = vpack.c.b16 %v4756, %v4755
      %v4765 = vpack.c.b16 %v4758, %v4757
      %v4766 = vpack.c.b16 %v4760, %v4759
      %v4767 = vpack.c.b16 %v4762, %v4761
      %v4774 = vsel %vm247, %v4742, 0
      %4776 = vmatpush.bf16.msra.mxu0 0
      %4777 = vmatpush.bf16.msra.mxu0 0
      %4778 = vmatpush.bf16.msra.mxu0 0
      %4779 = vmatpush.bf16.msra.mxu0 %v4767
      %4780 = vmatpush.bf16.msra.mxu0 %v4766
      %4781 = vmatpush.bf16.msra.mxu0 %v4765
      %4782 = vmatpush.bf16.msra.mxu0 %v4764
      %4783 = vmatpush.bf16.msra.mxu0 %v4763
      %4784 = vmatmul.bf16.gmra.mxu0 %v4774
      %v4785 = vpop.f32.mrf.mxu0
      %v4786 = vadd.f32 0.0, %v4785
      %v4787 = vpop.f32.mrf.mxu0
      %4788 = vdwg.mxu0
      %v4789 = vadd.f32 %v4730, %v4786
      %v4790 = vpack.c.bf16 %v4789, %v4789
      %s4791 = scalar_lea.vmem %s177, 28
      %4792 = vst.msk [vmem:[%s4791] sm:$0xf] %vm751, %v4790
      %v4793 = vsel %vm753, %v4789, 0.0
      %v4794 = vrot.slane %v4793, 4
      %v4795 = vadd.f32 %v4793, %v4794
      %v4796 = vrot.slane %v4795, 2
      %v4797 = vadd.f32 %v4795, %v4796
      %v4798 = vrot.slane %v4797, 1
      %v4799 = vadd.f32 %v4797, %v4798
      %v4800 = vadd.f32 %v4223, %v4799
      %v4801 = vmul.f32 %v4789, %v4789
      %v4802 = vsel %vm753, %v4801, 0.0
      %v4803 = vrot.slane %v4802, 4
      %v4804 = vadd.f32 %v4802, %v4803
      %v4805 = vrot.slane %v4804, 2
      %v4806 = vadd.f32 %v4804, %v4805
      %v4807 = vrot.slane %v4806, 1
      %v4808 = vadd.f32 %v4806, %v4807
      %v4809 = vadd.f32 %v4232, %v4808
      %vm4810 = vcmask 516096
      %4811 = vst.msk [vmem:[%s181] sm:$0x1] %vm4810, %v4800
      %4812 = vst.msk [vmem:[%s181 + $0x1] sm:$0x1] %vm4810, %v4809
      %p4813 = scmp.lt.s32.totalorder %s15, 1
      %s4814 = scalar_select %p4813, %s15, 1
      %s4815 = smul.addr %s4814, 8
      %s4816 = smul.addr %s4815, 4
      %s4817 = scalar_lea.vmem %s2, %s4816
      %p4818 = scmp.lt.s32.totalorder %s15, 1
      %s4819 = scalar_select %p4818, %s15, 1
      %s4820 = smul.addr %s4819, 2
      %s4821 = scalar_lea.vmem %s3, %s4820
      // Predicated region
      $region29: #{double_conv_forward.6} parent=27 // pred_check
        %p4822 = pneg %p80
      $region30: #{double_conv_forward.6} parent=27 // pred_check_branch
        %4824 = sbr.rel (%p4822) target = $region32
      $region31: #{double_conv_forward.6} parent=27 // pred_region
        _
      $region32: #{double_conv_forward.6} parent=27 // pred_fallthru
        _
      // Predicated region
      $region33: #{double_conv_forward.6} parent=27 // pred_check
        %p4825 = pneg %p106
      $region34: #{double_conv_forward.6} parent=27 // pred_check_branch
        %4827 = sbr.rel (%p4825) target = $region36
      $region35: #{double_conv_forward.6} parent=27 // pred_region
        _
      $region36: #{double_conv_forward.6} parent=27 // pred_fallthru
        _
    $region28: #{double_conv_forward.6} parent=5 // pred_fallthru
      _
    %p4828 = scmp.le.s32.totalorder 2, %s10
    // Predicated region
    $region37: #{double_conv_forward.6} parent=5 // pred_check
      %p4829 = pneg %p4828
    $region38: #{double_conv_forward.6} parent=5 // pred_check_branch
      %4831 = sbr.rel (%p4829) target = $region40
    $region39: #{double_conv_forward.6} parent=5 // pred_region
      %s4832 = ssub.s32 %s10, 2
      // Predicated region
      $region41: #{double_conv_forward.6} parent=39 // pred_check
        %p4833 = pneg %p86
      $region42: #{double_conv_forward.6} parent=39 // pred_check_branch
        %4835 = sbr.rel (%p4833) target = $region44
      $region43: #{double_conv_forward.6} parent=39 // pred_region
        %p4836 = scmp.lt.s32.totalorder %s16, 1
        %s4837 = scalar_select %p4836, %s16, 1
        %s4838 = smul.addr %s4837, 8
        %s4839 = smul.addr %s4838, 4
        %s4840 = scalar_lea.vmem %s2, %s4839
      $region44: #{double_conv_forward.6} parent=39 // pred_fallthru
        _
      // Predicated region
      $region45: #{double_conv_forward.6} parent=39 // pred_check
        %p4841 = pneg %p112
      $region46: #{double_conv_forward.6} parent=39 // pred_check_branch
        %4843 = sbr.rel (%p4841) target = $region48
      $region47: #{double_conv_forward.6} parent=39 // pred_region
        %p4844 = scmp.lt.s32.totalorder %s16, 1
        %s4845 = scalar_select %p4844, %s16, 1
        %s4846 = smul.addr %s4845, 2
        %s4847 = scalar_lea.vmem %s3, %s4846
      $region48: #{double_conv_forward.6} parent=39 // pred_fallthru
        _
    $region40: #{double_conv_forward.6} parent=5 // pred_fallthru
      _
  $region6: #{double_conv_forward.6} parent=0 // loop_footer
    %s14 = sadd.s32 1, %s10
  $region7: #{double_conv_forward.6} parent=0 // loop_footer_branch
    %9 = sbr.rel target = $region3
  $region8: #{double_conv_forward.6} parent=0 // loop_exit
    _

</llo_original>
